<compile_context>
chip_gen: v7x
topology: tpu7x:2x2x1
jax: 0.10.0
libtpu: 0.0.40
codegen_flags: <defaults>
</compile_context>

<pallas_src>
import functools
import math
import numpy as np

import jax
import jax.numpy as jnp
from jax.experimental import pallas as pl
from jax.experimental.pallas import tpu as pltpu  # noqa: F401  (TPU backend)

# ----------------------------------------------------------------------------
# "config_manager" values (synthetic, deterministic)
# ----------------------------------------------------------------------------
MODEL_DIM = 32            # config_manager.get_model_dim()
NUM_HEADS = 4             # config_manager.get_num_heads()
NUM_LAYERS = 2            # config_manager.get_num_layers()
MAX_SHARES = 5            # config_manager.get_max_shares_per_trade()
ACTION_DIM = 1 + 2 * MAX_SHARES
FFN_DIM = 2048            # nn.TransformerEncoderLayer default dim_feedforward
INPUT_DIM_RAW = 7         # input_dim passed to ActorNetwork.__init__
INPUT_DIM = INPUT_DIM_RAW + 1   # module does input_dim + 1
BATCH = 2
SEQ = 8
HEAD_DIM = MODEL_DIM // NUM_HEADS
LN_EPS = 1e-5
OUT_PAD = 128             # lane-dense padded head output; sliced to ACTION_DIM outside


# ----------------------------------------------------------------------------
# Fused Pallas kernel
# ----------------------------------------------------------------------------
def _layer_norm(x, g, b):
    mu = jnp.mean(x, axis=-1, keepdims=True)
    var = jnp.mean(jnp.square(x - mu), axis=-1, keepdims=True)
    return (x - mu) * jax.lax.rsqrt(var + LN_EPS) * g + b


def actor_kernel(B, S,
                 x_ref, emb_w_ref, emb_bpe_ref,
                 wqkv_ref, bqkv_ref, wo_ref, bo_ref,
                 g1_ref, be1_ref, w1_ref, b1_ref, w2_ref, b2_ref,
                 g2_ref, be2_ref, fc_w_ref, fc_b_ref, o_ref):
    D = MODEL_DIM

    # ---- embedding + (bias + positional encoding) ---------------------------
    # x_ref: (B*S, IN); emb_w: (IN, D); emb_bpe: (B*S, D) pre-folded table
    h = jnp.dot(x_ref[...], emb_w_ref[...], preferred_element_type=jnp.float32)
    h = h + emb_bpe_ref[...]                                   # (B*S, D)

    scale = 1.0 / math.sqrt(HEAD_DIM)

    # ---- TransformerEncoder layers (post-norm, ReLU FFN) ---------------------
    for li in range(NUM_LAYERS):                               # static unroll (2)
        # fused QKV projection: one (B*S, D) @ (D, 3D) MXU push
        qkv = jnp.dot(h, wqkv_ref[li],
                      preferred_element_type=jnp.float32) + bqkv_ref[li]
        q = (qkv[:, 0:D] * scale).reshape(B, S, D)             # scale folded into q
        k = qkv[:, D:2 * D].reshape(B, S, D)
        v = qkv[:, 2 * D:3 * D].reshape(B, S, D)

        heads = []
        for hh in range(NUM_HEADS):                            # static unroll (4)
            sl = slice(hh * HEAD_DIM, (hh + 1) * HEAD_DIM)
            qh, kh, vh = q[..., sl], k[..., sl], v[..., sl]    # (B, S, HD)
            s = jnp.einsum("bqd,bkd->bqk", qh, kh,
                           preferred_element_type=jnp.float32)  # (B, S, S)
            s = s - jnp.max(s, axis=-1, keepdims=True)
            p = jnp.exp(s)
            p = p * pl.reciprocal(jnp.sum(p, axis=-1, keepdims=True), approx=True)
            heads.append(jnp.einsum("bqk,bkd->bqd", p, vh,
                                    preferred_element_type=jnp.float32))
        attn = jnp.concatenate(heads, axis=-1).reshape(B * S, D)
        attn = jnp.dot(attn, wo_ref[li],
                       preferred_element_type=jnp.float32) + bo_ref[li]

        h1 = _layer_norm(h + attn, g1_ref[li], be1_ref[li])

        # FFN: bf16 operands, f32 accumulation; elementwise math stays f32
        ff = jnp.dot(h1.astype(jnp.bfloat16), w1_ref[li],
                     preferred_element_type=jnp.float32) + b1_ref[li]
        ff = jnp.maximum(ff, 0.0)                              # ReLU (PyTorch default)
        ff = jnp.dot(ff.astype(jnp.bfloat16), w2_ref[li],
                     preferred_element_type=jnp.float32) + b2_ref[li]

        h = _layer_norm(h1 + ff, g2_ref[li], be2_ref[li])

    # ---- clamp + fc head on the last token of every sequence -----------------
    x_last = jnp.concatenate(
        [h[b * S + S - 1: b * S + S, :] for b in range(B)], axis=0)   # (B, D)
    x_last = jnp.clip(x_last, -10.0, 10.0)
    o_ref[...] = jnp.dot(x_last, fc_w_ref[...],
                         preferred_element_type=jnp.float32) + fc_b_ref[...]


def actor_forward_pallas(x, packed):
    if x.ndim == 2:                      # mirrors `if x.dim() == 2: x = x.unsqueeze(0)`
        x = x[None]
    B, S, IN = x.shape
    assert packed["emb_bpe"].shape == (B * S, MODEL_DIM)
    xf = x.reshape(B * S, IN)

    out = pl.pallas_call(
        functools.partial(actor_kernel, B, S),
        out_shape=jax.ShapeDtypeStruct((B, OUT_PAD), jnp.float32),
        # gridless, full-array blocks: everything resident in VMEM (~1 MB total)
    )(xf, packed["emb_w"], packed["emb_bpe"],
      packed["wqkv"], packed["bqkv"], packed["wo"], packed["bo"],
      packed["g1"], packed["be1"], packed["w1"], packed["b1"],
      packed["w2"], packed["b2"], packed["g2"], packed["be2"],
      packed["fc_w"], packed["fc_b"])
    return out[:, :ACTION_DIM]


# ----------------------------------------------------------------------------
# Parameter setup (deterministic, synthetic) + positional encoding (glue)
# ----------------------------------------------------------------------------
def sinusoidal_pe(seq_len, d_model):
    pos = jnp.arange(seq_len, dtype=jnp.float32)[:, None]
    div = jnp.exp(jnp.arange(0, d_model, 2, dtype=jnp.float32)
                  * (-math.log(10000.0) / d_model))
    pe = jnp.zeros((seq_len, d_model), jnp.float32)
    pe = pe.at[:, 0::2].set(jnp.sin(pos * div))
    pe = pe.at[:, 1::2].set(jnp.cos(pos * div))
    return pe


def _dense(key, fan_in, fan_out):
    kw, kb = jax.random.split(key)
    w = jax.random.normal(kw, (fan_in, fan_out), jnp.float32) / jnp.sqrt(float(fan_in))
    b = 0.01 * jax.random.normal(kb, (1, fan_out), jnp.float32)
    return w, b


def init_params(key):
    keys = jax.random.split(key, 2 + NUM_LAYERS)
    emb_w, emb_b = _dense(keys[0], INPUT_DIM, MODEL_DIM)
    fc_w, fc_b = _dense(keys[1], MODEL_DIM, ACTION_DIM)
    layers = []
    for li in range(NUM_LAYERS):
        lk = jax.random.split(keys[2 + li], 6)
        wq, bq = _dense(lk[0], MODEL_DIM, MODEL_DIM)
        wk, bk = _dense(lk[1], MODEL_DIM, MODEL_DIM)
        wv, bv = _dense(lk[2], MODEL_DIM, MODEL_DIM)
        wo, bo = _dense(lk[3], MODEL_DIM, MODEL_DIM)
        w1, b1 = _dense(lk[4], MODEL_DIM, FFN_DIM)
        w2, b2 = _dense(lk[5], FFN_DIM, MODEL_DIM)
        layers.append(dict(
            wq=wq, bq=bq, wk=wk, bk=bk, wv=wv, bv=bv, wo=wo, bo=bo,
            w1=w1, b1=b1, w2=w2, b2=b2,
            g1=jnp.ones((1, MODEL_DIM), jnp.float32),
            be1=jnp.zeros((1, MODEL_DIM), jnp.float32),
            g2=jnp.ones((1, MODEL_DIM), jnp.float32),
            be2=jnp.zeros((1, MODEL_DIM), jnp.float32),
        ))
    return dict(emb_w=emb_w, emb_b=emb_b, fc_w=fc_w, fc_b=fc_b,
                layers=layers, pe=sinusoidal_pe(SEQ, MODEL_DIM))


def pack_params(p, batch):
    """Fold / stack parameters for the single fused kernel (done once)."""
    layers = p["layers"]

    def stack(name):
        return jnp.stack([lp[name] for lp in layers])

    wqkv = jnp.stack([jnp.concatenate([lp["wq"], lp["wk"], lp["wv"]], axis=1)
                      for lp in layers])                               # (L, D, 3D)
    bqkv = jnp.stack([jnp.concatenate([lp["bq"], lp["bk"], lp["bv"]], axis=1)
                      for lp in layers])                               # (L, 1, 3D)
    emb_bpe = jnp.tile(p["emb_b"] + p["pe"], (batch, 1))               # (B*S, D)
    fc_w_pad = jnp.zeros((MODEL_DIM, OUT_PAD), jnp.float32).at[:, :ACTION_DIM].set(p["fc_w"])
    fc_b_pad = jnp.zeros((1, OUT_PAD), jnp.float32).at[:, :ACTION_DIM].set(p["fc_b"])

    return dict(
        emb_w=p["emb_w"], emb_bpe=emb_bpe,
        wqkv=wqkv, bqkv=bqkv,
        wo=stack("wo"), bo=stack("bo"),
        g1=stack("g1"), be1=stack("be1"),
        w1=stack("w1").astype(jnp.bfloat16), b1=stack("b1"),
        w2=stack("w2").astype(jnp.bfloat16), b2=stack("b2"),
        g2=stack("g2"), be2=stack("be2"),
        fc_w=fc_w_pad, fc_b=fc_b_pad,
    )


# ----------------------------------------------------------------------------
# Pure-JAX reference (f32, highest precision) matching the PyTorch module
# ----------------------------------------------------------------------------
def _ref_ln(x, g, b):
    mu = jnp.mean(x, axis=-1, keepdims=True)
    var = jnp.mean(jnp.square(x - mu), axis=-1, keepdims=True)
    return (x - mu) / jnp.sqrt(var + LN_EPS) * g[0] + b[0]


def actor_forward_ref(x, params):
    if x.ndim == 2:
        x = x[None]
    h = jnp.einsum("bsi,id->bsd", x, params["emb_w"],
                   precision="highest") + params["emb_b"][0] + params["pe"]
    for lp in params["layers"]:
        B, S, D = h.shape
        q = (h @ lp["wq"] + lp["bq"][0]).reshape(B, S, NUM_HEADS, HEAD_DIM)
        k = (h @ lp["wk"] + lp["bk"][0]).reshape(B, S, NUM_HEADS, HEAD_DIM)
        v = (h @ lp["wv"] + lp["bv"][0]).reshape(B, S, NUM_HEADS, HEAD_DIM)
        s = jnp.einsum("bqhd,bkhd->bhqk", q, k, precision="highest") / math.sqrt(HEAD_DIM)
        p = jax.nn.softmax(s, axis=-1)
        a = jnp.einsum("bhqk,bkhd->bqhd", p, v, precision="highest").reshape(B, S, D)
        a = a @ lp["wo"] + lp["bo"][0]
        h1 = _ref_ln(h + a, lp["g1"], lp["be1"])
        ff = jnp.maximum(h1 @ lp["w1"] + lp["b1"][0], 0.0)
        ff = ff @ lp["w2"] + lp["b2"][0]
        h = _ref_ln(h1 + ff, lp["g2"], lp["be2"])
    h = jnp.clip(h, -10.0, 10.0)
    return h[:, -1, :] @ params["fc_w"] + params["fc_b"][0]


# ----------------------------------------------------------------------------
if __name__ == "__main__":
    key = jax.random.PRNGKey(0)
    k_param, k_x = jax.random.split(key)
    params = init_params(k_param)
    packed = pack_params(params, BATCH)
    x = jax.random.normal(k_x, (BATCH, SEQ, INPUT_DIM), jnp.float32)

    logits = jax.block_until_ready(actor_forward_pallas(x, packed))
    ref = jax.block_until_ready(actor_forward_ref(x, params))

    assert logits.shape == (BATCH, ACTION_DIM)
    assert bool(jnp.all(jnp.isfinite(logits)))
    np.testing.assert_allclose(np.asarray(logits), np.asarray(ref),
                               rtol=5e-2, atol=5e-2)
    print("KERNEL_OK")
</pallas_src>

<mosaic_0001>
module attributes {stable_mosaic.version = 11 : i64} {
  func.func @actor_kernel(%arg0: memref<16x8xf32, #tpu.memory_space<vmem>>, %arg1: memref<8x32xf32, #tpu.memory_space<vmem>>, %arg2: memref<16x32xf32, #tpu.memory_space<vmem>>, %arg3: memref<2x32x96xf32, #tpu.memory_space<vmem>>, %arg4: memref<2x1x96xf32, #tpu.memory_space<vmem>>, %arg5: memref<2x32x32xf32, #tpu.memory_space<vmem>>, %arg6: memref<2x1x32xf32, #tpu.memory_space<vmem>>, %arg7: memref<2x1x32xf32, #tpu.memory_space<vmem>>, %arg8: memref<2x1x32xf32, #tpu.memory_space<vmem>>, %arg9: memref<2x32x2048xbf16, #tpu.memory_space<vmem>>, %arg10: memref<2x1x2048xf32, #tpu.memory_space<vmem>>, %arg11: memref<2x2048x32xbf16, #tpu.memory_space<vmem>>, %arg12: memref<2x1x32xf32, #tpu.memory_space<vmem>>, %arg13: memref<2x1x32xf32, #tpu.memory_space<vmem>>, %arg14: memref<2x1x32xf32, #tpu.memory_space<vmem>>, %arg15: memref<32x128xf32, #tpu.memory_space<vmem>>, %arg16: memref<1x128xf32, #tpu.memory_space<vmem>>, %arg17: memref<2x128xf32, #tpu.memory_space<vmem>>) attributes {dimension_semantics = [], scalar_prefetch = 0 : i64, scratch_operands = 0 : i64, tpu.core_type = #tpu.core_type<tc>} {
    %c0 = arith.constant 0 : index
    %c0_0 = arith.constant 0 : index
    %0 = vector.load %arg0[%c0, %c0_0] : memref<16x8xf32, #tpu.memory_space<vmem>>, vector<16x8xf32>
    %c0_1 = arith.constant 0 : index
    %c0_2 = arith.constant 0 : index
    %1 = vector.load %arg1[%c0_1, %c0_2] : memref<8x32xf32, #tpu.memory_space<vmem>>, vector<8x32xf32>
    %cst = arith.constant dense<0.000000e+00> : vector<16x32xf32>
    %2 = tpu.matmul %0, %1, %cst {dimension_numbers = #tpu.dot_dimension_numbers<[1], [0], [0], [1], [0, 0, 1, 1], [], []>} : vector<16x8xf32>, vector<8x32xf32>, vector<16x32xf32> -> vector<16x32xf32>
    %c0_3 = arith.constant 0 : index
    %c0_4 = arith.constant 0 : index
    %3 = vector.load %arg2[%c0_3, %c0_4] : memref<16x32xf32, #tpu.memory_space<vmem>>, vector<16x32xf32>
    %4 = arith.addf %2, %3 : vector<16x32xf32>
    %c0_5 = arith.constant 0 : index
    %c0_6 = arith.constant 0 : index
    %c0_7 = arith.constant 0 : index
    %5 = vector.load %arg3[%c0_5, %c0_6, %c0_7] : memref<2x32x96xf32, #tpu.memory_space<vmem>>, vector<1x32x96xf32>
    %6 = vector.shape_cast %5 : vector<1x32x96xf32> to vector<32x96xf32>
    %cst_8 = arith.constant dense<0.000000e+00> : vector<16x96xf32>
    %7 = tpu.matmul %4, %6, %cst_8 {dimension_numbers = #tpu.dot_dimension_numbers<[1], [0], [0], [1], [0, 0, 1, 1], [], []>} : vector<16x32xf32>, vector<32x96xf32>, vector<16x96xf32> -> vector<16x96xf32>
    %c0_9 = arith.constant 0 : index
    %c0_10 = arith.constant 0 : index
    %c0_11 = arith.constant 0 : index
    %8 = vector.load %arg4[%c0_9, %c0_10, %c0_11] : memref<2x1x96xf32, #tpu.memory_space<vmem>>, vector<1x1x96xf32>
    %9 = vector.shape_cast %8 : vector<1x1x96xf32> to vector<1x96xf32>
    %10 = vector.broadcast %9 : vector<1x96xf32> to vector<16x96xf32>
    %11 = arith.addf %7, %10 : vector<16x96xf32>
    %12 = vector.extract_strided_slice %11 {offsets = [0, 0], sizes = [16, 32], strides = [1, 1]} : vector<16x96xf32> to vector<16x32xf32>
    %cst_12 = arith.constant 0.353553385 : f32
    %13 = vector.broadcast %cst_12 : f32 to vector<16x32xf32>
    %14 = arith.mulf %12, %13 : vector<16x32xf32>
    %15 = vector.shape_cast %14 : vector<16x32xf32> to vector<2x8x32xf32>
    %16 = vector.extract_strided_slice %11 {offsets = [0, 32], sizes = [16, 32], strides = [1, 1]} : vector<16x96xf32> to vector<16x32xf32>
    %17 = vector.shape_cast %16 : vector<16x32xf32> to vector<2x8x32xf32>
    %18 = vector.extract_strided_slice %11 {offsets = [0, 64], sizes = [16, 32], strides = [1, 1]} : vector<16x96xf32> to vector<16x32xf32>
    %19 = vector.shape_cast %18 : vector<16x32xf32> to vector<2x8x32xf32>
    %20 = vector.extract_strided_slice %15 {offsets = [0, 0, 0], sizes = [2, 8, 8], strides = [1, 1, 1]} : vector<2x8x32xf32> to vector<2x8x8xf32>
    %21 = vector.extract_strided_slice %17 {offsets = [0, 0, 0], sizes = [2, 8, 8], strides = [1, 1, 1]} : vector<2x8x32xf32> to vector<2x8x8xf32>
    %22 = vector.extract_strided_slice %19 {offsets = [0, 0, 0], sizes = [2, 8, 8], strides = [1, 1, 1]} : vector<2x8x32xf32> to vector<2x8x8xf32>
    "tpu.trace_start"() <{level = 10 : i32, message = "bqd,bkd->bqk"}> : () -> ()
    %cst_13 = arith.constant dense<0.000000e+00> : vector<2x8x8xf32>
    %23 = tpu.matmul %20, %21, %cst_13 {dimension_numbers = #tpu.dot_dimension_numbers<[2], [2], [1], [1], [0, 0, 0, 1, 1, 1], [0], [0]>} : vector<2x8x8xf32>, vector<2x8x8xf32>, vector<2x8x8xf32> -> vector<2x8x8xf32>
    "tpu.trace_stop"() : () -> ()
    %cst_14 = arith.constant dense<0xFF800000> : vector<2x8xf32>
    %24 = vector.multi_reduction <maximumf>, %23, %cst_14 [2] : vector<2x8x8xf32> to vector<2x8xf32>
    %25 = vector.shape_cast %24 : vector<2x8xf32> to vector<2x8x1xf32>
    %26 = vector.broadcast %25 : vector<2x8x1xf32> to vector<2x8x8xf32>
    %27 = arith.subf %23, %26 : vector<2x8x8xf32>
    %28 = math.exp %27 : vector<2x8x8xf32>
    %cst_15 = arith.constant dense<0.000000e+00> : vector<2x8xf32>
    %29 = vector.multi_reduction <add>, %28, %cst_15 [2] : vector<2x8x8xf32> to vector<2x8xf32>
    %30 = vector.shape_cast %29 : vector<2x8xf32> to vector<2x8x1xf32>
    %31 = tpu.reciprocal %30 {approx = true} : vector<2x8x1xf32> -> vector<2x8x1xf32>
    %32 = vector.broadcast %31 : vector<2x8x1xf32> to vector<2x8x8xf32>
    %33 = arith.mulf %28, %32 : vector<2x8x8xf32>
    "tpu.trace_start"() <{level = 10 : i32, message = "bqk,bkd->bqd"}> : () -> ()
    %cst_16 = arith.constant dense<0.000000e+00> : vector<2x8x8xf32>
    %34 = tpu.matmul %33, %22, %cst_16 {dimension_numbers = #tpu.dot_dimension_numbers<[2], [1], [1], [2], [0, 0, 0, 1, 1, 2], [0], [0]>} : vector<2x8x8xf32>, vector<2x8x8xf32>, vector<2x8x8xf32> -> vector<2x8x8xf32>
    "tpu.trace_stop"() : () -> ()
    %35 = vector.extract_strided_slice %15 {offsets = [0, 0, 8], sizes = [2, 8, 8], strides = [1, 1, 1]} : vector<2x8x32xf32> to vector<2x8x8xf32>
    %36 = vector.extract_strided_slice %17 {offsets = [0, 0, 8], sizes = [2, 8, 8], strides = [1, 1, 1]} : vector<2x8x32xf32> to vector<2x8x8xf32>
    %37 = vector.extract_strided_slice %19 {offsets = [0, 0, 8], sizes = [2, 8, 8], strides = [1, 1, 1]} : vector<2x8x32xf32> to vector<2x8x8xf32>
    "tpu.trace_start"() <{level = 10 : i32, message = "bqd,bkd->bqk"}> : () -> ()
    %cst_17 = arith.constant dense<0.000000e+00> : vector<2x8x8xf32>
    %38 = tpu.matmul %35, %36, %cst_17 {dimension_numbers = #tpu.dot_dimension_numbers<[2], [2], [1], [1], [0, 0, 0, 1, 1, 1], [0], [0]>} : vector<2x8x8xf32>, vector<2x8x8xf32>, vector<2x8x8xf32> -> vector<2x8x8xf32>
    "tpu.trace_stop"() : () -> ()
    %cst_18 = arith.constant dense<0xFF800000> : vector<2x8xf32>
    %39 = vector.multi_reduction <maximumf>, %38, %cst_18 [2] : vector<2x8x8xf32> to vector<2x8xf32>
    %40 = vector.shape_cast %39 : vector<2x8xf32> to vector<2x8x1xf32>
    %41 = vector.broadcast %40 : vector<2x8x1xf32> to vector<2x8x8xf32>
    %42 = arith.subf %38, %41 : vector<2x8x8xf32>
    %43 = math.exp %42 : vector<2x8x8xf32>
    %cst_19 = arith.constant dense<0.000000e+00> : vector<2x8xf32>
    %44 = vector.multi_reduction <add>, %43, %cst_19 [2] : vector<2x8x8xf32> to vector<2x8xf32>
    %45 = vector.shape_cast %44 : vector<2x8xf32> to vector<2x8x1xf32>
    %46 = tpu.reciprocal %45 {approx = true} : vector<2x8x1xf32> -> vector<2x8x1xf32>
    %47 = vector.broadcast %46 : vector<2x8x1xf32> to vector<2x8x8xf32>
    %48 = arith.mulf %43, %47 : vector<2x8x8xf32>
    "tpu.trace_start"() <{level = 10 : i32, message = "bqk,bkd->bqd"}> : () -> ()
    %cst_20 = arith.constant dense<0.000000e+00> : vector<2x8x8xf32>
    %49 = tpu.matmul %48, %37, %cst_20 {dimension_numbers = #tpu.dot_dimension_numbers<[2], [1], [1], [2], [0, 0, 0, 1, 1, 2], [0], [0]>} : vector<2x8x8xf32>, vector<2x8x8xf32>, vector<2x8x8xf32> -> vector<2x8x8xf32>
    "tpu.trace_stop"() : () -> ()
    %50 = vector.extract_strided_slice %15 {offsets = [0, 0, 16], sizes = [2, 8, 8], strides = [1, 1, 1]} : vector<2x8x32xf32> to vector<2x8x8xf32>
    %51 = vector.extract_strided_slice %17 {offsets = [0, 0, 16], sizes = [2, 8, 8], strides = [1, 1, 1]} : vector<2x8x32xf32> to vector<2x8x8xf32>
    %52 = vector.extract_strided_slice %19 {offsets = [0, 0, 16], sizes = [2, 8, 8], strides = [1, 1, 1]} : vector<2x8x32xf32> to vector<2x8x8xf32>
    "tpu.trace_start"() <{level = 10 : i32, message = "bqd,bkd->bqk"}> : () -> ()
    %cst_21 = arith.constant dense<0.000000e+00> : vector<2x8x8xf32>
    %53 = tpu.matmul %50, %51, %cst_21 {dimension_numbers = #tpu.dot_dimension_numbers<[2], [2], [1], [1], [0, 0, 0, 1, 1, 1], [0], [0]>} : vector<2x8x8xf32>, vector<2x8x8xf32>, vector<2x8x8xf32> -> vector<2x8x8xf32>
    "tpu.trace_stop"() : () -> ()
    %cst_22 = arith.constant dense<0xFF800000> : vector<2x8xf32>
    %54 = vector.multi_reduction <maximumf>, %53, %cst_22 [2] : vector<2x8x8xf32> to vector<2x8xf32>
    %55 = vector.shape_cast %54 : vector<2x8xf32> to vector<2x8x1xf32>
    %56 = vector.broadcast %55 : vector<2x8x1xf32> to vector<2x8x8xf32>
    %57 = arith.subf %53, %56 : vector<2x8x8xf32>
    %58 = math.exp %57 : vector<2x8x8xf32>
    %cst_23 = arith.constant dense<0.000000e+00> : vector<2x8xf32>
    %59 = vector.multi_reduction <add>, %58, %cst_23 [2] : vector<2x8x8xf32> to vector<2x8xf32>
    %60 = vector.shape_cast %59 : vector<2x8xf32> to vector<2x8x1xf32>
    %61 = tpu.reciprocal %60 {approx = true} : vector<2x8x1xf32> -> vector<2x8x1xf32>
    %62 = vector.broadcast %61 : vector<2x8x1xf32> to vector<2x8x8xf32>
    %63 = arith.mulf %58, %62 : vector<2x8x8xf32>
    "tpu.trace_start"() <{level = 10 : i32, message = "bqk,bkd->bqd"}> : () -> ()
    %cst_24 = arith.constant dense<0.000000e+00> : vector<2x8x8xf32>
    %64 = tpu.matmul %63, %52, %cst_24 {dimension_numbers = #tpu.dot_dimension_numbers<[2], [1], [1], [2], [0, 0, 0, 1, 1, 2], [0], [0]>} : vector<2x8x8xf32>, vector<2x8x8xf32>, vector<2x8x8xf32> -> vector<2x8x8xf32>
    "tpu.trace_stop"() : () -> ()
    %65 = vector.extract_strided_slice %15 {offsets = [0, 0, 24], sizes = [2, 8, 8], strides = [1, 1, 1]} : vector<2x8x32xf32> to vector<2x8x8xf32>
    %66 = vector.extract_strided_slice %17 {offsets = [0, 0, 24], sizes = [2, 8, 8], strides = [1, 1, 1]} : vector<2x8x32xf32> to vector<2x8x8xf32>
    %67 = vector.extract_strided_slice %19 {offsets = [0, 0, 24], sizes = [2, 8, 8], strides = [1, 1, 1]} : vector<2x8x32xf32> to vector<2x8x8xf32>
    "tpu.trace_start"() <{level = 10 : i32, message = "bqd,bkd->bqk"}> : () -> ()
    %cst_25 = arith.constant dense<0.000000e+00> : vector<2x8x8xf32>
    %68 = tpu.matmul %65, %66, %cst_25 {dimension_numbers = #tpu.dot_dimension_numbers<[2], [2], [1], [1], [0, 0, 0, 1, 1, 1], [0], [0]>} : vector<2x8x8xf32>, vector<2x8x8xf32>, vector<2x8x8xf32> -> vector<2x8x8xf32>
    "tpu.trace_stop"() : () -> ()
    %cst_26 = arith.constant dense<0xFF800000> : vector<2x8xf32>
    %69 = vector.multi_reduction <maximumf>, %68, %cst_26 [2] : vector<2x8x8xf32> to vector<2x8xf32>
    %70 = vector.shape_cast %69 : vector<2x8xf32> to vector<2x8x1xf32>
    %71 = vector.broadcast %70 : vector<2x8x1xf32> to vector<2x8x8xf32>
    %72 = arith.subf %68, %71 : vector<2x8x8xf32>
    %73 = math.exp %72 : vector<2x8x8xf32>
    %cst_27 = arith.constant dense<0.000000e+00> : vector<2x8xf32>
    %74 = vector.multi_reduction <add>, %73, %cst_27 [2] : vector<2x8x8xf32> to vector<2x8xf32>
    %75 = vector.shape_cast %74 : vector<2x8xf32> to vector<2x8x1xf32>
    %76 = tpu.reciprocal %75 {approx = true} : vector<2x8x1xf32> -> vector<2x8x1xf32>
    %77 = vector.broadcast %76 : vector<2x8x1xf32> to vector<2x8x8xf32>
    %78 = arith.mulf %73, %77 : vector<2x8x8xf32>
    "tpu.trace_start"() <{level = 10 : i32, message = "bqk,bkd->bqd"}> : () -> ()
    %cst_28 = arith.constant dense<0.000000e+00> : vector<2x8x8xf32>
    %79 = tpu.matmul %78, %67, %cst_28 {dimension_numbers = #tpu.dot_dimension_numbers<[2], [1], [1], [2], [0, 0, 0, 1, 1, 2], [0], [0]>} : vector<2x8x8xf32>, vector<2x8x8xf32>, vector<2x8x8xf32> -> vector<2x8x8xf32>
    "tpu.trace_stop"() : () -> ()
    %80 = tpu.concatenate %34, %49, %64, %79 in 2 : vector<2x8x8xf32>, vector<2x8x8xf32>, vector<2x8x8xf32>, vector<2x8x8xf32> -> vector<2x8x32xf32>
    %81 = vector.shape_cast %80 : vector<2x8x32xf32> to vector<16x32xf32>
    %c0_29 = arith.constant 0 : index
    %c0_30 = arith.constant 0 : index
    %c0_31 = arith.constant 0 : index
    %82 = vector.load %arg5[%c0_29, %c0_30, %c0_31] : memref<2x32x32xf32, #tpu.memory_space<vmem>>, vector<1x32x32xf32>
    %83 = vector.shape_cast %82 : vector<1x32x32xf32> to vector<32x32xf32>
    %cst_32 = arith.constant dense<0.000000e+00> : vector<16x32xf32>
    %84 = tpu.matmul %81, %83, %cst_32 {dimension_numbers = #tpu.dot_dimension_numbers<[1], [0], [0], [1], [0, 0, 1, 1], [], []>} : vector<16x32xf32>, vector<32x32xf32>, vector<16x32xf32> -> vector<16x32xf32>
    %c0_33 = arith.constant 0 : index
    %c0_34 = arith.constant 0 : index
    %c0_35 = arith.constant 0 : index
    %85 = vector.load %arg6[%c0_33, %c0_34, %c0_35] : memref<2x1x32xf32, #tpu.memory_space<vmem>>, vector<1x1x32xf32>
    %86 = vector.shape_cast %85 : vector<1x1x32xf32> to vector<1x32xf32>
    %87 = vector.broadcast %86 : vector<1x32xf32> to vector<16x32xf32>
    %88 = arith.addf %84, %87 : vector<16x32xf32>
    %89 = arith.addf %4, %88 : vector<16x32xf32>
    %c0_36 = arith.constant 0 : index
    %c0_37 = arith.constant 0 : index
    %c0_38 = arith.constant 0 : index
    %90 = vector.load %arg7[%c0_36, %c0_37, %c0_38] : memref<2x1x32xf32, #tpu.memory_space<vmem>>, vector<1x1x32xf32>
    %91 = vector.shape_cast %90 : vector<1x1x32xf32> to vector<1x32xf32>
    %c0_39 = arith.constant 0 : index
    %c0_40 = arith.constant 0 : index
    %c0_41 = arith.constant 0 : index
    %92 = vector.load %arg8[%c0_39, %c0_40, %c0_41] : memref<2x1x32xf32, #tpu.memory_space<vmem>>, vector<1x1x32xf32>
    %93 = vector.shape_cast %92 : vector<1x1x32xf32> to vector<1x32xf32>
    %cst_42 = arith.constant dense<0.000000e+00> : vector<16xf32>
    %94 = vector.multi_reduction <add>, %89, %cst_42 [1] : vector<16x32xf32> to vector<16xf32>
    %95 = vector.shape_cast %94 : vector<16xf32> to vector<16x1xf32>
    %cst_43 = arith.constant 3.200000e+01 : f32
    %96 = vector.broadcast %cst_43 : f32 to vector<16x1xf32>
    %97 = arith.divf %95, %96 : vector<16x1xf32>
    %98 = vector.broadcast %97 : vector<16x1xf32> to vector<16x32xf32>
    %99 = arith.subf %89, %98 : vector<16x32xf32>
    %100 = arith.mulf %99, %99 : vector<16x32xf32>
    %cst_44 = arith.constant dense<0.000000e+00> : vector<16xf32>
    %101 = vector.multi_reduction <add>, %100, %cst_44 [1] : vector<16x32xf32> to vector<16xf32>
    %102 = vector.shape_cast %101 : vector<16xf32> to vector<16x1xf32>
    %cst_45 = arith.constant 3.200000e+01 : f32
    %103 = vector.broadcast %cst_45 : f32 to vector<16x1xf32>
    %104 = arith.divf %102, %103 : vector<16x1xf32>
    %105 = vector.broadcast %97 : vector<16x1xf32> to vector<16x32xf32>
    %106 = arith.subf %89, %105 : vector<16x32xf32>
    %cst_46 = arith.constant 9.99999974E-6 : f32
    %107 = vector.broadcast %cst_46 : f32 to vector<16x1xf32>
    %108 = arith.addf %104, %107 : vector<16x1xf32>
    %109 = math.rsqrt %108 : vector<16x1xf32>
    %110 = vector.broadcast %109 : vector<16x1xf32> to vector<16x32xf32>
    %111 = arith.mulf %106, %110 : vector<16x32xf32>
    %112 = vector.broadcast %91 : vector<1x32xf32> to vector<16x32xf32>
    %113 = arith.mulf %111, %112 : vector<16x32xf32>
    %114 = vector.broadcast %93 : vector<1x32xf32> to vector<16x32xf32>
    %115 = arith.addf %113, %114 : vector<16x32xf32>
    %116 = arith.truncf %115 : vector<16x32xf32> to vector<16x32xbf16>
    %c0_47 = arith.constant 0 : index
    %c0_48 = arith.constant 0 : index
    %c0_49 = arith.constant 0 : index
    %117 = vector.load %arg9[%c0_47, %c0_48, %c0_49] : memref<2x32x2048xbf16, #tpu.memory_space<vmem>>, vector<1x32x2048xbf16>
    %118 = vector.shape_cast %117 : vector<1x32x2048xbf16> to vector<32x2048xbf16>
    %cst_50 = arith.constant dense<0.000000e+00> : vector<16x2048xf32>
    %119 = tpu.matmul %116, %118, %cst_50 {dimension_numbers = #tpu.dot_dimension_numbers<[1], [0], [0], [1], [0, 0, 1, 1], [], []>} : vector<16x32xbf16>, vector<32x2048xbf16>, vector<16x2048xf32> -> vector<16x2048xf32>
    %c0_51 = arith.constant 0 : index
    %c0_52 = arith.constant 0 : index
    %c0_53 = arith.constant 0 : index
    %120 = vector.load %arg10[%c0_51, %c0_52, %c0_53] : memref<2x1x2048xf32, #tpu.memory_space<vmem>>, vector<1x1x2048xf32>
    %121 = vector.shape_cast %120 : vector<1x1x2048xf32> to vector<1x2048xf32>
    %122 = vector.broadcast %121 : vector<1x2048xf32> to vector<16x2048xf32>
    %123 = arith.addf %119, %122 : vector<16x2048xf32>
    %cst_54 = arith.constant 0.000000e+00 : f32
    %124 = vector.broadcast %cst_54 : f32 to vector<16x2048xf32>
    %125 = arith.maximumf %123, %124 : vector<16x2048xf32>
    %126 = arith.truncf %125 : vector<16x2048xf32> to vector<16x2048xbf16>
    %c0_55 = arith.constant 0 : index
    %c0_56 = arith.constant 0 : index
    %c0_57 = arith.constant 0 : index
    %127 = vector.load %arg11[%c0_55, %c0_56, %c0_57] : memref<2x2048x32xbf16, #tpu.memory_space<vmem>>, vector<1x2048x32xbf16>
    %128 = vector.shape_cast %127 : vector<1x2048x32xbf16> to vector<2048x32xbf16>
    %cst_58 = arith.constant dense<0.000000e+00> : vector<16x32xf32>
    %129 = tpu.matmul %126, %128, %cst_58 {dimension_numbers = #tpu.dot_dimension_numbers<[1], [0], [0], [1], [0, 0, 1, 1], [], []>} : vector<16x2048xbf16>, vector<2048x32xbf16>, vector<16x32xf32> -> vector<16x32xf32>
    %c0_59 = arith.constant 0 : index
    %c0_60 = arith.constant 0 : index
    %c0_61 = arith.constant 0 : index
    %130 = vector.load %arg12[%c0_59, %c0_60, %c0_61] : memref<2x1x32xf32, #tpu.memory_space<vmem>>, vector<1x1x32xf32>
    %131 = vector.shape_cast %130 : vector<1x1x32xf32> to vector<1x32xf32>
    %132 = vector.broadcast %131 : vector<1x32xf32> to vector<16x32xf32>
    %133 = arith.addf %129, %132 : vector<16x32xf32>
    %134 = arith.addf %115, %133 : vector<16x32xf32>
    %c0_62 = arith.constant 0 : index
    %c0_63 = arith.constant 0 : index
    %c0_64 = arith.constant 0 : index
    %135 = vector.load %arg13[%c0_62, %c0_63, %c0_64] : memref<2x1x32xf32, #tpu.memory_space<vmem>>, vector<1x1x32xf32>
    %136 = vector.shape_cast %135 : vector<1x1x32xf32> to vector<1x32xf32>
    %c0_65 = arith.constant 0 : index
    %c0_66 = arith.constant 0 : index
    %c0_67 = arith.constant 0 : index
    %137 = vector.load %arg14[%c0_65, %c0_66, %c0_67] : memref<2x1x32xf32, #tpu.memory_space<vmem>>, vector<1x1x32xf32>
    %138 = vector.shape_cast %137 : vector<1x1x32xf32> to vector<1x32xf32>
    %cst_68 = arith.constant dense<0.000000e+00> : vector<16xf32>
    %139 = vector.multi_reduction <add>, %134, %cst_68 [1] : vector<16x32xf32> to vector<16xf32>
    %140 = vector.shape_cast %139 : vector<16xf32> to vector<16x1xf32>
    %cst_69 = arith.constant 3.200000e+01 : f32
    %141 = vector.broadcast %cst_69 : f32 to vector<16x1xf32>
    %142 = arith.divf %140, %141 : vector<16x1xf32>
    %143 = vector.broadcast %142 : vector<16x1xf32> to vector<16x32xf32>
    %144 = arith.subf %134, %143 : vector<16x32xf32>
    %145 = arith.mulf %144, %144 : vector<16x32xf32>
    %cst_70 = arith.constant dense<0.000000e+00> : vector<16xf32>
    %146 = vector.multi_reduction <add>, %145, %cst_70 [1] : vector<16x32xf32> to vector<16xf32>
    %147 = vector.shape_cast %146 : vector<16xf32> to vector<16x1xf32>
    %cst_71 = arith.constant 3.200000e+01 : f32
    %148 = vector.broadcast %cst_71 : f32 to vector<16x1xf32>
    %149 = arith.divf %147, %148 : vector<16x1xf32>
    %150 = vector.broadcast %142 : vector<16x1xf32> to vector<16x32xf32>
    %151 = arith.subf %134, %150 : vector<16x32xf32>
    %cst_72 = arith.constant 9.99999974E-6 : f32
    %152 = vector.broadcast %cst_72 : f32 to vector<16x1xf32>
    %153 = arith.addf %149, %152 : vector<16x1xf32>
    %154 = math.rsqrt %153 : vector<16x1xf32>
    %155 = vector.broadcast %154 : vector<16x1xf32> to vector<16x32xf32>
    %156 = arith.mulf %151, %155 : vector<16x32xf32>
    %157 = vector.broadcast %136 : vector<1x32xf32> to vector<16x32xf32>
    %158 = arith.mulf %156, %157 : vector<16x32xf32>
    %159 = vector.broadcast %138 : vector<1x32xf32> to vector<16x32xf32>
    %160 = arith.addf %158, %159 : vector<16x32xf32>
    %c1 = arith.constant 1 : index
    %c0_73 = arith.constant 0 : index
    %c0_74 = arith.constant 0 : index
    %161 = vector.load %arg3[%c1, %c0_73, %c0_74] : memref<2x32x96xf32, #tpu.memory_space<vmem>>, vector<1x32x96xf32>
    %162 = vector.shape_cast %161 : vector<1x32x96xf32> to vector<32x96xf32>
    %cst_75 = arith.constant dense<0.000000e+00> : vector<16x96xf32>
    %163 = tpu.matmul %160, %162, %cst_75 {dimension_numbers = #tpu.dot_dimension_numbers<[1], [0], [0], [1], [0, 0, 1, 1], [], []>} : vector<16x32xf32>, vector<32x96xf32>, vector<16x96xf32> -> vector<16x96xf32>
    %c1_76 = arith.constant 1 : index
    %c0_77 = arith.constant 0 : index
    %c0_78 = arith.constant 0 : index
    %164 = vector.load %arg4[%c1_76, %c0_77, %c0_78] : memref<2x1x96xf32, #tpu.memory_space<vmem>>, vector<1x1x96xf32>
    %165 = vector.shape_cast %164 : vector<1x1x96xf32> to vector<1x96xf32>
    %166 = vector.broadcast %165 : vector<1x96xf32> to vector<16x96xf32>
    %167 = arith.addf %163, %166 : vector<16x96xf32>
    %168 = vector.extract_strided_slice %167 {offsets = [0, 0], sizes = [16, 32], strides = [1, 1]} : vector<16x96xf32> to vector<16x32xf32>
    %cst_79 = arith.constant 0.353553385 : f32
    %169 = vector.broadcast %cst_79 : f32 to vector<16x32xf32>
    %170 = arith.mulf %168, %169 : vector<16x32xf32>
    %171 = vector.shape_cast %170 : vector<16x32xf32> to vector<2x8x32xf32>
    %172 = vector.extract_strided_slice %167 {offsets = [0, 32], sizes = [16, 32], strides = [1, 1]} : vector<16x96xf32> to vector<16x32xf32>
    %173 = vector.shape_cast %172 : vector<16x32xf32> to vector<2x8x32xf32>
    %174 = vector.extract_strided_slice %167 {offsets = [0, 64], sizes = [16, 32], strides = [1, 1]} : vector<16x96xf32> to vector<16x32xf32>
    %175 = vector.shape_cast %174 : vector<16x32xf32> to vector<2x8x32xf32>
    %176 = vector.extract_strided_slice %171 {offsets = [0, 0, 0], sizes = [2, 8, 8], strides = [1, 1, 1]} : vector<2x8x32xf32> to vector<2x8x8xf32>
    %177 = vector.extract_strided_slice %173 {offsets = [0, 0, 0], sizes = [2, 8, 8], strides = [1, 1, 1]} : vector<2x8x32xf32> to vector<2x8x8xf32>
    %178 = vector.extract_strided_slice %175 {offsets = [0, 0, 0], sizes = [2, 8, 8], strides = [1, 1, 1]} : vector<2x8x32xf32> to vector<2x8x8xf32>
    "tpu.trace_start"() <{level = 10 : i32, message = "bqd,bkd->bqk"}> : () -> ()
    %cst_80 = arith.constant dense<0.000000e+00> : vector<2x8x8xf32>
    %179 = tpu.matmul %176, %177, %cst_80 {dimension_numbers = #tpu.dot_dimension_numbers<[2], [2], [1], [1], [0, 0, 0, 1, 1, 1], [0], [0]>} : vector<2x8x8xf32>, vector<2x8x8xf32>, vector<2x8x8xf32> -> vector<2x8x8xf32>
    "tpu.trace_stop"() : () -> ()
    %cst_81 = arith.constant dense<0xFF800000> : vector<2x8xf32>
    %180 = vector.multi_reduction <maximumf>, %179, %cst_81 [2] : vector<2x8x8xf32> to vector<2x8xf32>
    %181 = vector.shape_cast %180 : vector<2x8xf32> to vector<2x8x1xf32>
    %182 = vector.broadcast %181 : vector<2x8x1xf32> to vector<2x8x8xf32>
    %183 = arith.subf %179, %182 : vector<2x8x8xf32>
    %184 = math.exp %183 : vector<2x8x8xf32>
    %cst_82 = arith.constant dense<0.000000e+00> : vector<2x8xf32>
    %185 = vector.multi_reduction <add>, %184, %cst_82 [2] : vector<2x8x8xf32> to vector<2x8xf32>
    %186 = vector.shape_cast %185 : vector<2x8xf32> to vector<2x8x1xf32>
    %187 = tpu.reciprocal %186 {approx = true} : vector<2x8x1xf32> -> vector<2x8x1xf32>
    %188 = vector.broadcast %187 : vector<2x8x1xf32> to vector<2x8x8xf32>
    %189 = arith.mulf %184, %188 : vector<2x8x8xf32>
    "tpu.trace_start"() <{level = 10 : i32, message = "bqk,bkd->bqd"}> : () -> ()
    %cst_83 = arith.constant dense<0.000000e+00> : vector<2x8x8xf32>
    %190 = tpu.matmul %189, %178, %cst_83 {dimension_numbers = #tpu.dot_dimension_numbers<[2], [1], [1], [2], [0, 0, 0, 1, 1, 2], [0], [0]>} : vector<2x8x8xf32>, vector<2x8x8xf32>, vector<2x8x8xf32> -> vector<2x8x8xf32>
    "tpu.trace_stop"() : () -> ()
    %191 = vector.extract_strided_slice %171 {offsets = [0, 0, 8], sizes = [2, 8, 8], strides = [1, 1, 1]} : vector<2x8x32xf32> to vector<2x8x8xf32>
    %192 = vector.extract_strided_slice %173 {offsets = [0, 0, 8], sizes = [2, 8, 8], strides = [1, 1, 1]} : vector<2x8x32xf32> to vector<2x8x8xf32>
    %193 = vector.extract_strided_slice %175 {offsets = [0, 0, 8], sizes = [2, 8, 8], strides = [1, 1, 1]} : vector<2x8x32xf32> to vector<2x8x8xf32>
    "tpu.trace_start"() <{level = 10 : i32, message = "bqd,bkd->bqk"}> : () -> ()
    %cst_84 = arith.constant dense<0.000000e+00> : vector<2x8x8xf32>
    %194 = tpu.matmul %191, %192, %cst_84 {dimension_numbers = #tpu.dot_dimension_numbers<[2], [2], [1], [1], [0, 0, 0, 1, 1, 1], [0], [0]>} : vector<2x8x8xf32>, vector<2x8x8xf32>, vector<2x8x8xf32> -> vector<2x8x8xf32>
    "tpu.trace_stop"() : () -> ()
    %cst_85 = arith.constant dense<0xFF800000> : vector<2x8xf32>
    %195 = vector.multi_reduction <maximumf>, %194, %cst_85 [2] : vector<2x8x8xf32> to vector<2x8xf32>
    %196 = vector.shape_cast %195 : vector<2x8xf32> to vector<2x8x1xf32>
    %197 = vector.broadcast %196 : vector<2x8x1xf32> to vector<2x8x8xf32>
    %198 = arith.subf %194, %197 : vector<2x8x8xf32>
    %199 = math.exp %198 : vector<2x8x8xf32>
    %cst_86 = arith.constant dense<0.000000e+00> : vector<2x8xf32>
    %200 = vector.multi_reduction <add>, %199, %cst_86 [2] : vector<2x8x8xf32> to vector<2x8xf32>
    %201 = vector.shape_cast %200 : vector<2x8xf32> to vector<2x8x1xf32>
    %202 = tpu.reciprocal %201 {approx = true} : vector<2x8x1xf32> -> vector<2x8x1xf32>
    %203 = vector.broadcast %202 : vector<2x8x1xf32> to vector<2x8x8xf32>
    %204 = arith.mulf %199, %203 : vector<2x8x8xf32>
    "tpu.trace_start"() <{level = 10 : i32, message = "bqk,bkd->bqd"}> : () -> ()
    %cst_87 = arith.constant dense<0.000000e+00> : vector<2x8x8xf32>
    %205 = tpu.matmul %204, %193, %cst_87 {dimension_numbers = #tpu.dot_dimension_numbers<[2], [1], [1], [2], [0, 0, 0, 1, 1, 2], [0], [0]>} : vector<2x8x8xf32>, vector<2x8x8xf32>, vector<2x8x8xf32> -> vector<2x8x8xf32>
    "tpu.trace_stop"() : () -> ()
    %206 = vector.extract_strided_slice %171 {offsets = [0, 0, 16], sizes = [2, 8, 8], strides = [1, 1, 1]} : vector<2x8x32xf32> to vector<2x8x8xf32>
    %207 = vector.extract_strided_slice %173 {offsets = [0, 0, 16], sizes = [2, 8, 8], strides = [1, 1, 1]} : vector<2x8x32xf32> to vector<2x8x8xf32>
    %208 = vector.extract_strided_slice %175 {offsets = [0, 0, 16], sizes = [2, 8, 8], strides = [1, 1, 1]} : vector<2x8x32xf32> to vector<2x8x8xf32>
    "tpu.trace_start"() <{level = 10 : i32, message = "bqd,bkd->bqk"}> : () -> ()
    %cst_88 = arith.constant dense<0.000000e+00> : vector<2x8x8xf32>
    %209 = tpu.matmul %206, %207, %cst_88 {dimension_numbers = #tpu.dot_dimension_numbers<[2], [2], [1], [1], [0, 0, 0, 1, 1, 1], [0], [0]>} : vector<2x8x8xf32>, vector<2x8x8xf32>, vector<2x8x8xf32> -> vector<2x8x8xf32>
    "tpu.trace_stop"() : () -> ()
    %cst_89 = arith.constant dense<0xFF800000> : vector<2x8xf32>
    %210 = vector.multi_reduction <maximumf>, %209, %cst_89 [2] : vector<2x8x8xf32> to vector<2x8xf32>
    %211 = vector.shape_cast %210 : vector<2x8xf32> to vector<2x8x1xf32>
    %212 = vector.broadcast %211 : vector<2x8x1xf32> to vector<2x8x8xf32>
    %213 = arith.subf %209, %212 : vector<2x8x8xf32>
    %214 = math.exp %213 : vector<2x8x8xf32>
    %cst_90 = arith.constant dense<0.000000e+00> : vector<2x8xf32>
    %215 = vector.multi_reduction <add>, %214, %cst_90 [2] : vector<2x8x8xf32> to vector<2x8xf32>
    %216 = vector.shape_cast %215 : vector<2x8xf32> to vector<2x8x1xf32>
    %217 = tpu.reciprocal %216 {approx = true} : vector<2x8x1xf32> -> vector<2x8x1xf32>
    %218 = vector.broadcast %217 : vector<2x8x1xf32> to vector<2x8x8xf32>
    %219 = arith.mulf %214, %218 : vector<2x8x8xf32>
    "tpu.trace_start"() <{level = 10 : i32, message = "bqk,bkd->bqd"}> : () -> ()
    %cst_91 = arith.constant dense<0.000000e+00> : vector<2x8x8xf32>
    %220 = tpu.matmul %219, %208, %cst_91 {dimension_numbers = #tpu.dot_dimension_numbers<[2], [1], [1], [2], [0, 0, 0, 1, 1, 2], [0], [0]>} : vector<2x8x8xf32>, vector<2x8x8xf32>, vector<2x8x8xf32> -> vector<2x8x8xf32>
    "tpu.trace_stop"() : () -> ()
    %221 = vector.extract_strided_slice %171 {offsets = [0, 0, 24], sizes = [2, 8, 8], strides = [1, 1, 1]} : vector<2x8x32xf32> to vector<2x8x8xf32>
    %222 = vector.extract_strided_slice %173 {offsets = [0, 0, 24], sizes = [2, 8, 8], strides = [1, 1, 1]} : vector<2x8x32xf32> to vector<2x8x8xf32>
    %223 = vector.extract_strided_slice %175 {offsets = [0, 0, 24], sizes = [2, 8, 8], strides = [1, 1, 1]} : vector<2x8x32xf32> to vector<2x8x8xf32>
    "tpu.trace_start"() <{level = 10 : i32, message = "bqd,bkd->bqk"}> : () -> ()
    %cst_92 = arith.constant dense<0.000000e+00> : vector<2x8x8xf32>
    %224 = tpu.matmul %221, %222, %cst_92 {dimension_numbers = #tpu.dot_dimension_numbers<[2], [2], [1], [1], [0, 0, 0, 1, 1, 1], [0], [0]>} : vector<2x8x8xf32>, vector<2x8x8xf32>, vector<2x8x8xf32> -> vector<2x8x8xf32>
    "tpu.trace_stop"() : () -> ()
    %cst_93 = arith.constant dense<0xFF800000> : vector<2x8xf32>
    %225 = vector.multi_reduction <maximumf>, %224, %cst_93 [2] : vector<2x8x8xf32> to vector<2x8xf32>
    %226 = vector.shape_cast %225 : vector<2x8xf32> to vector<2x8x1xf32>
    %227 = vector.broadcast %226 : vector<2x8x1xf32> to vector<2x8x8xf32>
    %228 = arith.subf %224, %227 : vector<2x8x8xf32>
    %229 = math.exp %228 : vector<2x8x8xf32>
    %cst_94 = arith.constant dense<0.000000e+00> : vector<2x8xf32>
    %230 = vector.multi_reduction <add>, %229, %cst_94 [2] : vector<2x8x8xf32> to vector<2x8xf32>
    %231 = vector.shape_cast %230 : vector<2x8xf32> to vector<2x8x1xf32>
    %232 = tpu.reciprocal %231 {approx = true} : vector<2x8x1xf32> -> vector<2x8x1xf32>
    %233 = vector.broadcast %232 : vector<2x8x1xf32> to vector<2x8x8xf32>
    %234 = arith.mulf %229, %233 : vector<2x8x8xf32>
    "tpu.trace_start"() <{level = 10 : i32, message = "bqk,bkd->bqd"}> : () -> ()
    %cst_95 = arith.constant dense<0.000000e+00> : vector<2x8x8xf32>
    %235 = tpu.matmul %234, %223, %cst_95 {dimension_numbers = #tpu.dot_dimension_numbers<[2], [1], [1], [2], [0, 0, 0, 1, 1, 2], [0], [0]>} : vector<2x8x8xf32>, vector<2x8x8xf32>, vector<2x8x8xf32> -> vector<2x8x8xf32>
    "tpu.trace_stop"() : () -> ()
    %236 = tpu.concatenate %190, %205, %220, %235 in 2 : vector<2x8x8xf32>, vector<2x8x8xf32>, vector<2x8x8xf32>, vector<2x8x8xf32> -> vector<2x8x32xf32>
    %237 = vector.shape_cast %236 : vector<2x8x32xf32> to vector<16x32xf32>
    %c1_96 = arith.constant 1 : index
    %c0_97 = arith.constant 0 : index
    %c0_98 = arith.constant 0 : index
    %238 = vector.load %arg5[%c1_96, %c0_97, %c0_98] : memref<2x32x32xf32, #tpu.memory_space<vmem>>, vector<1x32x32xf32>
    %239 = vector.shape_cast %238 : vector<1x32x32xf32> to vector<32x32xf32>
    %cst_99 = arith.constant dense<0.000000e+00> : vector<16x32xf32>
    %240 = tpu.matmul %237, %239, %cst_99 {dimension_numbers = #tpu.dot_dimension_numbers<[1], [0], [0], [1], [0, 0, 1, 1], [], []>} : vector<16x32xf32>, vector<32x32xf32>, vector<16x32xf32> -> vector<16x32xf32>
    %c1_100 = arith.constant 1 : index
    %c0_101 = arith.constant 0 : index
    %c0_102 = arith.constant 0 : index
    %241 = vector.load %arg6[%c1_100, %c0_101, %c0_102] : memref<2x1x32xf32, #tpu.memory_space<vmem>>, vector<1x1x32xf32>
    %242 = vector.shape_cast %241 : vector<1x1x32xf32> to vector<1x32xf32>
    %243 = vector.broadcast %242 : vector<1x32xf32> to vector<16x32xf32>
    %244 = arith.addf %240, %243 : vector<16x32xf32>
    %245 = arith.addf %160, %244 : vector<16x32xf32>
    %c1_103 = arith.constant 1 : index
    %c0_104 = arith.constant 0 : index
    %c0_105 = arith.constant 0 : index
    %246 = vector.load %arg7[%c1_103, %c0_104, %c0_105] : memref<2x1x32xf32, #tpu.memory_space<vmem>>, vector<1x1x32xf32>
    %247 = vector.shape_cast %246 : vector<1x1x32xf32> to vector<1x32xf32>
    %c1_106 = arith.constant 1 : index
    %c0_107 = arith.constant 0 : index
    %c0_108 = arith.constant 0 : index
    %248 = vector.load %arg8[%c1_106, %c0_107, %c0_108] : memref<2x1x32xf32, #tpu.memory_space<vmem>>, vector<1x1x32xf32>
    %249 = vector.shape_cast %248 : vector<1x1x32xf32> to vector<1x32xf32>
    %cst_109 = arith.constant dense<0.000000e+00> : vector<16xf32>
    %250 = vector.multi_reduction <add>, %245, %cst_109 [1] : vector<16x32xf32> to vector<16xf32>
    %251 = vector.shape_cast %250 : vector<16xf32> to vector<16x1xf32>
    %cst_110 = arith.constant 3.200000e+01 : f32
    %252 = vector.broadcast %cst_110 : f32 to vector<16x1xf32>
    %253 = arith.divf %251, %252 : vector<16x1xf32>
    %254 = vector.broadcast %253 : vector<16x1xf32> to vector<16x32xf32>
    %255 = arith.subf %245, %254 : vector<16x32xf32>
    %256 = arith.mulf %255, %255 : vector<16x32xf32>
    %cst_111 = arith.constant dense<0.000000e+00> : vector<16xf32>
    %257 = vector.multi_reduction <add>, %256, %cst_111 [1] : vector<16x32xf32> to vector<16xf32>
    %258 = vector.shape_cast %257 : vector<16xf32> to vector<16x1xf32>
    %cst_112 = arith.constant 3.200000e+01 : f32
    %259 = vector.broadcast %cst_112 : f32 to vector<16x1xf32>
    %260 = arith.divf %258, %259 : vector<16x1xf32>
    %261 = vector.broadcast %253 : vector<16x1xf32> to vector<16x32xf32>
    %262 = arith.subf %245, %261 : vector<16x32xf32>
    %cst_113 = arith.constant 9.99999974E-6 : f32
    %263 = vector.broadcast %cst_113 : f32 to vector<16x1xf32>
    %264 = arith.addf %260, %263 : vector<16x1xf32>
    %265 = math.rsqrt %264 : vector<16x1xf32>
    %266 = vector.broadcast %265 : vector<16x1xf32> to vector<16x32xf32>
    %267 = arith.mulf %262, %266 : vector<16x32xf32>
    %268 = vector.broadcast %247 : vector<1x32xf32> to vector<16x32xf32>
    %269 = arith.mulf %267, %268 : vector<16x32xf32>
    %270 = vector.broadcast %249 : vector<1x32xf32> to vector<16x32xf32>
    %271 = arith.addf %269, %270 : vector<16x32xf32>
    %272 = arith.truncf %271 : vector<16x32xf32> to vector<16x32xbf16>
    %c1_114 = arith.constant 1 : index
    %c0_115 = arith.constant 0 : index
    %c0_116 = arith.constant 0 : index
    %273 = vector.load %arg9[%c1_114, %c0_115, %c0_116] : memref<2x32x2048xbf16, #tpu.memory_space<vmem>>, vector<1x32x2048xbf16>
    %274 = vector.shape_cast %273 : vector<1x32x2048xbf16> to vector<32x2048xbf16>
    %cst_117 = arith.constant dense<0.000000e+00> : vector<16x2048xf32>
    %275 = tpu.matmul %272, %274, %cst_117 {dimension_numbers = #tpu.dot_dimension_numbers<[1], [0], [0], [1], [0, 0, 1, 1], [], []>} : vector<16x32xbf16>, vector<32x2048xbf16>, vector<16x2048xf32> -> vector<16x2048xf32>
    %c1_118 = arith.constant 1 : index
    %c0_119 = arith.constant 0 : index
    %c0_120 = arith.constant 0 : index
    %276 = vector.load %arg10[%c1_118, %c0_119, %c0_120] : memref<2x1x2048xf32, #tpu.memory_space<vmem>>, vector<1x1x2048xf32>
    %277 = vector.shape_cast %276 : vector<1x1x2048xf32> to vector<1x2048xf32>
    %278 = vector.broadcast %277 : vector<1x2048xf32> to vector<16x2048xf32>
    %279 = arith.addf %275, %278 : vector<16x2048xf32>
    %cst_121 = arith.constant 0.000000e+00 : f32
    %280 = vector.broadcast %cst_121 : f32 to vector<16x2048xf32>
    %281 = arith.maximumf %279, %280 : vector<16x2048xf32>
    %282 = arith.truncf %281 : vector<16x2048xf32> to vector<16x2048xbf16>
    %c1_122 = arith.constant 1 : index
    %c0_123 = arith.constant 0 : index
    %c0_124 = arith.constant 0 : index
    %283 = vector.load %arg11[%c1_122, %c0_123, %c0_124] : memref<2x2048x32xbf16, #tpu.memory_space<vmem>>, vector<1x2048x32xbf16>
    %284 = vector.shape_cast %283 : vector<1x2048x32xbf16> to vector<2048x32xbf16>
    %cst_125 = arith.constant dense<0.000000e+00> : vector<16x32xf32>
    %285 = tpu.matmul %282, %284, %cst_125 {dimension_numbers = #tpu.dot_dimension_numbers<[1], [0], [0], [1], [0, 0, 1, 1], [], []>} : vector<16x2048xbf16>, vector<2048x32xbf16>, vector<16x32xf32> -> vector<16x32xf32>
    %c1_126 = arith.constant 1 : index
    %c0_127 = arith.constant 0 : index
    %c0_128 = arith.constant 0 : index
    %286 = vector.load %arg12[%c1_126, %c0_127, %c0_128] : memref<2x1x32xf32, #tpu.memory_space<vmem>>, vector<1x1x32xf32>
    %287 = vector.shape_cast %286 : vector<1x1x32xf32> to vector<1x32xf32>
    %288 = vector.broadcast %287 : vector<1x32xf32> to vector<16x32xf32>
    %289 = arith.addf %285, %288 : vector<16x32xf32>
    %290 = arith.addf %271, %289 : vector<16x32xf32>
    %c1_129 = arith.constant 1 : index
    %c0_130 = arith.constant 0 : index
    %c0_131 = arith.constant 0 : index
    %291 = vector.load %arg13[%c1_129, %c0_130, %c0_131] : memref<2x1x32xf32, #tpu.memory_space<vmem>>, vector<1x1x32xf32>
    %292 = vector.shape_cast %291 : vector<1x1x32xf32> to vector<1x32xf32>
    %c1_132 = arith.constant 1 : index
    %c0_133 = arith.constant 0 : index
    %c0_134 = arith.constant 0 : index
    %293 = vector.load %arg14[%c1_132, %c0_133, %c0_134] : memref<2x1x32xf32, #tpu.memory_space<vmem>>, vector<1x1x32xf32>
    %294 = vector.shape_cast %293 : vector<1x1x32xf32> to vector<1x32xf32>
    %cst_135 = arith.constant dense<0.000000e+00> : vector<16xf32>
    %295 = vector.multi_reduction <add>, %290, %cst_135 [1] : vector<16x32xf32> to vector<16xf32>
    %296 = vector.shape_cast %295 : vector<16xf32> to vector<16x1xf32>
    %cst_136 = arith.constant 3.200000e+01 : f32
    %297 = vector.broadcast %cst_136 : f32 to vector<16x1xf32>
    %298 = arith.divf %296, %297 : vector<16x1xf32>
    %299 = vector.broadcast %298 : vector<16x1xf32> to vector<16x32xf32>
    %300 = arith.subf %290, %299 : vector<16x32xf32>
    %301 = arith.mulf %300, %300 : vector<16x32xf32>
    %cst_137 = arith.constant dense<0.000000e+00> : vector<16xf32>
    %302 = vector.multi_reduction <add>, %301, %cst_137 [1] : vector<16x32xf32> to vector<16xf32>
    %303 = vector.shape_cast %302 : vector<16xf32> to vector<16x1xf32>
    %cst_138 = arith.constant 3.200000e+01 : f32
    %304 = vector.broadcast %cst_138 : f32 to vector<16x1xf32>
    %305 = arith.divf %303, %304 : vector<16x1xf32>
    %306 = vector.broadcast %298 : vector<16x1xf32> to vector<16x32xf32>
    %307 = arith.subf %290, %306 : vector<16x32xf32>
    %cst_139 = arith.constant 9.99999974E-6 : f32
    %308 = vector.broadcast %cst_139 : f32 to vector<16x1xf32>
    %309 = arith.addf %305, %308 : vector<16x1xf32>
    %310 = math.rsqrt %309 : vector<16x1xf32>
    %311 = vector.broadcast %310 : vector<16x1xf32> to vector<16x32xf32>
    %312 = arith.mulf %307, %311 : vector<16x32xf32>
    %313 = vector.broadcast %292 : vector<1x32xf32> to vector<16x32xf32>
    %314 = arith.mulf %312, %313 : vector<16x32xf32>
    %315 = vector.broadcast %294 : vector<1x32xf32> to vector<16x32xf32>
    %316 = arith.addf %314, %315 : vector<16x32xf32>
    %317 = vector.extract_strided_slice %316 {offsets = [7, 0], sizes = [1, 32], strides = [1, 1]} : vector<16x32xf32> to vector<1x32xf32>
    %318 = vector.extract_strided_slice %316 {offsets = [15, 0], sizes = [1, 32], strides = [1, 1]} : vector<16x32xf32> to vector<1x32xf32>
    %319 = tpu.concatenate %317, %318 in 0 : vector<1x32xf32>, vector<1x32xf32> -> vector<2x32xf32>
    %cst_140 = arith.constant -1.000000e+01 : f32
    %cst_141 = arith.constant 1.000000e+01 : f32
    %320 = vector.broadcast %cst_140 : f32 to vector<2x32xf32>
    %321 = arith.maximumf %320, %319 : vector<2x32xf32>
    %322 = vector.broadcast %cst_141 : f32 to vector<2x32xf32>
    %323 = arith.minimumf %322, %321 : vector<2x32xf32>
    %c0_142 = arith.constant 0 : index
    %c0_143 = arith.constant 0 : index
    %324 = vector.load %arg15[%c0_142, %c0_143] : memref<32x128xf32, #tpu.memory_space<vmem>>, vector<32x128xf32>
    %cst_144 = arith.constant dense<0.000000e+00> : vector<2x128xf32>
    %325 = tpu.matmul %323, %324, %cst_144 {dimension_numbers = #tpu.dot_dimension_numbers<[1], [0], [0], [1], [0, 0, 1, 1], [], []>} : vector<2x32xf32>, vector<32x128xf32>, vector<2x128xf32> -> vector<2x128xf32>
    %c0_145 = arith.constant 0 : index
    %c0_146 = arith.constant 0 : index
    %326 = vector.load %arg16[%c0_145, %c0_146] : memref<1x128xf32, #tpu.memory_space<vmem>>, vector<1x128xf32>
    %327 = vector.broadcast %326 : vector<1x128xf32> to vector<2x128xf32>
    %328 = arith.addf %325, %327 : vector<2x128xf32>
    %c0_147 = arith.constant 0 : index
    %c0_148 = arith.constant 0 : index
    %329 = vector.load %arg17[%c0_147, %c0_148] : memref<2x128xf32, #tpu.memory_space<vmem>>, vector<2x128xf32>
    tpu.vector_store %arg17[%c0_147, %c0_148], %328 {strides = array<i32>} : memref<2x128xf32, #tpu.memory_space<vmem>>, vector<2x128xf32>,
    return
  }
}

</mosaic_0001>

<llo_original>
// kernel: tpu_custom_call.1
$region0: #{tpu_custom_call.1}
  #allocation0 [shape = 'u32[]', space=smem, size = 0x4, offset = 0x4, fixed_abs, tag = 'smem constant byte address 0x4 - core index']
  #allocation1 [shape = 'u32[144,128]{1,0:T(1,128)}', space=vmem, size = 0x12000, scoped, tag = 'internal scratch']
  %s0 = inlined_call_operand.vmem [shape: f32[16,8], index: 0, kind: input, shape index: {}]
  %s1 = inlined_call_operand.vmem [shape: f32[8,32], index: 1, kind: input, shape index: {}]
  %s2 = inlined_call_operand.vmem [shape: f32[16,32], index: 2, kind: input, shape index: {}]
  %s3 = inlined_call_operand.vmem [shape: f32[2,32,96], index: 3, kind: input, shape index: {}]
  %s4 = inlined_call_operand.vmem [shape: f32[2,1,96], index: 4, kind: input, shape index: {}]
  %s5 = inlined_call_operand.vmem [shape: f32[2,32,32], index: 5, kind: input, shape index: {}]
  %s6 = inlined_call_operand.vmem [shape: f32[2,1,32], index: 6, kind: input, shape index: {}]
  %s7 = inlined_call_operand.vmem [shape: f32[2,1,32], index: 7, kind: input, shape index: {}]
  %s8 = inlined_call_operand.vmem [shape: f32[2,1,32], index: 8, kind: input, shape index: {}]
  %s9 = inlined_call_operand.vmem [shape: bf16[2,32,2048], index: 9, kind: input, shape index: {}]
  %s10 = inlined_call_operand.vmem [shape: f32[2,1,2048], index: 10, kind: input, shape index: {}]
  %s11 = inlined_call_operand.vmem [shape: bf16[2,2048,32], index: 11, kind: input, shape index: {}]
  %s12 = inlined_call_operand.vmem [shape: f32[2,1,32], index: 12, kind: input, shape index: {}]
  %s13 = inlined_call_operand.vmem [shape: f32[2,1,32], index: 13, kind: input, shape index: {}]
  %s14 = inlined_call_operand.vmem [shape: f32[2,1,32], index: 14, kind: input, shape index: {}]
  %s15 = inlined_call_operand.vmem [shape: f32[32,128], index: 15, kind: input, shape index: {}]
  %s16 = inlined_call_operand.vmem [shape: f32[1,128], index: 16, kind: input, shape index: {}]
  %s17 = inlined_call_operand.hbm [shape: f32[2,128], index: 17, kind: output, shape index: {}]
  %s18 = sld [smem:[#allocation0]]
  $region78: #{tpu_custom_call.1} parent=0
    _
  %s20 = ssub.s32 1, %s18
  %s21 = scalar_select 0, %s20, %s18
  $region1: #{tpu_custom_call.1} parent=0
    #allocation2 [shape = 'u8[1024]{0}', space=vmem, size = 0x400, scoped, tag = 'output window, operand 0, single buffered']
    #allocation3 [shape = 's32[1]{0}', space=sflag, size = 0x4, scoped, tag = 'scoped memory for tpu_custom_call.1']
    %22 = vsyncpa [#allocation3], 0
    // Predicated region
    $region2: #{tpu_custom_call.1} parent=1 // pred_check
      _
    $region3: #{tpu_custom_call.1} parent=1 // pred_check_branch
      %24 = sbr.rel (0) target = $region5
    $region4: #{tpu_custom_call.1} parent=1 // pred_region
      _
    $region5: #{tpu_custom_call.1} parent=1 // pred_fallthru
      _
    // Predicated region
    $region6: #{tpu_custom_call.1} parent=1 // pred_check
      _
    $region7: #{tpu_custom_call.1} parent=1 // pred_check_branch
      %26 = sbr.rel (0) target = $region9
    $region8: #{tpu_custom_call.1} parent=1 // pred_region
      _
    $region9: #{tpu_custom_call.1} parent=1 // pred_fallthru
      _
    // Predicated region
    $region10: #{tpu_custom_call.1} parent=1 // pred_check
      _
    $region11: #{tpu_custom_call.1} parent=1 // pred_check_branch
      %28 = sbr.rel (0) target = $region13
    $region12: #{tpu_custom_call.1} parent=1 // pred_region
      _
    $region13: #{tpu_custom_call.1} parent=1 // pred_fallthru
      _
    // Predicated region
    $region14: #{tpu_custom_call.1} parent=1 // pred_check
      _
    $region15: #{tpu_custom_call.1} parent=1 // pred_check_branch
      %30 = sbr.rel (0) target = $region17
    $region16: #{tpu_custom_call.1} parent=1 // pred_region
      _
    $region17: #{tpu_custom_call.1} parent=1 // pred_fallthru
      _
    // Predicated region
    $region18: #{tpu_custom_call.1} parent=1 // pred_check
      _
    $region19: #{tpu_custom_call.1} parent=1 // pred_check_branch
      %32 = sbr.rel (0) target = $region21
    $region20: #{tpu_custom_call.1} parent=1 // pred_region
      _
    $region21: #{tpu_custom_call.1} parent=1 // pred_fallthru
      _
    // Predicated region
    $region22: #{tpu_custom_call.1} parent=1 // pred_check
      _
    $region23: #{tpu_custom_call.1} parent=1 // pred_check_branch
      %34 = sbr.rel (0) target = $region25
    $region24: #{tpu_custom_call.1} parent=1 // pred_region
      _
    $region25: #{tpu_custom_call.1} parent=1 // pred_fallthru
      _
    // Predicated region
    $region26: #{tpu_custom_call.1} parent=1 // pred_check
      _
    $region27: #{tpu_custom_call.1} parent=1 // pred_check_branch
      %36 = sbr.rel (0) target = $region29
    $region28: #{tpu_custom_call.1} parent=1 // pred_region
      _
    $region29: #{tpu_custom_call.1} parent=1 // pred_fallthru
      _
    // Predicated region
    $region30: #{tpu_custom_call.1} parent=1 // pred_check
      _
    $region31: #{tpu_custom_call.1} parent=1 // pred_check_branch
      %38 = sbr.rel (0) target = $region33
    $region32: #{tpu_custom_call.1} parent=1 // pred_region
      _
    $region33: #{tpu_custom_call.1} parent=1 // pred_fallthru
      _
    // Predicated region
    $region34: #{tpu_custom_call.1} parent=1 // pred_check
      _
    $region35: #{tpu_custom_call.1} parent=1 // pred_check_branch
      %40 = sbr.rel (0) target = $region37
    $region36: #{tpu_custom_call.1} parent=1 // pred_region
      _
    $region37: #{tpu_custom_call.1} parent=1 // pred_fallthru
      _
    // Predicated region
    $region38: #{tpu_custom_call.1} parent=1 // pred_check
      _
    $region39: #{tpu_custom_call.1} parent=1 // pred_check_branch
      %42 = sbr.rel (0) target = $region41
    $region40: #{tpu_custom_call.1} parent=1 // pred_region
      _
    $region41: #{tpu_custom_call.1} parent=1 // pred_fallthru
      _
    // Predicated region
    $region42: #{tpu_custom_call.1} parent=1 // pred_check
      _
    $region43: #{tpu_custom_call.1} parent=1 // pred_check_branch
      %44 = sbr.rel (0) target = $region45
    $region44: #{tpu_custom_call.1} parent=1 // pred_region
      _
    $region45: #{tpu_custom_call.1} parent=1 // pred_fallthru
      _
    // Predicated region
    $region46: #{tpu_custom_call.1} parent=1 // pred_check
      _
    $region47: #{tpu_custom_call.1} parent=1 // pred_check_branch
      %46 = sbr.rel (0) target = $region49
    $region48: #{tpu_custom_call.1} parent=1 // pred_region
      _
    $region49: #{tpu_custom_call.1} parent=1 // pred_fallthru
      _
    // Predicated region
    $region50: #{tpu_custom_call.1} parent=1 // pred_check
      _
    $region51: #{tpu_custom_call.1} parent=1 // pred_check_branch
      %48 = sbr.rel (0) target = $region53
    $region52: #{tpu_custom_call.1} parent=1 // pred_region
      _
    $region53: #{tpu_custom_call.1} parent=1 // pred_fallthru
      _
    // Predicated region
    $region54: #{tpu_custom_call.1} parent=1 // pred_check
      _
    $region55: #{tpu_custom_call.1} parent=1 // pred_check_branch
      %50 = sbr.rel (0) target = $region57
    $region56: #{tpu_custom_call.1} parent=1 // pred_region
      _
    $region57: #{tpu_custom_call.1} parent=1 // pred_fallthru
      _
    // Predicated region
    $region58: #{tpu_custom_call.1} parent=1 // pred_check
      _
    $region59: #{tpu_custom_call.1} parent=1 // pred_check_branch
      %52 = sbr.rel (0) target = $region61
    $region60: #{tpu_custom_call.1} parent=1 // pred_region
      _
    $region61: #{tpu_custom_call.1} parent=1 // pred_fallthru
      _
    // Predicated region
    $region62: #{tpu_custom_call.1} parent=1 // pred_check
      _
    $region63: #{tpu_custom_call.1} parent=1 // pred_check_branch
      %54 = sbr.rel (0) target = $region65
    $region64: #{tpu_custom_call.1} parent=1 // pred_region
      _
    $region65: #{tpu_custom_call.1} parent=1 // pred_fallthru
      _
    // Predicated region
    $region66: #{tpu_custom_call.1} parent=1 // pred_check
      _
    $region67: #{tpu_custom_call.1} parent=1 // pred_check_branch
      %56 = sbr.rel (0) target = $region69
    $region68: #{tpu_custom_call.1} parent=1 // pred_region
      _
    $region69: #{tpu_custom_call.1} parent=1 // pred_fallthru
      _
    %v58 = vld [vmem:[%s0] sm:$0xff]
    %v59 = vld [vmem:[%s0 + $0x8] sm:$0xff]
    %v60 = vld [vmem:[%s1] sm:$0xff]
    %v61 = vld [vmem:[%s2] sm:$0xff]
    %v62 = vld [vmem:[%s2 + $0x8] sm:$0xff]
    %vm63 = vcmask 64512
    %v65 = vsel %vm63, %v58, 0
    %v68 = vsel %vm63, %v59, 0
    %70 = vmatprep.subr.mxu0 0.0
    %71 = vmatpush1.msra.mxu0 %v60
    %72 = vmatprep.subr.mxu0 0.0
    %73 = vmatpush1.msra.mxu0 0.0
    %74 = vmatprep.subr.mxu0 0.0
    %75 = vmatpush1.msra.mxu0 0.0
    %76 = vmatprep.subr.mxu0 0.0
    %77 = vmatpush1.msra.mxu0 0.0
    %78 = vmatprep.subr.mxu0 0.0
    %79 = vmatpush1.msra.mxu0 0.0
    %80 = vmatprep.subr.mxu0 0.0
    %81 = vmatpush1.msra.mxu0 0.0
    %82 = vmatprep.subr.mxu0 0.0
    %83 = vmatpush1.msra.mxu0 0.0
    %84 = vmatprep.subr.mxu0 0.0
    %85 = vmatpush1.msra.mxu0 0.0
    %86 = vmatprep.subr.mxu0 0.0
    %87 = vmatpush1.msra.mxu0 0.0
    %88 = vmatprep.subr.mxu0 0.0
    %89 = vmatpush1.msra.mxu0 0.0
    %90 = vmatprep.subr.mxu0 0.0
    %91 = vmatpush1.msra.mxu0 0.0
    %92 = vmatprep.subr.mxu0 0.0
    %93 = vmatpush1.msra.mxu0 0.0
    %94 = vmatprep.subr.mxu0 0.0
    %95 = vmatpush1.msra.mxu0 0.0
    %96 = vmatprep.subr.mxu0 0.0
    %97 = vmatpush1.msra.mxu0 0.0
    %98 = vmatprep.subr.mxu0 0.0
    %99 = vmatpush1.msra.mxu0 0.0
    %100 = vmatprep.subr.mxu0 0.0
    %101 = vmatpush1.msra.mxu0 0.0
    %102 = vmatprep.subr.mxu0 0.0
    %103 = vmatpush1.msra.mxu0 0.0
    %104 = vmatprep.subr.mxu0 0.0
    %105 = vmatpush1.msra.mxu0 0.0
    %106 = vmatprep.subr.mxu0 0.0
    %107 = vmatpush1.msra.mxu0 0.0
    %108 = vmatprep.subr.mxu0 0.0
    %109 = vmatpush1.msra.mxu0 0.0
    %110 = vmatprep.subr.mxu0 0.0
    %111 = vmatpush1.msra.mxu0 0.0
    %112 = vmatprep.subr.mxu0 0.0
    %113 = vmatpush1.msra.mxu0 0.0
    %114 = vmatprep.subr.mxu0 0.0
    %115 = vmatpush1.msra.mxu0 0.0
    %116 = vmatprep.subr.mxu0 0.0
    %117 = vmatpush1.msra.mxu0 0.0
    %118 = vmatprep.subr.mxu0 0.0
    %119 = vmatpush1.msra.mxu0 0.0
    %120 = vmatprep.subr.mxu0 0.0
    %121 = vmatpush1.msra.mxu0 0.0
    %122 = vmatprep.subr.mxu0 0.0
    %123 = vmatpush1.msra.mxu0 0.0
    %124 = vmatprep.subr.mxu0 0.0
    %125 = vmatpush1.msra.mxu0 0.0
    %126 = vmatprep.subr.mxu0 0.0
    %127 = vmatpush1.msra.mxu0 0.0
    %128 = vmatprep.subr.mxu0 0.0
    %129 = vmatpush1.msra.mxu0 0.0
    %130 = vmatprep.subr.mxu0 0.0
    %131 = vmatpush1.msra.mxu0 0.0
    %132 = vmatprep.subr.mxu0 0.0
    %133 = vmatpush1.msra.mxu0 0.0
    %134 = vmatprep.mubr.f32.mxu0 0.0
    %135 = vmatmul.mubr.f32.gmra.mrb[0].mxu0 %v65
    %v136 = vpop.f32.mrb[0].mxu0
    %v137 = vadd.f32 %v61, %v136
    %v138 = vpop.f32.mrb[0].mxu0
    %139 = vmatprep.mubr.f32.mxu0 0.0
    %140 = vmatmul.mubr.f32.gmra.mrb[0].mxu0 %v68
    %v141 = vpop.f32.mrb[0].mxu0
    %v142 = vadd.f32 %v62, %v141
    %v143 = vpop.f32.mrb[0].mxu0
    %144 = vdwg.mxu0
    %v145 = vld [vmem:[%s3] sm:$0xff]
    %v146 = vld [vmem:[%s3 + $0x8] sm:$0xff]
    %v147 = vld [vmem:[%s3 + $0x10] sm:$0xff]
    %v148 = vld [vmem:[%s3 + $0x18] sm:$0xff]
    %v149 = vld [vmem:[%s4] sm:$0x1]
    %v151 = vlaneseq
    %v152 = vshrl.u32 %v151, 7
    %v153 = vsub.s32 0, %v152
    %v154 = vrot.slane %v149, %v153
    %vm156 = vcmask 261120
    %v158 = vsel %vm156, %v137, 0
    %v161 = vsel %vm156, %v142, 0
    %163 = vmatprep.subr.mxu0 0.0
    %164 = vmatpush1.msra.mxu0 %v145
    %165 = vmatprep.subr.mxu0 0.0
    %166 = vmatpush1.msra.mxu0 %v146
    %167 = vmatprep.subr.mxu0 0.0
    %168 = vmatpush1.msra.mxu0 %v147
    %169 = vmatprep.subr.mxu0 0.0
    %170 = vmatpush1.msra.mxu0 %v148
    %171 = vmatprep.subr.mxu0 0.0
    %172 = vmatpush1.msra.mxu0 0.0
    %173 = vmatprep.subr.mxu0 0.0
    %174 = vmatpush1.msra.mxu0 0.0
    %175 = vmatprep.subr.mxu0 0.0
    %176 = vmatpush1.msra.mxu0 0.0
    %177 = vmatprep.subr.mxu0 0.0
    %178 = vmatpush1.msra.mxu0 0.0
    %179 = vmatprep.subr.mxu0 0.0
    %180 = vmatpush1.msra.mxu0 0.0
    %181 = vmatprep.subr.mxu0 0.0
    %182 = vmatpush1.msra.mxu0 0.0
    %183 = vmatprep.subr.mxu0 0.0
    %184 = vmatpush1.msra.mxu0 0.0
    %185 = vmatprep.subr.mxu0 0.0
    %186 = vmatpush1.msra.mxu0 0.0
    %187 = vmatprep.subr.mxu0 0.0
    %188 = vmatpush1.msra.mxu0 0.0
    %189 = vmatprep.subr.mxu0 0.0
    %190 = vmatpush1.msra.mxu0 0.0
    %191 = vmatprep.subr.mxu0 0.0
    %192 = vmatpush1.msra.mxu0 0.0
    %193 = vmatprep.subr.mxu0 0.0
    %194 = vmatpush1.msra.mxu0 0.0
    %195 = vmatprep.subr.mxu0 0.0
    %196 = vmatpush1.msra.mxu0 0.0
    %197 = vmatprep.subr.mxu0 0.0
    %198 = vmatpush1.msra.mxu0 0.0
    %199 = vmatprep.subr.mxu0 0.0
    %200 = vmatpush1.msra.mxu0 0.0
    %201 = vmatprep.subr.mxu0 0.0
    %202 = vmatpush1.msra.mxu0 0.0
    %203 = vmatprep.subr.mxu0 0.0
    %204 = vmatpush1.msra.mxu0 0.0
    %205 = vmatprep.subr.mxu0 0.0
    %206 = vmatpush1.msra.mxu0 0.0
    %207 = vmatprep.subr.mxu0 0.0
    %208 = vmatpush1.msra.mxu0 0.0
    %209 = vmatprep.subr.mxu0 0.0
    %210 = vmatpush1.msra.mxu0 0.0
    %211 = vmatprep.subr.mxu0 0.0
    %212 = vmatpush1.msra.mxu0 0.0
    %213 = vmatprep.subr.mxu0 0.0
    %214 = vmatpush1.msra.mxu0 0.0
    %215 = vmatprep.subr.mxu0 0.0
    %216 = vmatpush1.msra.mxu0 0.0
    %217 = vmatprep.subr.mxu0 0.0
    %218 = vmatpush1.msra.mxu0 0.0
    %219 = vmatprep.subr.mxu0 0.0
    %220 = vmatpush1.msra.mxu0 0.0
    %221 = vmatprep.subr.mxu0 0.0
    %222 = vmatpush1.msra.mxu0 0.0
    %223 = vmatprep.subr.mxu0 0.0
    %224 = vmatpush1.msra.mxu0 0.0
    %225 = vmatprep.subr.mxu0 0.0
    %226 = vmatpush1.msra.mxu0 0.0
    %227 = vmatprep.mubr.f32.mxu0 0.0
    %228 = vmatmul.mubr.f32.gmra.mrb[0].mxu0 %v158
    %v229 = vpop.f32.mrb[0].mxu0
    %v230 = vadd.f32 %v154, %v229
    %v231 = vpop.f32.mrb[0].mxu0
    %232 = vmatprep.mubr.f32.mxu0 0.0
    %233 = vmatmul.mubr.f32.gmra.mrb[0].mxu0 %v161
    %v234 = vpop.f32.mrb[0].mxu0
    %v235 = vadd.f32 %v154, %v234
    %v236 = vpop.f32.mrb[0].mxu0
    %237 = vdwg.mxu0
    %v238 = vmul.f32 %v230, 0.35355338
    %v239 = vmul.f32 %v235, 0.35355338
    %241 = vrot.lane.b32.xlu0 %v230, 96
    %v242 = vpop.permute.xlu0 %241
    %v244 = vsel %vm63, %v238, 0
    %v246 = vsel %vm63, %v242, 0
    %248 = vmatprep.subr.mxu0 0.0
    %249 = vmatpush1.xpose.msra.mxu0 %v246
    %250 = vmatprep.subr.mxu0 0.0
    %251 = vmatpush1.xpose.msra.mxu0 0.0
    %252 = vmatprep.subr.mxu0 0.0
    %253 = vmatpush1.xpose.msra.mxu0 0.0
    %254 = vmatprep.subr.mxu0 0.0
    %255 = vmatpush1.xpose.msra.mxu0 0.0
    %256 = vmatprep.subr.mxu0 0.0
    %257 = vmatpush1.xpose.msra.mxu0 0.0
    %258 = vmatprep.subr.mxu0 0.0
    %259 = vmatpush1.xpose.msra.mxu0 0.0
    %260 = vmatprep.subr.mxu0 0.0
    %261 = vmatpush1.xpose.msra.mxu0 0.0
    %262 = vmatprep.subr.mxu0 0.0
    %263 = vmatpush1.xpose.msra.mxu0 0.0
    %264 = vmatprep.subr.mxu0 0.0
    %265 = vmatpush1.xpose.msra.mxu0 0.0
    %266 = vmatprep.subr.mxu0 0.0
    %267 = vmatpush1.xpose.msra.mxu0 0.0
    %268 = vmatprep.subr.mxu0 0.0
    %269 = vmatpush1.xpose.msra.mxu0 0.0
    %270 = vmatprep.subr.mxu0 0.0
    %271 = vmatpush1.xpose.msra.mxu0 0.0
    %272 = vmatprep.subr.mxu0 0.0
    %273 = vmatpush1.xpose.msra.mxu0 0.0
    %274 = vmatprep.subr.mxu0 0.0
    %275 = vmatpush1.xpose.msra.mxu0 0.0
    %276 = vmatprep.subr.mxu0 0.0
    %277 = vmatpush1.xpose.msra.mxu0 0.0
    %278 = vmatprep.subr.mxu0 0.0
    %279 = vmatpush1.xpose.msra.mxu0 0.0
    %280 = vmatprep.subr.mxu0 0.0
    %281 = vmatpush1.xpose.msra.mxu0 0.0
    %282 = vmatprep.subr.mxu0 0.0
    %283 = vmatpush1.xpose.msra.mxu0 0.0
    %284 = vmatprep.subr.mxu0 0.0
    %285 = vmatpush1.xpose.msra.mxu0 0.0
    %286 = vmatprep.subr.mxu0 0.0
    %287 = vmatpush1.xpose.msra.mxu0 0.0
    %288 = vmatprep.subr.mxu0 0.0
    %289 = vmatpush1.xpose.msra.mxu0 0.0
    %290 = vmatprep.subr.mxu0 0.0
    %291 = vmatpush1.xpose.msra.mxu0 0.0
    %292 = vmatprep.subr.mxu0 0.0
    %293 = vmatpush1.xpose.msra.mxu0 0.0
    %294 = vmatprep.subr.mxu0 0.0
    %295 = vmatpush1.xpose.msra.mxu0 0.0
    %296 = vmatprep.subr.mxu0 0.0
    %297 = vmatpush1.xpose.msra.mxu0 0.0
    %298 = vmatprep.subr.mxu0 0.0
    %299 = vmatpush1.xpose.msra.mxu0 0.0
    %300 = vmatprep.subr.mxu0 0.0
    %301 = vmatpush1.xpose.msra.mxu0 0.0
    %302 = vmatprep.subr.mxu0 0.0
    %303 = vmatpush1.xpose.msra.mxu0 0.0
    %304 = vmatprep.subr.mxu0 0.0
    %305 = vmatpush1.xpose.msra.mxu0 0.0
    %306 = vmatprep.subr.mxu0 0.0
    %307 = vmatpush1.xpose.msra.mxu0 0.0
    %308 = vmatprep.subr.mxu0 0.0
    %309 = vmatpush1.xpose.msra.mxu0 0.0
    %310 = vmatprep.subr.mxu0 0.0
    %311 = vmatpush1.xpose.msra.mxu0 0.0
    %312 = vmatprep.mubr.f32.mxu0 0.0
    %313 = vmatmul.mubr.f32.gmra.mrb[0].mxu0 %v244
    %v314 = vpop.f32.mrb[0].mxu0
    %v315 = vadd.f32 0.0, %v314
    %v316 = vpop.f32.mrb[0].mxu0
    %317 = vdwg.mxu0
    %319 = vrot.lane.b32.xlu0 %v235, 96
    %v320 = vpop.permute.xlu0 %319
    %v322 = vsel %vm63, %v239, 0
    %v324 = vsel %vm63, %v320, 0
    %326 = vmatprep.subr.mxu0 0.0
    %327 = vmatpush1.xpose.msra.mxu0 %v324
    %328 = vmatprep.subr.mxu0 0.0
    %329 = vmatpush1.xpose.msra.mxu0 0.0
    %330 = vmatprep.subr.mxu0 0.0
    %331 = vmatpush1.xpose.msra.mxu0 0.0
    %332 = vmatprep.subr.mxu0 0.0
    %333 = vmatpush1.xpose.msra.mxu0 0.0
    %334 = vmatprep.subr.mxu0 0.0
    %335 = vmatpush1.xpose.msra.mxu0 0.0
    %336 = vmatprep.subr.mxu0 0.0
    %337 = vmatpush1.xpose.msra.mxu0 0.0
    %338 = vmatprep.subr.mxu0 0.0
    %339 = vmatpush1.xpose.msra.mxu0 0.0
    %340 = vmatprep.subr.mxu0 0.0
    %341 = vmatpush1.xpose.msra.mxu0 0.0
    %342 = vmatprep.subr.mxu0 0.0
    %343 = vmatpush1.xpose.msra.mxu0 0.0
    %344 = vmatprep.subr.mxu0 0.0
    %345 = vmatpush1.xpose.msra.mxu0 0.0
    %346 = vmatprep.subr.mxu0 0.0
    %347 = vmatpush1.xpose.msra.mxu0 0.0
    %348 = vmatprep.subr.mxu0 0.0
    %349 = vmatpush1.xpose.msra.mxu0 0.0
    %350 = vmatprep.subr.mxu0 0.0
    %351 = vmatpush1.xpose.msra.mxu0 0.0
    %352 = vmatprep.subr.mxu0 0.0
    %353 = vmatpush1.xpose.msra.mxu0 0.0
    %354 = vmatprep.subr.mxu0 0.0
    %355 = vmatpush1.xpose.msra.mxu0 0.0
    %356 = vmatprep.subr.mxu0 0.0
    %357 = vmatpush1.xpose.msra.mxu0 0.0
    %358 = vmatprep.subr.mxu0 0.0
    %359 = vmatpush1.xpose.msra.mxu0 0.0
    %360 = vmatprep.subr.mxu0 0.0
    %361 = vmatpush1.xpose.msra.mxu0 0.0
    %362 = vmatprep.subr.mxu0 0.0
    %363 = vmatpush1.xpose.msra.mxu0 0.0
    %364 = vmatprep.subr.mxu0 0.0
    %365 = vmatpush1.xpose.msra.mxu0 0.0
    %366 = vmatprep.subr.mxu0 0.0
    %367 = vmatpush1.xpose.msra.mxu0 0.0
    %368 = vmatprep.subr.mxu0 0.0
    %369 = vmatpush1.xpose.msra.mxu0 0.0
    %370 = vmatprep.subr.mxu0 0.0
    %371 = vmatpush1.xpose.msra.mxu0 0.0
    %372 = vmatprep.subr.mxu0 0.0
    %373 = vmatpush1.xpose.msra.mxu0 0.0
    %374 = vmatprep.subr.mxu0 0.0
    %375 = vmatpush1.xpose.msra.mxu0 0.0
    %376 = vmatprep.subr.mxu0 0.0
    %377 = vmatpush1.xpose.msra.mxu0 0.0
    %378 = vmatprep.subr.mxu0 0.0
    %379 = vmatpush1.xpose.msra.mxu0 0.0
    %380 = vmatprep.subr.mxu0 0.0
    %381 = vmatpush1.xpose.msra.mxu0 0.0
    %382 = vmatprep.subr.mxu0 0.0
    %383 = vmatpush1.xpose.msra.mxu0 0.0
    %384 = vmatprep.subr.mxu0 0.0
    %385 = vmatpush1.xpose.msra.mxu0 0.0
    %386 = vmatprep.subr.mxu0 0.0
    %387 = vmatpush1.xpose.msra.mxu0 0.0
    %388 = vmatprep.subr.mxu0 0.0
    %389 = vmatpush1.xpose.msra.mxu0 0.0
    %390 = vmatprep.mubr.f32.mxu0 0.0
    %391 = vmatmul.mubr.f32.gmra.mrb[0].mxu0 %v322
    %v392 = vpop.f32.mrb[0].mxu0
    %v393 = vadd.f32 0.0, %v392
    %v394 = vpop.f32.mrb[0].mxu0
    %395 = vdwg.mxu0
    %v396 = vsel %vm63, %v315, -inf
    %397 = vmax.xlane.f32.xlu0 %v396
    %v398 = vpop.xlane.xlu0 %397
    %v399 = vsel %vm63, %v393, -inf
    %400 = vmax.xlane.f32.xlu0 %v399
    %v401 = vpop.xlane.xlu0 %400
    %v402 = vsub.f32 %v315, %v398
    %v403 = vsub.f32 %v393, %v401
    %v404 = vmul.f32 %v402, 1.442695
    %v405 = vpow.pop %v404
    %v406 = vmul.f32 %v403, 1.442695
    %v407 = vpow.pop %v406
    %v408 = vsel %vm63, %v405, 0.0
    %409 = vadd.xlane.f32.xlu0 %v408
    %v410 = vpop.xlane.xlu0 %409
    %v411 = vsel %vm63, %v407, 0.0
    %412 = vadd.xlane.f32.xlu0 %v411
    %v413 = vpop.xlane.xlu0 %412
    %v414 = vrcp.pop %v410
    %v415 = vrcp.pop %v413
    %v416 = vmul.f32 %v405, %v414
    %v417 = vmul.f32 %v407, %v415
    %418 = vrot.lane.b32.xlu0 %v230, 64
    %v419 = vpop.permute.xlu0 %418
    %v422 = vsel %vm63, %v416, 0
    %424 = vmatprep.subr.mxu0 0.0
    %425 = vmatpush1.msra.mxu0 %v419
    %426 = vmatprep.subr.mxu0 0.0
    %427 = vmatpush1.msra.mxu0 0.0
    %428 = vmatprep.subr.mxu0 0.0
    %429 = vmatpush1.msra.mxu0 0.0
    %430 = vmatprep.subr.mxu0 0.0
    %431 = vmatpush1.msra.mxu0 0.0
    %432 = vmatprep.subr.mxu0 0.0
    %433 = vmatpush1.msra.mxu0 0.0
    %434 = vmatprep.subr.mxu0 0.0
    %435 = vmatpush1.msra.mxu0 0.0
    %436 = vmatprep.subr.mxu0 0.0
    %437 = vmatpush1.msra.mxu0 0.0
    %438 = vmatprep.subr.mxu0 0.0
    %439 = vmatpush1.msra.mxu0 0.0
    %440 = vmatprep.subr.mxu0 0.0
    %441 = vmatpush1.msra.mxu0 0.0
    %442 = vmatprep.subr.mxu0 0.0
    %443 = vmatpush1.msra.mxu0 0.0
    %444 = vmatprep.subr.mxu0 0.0
    %445 = vmatpush1.msra.mxu0 0.0
    %446 = vmatprep.subr.mxu0 0.0
    %447 = vmatpush1.msra.mxu0 0.0
    %448 = vmatprep.subr.mxu0 0.0
    %449 = vmatpush1.msra.mxu0 0.0
    %450 = vmatprep.subr.mxu0 0.0
    %451 = vmatpush1.msra.mxu0 0.0
    %452 = vmatprep.subr.mxu0 0.0
    %453 = vmatpush1.msra.mxu0 0.0
    %454 = vmatprep.subr.mxu0 0.0
    %455 = vmatpush1.msra.mxu0 0.0
    %456 = vmatprep.subr.mxu0 0.0
    %457 = vmatpush1.msra.mxu0 0.0
    %458 = vmatprep.subr.mxu0 0.0
    %459 = vmatpush1.msra.mxu0 0.0
    %460 = vmatprep.subr.mxu0 0.0
    %461 = vmatpush1.msra.mxu0 0.0
    %462 = vmatprep.subr.mxu0 0.0
    %463 = vmatpush1.msra.mxu0 0.0
    %464 = vmatprep.subr.mxu0 0.0
    %465 = vmatpush1.msra.mxu0 0.0
    %466 = vmatprep.subr.mxu0 0.0
    %467 = vmatpush1.msra.mxu0 0.0
    %468 = vmatprep.subr.mxu0 0.0
    %469 = vmatpush1.msra.mxu0 0.0
    %470 = vmatprep.subr.mxu0 0.0
    %471 = vmatpush1.msra.mxu0 0.0
    %472 = vmatprep.subr.mxu0 0.0
    %473 = vmatpush1.msra.mxu0 0.0
    %474 = vmatprep.subr.mxu0 0.0
    %475 = vmatpush1.msra.mxu0 0.0
    %476 = vmatprep.subr.mxu0 0.0
    %477 = vmatpush1.msra.mxu0 0.0
    %478 = vmatprep.subr.mxu0 0.0
    %479 = vmatpush1.msra.mxu0 0.0
    %480 = vmatprep.subr.mxu0 0.0
    %481 = vmatpush1.msra.mxu0 0.0
    %482 = vmatprep.subr.mxu0 0.0
    %483 = vmatpush1.msra.mxu0 0.0
    %484 = vmatprep.subr.mxu0 0.0
    %485 = vmatpush1.msra.mxu0 0.0
    %486 = vmatprep.subr.mxu0 0.0
    %487 = vmatpush1.msra.mxu0 0.0
    %488 = vmatprep.mubr.f32.mxu0 0.0
    %489 = vmatmul.mubr.f32.gmra.mrb[0].mxu0 %v422
    %v490 = vpop.f32.mrb[0].mxu0
    %v491 = vadd.f32 0.0, %v490
    %v492 = vpop.f32.mrb[0].mxu0
    %493 = vdwg.mxu0
    %494 = vrot.lane.b32.xlu0 %v235, 64
    %v495 = vpop.permute.xlu0 %494
    %v498 = vsel %vm63, %v417, 0
    %500 = vmatprep.subr.mxu0 0.0
    %501 = vmatpush1.msra.mxu0 %v495
    %502 = vmatprep.subr.mxu0 0.0
    %503 = vmatpush1.msra.mxu0 0.0
    %504 = vmatprep.subr.mxu0 0.0
    %505 = vmatpush1.msra.mxu0 0.0
    %506 = vmatprep.subr.mxu0 0.0
    %507 = vmatpush1.msra.mxu0 0.0
    %508 = vmatprep.subr.mxu0 0.0
    %509 = vmatpush1.msra.mxu0 0.0
    %510 = vmatprep.subr.mxu0 0.0
    %511 = vmatpush1.msra.mxu0 0.0
    %512 = vmatprep.subr.mxu0 0.0
    %513 = vmatpush1.msra.mxu0 0.0
    %514 = vmatprep.subr.mxu0 0.0
    %515 = vmatpush1.msra.mxu0 0.0
    %516 = vmatprep.subr.mxu0 0.0
    %517 = vmatpush1.msra.mxu0 0.0
    %518 = vmatprep.subr.mxu0 0.0
    %519 = vmatpush1.msra.mxu0 0.0
    %520 = vmatprep.subr.mxu0 0.0
    %521 = vmatpush1.msra.mxu0 0.0
    %522 = vmatprep.subr.mxu0 0.0
    %523 = vmatpush1.msra.mxu0 0.0
    %524 = vmatprep.subr.mxu0 0.0
    %525 = vmatpush1.msra.mxu0 0.0
    %526 = vmatprep.subr.mxu0 0.0
    %527 = vmatpush1.msra.mxu0 0.0
    %528 = vmatprep.subr.mxu0 0.0
    %529 = vmatpush1.msra.mxu0 0.0
    %530 = vmatprep.subr.mxu0 0.0
    %531 = vmatpush1.msra.mxu0 0.0
    %532 = vmatprep.subr.mxu0 0.0
    %533 = vmatpush1.msra.mxu0 0.0
    %534 = vmatprep.subr.mxu0 0.0
    %535 = vmatpush1.msra.mxu0 0.0
    %536 = vmatprep.subr.mxu0 0.0
    %537 = vmatpush1.msra.mxu0 0.0
    %538 = vmatprep.subr.mxu0 0.0
    %539 = vmatpush1.msra.mxu0 0.0
    %540 = vmatprep.subr.mxu0 0.0
    %541 = vmatpush1.msra.mxu0 0.0
    %542 = vmatprep.subr.mxu0 0.0
    %543 = vmatpush1.msra.mxu0 0.0
    %544 = vmatprep.subr.mxu0 0.0
    %545 = vmatpush1.msra.mxu0 0.0
    %546 = vmatprep.subr.mxu0 0.0
    %547 = vmatpush1.msra.mxu0 0.0
    %548 = vmatprep.subr.mxu0 0.0
    %549 = vmatpush1.msra.mxu0 0.0
    %550 = vmatprep.subr.mxu0 0.0
    %551 = vmatpush1.msra.mxu0 0.0
    %552 = vmatprep.subr.mxu0 0.0
    %553 = vmatpush1.msra.mxu0 0.0
    %554 = vmatprep.subr.mxu0 0.0
    %555 = vmatpush1.msra.mxu0 0.0
    %556 = vmatprep.subr.mxu0 0.0
    %557 = vmatpush1.msra.mxu0 0.0
    %558 = vmatprep.subr.mxu0 0.0
    %559 = vmatpush1.msra.mxu0 0.0
    %560 = vmatprep.subr.mxu0 0.0
    %561 = vmatpush1.msra.mxu0 0.0
    %562 = vmatprep.subr.mxu0 0.0
    %563 = vmatpush1.msra.mxu0 0.0
    %564 = vmatprep.mubr.f32.mxu0 0.0
    %565 = vmatmul.mubr.f32.gmra.mrb[0].mxu0 %v498
    %v566 = vpop.f32.mrb[0].mxu0
    %v567 = vadd.f32 0.0, %v566
    %v568 = vpop.f32.mrb[0].mxu0
    %569 = vdwg.mxu0
    %570 = vrot.lane.b32.xlu0 %v238, 120
    %v571 = vpop.permute.xlu0 %570
    %572 = vrot.lane.b32.xlu0 %v230, 88
    %v573 = vpop.permute.xlu0 %572
    %v574 = vsel %vm63, %v571, 0
    %v576 = vsel %vm63, %v573, 0
    %578 = vmatprep.subr.mxu0 0.0
    %579 = vmatpush1.xpose.msra.mxu0 %v576
    %580 = vmatprep.subr.mxu0 0.0
    %581 = vmatpush1.xpose.msra.mxu0 0.0
    %582 = vmatprep.subr.mxu0 0.0
    %583 = vmatpush1.xpose.msra.mxu0 0.0
    %584 = vmatprep.subr.mxu0 0.0
    %585 = vmatpush1.xpose.msra.mxu0 0.0
    %586 = vmatprep.subr.mxu0 0.0
    %587 = vmatpush1.xpose.msra.mxu0 0.0
    %588 = vmatprep.subr.mxu0 0.0
    %589 = vmatpush1.xpose.msra.mxu0 0.0
    %590 = vmatprep.subr.mxu0 0.0
    %591 = vmatpush1.xpose.msra.mxu0 0.0
    %592 = vmatprep.subr.mxu0 0.0
    %593 = vmatpush1.xpose.msra.mxu0 0.0
    %594 = vmatprep.subr.mxu0 0.0
    %595 = vmatpush1.xpose.msra.mxu0 0.0
    %596 = vmatprep.subr.mxu0 0.0
    %597 = vmatpush1.xpose.msra.mxu0 0.0
    %598 = vmatprep.subr.mxu0 0.0
    %599 = vmatpush1.xpose.msra.mxu0 0.0
    %600 = vmatprep.subr.mxu0 0.0
    %601 = vmatpush1.xpose.msra.mxu0 0.0
    %602 = vmatprep.subr.mxu0 0.0
    %603 = vmatpush1.xpose.msra.mxu0 0.0
    %604 = vmatprep.subr.mxu0 0.0
    %605 = vmatpush1.xpose.msra.mxu0 0.0
    %606 = vmatprep.subr.mxu0 0.0
    %607 = vmatpush1.xpose.msra.mxu0 0.0
    %608 = vmatprep.subr.mxu0 0.0
    %609 = vmatpush1.xpose.msra.mxu0 0.0
    %610 = vmatprep.subr.mxu0 0.0
    %611 = vmatpush1.xpose.msra.mxu0 0.0
    %612 = vmatprep.subr.mxu0 0.0
    %613 = vmatpush1.xpose.msra.mxu0 0.0
    %614 = vmatprep.subr.mxu0 0.0
    %615 = vmatpush1.xpose.msra.mxu0 0.0
    %616 = vmatprep.subr.mxu0 0.0
    %617 = vmatpush1.xpose.msra.mxu0 0.0
    %618 = vmatprep.subr.mxu0 0.0
    %619 = vmatpush1.xpose.msra.mxu0 0.0
    %620 = vmatprep.subr.mxu0 0.0
    %621 = vmatpush1.xpose.msra.mxu0 0.0
    %622 = vmatprep.subr.mxu0 0.0
    %623 = vmatpush1.xpose.msra.mxu0 0.0
    %624 = vmatprep.subr.mxu0 0.0
    %625 = vmatpush1.xpose.msra.mxu0 0.0
    %626 = vmatprep.subr.mxu0 0.0
    %627 = vmatpush1.xpose.msra.mxu0 0.0
    %628 = vmatprep.subr.mxu0 0.0
    %629 = vmatpush1.xpose.msra.mxu0 0.0
    %630 = vmatprep.subr.mxu0 0.0
    %631 = vmatpush1.xpose.msra.mxu0 0.0
    %632 = vmatprep.subr.mxu0 0.0
    %633 = vmatpush1.xpose.msra.mxu0 0.0
    %634 = vmatprep.subr.mxu0 0.0
    %635 = vmatpush1.xpose.msra.mxu0 0.0
    %636 = vmatprep.subr.mxu0 0.0
    %637 = vmatpush1.xpose.msra.mxu0 0.0
    %638 = vmatprep.subr.mxu0 0.0
    %639 = vmatpush1.xpose.msra.mxu0 0.0
    %640 = vmatprep.subr.mxu0 0.0
    %641 = vmatpush1.xpose.msra.mxu0 0.0
    %642 = vmatprep.mubr.f32.mxu0 0.0
    %643 = vmatmul.mubr.f32.gmra.mrb[0].mxu0 %v574
    %v644 = vpop.f32.mrb[0].mxu0
    %v645 = vadd.f32 0.0, %v644
    %v646 = vpop.f32.mrb[0].mxu0
    %647 = vdwg.mxu0
    %648 = vrot.lane.b32.xlu0 %v239, 120
    %v649 = vpop.permute.xlu0 %648
    %650 = vrot.lane.b32.xlu0 %v235, 88
    %v651 = vpop.permute.xlu0 %650
    %v652 = vsel %vm63, %v649, 0
    %v654 = vsel %vm63, %v651, 0
    %656 = vmatprep.subr.mxu0 0.0
    %657 = vmatpush1.xpose.msra.mxu0 %v654
    %658 = vmatprep.subr.mxu0 0.0
    %659 = vmatpush1.xpose.msra.mxu0 0.0
    %660 = vmatprep.subr.mxu0 0.0
    %661 = vmatpush1.xpose.msra.mxu0 0.0
    %662 = vmatprep.subr.mxu0 0.0
    %663 = vmatpush1.xpose.msra.mxu0 0.0
    %664 = vmatprep.subr.mxu0 0.0
    %665 = vmatpush1.xpose.msra.mxu0 0.0
    %666 = vmatprep.subr.mxu0 0.0
    %667 = vmatpush1.xpose.msra.mxu0 0.0
    %668 = vmatprep.subr.mxu0 0.0
    %669 = vmatpush1.xpose.msra.mxu0 0.0
    %670 = vmatprep.subr.mxu0 0.0
    %671 = vmatpush1.xpose.msra.mxu0 0.0
    %672 = vmatprep.subr.mxu0 0.0
    %673 = vmatpush1.xpose.msra.mxu0 0.0
    %674 = vmatprep.subr.mxu0 0.0
    %675 = vmatpush1.xpose.msra.mxu0 0.0
    %676 = vmatprep.subr.mxu0 0.0
    %677 = vmatpush1.xpose.msra.mxu0 0.0
    %678 = vmatprep.subr.mxu0 0.0
    %679 = vmatpush1.xpose.msra.mxu0 0.0
    %680 = vmatprep.subr.mxu0 0.0
    %681 = vmatpush1.xpose.msra.mxu0 0.0
    %682 = vmatprep.subr.mxu0 0.0
    %683 = vmatpush1.xpose.msra.mxu0 0.0
    %684 = vmatprep.subr.mxu0 0.0
    %685 = vmatpush1.xpose.msra.mxu0 0.0
    %686 = vmatprep.subr.mxu0 0.0
    %687 = vmatpush1.xpose.msra.mxu0 0.0
    %688 = vmatprep.subr.mxu0 0.0
    %689 = vmatpush1.xpose.msra.mxu0 0.0
    %690 = vmatprep.subr.mxu0 0.0
    %691 = vmatpush1.xpose.msra.mxu0 0.0
    %692 = vmatprep.subr.mxu0 0.0
    %693 = vmatpush1.xpose.msra.mxu0 0.0
    %694 = vmatprep.subr.mxu0 0.0
    %695 = vmatpush1.xpose.msra.mxu0 0.0
    %696 = vmatprep.subr.mxu0 0.0
    %697 = vmatpush1.xpose.msra.mxu0 0.0
    %698 = vmatprep.subr.mxu0 0.0
    %699 = vmatpush1.xpose.msra.mxu0 0.0
    %700 = vmatprep.subr.mxu0 0.0
    %701 = vmatpush1.xpose.msra.mxu0 0.0
    %702 = vmatprep.subr.mxu0 0.0
    %703 = vmatpush1.xpose.msra.mxu0 0.0
    %704 = vmatprep.subr.mxu0 0.0
    %705 = vmatpush1.xpose.msra.mxu0 0.0
    %706 = vmatprep.subr.mxu0 0.0
    %707 = vmatpush1.xpose.msra.mxu0 0.0
    %708 = vmatprep.subr.mxu0 0.0
    %709 = vmatpush1.xpose.msra.mxu0 0.0
    %710 = vmatprep.subr.mxu0 0.0
    %711 = vmatpush1.xpose.msra.mxu0 0.0
    %712 = vmatprep.subr.mxu0 0.0
    %713 = vmatpush1.xpose.msra.mxu0 0.0
    %714 = vmatprep.subr.mxu0 0.0
    %715 = vmatpush1.xpose.msra.mxu0 0.0
    %716 = vmatprep.subr.mxu0 0.0
    %717 = vmatpush1.xpose.msra.mxu0 0.0
    %718 = vmatprep.subr.mxu0 0.0
    %719 = vmatpush1.xpose.msra.mxu0 0.0
    %720 = vmatprep.mubr.f32.mxu0 0.0
    %721 = vmatmul.mubr.f32.gmra.mrb[0].mxu0 %v652
    %v722 = vpop.f32.mrb[0].mxu0
    %v723 = vadd.f32 0.0, %v722
    %v724 = vpop.f32.mrb[0].mxu0
    %725 = vdwg.mxu0
    %v726 = vsel %vm63, %v645, -inf
    %727 = vmax.xlane.f32.xlu0 %v726
    %v728 = vpop.xlane.xlu0 %727
    %v729 = vsel %vm63, %v723, -inf
    %730 = vmax.xlane.f32.xlu0 %v729
    %v731 = vpop.xlane.xlu0 %730
    %v732 = vsub.f32 %v645, %v728
    %v733 = vsub.f32 %v723, %v731
    %v734 = vmul.f32 %v732, 1.442695
    %v735 = vpow.pop %v734
    %v736 = vmul.f32 %v733, 1.442695
    %v737 = vpow.pop %v736
    %v738 = vsel %vm63, %v735, 0.0
    %739 = vadd.xlane.f32.xlu0 %v738
    %v740 = vpop.xlane.xlu0 %739
    %v741 = vsel %vm63, %v737, 0.0
    %742 = vadd.xlane.f32.xlu0 %v741
    %v743 = vpop.xlane.xlu0 %742
    %v744 = vrcp.pop %v740
    %v745 = vrcp.pop %v743
    %v746 = vmul.f32 %v735, %v744
    %v747 = vmul.f32 %v737, %v745
    %748 = vrot.lane.b32.xlu0 %v230, 56
    %v749 = vpop.permute.xlu0 %748
    %v752 = vsel %vm63, %v746, 0
    %754 = vmatprep.subr.mxu0 0.0
    %755 = vmatpush1.msra.mxu0 %v749
    %756 = vmatprep.subr.mxu0 0.0
    %757 = vmatpush1.msra.mxu0 0.0
    %758 = vmatprep.subr.mxu0 0.0
    %759 = vmatpush1.msra.mxu0 0.0
    %760 = vmatprep.subr.mxu0 0.0
    %761 = vmatpush1.msra.mxu0 0.0
    %762 = vmatprep.subr.mxu0 0.0
    %763 = vmatpush1.msra.mxu0 0.0
    %764 = vmatprep.subr.mxu0 0.0
    %765 = vmatpush1.msra.mxu0 0.0
    %766 = vmatprep.subr.mxu0 0.0
    %767 = vmatpush1.msra.mxu0 0.0
    %768 = vmatprep.subr.mxu0 0.0
    %769 = vmatpush1.msra.mxu0 0.0
    %770 = vmatprep.subr.mxu0 0.0
    %771 = vmatpush1.msra.mxu0 0.0
    %772 = vmatprep.subr.mxu0 0.0
    %773 = vmatpush1.msra.mxu0 0.0
    %774 = vmatprep.subr.mxu0 0.0
    %775 = vmatpush1.msra.mxu0 0.0
    %776 = vmatprep.subr.mxu0 0.0
    %777 = vmatpush1.msra.mxu0 0.0
    %778 = vmatprep.subr.mxu0 0.0
    %779 = vmatpush1.msra.mxu0 0.0
    %780 = vmatprep.subr.mxu0 0.0
    %781 = vmatpush1.msra.mxu0 0.0
    %782 = vmatprep.subr.mxu0 0.0
    %783 = vmatpush1.msra.mxu0 0.0
    %784 = vmatprep.subr.mxu0 0.0
    %785 = vmatpush1.msra.mxu0 0.0
    %786 = vmatprep.subr.mxu0 0.0
    %787 = vmatpush1.msra.mxu0 0.0
    %788 = vmatprep.subr.mxu0 0.0
    %789 = vmatpush1.msra.mxu0 0.0
    %790 = vmatprep.subr.mxu0 0.0
    %791 = vmatpush1.msra.mxu0 0.0
    %792 = vmatprep.subr.mxu0 0.0
    %793 = vmatpush1.msra.mxu0 0.0
    %794 = vmatprep.subr.mxu0 0.0
    %795 = vmatpush1.msra.mxu0 0.0
    %796 = vmatprep.subr.mxu0 0.0
    %797 = vmatpush1.msra.mxu0 0.0
    %798 = vmatprep.subr.mxu0 0.0
    %799 = vmatpush1.msra.mxu0 0.0
    %800 = vmatprep.subr.mxu0 0.0
    %801 = vmatpush1.msra.mxu0 0.0
    %802 = vmatprep.subr.mxu0 0.0
    %803 = vmatpush1.msra.mxu0 0.0
    %804 = vmatprep.subr.mxu0 0.0
    %805 = vmatpush1.msra.mxu0 0.0
    %806 = vmatprep.subr.mxu0 0.0
    %807 = vmatpush1.msra.mxu0 0.0
    %808 = vmatprep.subr.mxu0 0.0
    %809 = vmatpush1.msra.mxu0 0.0
    %810 = vmatprep.subr.mxu0 0.0
    %811 = vmatpush1.msra.mxu0 0.0
    %812 = vmatprep.subr.mxu0 0.0
    %813 = vmatpush1.msra.mxu0 0.0
    %814 = vmatprep.subr.mxu0 0.0
    %815 = vmatpush1.msra.mxu0 0.0
    %816 = vmatprep.subr.mxu0 0.0
    %817 = vmatpush1.msra.mxu0 0.0
    %818 = vmatprep.mubr.f32.mxu0 0.0
    %819 = vmatmul.mubr.f32.gmra.mrb[0].mxu0 %v752
    %v820 = vpop.f32.mrb[0].mxu0
    %v821 = vadd.f32 0.0, %v820
    %v822 = vpop.f32.mrb[0].mxu0
    %823 = vdwg.mxu0
    %824 = vrot.lane.b32.xlu0 %v235, 56
    %v825 = vpop.permute.xlu0 %824
    %v828 = vsel %vm63, %v747, 0
    %830 = vmatprep.subr.mxu0 0.0
    %831 = vmatpush1.msra.mxu0 %v825
    %832 = vmatprep.subr.mxu0 0.0
    %833 = vmatpush1.msra.mxu0 0.0
    %834 = vmatprep.subr.mxu0 0.0
    %835 = vmatpush1.msra.mxu0 0.0
    %836 = vmatprep.subr.mxu0 0.0
    %837 = vmatpush1.msra.mxu0 0.0
    %838 = vmatprep.subr.mxu0 0.0
    %839 = vmatpush1.msra.mxu0 0.0
    %840 = vmatprep.subr.mxu0 0.0
    %841 = vmatpush1.msra.mxu0 0.0
    %842 = vmatprep.subr.mxu0 0.0
    %843 = vmatpush1.msra.mxu0 0.0
    %844 = vmatprep.subr.mxu0 0.0
    %845 = vmatpush1.msra.mxu0 0.0
    %846 = vmatprep.subr.mxu0 0.0
    %847 = vmatpush1.msra.mxu0 0.0
    %848 = vmatprep.subr.mxu0 0.0
    %849 = vmatpush1.msra.mxu0 0.0
    %850 = vmatprep.subr.mxu0 0.0
    %851 = vmatpush1.msra.mxu0 0.0
    %852 = vmatprep.subr.mxu0 0.0
    %853 = vmatpush1.msra.mxu0 0.0
    %854 = vmatprep.subr.mxu0 0.0
    %855 = vmatpush1.msra.mxu0 0.0
    %856 = vmatprep.subr.mxu0 0.0
    %857 = vmatpush1.msra.mxu0 0.0
    %858 = vmatprep.subr.mxu0 0.0
    %859 = vmatpush1.msra.mxu0 0.0
    %860 = vmatprep.subr.mxu0 0.0
    %861 = vmatpush1.msra.mxu0 0.0
    %862 = vmatprep.subr.mxu0 0.0
    %863 = vmatpush1.msra.mxu0 0.0
    %864 = vmatprep.subr.mxu0 0.0
    %865 = vmatpush1.msra.mxu0 0.0
    %866 = vmatprep.subr.mxu0 0.0
    %867 = vmatpush1.msra.mxu0 0.0
    %868 = vmatprep.subr.mxu0 0.0
    %869 = vmatpush1.msra.mxu0 0.0
    %870 = vmatprep.subr.mxu0 0.0
    %871 = vmatpush1.msra.mxu0 0.0
    %872 = vmatprep.subr.mxu0 0.0
    %873 = vmatpush1.msra.mxu0 0.0
    %874 = vmatprep.subr.mxu0 0.0
    %875 = vmatpush1.msra.mxu0 0.0
    %876 = vmatprep.subr.mxu0 0.0
    %877 = vmatpush1.msra.mxu0 0.0
    %878 = vmatprep.subr.mxu0 0.0
    %879 = vmatpush1.msra.mxu0 0.0
    %880 = vmatprep.subr.mxu0 0.0
    %881 = vmatpush1.msra.mxu0 0.0
    %882 = vmatprep.subr.mxu0 0.0
    %883 = vmatpush1.msra.mxu0 0.0
    %884 = vmatprep.subr.mxu0 0.0
    %885 = vmatpush1.msra.mxu0 0.0
    %886 = vmatprep.subr.mxu0 0.0
    %887 = vmatpush1.msra.mxu0 0.0
    %888 = vmatprep.subr.mxu0 0.0
    %889 = vmatpush1.msra.mxu0 0.0
    %890 = vmatprep.subr.mxu0 0.0
    %891 = vmatpush1.msra.mxu0 0.0
    %892 = vmatprep.subr.mxu0 0.0
    %893 = vmatpush1.msra.mxu0 0.0
    %894 = vmatprep.mubr.f32.mxu0 0.0
    %895 = vmatmul.mubr.f32.gmra.mrb[0].mxu0 %v828
    %v896 = vpop.f32.mrb[0].mxu0
    %v897 = vadd.f32 0.0, %v896
    %v898 = vpop.f32.mrb[0].mxu0
    %899 = vdwg.mxu0
    %900 = vrot.lane.b32.xlu0 %v238, 112
    %v901 = vpop.permute.xlu0 %900
    %902 = vrot.lane.b32.xlu0 %v230, 80
    %v903 = vpop.permute.xlu0 %902
    %v904 = vsel %vm63, %v901, 0
    %v906 = vsel %vm63, %v903, 0
    %908 = vmatprep.subr.mxu0 0.0
    %909 = vmatpush1.xpose.msra.mxu0 %v906
    %910 = vmatprep.subr.mxu0 0.0
    %911 = vmatpush1.xpose.msra.mxu0 0.0
    %912 = vmatprep.subr.mxu0 0.0
    %913 = vmatpush1.xpose.msra.mxu0 0.0
    %914 = vmatprep.subr.mxu0 0.0
    %915 = vmatpush1.xpose.msra.mxu0 0.0
    %916 = vmatprep.subr.mxu0 0.0
    %917 = vmatpush1.xpose.msra.mxu0 0.0
    %918 = vmatprep.subr.mxu0 0.0
    %919 = vmatpush1.xpose.msra.mxu0 0.0
    %920 = vmatprep.subr.mxu0 0.0
    %921 = vmatpush1.xpose.msra.mxu0 0.0
    %922 = vmatprep.subr.mxu0 0.0
    %923 = vmatpush1.xpose.msra.mxu0 0.0
    %924 = vmatprep.subr.mxu0 0.0
    %925 = vmatpush1.xpose.msra.mxu0 0.0
    %926 = vmatprep.subr.mxu0 0.0
    %927 = vmatpush1.xpose.msra.mxu0 0.0
    %928 = vmatprep.subr.mxu0 0.0
    %929 = vmatpush1.xpose.msra.mxu0 0.0
    %930 = vmatprep.subr.mxu0 0.0
    %931 = vmatpush1.xpose.msra.mxu0 0.0
    %932 = vmatprep.subr.mxu0 0.0
    %933 = vmatpush1.xpose.msra.mxu0 0.0
    %934 = vmatprep.subr.mxu0 0.0
    %935 = vmatpush1.xpose.msra.mxu0 0.0
    %936 = vmatprep.subr.mxu0 0.0
    %937 = vmatpush1.xpose.msra.mxu0 0.0
    %938 = vmatprep.subr.mxu0 0.0
    %939 = vmatpush1.xpose.msra.mxu0 0.0
    %940 = vmatprep.subr.mxu0 0.0
    %941 = vmatpush1.xpose.msra.mxu0 0.0
    %942 = vmatprep.subr.mxu0 0.0
    %943 = vmatpush1.xpose.msra.mxu0 0.0
    %944 = vmatprep.subr.mxu0 0.0
    %945 = vmatpush1.xpose.msra.mxu0 0.0
    %946 = vmatprep.subr.mxu0 0.0
    %947 = vmatpush1.xpose.msra.mxu0 0.0
    %948 = vmatprep.subr.mxu0 0.0
    %949 = vmatpush1.xpose.msra.mxu0 0.0
    %950 = vmatprep.subr.mxu0 0.0
    %951 = vmatpush1.xpose.msra.mxu0 0.0
    %952 = vmatprep.subr.mxu0 0.0
    %953 = vmatpush1.xpose.msra.mxu0 0.0
    %954 = vmatprep.subr.mxu0 0.0
    %955 = vmatpush1.xpose.msra.mxu0 0.0
    %956 = vmatprep.subr.mxu0 0.0
    %957 = vmatpush1.xpose.msra.mxu0 0.0
    %958 = vmatprep.subr.mxu0 0.0
    %959 = vmatpush1.xpose.msra.mxu0 0.0
    %960 = vmatprep.subr.mxu0 0.0
    %961 = vmatpush1.xpose.msra.mxu0 0.0
    %962 = vmatprep.subr.mxu0 0.0
    %963 = vmatpush1.xpose.msra.mxu0 0.0
    %964 = vmatprep.subr.mxu0 0.0
    %965 = vmatpush1.xpose.msra.mxu0 0.0
    %966 = vmatprep.subr.mxu0 0.0
    %967 = vmatpush1.xpose.msra.mxu0 0.0
    %968 = vmatprep.subr.mxu0 0.0
    %969 = vmatpush1.xpose.msra.mxu0 0.0
    %970 = vmatprep.subr.mxu0 0.0
    %971 = vmatpush1.xpose.msra.mxu0 0.0
    %972 = vmatprep.mubr.f32.mxu0 0.0
    %973 = vmatmul.mubr.f32.gmra.mrb[0].mxu0 %v904
    %v974 = vpop.f32.mrb[0].mxu0
    %v975 = vadd.f32 0.0, %v974
    %v976 = vpop.f32.mrb[0].mxu0
    %977 = vdwg.mxu0
    %978 = vrot.lane.b32.xlu0 %v239, 112
    %v979 = vpop.permute.xlu0 %978
    %980 = vrot.lane.b32.xlu0 %v235, 80
    %v981 = vpop.permute.xlu0 %980
    %v982 = vsel %vm63, %v979, 0
    %v984 = vsel %vm63, %v981, 0
    %986 = vmatprep.subr.mxu0 0.0
    %987 = vmatpush1.xpose.msra.mxu0 %v984
    %988 = vmatprep.subr.mxu0 0.0
    %989 = vmatpush1.xpose.msra.mxu0 0.0
    %990 = vmatprep.subr.mxu0 0.0
    %991 = vmatpush1.xpose.msra.mxu0 0.0
    %992 = vmatprep.subr.mxu0 0.0
    %993 = vmatpush1.xpose.msra.mxu0 0.0
    %994 = vmatprep.subr.mxu0 0.0
    %995 = vmatpush1.xpose.msra.mxu0 0.0
    %996 = vmatprep.subr.mxu0 0.0
    %997 = vmatpush1.xpose.msra.mxu0 0.0
    %998 = vmatprep.subr.mxu0 0.0
    %999 = vmatpush1.xpose.msra.mxu0 0.0
    %1000 = vmatprep.subr.mxu0 0.0
    %1001 = vmatpush1.xpose.msra.mxu0 0.0
    %1002 = vmatprep.subr.mxu0 0.0
    %1003 = vmatpush1.xpose.msra.mxu0 0.0
    %1004 = vmatprep.subr.mxu0 0.0
    %1005 = vmatpush1.xpose.msra.mxu0 0.0
    %1006 = vmatprep.subr.mxu0 0.0
    %1007 = vmatpush1.xpose.msra.mxu0 0.0
    %1008 = vmatprep.subr.mxu0 0.0
    %1009 = vmatpush1.xpose.msra.mxu0 0.0
    %1010 = vmatprep.subr.mxu0 0.0
    %1011 = vmatpush1.xpose.msra.mxu0 0.0
    %1012 = vmatprep.subr.mxu0 0.0
    %1013 = vmatpush1.xpose.msra.mxu0 0.0
    %1014 = vmatprep.subr.mxu0 0.0
    %1015 = vmatpush1.xpose.msra.mxu0 0.0
    %1016 = vmatprep.subr.mxu0 0.0
    %1017 = vmatpush1.xpose.msra.mxu0 0.0
    %1018 = vmatprep.subr.mxu0 0.0
    %1019 = vmatpush1.xpose.msra.mxu0 0.0
    %1020 = vmatprep.subr.mxu0 0.0
    %1021 = vmatpush1.xpose.msra.mxu0 0.0
    %1022 = vmatprep.subr.mxu0 0.0
    %1023 = vmatpush1.xpose.msra.mxu0 0.0
    %1024 = vmatprep.subr.mxu0 0.0
    %1025 = vmatpush1.xpose.msra.mxu0 0.0
    %1026 = vmatprep.subr.mxu0 0.0
    %1027 = vmatpush1.xpose.msra.mxu0 0.0
    %1028 = vmatprep.subr.mxu0 0.0
    %1029 = vmatpush1.xpose.msra.mxu0 0.0
    %1030 = vmatprep.subr.mxu0 0.0
    %1031 = vmatpush1.xpose.msra.mxu0 0.0
    %1032 = vmatprep.subr.mxu0 0.0
    %1033 = vmatpush1.xpose.msra.mxu0 0.0
    %1034 = vmatprep.subr.mxu0 0.0
    %1035 = vmatpush1.xpose.msra.mxu0 0.0
    %1036 = vmatprep.subr.mxu0 0.0
    %1037 = vmatpush1.xpose.msra.mxu0 0.0
    %1038 = vmatprep.subr.mxu0 0.0
    %1039 = vmatpush1.xpose.msra.mxu0 0.0
    %1040 = vmatprep.subr.mxu0 0.0
    %1041 = vmatpush1.xpose.msra.mxu0 0.0
    %1042 = vmatprep.subr.mxu0 0.0
    %1043 = vmatpush1.xpose.msra.mxu0 0.0
    %1044 = vmatprep.subr.mxu0 0.0
    %1045 = vmatpush1.xpose.msra.mxu0 0.0
    %1046 = vmatprep.subr.mxu0 0.0
    %1047 = vmatpush1.xpose.msra.mxu0 0.0
    %1048 = vmatprep.subr.mxu0 0.0
    %1049 = vmatpush1.xpose.msra.mxu0 0.0
    %1050 = vmatprep.mubr.f32.mxu0 0.0
    %1051 = vmatmul.mubr.f32.gmra.mrb[0].mxu0 %v982
    %v1052 = vpop.f32.mrb[0].mxu0
    %v1053 = vadd.f32 0.0, %v1052
    %v1054 = vpop.f32.mrb[0].mxu0
    %1055 = vdwg.mxu0
    %v1056 = vsel %vm63, %v975, -inf
    %1057 = vmax.xlane.f32.xlu0 %v1056
    %v1058 = vpop.xlane.xlu0 %1057
    %v1059 = vsel %vm63, %v1053, -inf
    %1060 = vmax.xlane.f32.xlu0 %v1059
    %v1061 = vpop.xlane.xlu0 %1060
    %v1062 = vsub.f32 %v975, %v1058
    %v1063 = vsub.f32 %v1053, %v1061
    %v1064 = vmul.f32 %v1062, 1.442695
    %v1065 = vpow.pop %v1064
    %v1066 = vmul.f32 %v1063, 1.442695
    %v1067 = vpow.pop %v1066
    %v1068 = vsel %vm63, %v1065, 0.0
    %1069 = vadd.xlane.f32.xlu0 %v1068
    %v1070 = vpop.xlane.xlu0 %1069
    %v1071 = vsel %vm63, %v1067, 0.0
    %1072 = vadd.xlane.f32.xlu0 %v1071
    %v1073 = vpop.xlane.xlu0 %1072
    %v1074 = vrcp.pop %v1070
    %v1075 = vrcp.pop %v1073
    %v1076 = vmul.f32 %v1065, %v1074
    %v1077 = vmul.f32 %v1067, %v1075
    %1078 = vrot.lane.b32.xlu0 %v230, 48
    %v1079 = vpop.permute.xlu0 %1078
    %v1082 = vsel %vm63, %v1076, 0
    %1084 = vmatprep.subr.mxu0 0.0
    %1085 = vmatpush1.msra.mxu0 %v1079
    %1086 = vmatprep.subr.mxu0 0.0
    %1087 = vmatpush1.msra.mxu0 0.0
    %1088 = vmatprep.subr.mxu0 0.0
    %1089 = vmatpush1.msra.mxu0 0.0
    %1090 = vmatprep.subr.mxu0 0.0
    %1091 = vmatpush1.msra.mxu0 0.0
    %1092 = vmatprep.subr.mxu0 0.0
    %1093 = vmatpush1.msra.mxu0 0.0
    %1094 = vmatprep.subr.mxu0 0.0
    %1095 = vmatpush1.msra.mxu0 0.0
    %1096 = vmatprep.subr.mxu0 0.0
    %1097 = vmatpush1.msra.mxu0 0.0
    %1098 = vmatprep.subr.mxu0 0.0
    %1099 = vmatpush1.msra.mxu0 0.0
    %1100 = vmatprep.subr.mxu0 0.0
    %1101 = vmatpush1.msra.mxu0 0.0
    %1102 = vmatprep.subr.mxu0 0.0
    %1103 = vmatpush1.msra.mxu0 0.0
    %1104 = vmatprep.subr.mxu0 0.0
    %1105 = vmatpush1.msra.mxu0 0.0
    %1106 = vmatprep.subr.mxu0 0.0
    %1107 = vmatpush1.msra.mxu0 0.0
    %1108 = vmatprep.subr.mxu0 0.0
    %1109 = vmatpush1.msra.mxu0 0.0
    %1110 = vmatprep.subr.mxu0 0.0
    %1111 = vmatpush1.msra.mxu0 0.0
    %1112 = vmatprep.subr.mxu0 0.0
    %1113 = vmatpush1.msra.mxu0 0.0
    %1114 = vmatprep.subr.mxu0 0.0
    %1115 = vmatpush1.msra.mxu0 0.0
    %1116 = vmatprep.subr.mxu0 0.0
    %1117 = vmatpush1.msra.mxu0 0.0
    %1118 = vmatprep.subr.mxu0 0.0
    %1119 = vmatpush1.msra.mxu0 0.0
    %1120 = vmatprep.subr.mxu0 0.0
    %1121 = vmatpush1.msra.mxu0 0.0
    %1122 = vmatprep.subr.mxu0 0.0
    %1123 = vmatpush1.msra.mxu0 0.0
    %1124 = vmatprep.subr.mxu0 0.0
    %1125 = vmatpush1.msra.mxu0 0.0
    %1126 = vmatprep.subr.mxu0 0.0
    %1127 = vmatpush1.msra.mxu0 0.0
    %1128 = vmatprep.subr.mxu0 0.0
    %1129 = vmatpush1.msra.mxu0 0.0
    %1130 = vmatprep.subr.mxu0 0.0
    %1131 = vmatpush1.msra.mxu0 0.0
    %1132 = vmatprep.subr.mxu0 0.0
    %1133 = vmatpush1.msra.mxu0 0.0
    %1134 = vmatprep.subr.mxu0 0.0
    %1135 = vmatpush1.msra.mxu0 0.0
    %1136 = vmatprep.subr.mxu0 0.0
    %1137 = vmatpush1.msra.mxu0 0.0
    %1138 = vmatprep.subr.mxu0 0.0
    %1139 = vmatpush1.msra.mxu0 0.0
    %1140 = vmatprep.subr.mxu0 0.0
    %1141 = vmatpush1.msra.mxu0 0.0
    %1142 = vmatprep.subr.mxu0 0.0
    %1143 = vmatpush1.msra.mxu0 0.0
    %1144 = vmatprep.subr.mxu0 0.0
    %1145 = vmatpush1.msra.mxu0 0.0
    %1146 = vmatprep.subr.mxu0 0.0
    %1147 = vmatpush1.msra.mxu0 0.0
    %1148 = vmatprep.mubr.f32.mxu0 0.0
    %1149 = vmatmul.mubr.f32.gmra.mrb[0].mxu0 %v1082
    %v1150 = vpop.f32.mrb[0].mxu0
    %v1151 = vadd.f32 0.0, %v1150
    %v1152 = vpop.f32.mrb[0].mxu0
    %1153 = vdwg.mxu0
    %1154 = vrot.lane.b32.xlu0 %v235, 48
    %v1155 = vpop.permute.xlu0 %1154
    %v1158 = vsel %vm63, %v1077, 0
    %1160 = vmatprep.subr.mxu0 0.0
    %1161 = vmatpush1.msra.mxu0 %v1155
    %1162 = vmatprep.subr.mxu0 0.0
    %1163 = vmatpush1.msra.mxu0 0.0
    %1164 = vmatprep.subr.mxu0 0.0
    %1165 = vmatpush1.msra.mxu0 0.0
    %1166 = vmatprep.subr.mxu0 0.0
    %1167 = vmatpush1.msra.mxu0 0.0
    %1168 = vmatprep.subr.mxu0 0.0
    %1169 = vmatpush1.msra.mxu0 0.0
    %1170 = vmatprep.subr.mxu0 0.0
    %1171 = vmatpush1.msra.mxu0 0.0
    %1172 = vmatprep.subr.mxu0 0.0
    %1173 = vmatpush1.msra.mxu0 0.0
    %1174 = vmatprep.subr.mxu0 0.0
    %1175 = vmatpush1.msra.mxu0 0.0
    %1176 = vmatprep.subr.mxu0 0.0
    %1177 = vmatpush1.msra.mxu0 0.0
    %1178 = vmatprep.subr.mxu0 0.0
    %1179 = vmatpush1.msra.mxu0 0.0
    %1180 = vmatprep.subr.mxu0 0.0
    %1181 = vmatpush1.msra.mxu0 0.0
    %1182 = vmatprep.subr.mxu0 0.0
    %1183 = vmatpush1.msra.mxu0 0.0
    %1184 = vmatprep.subr.mxu0 0.0
    %1185 = vmatpush1.msra.mxu0 0.0
    %1186 = vmatprep.subr.mxu0 0.0
    %1187 = vmatpush1.msra.mxu0 0.0
    %1188 = vmatprep.subr.mxu0 0.0
    %1189 = vmatpush1.msra.mxu0 0.0
    %1190 = vmatprep.subr.mxu0 0.0
    %1191 = vmatpush1.msra.mxu0 0.0
    %1192 = vmatprep.subr.mxu0 0.0
    %1193 = vmatpush1.msra.mxu0 0.0
    %1194 = vmatprep.subr.mxu0 0.0
    %1195 = vmatpush1.msra.mxu0 0.0
    %1196 = vmatprep.subr.mxu0 0.0
    %1197 = vmatpush1.msra.mxu0 0.0
    %1198 = vmatprep.subr.mxu0 0.0
    %1199 = vmatpush1.msra.mxu0 0.0
    %1200 = vmatprep.subr.mxu0 0.0
    %1201 = vmatpush1.msra.mxu0 0.0
    %1202 = vmatprep.subr.mxu0 0.0
    %1203 = vmatpush1.msra.mxu0 0.0
    %1204 = vmatprep.subr.mxu0 0.0
    %1205 = vmatpush1.msra.mxu0 0.0
    %1206 = vmatprep.subr.mxu0 0.0
    %1207 = vmatpush1.msra.mxu0 0.0
    %1208 = vmatprep.subr.mxu0 0.0
    %1209 = vmatpush1.msra.mxu0 0.0
    %1210 = vmatprep.subr.mxu0 0.0
    %1211 = vmatpush1.msra.mxu0 0.0
    %1212 = vmatprep.subr.mxu0 0.0
    %1213 = vmatpush1.msra.mxu0 0.0
    %1214 = vmatprep.subr.mxu0 0.0
    %1215 = vmatpush1.msra.mxu0 0.0
    %1216 = vmatprep.subr.mxu0 0.0
    %1217 = vmatpush1.msra.mxu0 0.0
    %1218 = vmatprep.subr.mxu0 0.0
    %1219 = vmatpush1.msra.mxu0 0.0
    %1220 = vmatprep.subr.mxu0 0.0
    %1221 = vmatpush1.msra.mxu0 0.0
    %1222 = vmatprep.subr.mxu0 0.0
    %1223 = vmatpush1.msra.mxu0 0.0
    %1224 = vmatprep.mubr.f32.mxu0 0.0
    %1225 = vmatmul.mubr.f32.gmra.mrb[0].mxu0 %v1158
    %v1226 = vpop.f32.mrb[0].mxu0
    %v1227 = vadd.f32 0.0, %v1226
    %v1228 = vpop.f32.mrb[0].mxu0
    %1229 = vdwg.mxu0
    %1230 = vrot.lane.b32.xlu0 %v238, 104
    %v1231 = vpop.permute.xlu0 %1230
    %1232 = vrot.lane.b32.xlu0 %v230, 72
    %v1233 = vpop.permute.xlu0 %1232
    %v1234 = vsel %vm63, %v1231, 0
    %v1236 = vsel %vm63, %v1233, 0
    %1238 = vmatprep.subr.mxu0 0.0
    %1239 = vmatpush1.xpose.msra.mxu0 %v1236
    %1240 = vmatprep.subr.mxu0 0.0
    %1241 = vmatpush1.xpose.msra.mxu0 0.0
    %1242 = vmatprep.subr.mxu0 0.0
    %1243 = vmatpush1.xpose.msra.mxu0 0.0
    %1244 = vmatprep.subr.mxu0 0.0
    %1245 = vmatpush1.xpose.msra.mxu0 0.0
    %1246 = vmatprep.subr.mxu0 0.0
    %1247 = vmatpush1.xpose.msra.mxu0 0.0
    %1248 = vmatprep.subr.mxu0 0.0
    %1249 = vmatpush1.xpose.msra.mxu0 0.0
    %1250 = vmatprep.subr.mxu0 0.0
    %1251 = vmatpush1.xpose.msra.mxu0 0.0
    %1252 = vmatprep.subr.mxu0 0.0
    %1253 = vmatpush1.xpose.msra.mxu0 0.0
    %1254 = vmatprep.subr.mxu0 0.0
    %1255 = vmatpush1.xpose.msra.mxu0 0.0
    %1256 = vmatprep.subr.mxu0 0.0
    %1257 = vmatpush1.xpose.msra.mxu0 0.0
    %1258 = vmatprep.subr.mxu0 0.0
    %1259 = vmatpush1.xpose.msra.mxu0 0.0
    %1260 = vmatprep.subr.mxu0 0.0
    %1261 = vmatpush1.xpose.msra.mxu0 0.0
    %1262 = vmatprep.subr.mxu0 0.0
    %1263 = vmatpush1.xpose.msra.mxu0 0.0
    %1264 = vmatprep.subr.mxu0 0.0
    %1265 = vmatpush1.xpose.msra.mxu0 0.0
    %1266 = vmatprep.subr.mxu0 0.0
    %1267 = vmatpush1.xpose.msra.mxu0 0.0
    %1268 = vmatprep.subr.mxu0 0.0
    %1269 = vmatpush1.xpose.msra.mxu0 0.0
    %1270 = vmatprep.subr.mxu0 0.0
    %1271 = vmatpush1.xpose.msra.mxu0 0.0
    %1272 = vmatprep.subr.mxu0 0.0
    %1273 = vmatpush1.xpose.msra.mxu0 0.0
    %1274 = vmatprep.subr.mxu0 0.0
    %1275 = vmatpush1.xpose.msra.mxu0 0.0
    %1276 = vmatprep.subr.mxu0 0.0
    %1277 = vmatpush1.xpose.msra.mxu0 0.0
    %1278 = vmatprep.subr.mxu0 0.0
    %1279 = vmatpush1.xpose.msra.mxu0 0.0
    %1280 = vmatprep.subr.mxu0 0.0
    %1281 = vmatpush1.xpose.msra.mxu0 0.0
    %1282 = vmatprep.subr.mxu0 0.0
    %1283 = vmatpush1.xpose.msra.mxu0 0.0
    %1284 = vmatprep.subr.mxu0 0.0
    %1285 = vmatpush1.xpose.msra.mxu0 0.0
    %1286 = vmatprep.subr.mxu0 0.0
    %1287 = vmatpush1.xpose.msra.mxu0 0.0
    %1288 = vmatprep.subr.mxu0 0.0
    %1289 = vmatpush1.xpose.msra.mxu0 0.0
    %1290 = vmatprep.subr.mxu0 0.0
    %1291 = vmatpush1.xpose.msra.mxu0 0.0
    %1292 = vmatprep.subr.mxu0 0.0
    %1293 = vmatpush1.xpose.msra.mxu0 0.0
    %1294 = vmatprep.subr.mxu0 0.0
    %1295 = vmatpush1.xpose.msra.mxu0 0.0
    %1296 = vmatprep.subr.mxu0 0.0
    %1297 = vmatpush1.xpose.msra.mxu0 0.0
    %1298 = vmatprep.subr.mxu0 0.0
    %1299 = vmatpush1.xpose.msra.mxu0 0.0
    %1300 = vmatprep.subr.mxu0 0.0
    %1301 = vmatpush1.xpose.msra.mxu0 0.0
    %1302 = vmatprep.mubr.f32.mxu0 0.0
    %1303 = vmatmul.mubr.f32.gmra.mrb[0].mxu0 %v1234
    %v1304 = vpop.f32.mrb[0].mxu0
    %v1305 = vadd.f32 0.0, %v1304
    %v1306 = vpop.f32.mrb[0].mxu0
    %1307 = vdwg.mxu0
    %1308 = vrot.lane.b32.xlu0 %v239, 104
    %v1309 = vpop.permute.xlu0 %1308
    %1310 = vrot.lane.b32.xlu0 %v235, 72
    %v1311 = vpop.permute.xlu0 %1310
    %v1312 = vsel %vm63, %v1309, 0
    %v1314 = vsel %vm63, %v1311, 0
    %1316 = vmatprep.subr.mxu0 0.0
    %1317 = vmatpush1.xpose.msra.mxu0 %v1314
    %1318 = vmatprep.subr.mxu0 0.0
    %1319 = vmatpush1.xpose.msra.mxu0 0.0
    %1320 = vmatprep.subr.mxu0 0.0
    %1321 = vmatpush1.xpose.msra.mxu0 0.0
    %1322 = vmatprep.subr.mxu0 0.0
    %1323 = vmatpush1.xpose.msra.mxu0 0.0
    %1324 = vmatprep.subr.mxu0 0.0
    %1325 = vmatpush1.xpose.msra.mxu0 0.0
    %1326 = vmatprep.subr.mxu0 0.0
    %1327 = vmatpush1.xpose.msra.mxu0 0.0
    %1328 = vmatprep.subr.mxu0 0.0
    %1329 = vmatpush1.xpose.msra.mxu0 0.0
    %1330 = vmatprep.subr.mxu0 0.0
    %1331 = vmatpush1.xpose.msra.mxu0 0.0
    %1332 = vmatprep.subr.mxu0 0.0
    %1333 = vmatpush1.xpose.msra.mxu0 0.0
    %1334 = vmatprep.subr.mxu0 0.0
    %1335 = vmatpush1.xpose.msra.mxu0 0.0
    %1336 = vmatprep.subr.mxu0 0.0
    %1337 = vmatpush1.xpose.msra.mxu0 0.0
    %1338 = vmatprep.subr.mxu0 0.0
    %1339 = vmatpush1.xpose.msra.mxu0 0.0
    %1340 = vmatprep.subr.mxu0 0.0
    %1341 = vmatpush1.xpose.msra.mxu0 0.0
    %1342 = vmatprep.subr.mxu0 0.0
    %1343 = vmatpush1.xpose.msra.mxu0 0.0
    %1344 = vmatprep.subr.mxu0 0.0
    %1345 = vmatpush1.xpose.msra.mxu0 0.0
    %1346 = vmatprep.subr.mxu0 0.0
    %1347 = vmatpush1.xpose.msra.mxu0 0.0
    %1348 = vmatprep.subr.mxu0 0.0
    %1349 = vmatpush1.xpose.msra.mxu0 0.0
    %1350 = vmatprep.subr.mxu0 0.0
    %1351 = vmatpush1.xpose.msra.mxu0 0.0
    %1352 = vmatprep.subr.mxu0 0.0
    %1353 = vmatpush1.xpose.msra.mxu0 0.0
    %1354 = vmatprep.subr.mxu0 0.0
    %1355 = vmatpush1.xpose.msra.mxu0 0.0
    %1356 = vmatprep.subr.mxu0 0.0
    %1357 = vmatpush1.xpose.msra.mxu0 0.0
    %1358 = vmatprep.subr.mxu0 0.0
    %1359 = vmatpush1.xpose.msra.mxu0 0.0
    %1360 = vmatprep.subr.mxu0 0.0
    %1361 = vmatpush1.xpose.msra.mxu0 0.0
    %1362 = vmatprep.subr.mxu0 0.0
    %1363 = vmatpush1.xpose.msra.mxu0 0.0
    %1364 = vmatprep.subr.mxu0 0.0
    %1365 = vmatpush1.xpose.msra.mxu0 0.0
    %1366 = vmatprep.subr.mxu0 0.0
    %1367 = vmatpush1.xpose.msra.mxu0 0.0
    %1368 = vmatprep.subr.mxu0 0.0
    %1369 = vmatpush1.xpose.msra.mxu0 0.0
    %1370 = vmatprep.subr.mxu0 0.0
    %1371 = vmatpush1.xpose.msra.mxu0 0.0
    %1372 = vmatprep.subr.mxu0 0.0
    %1373 = vmatpush1.xpose.msra.mxu0 0.0
    %1374 = vmatprep.subr.mxu0 0.0
    %1375 = vmatpush1.xpose.msra.mxu0 0.0
    %1376 = vmatprep.subr.mxu0 0.0
    %1377 = vmatpush1.xpose.msra.mxu0 0.0
    %1378 = vmatprep.subr.mxu0 0.0
    %1379 = vmatpush1.xpose.msra.mxu0 0.0
    %1380 = vmatprep.mubr.f32.mxu0 0.0
    %1381 = vmatmul.mubr.f32.gmra.mrb[0].mxu0 %v1312
    %v1382 = vpop.f32.mrb[0].mxu0
    %v1383 = vadd.f32 0.0, %v1382
    %v1384 = vpop.f32.mrb[0].mxu0
    %1385 = vdwg.mxu0
    %v1386 = vsel %vm63, %v1305, -inf
    %1387 = vmax.xlane.f32.xlu0 %v1386
    %v1388 = vpop.xlane.xlu0 %1387
    %v1389 = vsel %vm63, %v1383, -inf
    %1390 = vmax.xlane.f32.xlu0 %v1389
    %v1391 = vpop.xlane.xlu0 %1390
    %v1392 = vsub.f32 %v1305, %v1388
    %v1393 = vsub.f32 %v1383, %v1391
    %v1394 = vmul.f32 %v1392, 1.442695
    %v1395 = vpow.pop %v1394
    %v1396 = vmul.f32 %v1393, 1.442695
    %v1397 = vpow.pop %v1396
    %v1398 = vsel %vm63, %v1395, 0.0
    %1399 = vadd.xlane.f32.xlu0 %v1398
    %v1400 = vpop.xlane.xlu0 %1399
    %v1401 = vsel %vm63, %v1397, 0.0
    %1402 = vadd.xlane.f32.xlu0 %v1401
    %v1403 = vpop.xlane.xlu0 %1402
    %v1404 = vrcp.pop %v1400
    %v1405 = vrcp.pop %v1403
    %v1406 = vmul.f32 %v1395, %v1404
    %v1407 = vmul.f32 %v1397, %v1405
    %1408 = vrot.lane.b32.xlu0 %v230, 40
    %v1409 = vpop.permute.xlu0 %1408
    %v1412 = vsel %vm63, %v1406, 0
    %1414 = vmatprep.subr.mxu0 0.0
    %1415 = vmatpush1.msra.mxu0 %v1409
    %1416 = vmatprep.subr.mxu0 0.0
    %1417 = vmatpush1.msra.mxu0 0.0
    %1418 = vmatprep.subr.mxu0 0.0
    %1419 = vmatpush1.msra.mxu0 0.0
    %1420 = vmatprep.subr.mxu0 0.0
    %1421 = vmatpush1.msra.mxu0 0.0
    %1422 = vmatprep.subr.mxu0 0.0
    %1423 = vmatpush1.msra.mxu0 0.0
    %1424 = vmatprep.subr.mxu0 0.0
    %1425 = vmatpush1.msra.mxu0 0.0
    %1426 = vmatprep.subr.mxu0 0.0
    %1427 = vmatpush1.msra.mxu0 0.0
    %1428 = vmatprep.subr.mxu0 0.0
    %1429 = vmatpush1.msra.mxu0 0.0
    %1430 = vmatprep.subr.mxu0 0.0
    %1431 = vmatpush1.msra.mxu0 0.0
    %1432 = vmatprep.subr.mxu0 0.0
    %1433 = vmatpush1.msra.mxu0 0.0
    %1434 = vmatprep.subr.mxu0 0.0
    %1435 = vmatpush1.msra.mxu0 0.0
    %1436 = vmatprep.subr.mxu0 0.0
    %1437 = vmatpush1.msra.mxu0 0.0
    %1438 = vmatprep.subr.mxu0 0.0
    %1439 = vmatpush1.msra.mxu0 0.0
    %1440 = vmatprep.subr.mxu0 0.0
    %1441 = vmatpush1.msra.mxu0 0.0
    %1442 = vmatprep.subr.mxu0 0.0
    %1443 = vmatpush1.msra.mxu0 0.0
    %1444 = vmatprep.subr.mxu0 0.0
    %1445 = vmatpush1.msra.mxu0 0.0
    %1446 = vmatprep.subr.mxu0 0.0
    %1447 = vmatpush1.msra.mxu0 0.0
    %1448 = vmatprep.subr.mxu0 0.0
    %1449 = vmatpush1.msra.mxu0 0.0
    %1450 = vmatprep.subr.mxu0 0.0
    %1451 = vmatpush1.msra.mxu0 0.0
    %1452 = vmatprep.subr.mxu0 0.0
    %1453 = vmatpush1.msra.mxu0 0.0
    %1454 = vmatprep.subr.mxu0 0.0
    %1455 = vmatpush1.msra.mxu0 0.0
    %1456 = vmatprep.subr.mxu0 0.0
    %1457 = vmatpush1.msra.mxu0 0.0
    %1458 = vmatprep.subr.mxu0 0.0
    %1459 = vmatpush1.msra.mxu0 0.0
    %1460 = vmatprep.subr.mxu0 0.0
    %1461 = vmatpush1.msra.mxu0 0.0
    %1462 = vmatprep.subr.mxu0 0.0
    %1463 = vmatpush1.msra.mxu0 0.0
    %1464 = vmatprep.subr.mxu0 0.0
    %1465 = vmatpush1.msra.mxu0 0.0
    %1466 = vmatprep.subr.mxu0 0.0
    %1467 = vmatpush1.msra.mxu0 0.0
    %1468 = vmatprep.subr.mxu0 0.0
    %1469 = vmatpush1.msra.mxu0 0.0
    %1470 = vmatprep.subr.mxu0 0.0
    %1471 = vmatpush1.msra.mxu0 0.0
    %1472 = vmatprep.subr.mxu0 0.0
    %1473 = vmatpush1.msra.mxu0 0.0
    %1474 = vmatprep.subr.mxu0 0.0
    %1475 = vmatpush1.msra.mxu0 0.0
    %1476 = vmatprep.subr.mxu0 0.0
    %1477 = vmatpush1.msra.mxu0 0.0
    %1478 = vmatprep.mubr.f32.mxu0 0.0
    %1479 = vmatmul.mubr.f32.gmra.mrb[0].mxu0 %v1412
    %v1480 = vpop.f32.mrb[0].mxu0
    %v1481 = vadd.f32 0.0, %v1480
    %v1482 = vpop.f32.mrb[0].mxu0
    %1483 = vdwg.mxu0
    %1484 = vrot.lane.b32.xlu0 %v235, 40
    %v1485 = vpop.permute.xlu0 %1484
    %v1488 = vsel %vm63, %v1407, 0
    %1490 = vmatprep.subr.mxu0 0.0
    %1491 = vmatpush1.msra.mxu0 %v1485
    %1492 = vmatprep.subr.mxu0 0.0
    %1493 = vmatpush1.msra.mxu0 0.0
    %1494 = vmatprep.subr.mxu0 0.0
    %1495 = vmatpush1.msra.mxu0 0.0
    %1496 = vmatprep.subr.mxu0 0.0
    %1497 = vmatpush1.msra.mxu0 0.0
    %1498 = vmatprep.subr.mxu0 0.0
    %1499 = vmatpush1.msra.mxu0 0.0
    %1500 = vmatprep.subr.mxu0 0.0
    %1501 = vmatpush1.msra.mxu0 0.0
    %1502 = vmatprep.subr.mxu0 0.0
    %1503 = vmatpush1.msra.mxu0 0.0
    %1504 = vmatprep.subr.mxu0 0.0
    %1505 = vmatpush1.msra.mxu0 0.0
    %1506 = vmatprep.subr.mxu0 0.0
    %1507 = vmatpush1.msra.mxu0 0.0
    %1508 = vmatprep.subr.mxu0 0.0
    %1509 = vmatpush1.msra.mxu0 0.0
    %1510 = vmatprep.subr.mxu0 0.0
    %1511 = vmatpush1.msra.mxu0 0.0
    %1512 = vmatprep.subr.mxu0 0.0
    %1513 = vmatpush1.msra.mxu0 0.0
    %1514 = vmatprep.subr.mxu0 0.0
    %1515 = vmatpush1.msra.mxu0 0.0
    %1516 = vmatprep.subr.mxu0 0.0
    %1517 = vmatpush1.msra.mxu0 0.0
    %1518 = vmatprep.subr.mxu0 0.0
    %1519 = vmatpush1.msra.mxu0 0.0
    %1520 = vmatprep.subr.mxu0 0.0
    %1521 = vmatpush1.msra.mxu0 0.0
    %1522 = vmatprep.subr.mxu0 0.0
    %1523 = vmatpush1.msra.mxu0 0.0
    %1524 = vmatprep.subr.mxu0 0.0
    %1525 = vmatpush1.msra.mxu0 0.0
    %1526 = vmatprep.subr.mxu0 0.0
    %1527 = vmatpush1.msra.mxu0 0.0
    %1528 = vmatprep.subr.mxu0 0.0
    %1529 = vmatpush1.msra.mxu0 0.0
    %1530 = vmatprep.subr.mxu0 0.0
    %1531 = vmatpush1.msra.mxu0 0.0
    %1532 = vmatprep.subr.mxu0 0.0
    %1533 = vmatpush1.msra.mxu0 0.0
    %1534 = vmatprep.subr.mxu0 0.0
    %1535 = vmatpush1.msra.mxu0 0.0
    %1536 = vmatprep.subr.mxu0 0.0
    %1537 = vmatpush1.msra.mxu0 0.0
    %1538 = vmatprep.subr.mxu0 0.0
    %1539 = vmatpush1.msra.mxu0 0.0
    %1540 = vmatprep.subr.mxu0 0.0
    %1541 = vmatpush1.msra.mxu0 0.0
    %1542 = vmatprep.subr.mxu0 0.0
    %1543 = vmatpush1.msra.mxu0 0.0
    %1544 = vmatprep.subr.mxu0 0.0
    %1545 = vmatpush1.msra.mxu0 0.0
    %1546 = vmatprep.subr.mxu0 0.0
    %1547 = vmatpush1.msra.mxu0 0.0
    %1548 = vmatprep.subr.mxu0 0.0
    %1549 = vmatpush1.msra.mxu0 0.0
    %1550 = vmatprep.subr.mxu0 0.0
    %1551 = vmatpush1.msra.mxu0 0.0
    %1552 = vmatprep.subr.mxu0 0.0
    %1553 = vmatpush1.msra.mxu0 0.0
    %1554 = vmatprep.mubr.f32.mxu0 0.0
    %1555 = vmatmul.mubr.f32.gmra.mrb[0].mxu0 %v1488
    %v1556 = vpop.f32.mrb[0].mxu0
    %v1557 = vadd.f32 0.0, %v1556
    %v1558 = vpop.f32.mrb[0].mxu0
    %1559 = vdwg.mxu0
    %1562 = vrot.lane.b32.xlu0 %v821, 8
    %v1563 = vpop.permute.xlu0 %1562
    %1564 = vrot.lane.b32.xlu0 %v897, 8
    %v1565 = vpop.permute.xlu0 %1564
    %1570 = vrot.lane.b32.xlu0 %v1151, 16
    %v1571 = vpop.permute.xlu0 %1570
    %1572 = vrot.lane.b32.xlu0 %v1227, 16
    %v1573 = vpop.permute.xlu0 %1572
    %1578 = vrot.lane.b32.xlu0 %v1481, 24
    %v1579 = vpop.permute.xlu0 %1578
    %1580 = vrot.lane.b32.xlu0 %v1557, 24
    %v1581 = vpop.permute.xlu0 %1580
    %v1584 = vsel %vm63, %v491, %v1563
    %v1585 = vsel %vm63, %v567, %v1565
    %vm1586 = vcmask 130048
    %v1587 = vsel %vm1586, %v1584, %v1571
    %v1588 = vsel %vm1586, %v1585, %v1573
    %vm1589 = vcmask 195584
    %v1590 = vsel %vm1589, %v1587, %v1579
    %v1591 = vsel %vm1589, %v1588, %v1581
    %v1592 = vld [vmem:[%s5] sm:$0xff]
    %v1593 = vld [vmem:[%s5 + $0x8] sm:$0xff]
    %v1594 = vld [vmem:[%s5 + $0x10] sm:$0xff]
    %v1595 = vld [vmem:[%s5 + $0x18] sm:$0xff]
    %v1596 = vld [vmem:[%s6] sm:$0x1]
    %v1598 = vlaneseq
    %v1599 = vshrl.u32 %v1598, 7
    %v1600 = vsub.s32 0, %v1599
    %v1601 = vrot.slane %v1596, %v1600
    %v1604 = vsel %vm156, %v1590, 0
    %v1607 = vsel %vm156, %v1591, 0
    %1609 = vmatprep.subr.mxu0 0.0
    %1610 = vmatpush1.msra.mxu0 %v1592
    %1611 = vmatprep.subr.mxu0 0.0
    %1612 = vmatpush1.msra.mxu0 %v1593
    %1613 = vmatprep.subr.mxu0 0.0
    %1614 = vmatpush1.msra.mxu0 %v1594
    %1615 = vmatprep.subr.mxu0 0.0
    %1616 = vmatpush1.msra.mxu0 %v1595
    %1617 = vmatprep.subr.mxu0 0.0
    %1618 = vmatpush1.msra.mxu0 0.0
    %1619 = vmatprep.subr.mxu0 0.0
    %1620 = vmatpush1.msra.mxu0 0.0
    %1621 = vmatprep.subr.mxu0 0.0
    %1622 = vmatpush1.msra.mxu0 0.0
    %1623 = vmatprep.subr.mxu0 0.0
    %1624 = vmatpush1.msra.mxu0 0.0
    %1625 = vmatprep.subr.mxu0 0.0
    %1626 = vmatpush1.msra.mxu0 0.0
    %1627 = vmatprep.subr.mxu0 0.0
    %1628 = vmatpush1.msra.mxu0 0.0
    %1629 = vmatprep.subr.mxu0 0.0
    %1630 = vmatpush1.msra.mxu0 0.0
    %1631 = vmatprep.subr.mxu0 0.0
    %1632 = vmatpush1.msra.mxu0 0.0
    %1633 = vmatprep.subr.mxu0 0.0
    %1634 = vmatpush1.msra.mxu0 0.0
    %1635 = vmatprep.subr.mxu0 0.0
    %1636 = vmatpush1.msra.mxu0 0.0
    %1637 = vmatprep.subr.mxu0 0.0
    %1638 = vmatpush1.msra.mxu0 0.0
    %1639 = vmatprep.subr.mxu0 0.0
    %1640 = vmatpush1.msra.mxu0 0.0
    %1641 = vmatprep.subr.mxu0 0.0
    %1642 = vmatpush1.msra.mxu0 0.0
    %1643 = vmatprep.subr.mxu0 0.0
    %1644 = vmatpush1.msra.mxu0 0.0
    %1645 = vmatprep.subr.mxu0 0.0
    %1646 = vmatpush1.msra.mxu0 0.0
    %1647 = vmatprep.subr.mxu0 0.0
    %1648 = vmatpush1.msra.mxu0 0.0
    %1649 = vmatprep.subr.mxu0 0.0
    %1650 = vmatpush1.msra.mxu0 0.0
    %1651 = vmatprep.subr.mxu0 0.0
    %1652 = vmatpush1.msra.mxu0 0.0
    %1653 = vmatprep.subr.mxu0 0.0
    %1654 = vmatpush1.msra.mxu0 0.0
    %1655 = vmatprep.subr.mxu0 0.0
    %1656 = vmatpush1.msra.mxu0 0.0
    %1657 = vmatprep.subr.mxu0 0.0
    %1658 = vmatpush1.msra.mxu0 0.0
    %1659 = vmatprep.subr.mxu0 0.0
    %1660 = vmatpush1.msra.mxu0 0.0
    %1661 = vmatprep.subr.mxu0 0.0
    %1662 = vmatpush1.msra.mxu0 0.0
    %1663 = vmatprep.subr.mxu0 0.0
    %1664 = vmatpush1.msra.mxu0 0.0
    %1665 = vmatprep.subr.mxu0 0.0
    %1666 = vmatpush1.msra.mxu0 0.0
    %1667 = vmatprep.subr.mxu0 0.0
    %1668 = vmatpush1.msra.mxu0 0.0
    %1669 = vmatprep.subr.mxu0 0.0
    %1670 = vmatpush1.msra.mxu0 0.0
    %1671 = vmatprep.subr.mxu0 0.0
    %1672 = vmatpush1.msra.mxu0 0.0
    %1673 = vmatprep.mubr.f32.mxu0 0.0
    %1674 = vmatmul.mubr.f32.gmra.mrb[0].mxu0 %v1604
    %v1675 = vpop.f32.mrb[0].mxu0
    %v1676 = vadd.f32 %v1601, %v1675
    %v1677 = vpop.f32.mrb[0].mxu0
    %1678 = vmatprep.mubr.f32.mxu0 0.0
    %1679 = vmatmul.mubr.f32.gmra.mrb[0].mxu0 %v1607
    %v1680 = vpop.f32.mrb[0].mxu0
    %v1681 = vadd.f32 %v1601, %v1680
    %v1682 = vpop.f32.mrb[0].mxu0
    %1683 = vdwg.mxu0
    %v1684 = vadd.f32 %v137, %v1676
    %v1685 = vadd.f32 %v142, %v1681
    %v1686 = vld [vmem:[%s7] sm:$0x1]
    %v1687 = vld [vmem:[%s8] sm:$0x1]
    %v1688 = vsel %vm156, %v1684, 0.0
    %1689 = vadd.xlane.f32.xlu0 %v1688
    %v1690 = vpop.xlane.xlu0 %1689
    %v1691 = vsel %vm156, %v1685, 0.0
    %1692 = vadd.xlane.f32.xlu0 %v1691
    %v1693 = vpop.xlane.xlu0 %1692
    %v1694 = vrcp.pop 32.0
    %v1695 = vmul.f32 %v1690, %v1694
    %v1696 = vmul.f32 %v1693, %v1694
    %v1697 = vsub.f32 %v1684, %v1695
    %v1698 = vsub.f32 %v1685, %v1696
    %v1699 = vmul.f32 %v1697, %v1697
    %v1700 = vmul.f32 %v1698, %v1698
    %v1701 = vsel %vm156, %v1699, 0.0
    %1702 = vadd.xlane.f32.xlu0 %v1701
    %v1703 = vpop.xlane.xlu0 %1702
    %v1704 = vsel %vm156, %v1700, 0.0
    %1705 = vadd.xlane.f32.xlu0 %v1704
    %v1706 = vpop.xlane.xlu0 %1705
    %v1707 = vmul.f32 %v1703, %v1694
    %v1708 = vmul.f32 %v1706, %v1694
    %v1709 = vadd.f32 %v1707, 1e-05
    %v1710 = vadd.f32 %v1708, 1e-05
    %v1711 = vrsqrt.pop %v1709
    %v1712 = vrsqrt.pop %v1710
    %v1713 = vmul.f32 %v1697, %v1711
    %v1714 = vmul.f32 %v1698, %v1712
    %v1716 = vlaneseq
    %v1717 = vshrl.u32 %v1716, 7
    %v1718 = vsub.s32 0, %v1717
    %v1719 = vrot.slane %v1686, %v1718
    %v1721 = vmul.f32 %v1713, %v1719
    %v1722 = vmul.f32 %v1714, %v1719
    %v1724 = vlaneseq
    %v1725 = vshrl.u32 %v1724, 7
    %v1726 = vsub.s32 0, %v1725
    %v1727 = vrot.slane %v1687, %v1726
    %v1729 = vadd.f32 %v1721, %v1727
    %v1730 = vadd.f32 %v1722, %v1727
    %v1731 = vpack.c.bf16 %v1730, %v1729
    %v1732 = vld [vmem:[%s9] sm:$0xff]
    %v1733 = vld [vmem:[%s9 + $0x8] sm:$0xff]
    %v1734 = vld [vmem:[%s9 + $0x10] sm:$0xff]
    %v1735 = vld [vmem:[%s9 + $0x18] sm:$0xff]
    %v1736 = vld [vmem:[%s9 + $0x20] sm:$0xff]
    %v1737 = vld [vmem:[%s9 + $0x28] sm:$0xff]
    %v1738 = vld [vmem:[%s9 + $0x30] sm:$0xff]
    %v1739 = vld [vmem:[%s9 + $0x38] sm:$0xff]
    %v1740 = vld [vmem:[%s9 + $0x40] sm:$0xff]
    %v1741 = vld [vmem:[%s9 + $0x48] sm:$0xff]
    %v1742 = vld [vmem:[%s9 + $0x50] sm:$0xff]
    %v1743 = vld [vmem:[%s9 + $0x58] sm:$0xff]
    %v1744 = vld [vmem:[%s9 + $0x60] sm:$0xff]
    %v1745 = vld [vmem:[%s9 + $0x68] sm:$0xff]
    %v1746 = vld [vmem:[%s9 + $0x70] sm:$0xff]
    %v1747 = vld [vmem:[%s9 + $0x78] sm:$0xff]
    %v1748 = vld [vmem:[%s9 + $0x80] sm:$0xff]
    %v1749 = vld [vmem:[%s9 + $0x88] sm:$0xff]
    %v1750 = vld [vmem:[%s9 + $0x90] sm:$0xff]
    %v1751 = vld [vmem:[%s9 + $0x98] sm:$0xff]
    %v1752 = vld [vmem:[%s9 + $0xa0] sm:$0xff]
    %v1753 = vld [vmem:[%s9 + $0xa8] sm:$0xff]
    %v1754 = vld [vmem:[%s9 + $0xb0] sm:$0xff]
    %v1755 = vld [vmem:[%s9 + $0xb8] sm:$0xff]
    %v1756 = vld [vmem:[%s9 + $0xc0] sm:$0xff]
    %v1757 = vld [vmem:[%s9 + $0xc8] sm:$0xff]
    %v1758 = vld [vmem:[%s9 + $0xd0] sm:$0xff]
    %v1759 = vld [vmem:[%s9 + $0xd8] sm:$0xff]
    %v1760 = vld [vmem:[%s9 + $0xe0] sm:$0xff]
    %v1761 = vld [vmem:[%s9 + $0xe8] sm:$0xff]
    %v1762 = vld [vmem:[%s9 + $0xf0] sm:$0xff]
    %v1763 = vld [vmem:[%s9 + $0xf8] sm:$0xff]
    %v1764 = vld [vmem:[%s10] sm:$0xff]
    %v1765 = vld [vmem:[%s10 + $0x8] sm:$0xff]
    %v1768 = vlaneseq
    %v1769 = vshrl.u32 %v1768, 7
    %v1770 = vsub.s32 0, %v1769
    %v1771 = vrot.slane %v1764, %v1770
    %v1772 = vlaneseq
    %v1773 = vshrl.u32 %v1772, 7
    %v1774 = vsub.s32 1, %v1773
    %v1775 = vrot.slane %v1764, %v1774
    %v1776 = vlaneseq
    %v1777 = vshrl.u32 %v1776, 7
    %v1778 = vsub.s32 2, %v1777
    %v1779 = vrot.slane %v1764, %v1778
    %v1780 = vlaneseq
    %v1781 = vshrl.u32 %v1780, 7
    %v1782 = vsub.s32 3, %v1781
    %v1783 = vrot.slane %v1764, %v1782
    %v1784 = vlaneseq
    %v1785 = vshrl.u32 %v1784, 7
    %v1786 = vsub.s32 4, %v1785
    %v1787 = vrot.slane %v1764, %v1786
    %v1788 = vlaneseq
    %v1789 = vshrl.u32 %v1788, 7
    %v1790 = vsub.s32 5, %v1789
    %v1791 = vrot.slane %v1764, %v1790
    %v1792 = vlaneseq
    %v1793 = vshrl.u32 %v1792, 7
    %v1794 = vsub.s32 6, %v1793
    %v1795 = vrot.slane %v1764, %v1794
    %v1796 = vlaneseq
    %v1797 = vshrl.u32 %v1796, 7
    %v1798 = vsub.s32 7, %v1797
    %v1799 = vrot.slane %v1764, %v1798
    %v1800 = vlaneseq
    %v1801 = vshrl.u32 %v1800, 7
    %v1802 = vsub.s32 0, %v1801
    %v1803 = vrot.slane %v1765, %v1802
    %v1804 = vlaneseq
    %v1805 = vshrl.u32 %v1804, 7
    %v1806 = vsub.s32 1, %v1805
    %v1807 = vrot.slane %v1765, %v1806
    %v1808 = vlaneseq
    %v1809 = vshrl.u32 %v1808, 7
    %v1810 = vsub.s32 2, %v1809
    %v1811 = vrot.slane %v1765, %v1810
    %v1812 = vlaneseq
    %v1813 = vshrl.u32 %v1812, 7
    %v1814 = vsub.s32 3, %v1813
    %v1815 = vrot.slane %v1765, %v1814
    %v1816 = vlaneseq
    %v1817 = vshrl.u32 %v1816, 7
    %v1818 = vsub.s32 4, %v1817
    %v1819 = vrot.slane %v1765, %v1818
    %v1820 = vlaneseq
    %v1821 = vshrl.u32 %v1820, 7
    %v1822 = vsub.s32 5, %v1821
    %v1823 = vrot.slane %v1765, %v1822
    %v1824 = vlaneseq
    %v1825 = vshrl.u32 %v1824, 7
    %v1826 = vsub.s32 6, %v1825
    %v1827 = vrot.slane %v1765, %v1826
    %v1828 = vlaneseq
    %v1829 = vshrl.u32 %v1828, 7
    %v1830 = vsub.s32 7, %v1829
    %v1831 = vrot.slane %v1765, %v1830
    %v1880 = vunpack.c.l.b16 %v1732
    %v1881 = vunpack.c.h.b16 %v1732
    %v1882 = vunpack.c.l.b16 %v1733
    %v1883 = vunpack.c.h.b16 %v1733
    %v1884 = vunpack.c.l.b16 %v1734
    %v1885 = vunpack.c.h.b16 %v1734
    %v1886 = vunpack.c.l.b16 %v1735
    %v1887 = vunpack.c.h.b16 %v1735
    %v1888 = vunpack.c.l.b16 %v1736
    %v1889 = vunpack.c.h.b16 %v1736
    %v1890 = vunpack.c.l.b16 %v1737
    %v1891 = vunpack.c.h.b16 %v1737
    %v1892 = vunpack.c.l.b16 %v1738
    %v1893 = vunpack.c.h.b16 %v1738
    %v1894 = vunpack.c.l.b16 %v1739
    %v1895 = vunpack.c.h.b16 %v1739
    %v1896 = vunpack.c.l.b16 %v1740
    %v1897 = vunpack.c.h.b16 %v1740
    %v1898 = vunpack.c.l.b16 %v1741
    %v1899 = vunpack.c.h.b16 %v1741
    %v1900 = vunpack.c.l.b16 %v1742
    %v1901 = vunpack.c.h.b16 %v1742
    %v1902 = vunpack.c.l.b16 %v1743
    %v1903 = vunpack.c.h.b16 %v1743
    %v1904 = vunpack.c.l.b16 %v1744
    %v1905 = vunpack.c.h.b16 %v1744
    %v1906 = vunpack.c.l.b16 %v1745
    %v1907 = vunpack.c.h.b16 %v1745
    %v1908 = vunpack.c.l.b16 %v1746
    %v1909 = vunpack.c.h.b16 %v1746
    %v1910 = vunpack.c.l.b16 %v1747
    %v1911 = vunpack.c.h.b16 %v1747
    %v1912 = vunpack.c.l.b16 %v1748
    %v1913 = vunpack.c.h.b16 %v1748
    %v1914 = vunpack.c.l.b16 %v1749
    %v1915 = vunpack.c.h.b16 %v1749
    %v1916 = vunpack.c.l.b16 %v1750
    %v1917 = vunpack.c.h.b16 %v1750
    %v1918 = vunpack.c.l.b16 %v1751
    %v1919 = vunpack.c.h.b16 %v1751
    %v1920 = vunpack.c.l.b16 %v1752
    %v1921 = vunpack.c.h.b16 %v1752
    %v1922 = vunpack.c.l.b16 %v1753
    %v1923 = vunpack.c.h.b16 %v1753
    %v1924 = vunpack.c.l.b16 %v1754
    %v1925 = vunpack.c.h.b16 %v1754
    %v1926 = vunpack.c.l.b16 %v1755
    %v1927 = vunpack.c.h.b16 %v1755
    %v1928 = vunpack.c.l.b16 %v1756
    %v1929 = vunpack.c.h.b16 %v1756
    %v1930 = vunpack.c.l.b16 %v1757
    %v1931 = vunpack.c.h.b16 %v1757
    %v1932 = vunpack.c.l.b16 %v1758
    %v1933 = vunpack.c.h.b16 %v1758
    %v1934 = vunpack.c.l.b16 %v1759
    %v1935 = vunpack.c.h.b16 %v1759
    %v1936 = vunpack.c.l.b16 %v1760
    %v1937 = vunpack.c.h.b16 %v1760
    %v1938 = vunpack.c.l.b16 %v1761
    %v1939 = vunpack.c.h.b16 %v1761
    %v1940 = vunpack.c.l.b16 %v1762
    %v1941 = vunpack.c.h.b16 %v1762
    %v1942 = vunpack.c.l.b16 %v1763
    %v1943 = vunpack.c.h.b16 %v1763
    %v1944 = vpack.c.b16 %v1896, %v1880
    %v1945 = vpack.c.b16 %v1897, %v1881
    %v1946 = vpack.c.b16 %v1898, %v1882
    %v1947 = vpack.c.b16 %v1899, %v1883
    %v1948 = vpack.c.b16 %v1900, %v1884
    %v1949 = vpack.c.b16 %v1901, %v1885
    %v1950 = vpack.c.b16 %v1902, %v1886
    %v1951 = vpack.c.b16 %v1903, %v1887
    %v1952 = vpack.c.b16 %v1904, %v1888
    %v1953 = vpack.c.b16 %v1905, %v1889
    %v1954 = vpack.c.b16 %v1906, %v1890
    %v1955 = vpack.c.b16 %v1907, %v1891
    %v1956 = vpack.c.b16 %v1908, %v1892
    %v1957 = vpack.c.b16 %v1909, %v1893
    %v1958 = vpack.c.b16 %v1910, %v1894
    %v1959 = vpack.c.b16 %v1911, %v1895
    %v1960 = vpack.c.b16 %v1928, %v1912
    %v1961 = vpack.c.b16 %v1929, %v1913
    %v1962 = vpack.c.b16 %v1930, %v1914
    %v1963 = vpack.c.b16 %v1931, %v1915
    %v1964 = vpack.c.b16 %v1932, %v1916
    %v1965 = vpack.c.b16 %v1933, %v1917
    %v1966 = vpack.c.b16 %v1934, %v1918
    %v1967 = vpack.c.b16 %v1935, %v1919
    %v1968 = vpack.c.b16 %v1936, %v1920
    %v1969 = vpack.c.b16 %v1937, %v1921
    %v1970 = vpack.c.b16 %v1938, %v1922
    %v1971 = vpack.c.b16 %v1939, %v1923
    %v1972 = vpack.c.b16 %v1940, %v1924
    %v1973 = vpack.c.b16 %v1941, %v1925
    %v1974 = vpack.c.b16 %v1942, %v1926
    %v1975 = vpack.c.b16 %v1943, %v1927
    %v2009 = vsel %vm156, %v1731, 0
    %2011 = vmatprep.subr.bf16.mxu0 %v1945
    %2012 = vmatpush1.bf16.msra.mxu0 %v1944
    %2013 = vmatprep.subr.bf16.mxu0 %v1961
    %2014 = vmatpush1.bf16.msra.mxu0 %v1960
    %2015 = vmatprep.subr.bf16.mxu0 0
    %2016 = vmatpush1.bf16.msra.mxu0 0
    %2017 = vmatprep.subr.bf16.mxu0 0
    %2018 = vmatpush1.bf16.msra.mxu0 0
    %2019 = vmatprep.subr.bf16.mxu0 0
    %2020 = vmatpush1.bf16.msra.mxu0 0
    %2021 = vmatprep.subr.bf16.mxu0 0
    %2022 = vmatpush1.bf16.msra.mxu0 0
    %2023 = vmatprep.subr.bf16.mxu0 0
    %2024 = vmatpush1.bf16.msra.mxu0 0
    %2025 = vmatprep.subr.bf16.mxu0 0
    %2026 = vmatpush1.bf16.msra.mxu0 0
    %2027 = vmatprep.subr.bf16.mxu0 0
    %2028 = vmatpush1.bf16.msra.mxu0 0
    %2029 = vmatprep.subr.bf16.mxu0 0
    %2030 = vmatpush1.bf16.msra.mxu0 0
    %2031 = vmatprep.subr.bf16.mxu0 0
    %2032 = vmatpush1.bf16.msra.mxu0 0
    %2033 = vmatprep.subr.bf16.mxu0 0
    %2034 = vmatpush1.bf16.msra.mxu0 0
    %2035 = vmatprep.subr.bf16.mxu0 0
    %2036 = vmatpush1.bf16.msra.mxu0 0
    %2037 = vmatprep.subr.bf16.mxu0 0
    %2038 = vmatpush1.bf16.msra.mxu0 0
    %2039 = vmatprep.subr.bf16.mxu0 0
    %2040 = vmatpush1.bf16.msra.mxu0 0
    %2041 = vmatprep.subr.bf16.mxu0 0
    %2042 = vmatpush1.bf16.msra.mxu0 0
    %2043 = vmatprep.mubr.bf16.mxu0 0
    %2044 = vmatmul.mubr.bf16.gmra.mrb[0].mxu0 %v2009
    %v2045 = vpop.f32.mrb[0].mxu0
    %v2046 = vadd.f32 %v1771, %v2045
    %v2047 = vpop.f32.mrb[0].mxu0
    %v2048 = vadd.f32 %v1775, %v2047
    %v2049 = vpop.f32.mrb[0].mxu0
    %v2050 = vadd.f32 %v1771, %v2049
    %v2051 = vpop.f32.mrb[0].mxu0
    %v2052 = vadd.f32 %v1775, %v2051
    %2053 = vdwg.mxu0
    %2054 = vmatprep.subr.bf16.mxu0 %v1947
    %2055 = vmatpush1.bf16.msra.mxu0 %v1946
    %2056 = vmatprep.subr.bf16.mxu0 %v1963
    %2057 = vmatpush1.bf16.msra.mxu0 %v1962
    %2058 = vmatprep.subr.bf16.mxu0 0
    %2059 = vmatpush1.bf16.msra.mxu0 0
    %2060 = vmatprep.subr.bf16.mxu0 0
    %2061 = vmatpush1.bf16.msra.mxu0 0
    %2062 = vmatprep.subr.bf16.mxu0 0
    %2063 = vmatpush1.bf16.msra.mxu0 0
    %2064 = vmatprep.subr.bf16.mxu0 0
    %2065 = vmatpush1.bf16.msra.mxu0 0
    %2066 = vmatprep.subr.bf16.mxu0 0
    %2067 = vmatpush1.bf16.msra.mxu0 0
    %2068 = vmatprep.subr.bf16.mxu0 0
    %2069 = vmatpush1.bf16.msra.mxu0 0
    %2070 = vmatprep.subr.bf16.mxu0 0
    %2071 = vmatpush1.bf16.msra.mxu0 0
    %2072 = vmatprep.subr.bf16.mxu0 0
    %2073 = vmatpush1.bf16.msra.mxu0 0
    %2074 = vmatprep.subr.bf16.mxu0 0
    %2075 = vmatpush1.bf16.msra.mxu0 0
    %2076 = vmatprep.subr.bf16.mxu0 0
    %2077 = vmatpush1.bf16.msra.mxu0 0
    %2078 = vmatprep.subr.bf16.mxu0 0
    %2079 = vmatpush1.bf16.msra.mxu0 0
    %2080 = vmatprep.subr.bf16.mxu0 0
    %2081 = vmatpush1.bf16.msra.mxu0 0
    %2082 = vmatprep.subr.bf16.mxu0 0
    %2083 = vmatpush1.bf16.msra.mxu0 0
    %2084 = vmatprep.subr.bf16.mxu0 0
    %2085 = vmatpush1.bf16.msra.mxu0 0
    %2086 = vmatprep.mubr.bf16.mxu0 0
    %2087 = vmatmul.mubr.bf16.gmra.mrb[0].mxu0 %v2009
    %v2088 = vpop.f32.mrb[0].mxu0
    %v2089 = vadd.f32 %v1779, %v2088
    %v2090 = vpop.f32.mrb[0].mxu0
    %v2091 = vadd.f32 %v1783, %v2090
    %v2092 = vpop.f32.mrb[0].mxu0
    %v2093 = vadd.f32 %v1779, %v2092
    %v2094 = vpop.f32.mrb[0].mxu0
    %v2095 = vadd.f32 %v1783, %v2094
    %2096 = vdwg.mxu0
    %2097 = vmatprep.subr.bf16.mxu0 %v1949
    %2098 = vmatpush1.bf16.msra.mxu0 %v1948
    %2099 = vmatprep.subr.bf16.mxu0 %v1965
    %2100 = vmatpush1.bf16.msra.mxu0 %v1964
    %2101 = vmatprep.subr.bf16.mxu0 0
    %2102 = vmatpush1.bf16.msra.mxu0 0
    %2103 = vmatprep.subr.bf16.mxu0 0
    %2104 = vmatpush1.bf16.msra.mxu0 0
    %2105 = vmatprep.subr.bf16.mxu0 0
    %2106 = vmatpush1.bf16.msra.mxu0 0
    %2107 = vmatprep.subr.bf16.mxu0 0
    %2108 = vmatpush1.bf16.msra.mxu0 0
    %2109 = vmatprep.subr.bf16.mxu0 0
    %2110 = vmatpush1.bf16.msra.mxu0 0
    %2111 = vmatprep.subr.bf16.mxu0 0
    %2112 = vmatpush1.bf16.msra.mxu0 0
    %2113 = vmatprep.subr.bf16.mxu0 0
    %2114 = vmatpush1.bf16.msra.mxu0 0
    %2115 = vmatprep.subr.bf16.mxu0 0
    %2116 = vmatpush1.bf16.msra.mxu0 0
    %2117 = vmatprep.subr.bf16.mxu0 0
    %2118 = vmatpush1.bf16.msra.mxu0 0
    %2119 = vmatprep.subr.bf16.mxu0 0
    %2120 = vmatpush1.bf16.msra.mxu0 0
    %2121 = vmatprep.subr.bf16.mxu0 0
    %2122 = vmatpush1.bf16.msra.mxu0 0
    %2123 = vmatprep.subr.bf16.mxu0 0
    %2124 = vmatpush1.bf16.msra.mxu0 0
    %2125 = vmatprep.subr.bf16.mxu0 0
    %2126 = vmatpush1.bf16.msra.mxu0 0
    %2127 = vmatprep.subr.bf16.mxu0 0
    %2128 = vmatpush1.bf16.msra.mxu0 0
    %2129 = vmatprep.mubr.bf16.mxu0 0
    %2130 = vmatmul.mubr.bf16.gmra.mrb[0].mxu0 %v2009
    %v2131 = vpop.f32.mrb[0].mxu0
    %v2132 = vadd.f32 %v1787, %v2131
    %v2133 = vpop.f32.mrb[0].mxu0
    %v2134 = vadd.f32 %v1791, %v2133
    %v2135 = vpop.f32.mrb[0].mxu0
    %v2136 = vadd.f32 %v1787, %v2135
    %v2137 = vpop.f32.mrb[0].mxu0
    %v2138 = vadd.f32 %v1791, %v2137
    %2139 = vdwg.mxu0
    %2140 = vmatprep.subr.bf16.mxu0 %v1951
    %2141 = vmatpush1.bf16.msra.mxu0 %v1950
    %2142 = vmatprep.subr.bf16.mxu0 %v1967
    %2143 = vmatpush1.bf16.msra.mxu0 %v1966
    %2144 = vmatprep.subr.bf16.mxu0 0
    %2145 = vmatpush1.bf16.msra.mxu0 0
    %2146 = vmatprep.subr.bf16.mxu0 0
    %2147 = vmatpush1.bf16.msra.mxu0 0
    %2148 = vmatprep.subr.bf16.mxu0 0
    %2149 = vmatpush1.bf16.msra.mxu0 0
    %2150 = vmatprep.subr.bf16.mxu0 0
    %2151 = vmatpush1.bf16.msra.mxu0 0
    %2152 = vmatprep.subr.bf16.mxu0 0
    %2153 = vmatpush1.bf16.msra.mxu0 0
    %2154 = vmatprep.subr.bf16.mxu0 0
    %2155 = vmatpush1.bf16.msra.mxu0 0
    %2156 = vmatprep.subr.bf16.mxu0 0
    %2157 = vmatpush1.bf16.msra.mxu0 0
    %2158 = vmatprep.subr.bf16.mxu0 0
    %2159 = vmatpush1.bf16.msra.mxu0 0
    %2160 = vmatprep.subr.bf16.mxu0 0
    %2161 = vmatpush1.bf16.msra.mxu0 0
    %2162 = vmatprep.subr.bf16.mxu0 0
    %2163 = vmatpush1.bf16.msra.mxu0 0
    %2164 = vmatprep.subr.bf16.mxu0 0
    %2165 = vmatpush1.bf16.msra.mxu0 0
    %2166 = vmatprep.subr.bf16.mxu0 0
    %2167 = vmatpush1.bf16.msra.mxu0 0
    %2168 = vmatprep.subr.bf16.mxu0 0
    %2169 = vmatpush1.bf16.msra.mxu0 0
    %2170 = vmatprep.subr.bf16.mxu0 0
    %2171 = vmatpush1.bf16.msra.mxu0 0
    %2172 = vmatprep.mubr.bf16.mxu0 0
    %2173 = vmatmul.mubr.bf16.gmra.mrb[0].mxu0 %v2009
    %v2174 = vpop.f32.mrb[0].mxu0
    %v2175 = vadd.f32 %v1795, %v2174
    %v2176 = vpop.f32.mrb[0].mxu0
    %v2177 = vadd.f32 %v1799, %v2176
    %v2178 = vpop.f32.mrb[0].mxu0
    %v2179 = vadd.f32 %v1795, %v2178
    %v2180 = vpop.f32.mrb[0].mxu0
    %v2181 = vadd.f32 %v1799, %v2180
    %2182 = vdwg.mxu0
    %2183 = vmatprep.subr.bf16.mxu0 %v1953
    %2184 = vmatpush1.bf16.msra.mxu0 %v1952
    %2185 = vmatprep.subr.bf16.mxu0 %v1969
    %2186 = vmatpush1.bf16.msra.mxu0 %v1968
    %2187 = vmatprep.subr.bf16.mxu0 0
    %2188 = vmatpush1.bf16.msra.mxu0 0
    %2189 = vmatprep.subr.bf16.mxu0 0
    %2190 = vmatpush1.bf16.msra.mxu0 0
    %2191 = vmatprep.subr.bf16.mxu0 0
    %2192 = vmatpush1.bf16.msra.mxu0 0
    %2193 = vmatprep.subr.bf16.mxu0 0
    %2194 = vmatpush1.bf16.msra.mxu0 0
    %2195 = vmatprep.subr.bf16.mxu0 0
    %2196 = vmatpush1.bf16.msra.mxu0 0
    %2197 = vmatprep.subr.bf16.mxu0 0
    %2198 = vmatpush1.bf16.msra.mxu0 0
    %2199 = vmatprep.subr.bf16.mxu0 0
    %2200 = vmatpush1.bf16.msra.mxu0 0
    %2201 = vmatprep.subr.bf16.mxu0 0
    %2202 = vmatpush1.bf16.msra.mxu0 0
    %2203 = vmatprep.subr.bf16.mxu0 0
    %2204 = vmatpush1.bf16.msra.mxu0 0
    %2205 = vmatprep.subr.bf16.mxu0 0
    %2206 = vmatpush1.bf16.msra.mxu0 0
    %2207 = vmatprep.subr.bf16.mxu0 0
    %2208 = vmatpush1.bf16.msra.mxu0 0
    %2209 = vmatprep.subr.bf16.mxu0 0
    %2210 = vmatpush1.bf16.msra.mxu0 0
    %2211 = vmatprep.subr.bf16.mxu0 0
    %2212 = vmatpush1.bf16.msra.mxu0 0
    %2213 = vmatprep.subr.bf16.mxu0 0
    %2214 = vmatpush1.bf16.msra.mxu0 0
    %2215 = vmatprep.mubr.bf16.mxu0 0
    %2216 = vmatmul.mubr.bf16.gmra.mrb[0].mxu0 %v2009
    %v2217 = vpop.f32.mrb[0].mxu0
    %v2218 = vadd.f32 %v1803, %v2217
    %v2219 = vpop.f32.mrb[0].mxu0
    %v2220 = vadd.f32 %v1807, %v2219
    %v2221 = vpop.f32.mrb[0].mxu0
    %v2222 = vadd.f32 %v1803, %v2221
    %v2223 = vpop.f32.mrb[0].mxu0
    %v2224 = vadd.f32 %v1807, %v2223
    %2225 = vdwg.mxu0
    %2226 = vmatprep.subr.bf16.mxu0 %v1955
    %2227 = vmatpush1.bf16.msra.mxu0 %v1954
    %2228 = vmatprep.subr.bf16.mxu0 %v1971
    %2229 = vmatpush1.bf16.msra.mxu0 %v1970
    %2230 = vmatprep.subr.bf16.mxu0 0
    %2231 = vmatpush1.bf16.msra.mxu0 0
    %2232 = vmatprep.subr.bf16.mxu0 0
    %2233 = vmatpush1.bf16.msra.mxu0 0
    %2234 = vmatprep.subr.bf16.mxu0 0
    %2235 = vmatpush1.bf16.msra.mxu0 0
    %2236 = vmatprep.subr.bf16.mxu0 0
    %2237 = vmatpush1.bf16.msra.mxu0 0
    %2238 = vmatprep.subr.bf16.mxu0 0
    %2239 = vmatpush1.bf16.msra.mxu0 0
    %2240 = vmatprep.subr.bf16.mxu0 0
    %2241 = vmatpush1.bf16.msra.mxu0 0
    %2242 = vmatprep.subr.bf16.mxu0 0
    %2243 = vmatpush1.bf16.msra.mxu0 0
    %2244 = vmatprep.subr.bf16.mxu0 0
    %2245 = vmatpush1.bf16.msra.mxu0 0
    %2246 = vmatprep.subr.bf16.mxu0 0
    %2247 = vmatpush1.bf16.msra.mxu0 0
    %2248 = vmatprep.subr.bf16.mxu0 0
    %2249 = vmatpush1.bf16.msra.mxu0 0
    %2250 = vmatprep.subr.bf16.mxu0 0
    %2251 = vmatpush1.bf16.msra.mxu0 0
    %2252 = vmatprep.subr.bf16.mxu0 0
    %2253 = vmatpush1.bf16.msra.mxu0 0
    %2254 = vmatprep.subr.bf16.mxu0 0
    %2255 = vmatpush1.bf16.msra.mxu0 0
    %2256 = vmatprep.subr.bf16.mxu0 0
    %2257 = vmatpush1.bf16.msra.mxu0 0
    %2258 = vmatprep.mubr.bf16.mxu0 0
    %2259 = vmatmul.mubr.bf16.gmra.mrb[0].mxu0 %v2009
    %v2260 = vpop.f32.mrb[0].mxu0
    %v2261 = vadd.f32 %v1811, %v2260
    %v2262 = vpop.f32.mrb[0].mxu0
    %v2263 = vadd.f32 %v1815, %v2262
    %v2264 = vpop.f32.mrb[0].mxu0
    %v2265 = vadd.f32 %v1811, %v2264
    %v2266 = vpop.f32.mrb[0].mxu0
    %v2267 = vadd.f32 %v1815, %v2266
    %2268 = vdwg.mxu0
    %2269 = vmatprep.subr.bf16.mxu0 %v1957
    %2270 = vmatpush1.bf16.msra.mxu0 %v1956
    %2271 = vmatprep.subr.bf16.mxu0 %v1973
    %2272 = vmatpush1.bf16.msra.mxu0 %v1972
    %2273 = vmatprep.subr.bf16.mxu0 0
    %2274 = vmatpush1.bf16.msra.mxu0 0
    %2275 = vmatprep.subr.bf16.mxu0 0
    %2276 = vmatpush1.bf16.msra.mxu0 0
    %2277 = vmatprep.subr.bf16.mxu0 0
    %2278 = vmatpush1.bf16.msra.mxu0 0
    %2279 = vmatprep.subr.bf16.mxu0 0
    %2280 = vmatpush1.bf16.msra.mxu0 0
    %2281 = vmatprep.subr.bf16.mxu0 0
    %2282 = vmatpush1.bf16.msra.mxu0 0
    %2283 = vmatprep.subr.bf16.mxu0 0
    %2284 = vmatpush1.bf16.msra.mxu0 0
    %2285 = vmatprep.subr.bf16.mxu0 0
    %2286 = vmatpush1.bf16.msra.mxu0 0
    %2287 = vmatprep.subr.bf16.mxu0 0
    %2288 = vmatpush1.bf16.msra.mxu0 0
    %2289 = vmatprep.subr.bf16.mxu0 0
    %2290 = vmatpush1.bf16.msra.mxu0 0
    %2291 = vmatprep.subr.bf16.mxu0 0
    %2292 = vmatpush1.bf16.msra.mxu0 0
    %2293 = vmatprep.subr.bf16.mxu0 0
    %2294 = vmatpush1.bf16.msra.mxu0 0
    %2295 = vmatprep.subr.bf16.mxu0 0
    %2296 = vmatpush1.bf16.msra.mxu0 0
    %2297 = vmatprep.subr.bf16.mxu0 0
    %2298 = vmatpush1.bf16.msra.mxu0 0
    %2299 = vmatprep.subr.bf16.mxu0 0
    %2300 = vmatpush1.bf16.msra.mxu0 0
    %2301 = vmatprep.mubr.bf16.mxu0 0
    %2302 = vmatmul.mubr.bf16.gmra.mrb[0].mxu0 %v2009
    %v2303 = vpop.f32.mrb[0].mxu0
    %v2304 = vadd.f32 %v1819, %v2303
    %v2305 = vpop.f32.mrb[0].mxu0
    %v2306 = vadd.f32 %v1823, %v2305
    %v2307 = vpop.f32.mrb[0].mxu0
    %v2308 = vadd.f32 %v1819, %v2307
    %v2309 = vpop.f32.mrb[0].mxu0
    %v2310 = vadd.f32 %v1823, %v2309
    %2311 = vdwg.mxu0
    %2312 = vmatprep.subr.bf16.mxu0 %v1959
    %2313 = vmatpush1.bf16.msra.mxu0 %v1958
    %2314 = vmatprep.subr.bf16.mxu0 %v1975
    %2315 = vmatpush1.bf16.msra.mxu0 %v1974
    %2316 = vmatprep.subr.bf16.mxu0 0
    %2317 = vmatpush1.bf16.msra.mxu0 0
    %2318 = vmatprep.subr.bf16.mxu0 0
    %2319 = vmatpush1.bf16.msra.mxu0 0
    %2320 = vmatprep.subr.bf16.mxu0 0
    %2321 = vmatpush1.bf16.msra.mxu0 0
    %2322 = vmatprep.subr.bf16.mxu0 0
    %2323 = vmatpush1.bf16.msra.mxu0 0
    %2324 = vmatprep.subr.bf16.mxu0 0
    %2325 = vmatpush1.bf16.msra.mxu0 0
    %2326 = vmatprep.subr.bf16.mxu0 0
    %2327 = vmatpush1.bf16.msra.mxu0 0
    %2328 = vmatprep.subr.bf16.mxu0 0
    %2329 = vmatpush1.bf16.msra.mxu0 0
    %2330 = vmatprep.subr.bf16.mxu0 0
    %2331 = vmatpush1.bf16.msra.mxu0 0
    %2332 = vmatprep.subr.bf16.mxu0 0
    %2333 = vmatpush1.bf16.msra.mxu0 0
    %2334 = vmatprep.subr.bf16.mxu0 0
    %2335 = vmatpush1.bf16.msra.mxu0 0
    %2336 = vmatprep.subr.bf16.mxu0 0
    %2337 = vmatpush1.bf16.msra.mxu0 0
    %2338 = vmatprep.subr.bf16.mxu0 0
    %2339 = vmatpush1.bf16.msra.mxu0 0
    %2340 = vmatprep.subr.bf16.mxu0 0
    %2341 = vmatpush1.bf16.msra.mxu0 0
    %2342 = vmatprep.subr.bf16.mxu0 0
    %2343 = vmatpush1.bf16.msra.mxu0 0
    %2344 = vmatprep.mubr.bf16.mxu0 0
    %2345 = vmatmul.mubr.bf16.gmra.mrb[0].mxu0 %v2009
    %v2346 = vpop.f32.mrb[0].mxu0
    %v2347 = vadd.f32 %v1827, %v2346
    %v2348 = vpop.f32.mrb[0].mxu0
    %v2349 = vadd.f32 %v1831, %v2348
    %v2350 = vpop.f32.mrb[0].mxu0
    %v2351 = vadd.f32 %v1827, %v2350
    %v2352 = vpop.f32.mrb[0].mxu0
    %v2353 = vadd.f32 %v1831, %v2352
    %2354 = vdwg.mxu0
    %v2355 = vmax.f32 %v2046, 0.0
    %v2356 = vmax.f32 %v2048, 0.0
    %v2357 = vmax.f32 %v2089, 0.0
    %v2358 = vmax.f32 %v2091, 0.0
    %v2359 = vmax.f32 %v2132, 0.0
    %v2360 = vmax.f32 %v2134, 0.0
    %v2361 = vmax.f32 %v2175, 0.0
    %v2362 = vmax.f32 %v2177, 0.0
    %v2363 = vmax.f32 %v2218, 0.0
    %v2364 = vmax.f32 %v2220, 0.0
    %v2365 = vmax.f32 %v2261, 0.0
    %v2366 = vmax.f32 %v2263, 0.0
    %v2367 = vmax.f32 %v2304, 0.0
    %v2368 = vmax.f32 %v2306, 0.0
    %v2369 = vmax.f32 %v2347, 0.0
    %v2370 = vmax.f32 %v2349, 0.0
    %v2371 = vmax.f32 %v2050, 0.0
    %v2372 = vmax.f32 %v2052, 0.0
    %v2373 = vmax.f32 %v2093, 0.0
    %v2374 = vmax.f32 %v2095, 0.0
    %v2375 = vmax.f32 %v2136, 0.0
    %v2376 = vmax.f32 %v2138, 0.0
    %v2377 = vmax.f32 %v2179, 0.0
    %v2378 = vmax.f32 %v2181, 0.0
    %v2379 = vmax.f32 %v2222, 0.0
    %v2380 = vmax.f32 %v2224, 0.0
    %v2381 = vmax.f32 %v2265, 0.0
    %v2382 = vmax.f32 %v2267, 0.0
    %v2383 = vmax.f32 %v2308, 0.0
    %v2384 = vmax.f32 %v2310, 0.0
    %v2385 = vmax.f32 %v2351, 0.0
    %v2386 = vmax.f32 %v2353, 0.0
    %v2387 = vpack.c.bf16 %v2371, %v2355
    %v2388 = vpack.c.bf16 %v2372, %v2356
    %v2389 = vpack.c.bf16 %v2373, %v2357
    %v2390 = vpack.c.bf16 %v2374, %v2358
    %v2391 = vpack.c.bf16 %v2375, %v2359
    %v2392 = vpack.c.bf16 %v2376, %v2360
    %v2393 = vpack.c.bf16 %v2377, %v2361
    %v2394 = vpack.c.bf16 %v2378, %v2362
    %v2395 = vpack.c.bf16 %v2379, %v2363
    %v2396 = vpack.c.bf16 %v2380, %v2364
    %v2397 = vpack.c.bf16 %v2381, %v2365
    %v2398 = vpack.c.bf16 %v2382, %v2366
    %v2399 = vpack.c.bf16 %v2383, %v2367
    %v2400 = vpack.c.bf16 %v2384, %v2368
    %v2401 = vpack.c.bf16 %v2385, %v2369
    %v2402 = vpack.c.bf16 %v2386, %v2370
    %v2403 = vld [vmem:[%s11] sm:$0xf]
    %v2404 = vld [vmem:[%s11 + $0x4] sm:$0xf]
    %v2405 = vld [vmem:[%s11 + $0x8] sm:$0xf]
    %v2406 = vld [vmem:[%s11 + $0xc] sm:$0xf]
    %v2407 = vld [vmem:[%s11 + $0x10] sm:$0xf]
    %v2408 = vld [vmem:[%s11 + $0x14] sm:$0xf]
    %v2409 = vld [vmem:[%s11 + $0x18] sm:$0xf]
    %v2410 = vld [vmem:[%s11 + $0x1c] sm:$0xf]
    %v2411 = vld [vmem:[%s11 + $0x20] sm:$0xf]
    %v2412 = vld [vmem:[%s11 + $0x24] sm:$0xf]
    %v2413 = vld [vmem:[%s11 + $0x28] sm:$0xf]
    %v2414 = vld [vmem:[%s11 + $0x2c] sm:$0xf]
    %v2415 = vld [vmem:[%s11 + $0x30] sm:$0xf]
    %v2416 = vld [vmem:[%s11 + $0x34] sm:$0xf]
    %v2417 = vld [vmem:[%s11 + $0x38] sm:$0xf]
    %v2418 = vld [vmem:[%s11 + $0x3c] sm:$0xf]
    %v2419 = vld [vmem:[%s11 + $0x40] sm:$0xf]
    %v2420 = vld [vmem:[%s11 + $0x44] sm:$0xf]
    %v2421 = vld [vmem:[%s11 + $0x48] sm:$0xf]
    %v2422 = vld [vmem:[%s11 + $0x4c] sm:$0xf]
    %v2423 = vld [vmem:[%s11 + $0x50] sm:$0xf]
    %v2424 = vld [vmem:[%s11 + $0x54] sm:$0xf]
    %v2425 = vld [vmem:[%s11 + $0x58] sm:$0xf]
    %v2426 = vld [vmem:[%s11 + $0x5c] sm:$0xf]
    %v2427 = vld [vmem:[%s11 + $0x60] sm:$0xf]
    %v2428 = vld [vmem:[%s11 + $0x64] sm:$0xf]
    %v2429 = vld [vmem:[%s11 + $0x68] sm:$0xf]
    %v2430 = vld [vmem:[%s11 + $0x6c] sm:$0xf]
    %v2431 = vld [vmem:[%s11 + $0x70] sm:$0xf]
    %v2432 = vld [vmem:[%s11 + $0x74] sm:$0xf]
    %v2433 = vld [vmem:[%s11 + $0x78] sm:$0xf]
    %v2434 = vld [vmem:[%s11 + $0x7c] sm:$0xf]
    %v2435 = vld [vmem:[%s11 + $0x80] sm:$0xf]
    %v2436 = vld [vmem:[%s11 + $0x84] sm:$0xf]
    %v2437 = vld [vmem:[%s11 + $0x88] sm:$0xf]
    %v2438 = vld [vmem:[%s11 + $0x8c] sm:$0xf]
    %v2439 = vld [vmem:[%s11 + $0x90] sm:$0xf]
    %v2440 = vld [vmem:[%s11 + $0x94] sm:$0xf]
    %v2441 = vld [vmem:[%s11 + $0x98] sm:$0xf]
    %v2442 = vld [vmem:[%s11 + $0x9c] sm:$0xf]
    %v2443 = vld [vmem:[%s11 + $0xa0] sm:$0xf]
    %v2444 = vld [vmem:[%s11 + $0xa4] sm:$0xf]
    %v2445 = vld [vmem:[%s11 + $0xa8] sm:$0xf]
    %v2446 = vld [vmem:[%s11 + $0xac] sm:$0xf]
    %v2447 = vld [vmem:[%s11 + $0xb0] sm:$0xf]
    %v2448 = vld [vmem:[%s11 + $0xb4] sm:$0xf]
    %v2449 = vld [vmem:[%s11 + $0xb8] sm:$0xf]
    %v2450 = vld [vmem:[%s11 + $0xbc] sm:$0xf]
    %v2451 = vld [vmem:[%s11 + $0xc0] sm:$0xf]
    %v2452 = vld [vmem:[%s11 + $0xc4] sm:$0xf]
    %v2453 = vld [vmem:[%s11 + $0xc8] sm:$0xf]
    %v2454 = vld [vmem:[%s11 + $0xcc] sm:$0xf]
    %v2455 = vld [vmem:[%s11 + $0xd0] sm:$0xf]
    %v2456 = vld [vmem:[%s11 + $0xd4] sm:$0xf]
    %v2457 = vld [vmem:[%s11 + $0xd8] sm:$0xf]
    %v2458 = vld [vmem:[%s11 + $0xdc] sm:$0xf]
    %v2459 = vld [vmem:[%s11 + $0xe0] sm:$0xf]
    %v2460 = vld [vmem:[%s11 + $0xe4] sm:$0xf]
    %v2461 = vld [vmem:[%s11 + $0xe8] sm:$0xf]
    %v2462 = vld [vmem:[%s11 + $0xec] sm:$0xf]
    %v2463 = vld [vmem:[%s11 + $0xf0] sm:$0xf]
    %v2464 = vld [vmem:[%s11 + $0xf4] sm:$0xf]
    %v2465 = vld [vmem:[%s11 + $0xf8] sm:$0xf]
    %v2466 = vld [vmem:[%s11 + $0xfc] sm:$0xf]
    %v2467 = vld [vmem:[%s11 + $0x100] sm:$0xf]
    %v2468 = vld [vmem:[%s11 + $0x104] sm:$0xf]
    %v2469 = vld [vmem:[%s11 + $0x108] sm:$0xf]
    %v2470 = vld [vmem:[%s11 + $0x10c] sm:$0xf]
    %v2471 = vld [vmem:[%s11 + $0x110] sm:$0xf]
    %v2472 = vld [vmem:[%s11 + $0x114] sm:$0xf]
    %v2473 = vld [vmem:[%s11 + $0x118] sm:$0xf]
    %v2474 = vld [vmem:[%s11 + $0x11c] sm:$0xf]
    %v2475 = vld [vmem:[%s11 + $0x120] sm:$0xf]
    %v2476 = vld [vmem:[%s11 + $0x124] sm:$0xf]
    %v2477 = vld [vmem:[%s11 + $0x128] sm:$0xf]
    %v2478 = vld [vmem:[%s11 + $0x12c] sm:$0xf]
    %v2479 = vld [vmem:[%s11 + $0x130] sm:$0xf]
    %v2480 = vld [vmem:[%s11 + $0x134] sm:$0xf]
    %v2481 = vld [vmem:[%s11 + $0x138] sm:$0xf]
    %v2482 = vld [vmem:[%s11 + $0x13c] sm:$0xf]
    %v2483 = vld [vmem:[%s11 + $0x140] sm:$0xf]
    %v2484 = vld [vmem:[%s11 + $0x144] sm:$0xf]
    %v2485 = vld [vmem:[%s11 + $0x148] sm:$0xf]
    %v2486 = vld [vmem:[%s11 + $0x14c] sm:$0xf]
    %v2487 = vld [vmem:[%s11 + $0x150] sm:$0xf]
    %v2488 = vld [vmem:[%s11 + $0x154] sm:$0xf]
    %v2489 = vld [vmem:[%s11 + $0x158] sm:$0xf]
    %v2490 = vld [vmem:[%s11 + $0x15c] sm:$0xf]
    %v2491 = vld [vmem:[%s11 + $0x160] sm:$0xf]
    %v2492 = vld [vmem:[%s11 + $0x164] sm:$0xf]
    %v2493 = vld [vmem:[%s11 + $0x168] sm:$0xf]
    %v2494 = vld [vmem:[%s11 + $0x16c] sm:$0xf]
    %v2495 = vld [vmem:[%s11 + $0x170] sm:$0xf]
    %v2496 = vld [vmem:[%s11 + $0x174] sm:$0xf]
    %v2497 = vld [vmem:[%s11 + $0x178] sm:$0xf]
    %v2498 = vld [vmem:[%s11 + $0x17c] sm:$0xf]
    %v2499 = vld [vmem:[%s11 + $0x180] sm:$0xf]
    %v2500 = vld [vmem:[%s11 + $0x184] sm:$0xf]
    %v2501 = vld [vmem:[%s11 + $0x188] sm:$0xf]
    %v2502 = vld [vmem:[%s11 + $0x18c] sm:$0xf]
    %v2503 = vld [vmem:[%s11 + $0x190] sm:$0xf]
    %v2504 = vld [vmem:[%s11 + $0x194] sm:$0xf]
    %v2505 = vld [vmem:[%s11 + $0x198] sm:$0xf]
    %v2506 = vld [vmem:[%s11 + $0x19c] sm:$0xf]
    %v2507 = vld [vmem:[%s11 + $0x1a0] sm:$0xf]
    %v2508 = vld [vmem:[%s11 + $0x1a4] sm:$0xf]
    %v2509 = vld [vmem:[%s11 + $0x1a8] sm:$0xf]
    %v2510 = vld [vmem:[%s11 + $0x1ac] sm:$0xf]
    %v2511 = vld [vmem:[%s11 + $0x1b0] sm:$0xf]
    %v2512 = vld [vmem:[%s11 + $0x1b4] sm:$0xf]
    %v2513 = vld [vmem:[%s11 + $0x1b8] sm:$0xf]
    %v2514 = vld [vmem:[%s11 + $0x1bc] sm:$0xf]
    %v2515 = vld [vmem:[%s11 + $0x1c0] sm:$0xf]
    %v2516 = vld [vmem:[%s11 + $0x1c4] sm:$0xf]
    %v2517 = vld [vmem:[%s11 + $0x1c8] sm:$0xf]
    %v2518 = vld [vmem:[%s11 + $0x1cc] sm:$0xf]
    %v2519 = vld [vmem:[%s11 + $0x1d0] sm:$0xf]
    %v2520 = vld [vmem:[%s11 + $0x1d4] sm:$0xf]
    %v2521 = vld [vmem:[%s11 + $0x1d8] sm:$0xf]
    %v2522 = vld [vmem:[%s11 + $0x1dc] sm:$0xf]
    %v2523 = vld [vmem:[%s11 + $0x1e0] sm:$0xf]
    %v2524 = vld [vmem:[%s11 + $0x1e4] sm:$0xf]
    %v2525 = vld [vmem:[%s11 + $0x1e8] sm:$0xf]
    %v2526 = vld [vmem:[%s11 + $0x1ec] sm:$0xf]
    %v2527 = vld [vmem:[%s11 + $0x1f0] sm:$0xf]
    %v2528 = vld [vmem:[%s11 + $0x1f4] sm:$0xf]
    %v2529 = vld [vmem:[%s11 + $0x1f8] sm:$0xf]
    %v2530 = vld [vmem:[%s11 + $0x1fc] sm:$0xf]
    %v2531 = vld [vmem:[%s11 + $0x200] sm:$0xf]
    %v2532 = vld [vmem:[%s11 + $0x204] sm:$0xf]
    %v2533 = vld [vmem:[%s11 + $0x208] sm:$0xf]
    %v2534 = vld [vmem:[%s11 + $0x20c] sm:$0xf]
    %v2535 = vld [vmem:[%s11 + $0x210] sm:$0xf]
    %v2536 = vld [vmem:[%s11 + $0x214] sm:$0xf]
    %v2537 = vld [vmem:[%s11 + $0x218] sm:$0xf]
    %v2538 = vld [vmem:[%s11 + $0x21c] sm:$0xf]
    %v2539 = vld [vmem:[%s11 + $0x220] sm:$0xf]
    %v2540 = vld [vmem:[%s11 + $0x224] sm:$0xf]
    %v2541 = vld [vmem:[%s11 + $0x228] sm:$0xf]
    %v2542 = vld [vmem:[%s11 + $0x22c] sm:$0xf]
    %v2543 = vld [vmem:[%s11 + $0x230] sm:$0xf]
    %v2544 = vld [vmem:[%s11 + $0x234] sm:$0xf]
    %v2545 = vld [vmem:[%s11 + $0x238] sm:$0xf]
    %v2546 = vld [vmem:[%s11 + $0x23c] sm:$0xf]
    %v2547 = vld [vmem:[%s11 + $0x240] sm:$0xf]
    %v2548 = vld [vmem:[%s11 + $0x244] sm:$0xf]
    %v2549 = vld [vmem:[%s11 + $0x248] sm:$0xf]
    %v2550 = vld [vmem:[%s11 + $0x24c] sm:$0xf]
    %v2551 = vld [vmem:[%s11 + $0x250] sm:$0xf]
    %v2552 = vld [vmem:[%s11 + $0x254] sm:$0xf]
    %v2553 = vld [vmem:[%s11 + $0x258] sm:$0xf]
    %v2554 = vld [vmem:[%s11 + $0x25c] sm:$0xf]
    %v2555 = vld [vmem:[%s11 + $0x260] sm:$0xf]
    %v2556 = vld [vmem:[%s11 + $0x264] sm:$0xf]
    %v2557 = vld [vmem:[%s11 + $0x268] sm:$0xf]
    %v2558 = vld [vmem:[%s11 + $0x26c] sm:$0xf]
    %v2559 = vld [vmem:[%s11 + $0x270] sm:$0xf]
    %v2560 = vld [vmem:[%s11 + $0x274] sm:$0xf]
    %v2561 = vld [vmem:[%s11 + $0x278] sm:$0xf]
    %v2562 = vld [vmem:[%s11 + $0x27c] sm:$0xf]
    %v2563 = vld [vmem:[%s11 + $0x280] sm:$0xf]
    %v2564 = vld [vmem:[%s11 + $0x284] sm:$0xf]
    %v2565 = vld [vmem:[%s11 + $0x288] sm:$0xf]
    %v2566 = vld [vmem:[%s11 + $0x28c] sm:$0xf]
    %v2567 = vld [vmem:[%s11 + $0x290] sm:$0xf]
    %v2568 = vld [vmem:[%s11 + $0x294] sm:$0xf]
    %v2569 = vld [vmem:[%s11 + $0x298] sm:$0xf]
    %v2570 = vld [vmem:[%s11 + $0x29c] sm:$0xf]
    %v2571 = vld [vmem:[%s11 + $0x2a0] sm:$0xf]
    %v2572 = vld [vmem:[%s11 + $0x2a4] sm:$0xf]
    %v2573 = vld [vmem:[%s11 + $0x2a8] sm:$0xf]
    %v2574 = vld [vmem:[%s11 + $0x2ac] sm:$0xf]
    %v2575 = vld [vmem:[%s11 + $0x2b0] sm:$0xf]
    %v2576 = vld [vmem:[%s11 + $0x2b4] sm:$0xf]
    %v2577 = vld [vmem:[%s11 + $0x2b8] sm:$0xf]
    %v2578 = vld [vmem:[%s11 + $0x2bc] sm:$0xf]
    %v2579 = vld [vmem:[%s11 + $0x2c0] sm:$0xf]
    %v2580 = vld [vmem:[%s11 + $0x2c4] sm:$0xf]
    %v2581 = vld [vmem:[%s11 + $0x2c8] sm:$0xf]
    %v2582 = vld [vmem:[%s11 + $0x2cc] sm:$0xf]
    %v2583 = vld [vmem:[%s11 + $0x2d0] sm:$0xf]
    %v2584 = vld [vmem:[%s11 + $0x2d4] sm:$0xf]
    %v2585 = vld [vmem:[%s11 + $0x2d8] sm:$0xf]
    %v2586 = vld [vmem:[%s11 + $0x2dc] sm:$0xf]
    %v2587 = vld [vmem:[%s11 + $0x2e0] sm:$0xf]
    %v2588 = vld [vmem:[%s11 + $0x2e4] sm:$0xf]
    %v2589 = vld [vmem:[%s11 + $0x2e8] sm:$0xf]
    %v2590 = vld [vmem:[%s11 + $0x2ec] sm:$0xf]
    %v2591 = vld [vmem:[%s11 + $0x2f0] sm:$0xf]
    %v2592 = vld [vmem:[%s11 + $0x2f4] sm:$0xf]
    %v2593 = vld [vmem:[%s11 + $0x2f8] sm:$0xf]
    %v2594 = vld [vmem:[%s11 + $0x2fc] sm:$0xf]
    %v2595 = vld [vmem:[%s11 + $0x300] sm:$0xf]
    %v2596 = vld [vmem:[%s11 + $0x304] sm:$0xf]
    %v2597 = vld [vmem:[%s11 + $0x308] sm:$0xf]
    %v2598 = vld [vmem:[%s11 + $0x30c] sm:$0xf]
    %v2599 = vld [vmem:[%s11 + $0x310] sm:$0xf]
    %v2600 = vld [vmem:[%s11 + $0x314] sm:$0xf]
    %v2601 = vld [vmem:[%s11 + $0x318] sm:$0xf]
    %v2602 = vld [vmem:[%s11 + $0x31c] sm:$0xf]
    %v2603 = vld [vmem:[%s11 + $0x320] sm:$0xf]
    %v2604 = vld [vmem:[%s11 + $0x324] sm:$0xf]
    %v2605 = vld [vmem:[%s11 + $0x328] sm:$0xf]
    %v2606 = vld [vmem:[%s11 + $0x32c] sm:$0xf]
    %v2607 = vld [vmem:[%s11 + $0x330] sm:$0xf]
    %v2608 = vld [vmem:[%s11 + $0x334] sm:$0xf]
    %v2609 = vld [vmem:[%s11 + $0x338] sm:$0xf]
    %v2610 = vld [vmem:[%s11 + $0x33c] sm:$0xf]
    %v2611 = vld [vmem:[%s11 + $0x340] sm:$0xf]
    %v2612 = vld [vmem:[%s11 + $0x344] sm:$0xf]
    %v2613 = vld [vmem:[%s11 + $0x348] sm:$0xf]
    %v2614 = vld [vmem:[%s11 + $0x34c] sm:$0xf]
    %v2615 = vld [vmem:[%s11 + $0x350] sm:$0xf]
    %v2616 = vld [vmem:[%s11 + $0x354] sm:$0xf]
    %v2617 = vld [vmem:[%s11 + $0x358] sm:$0xf]
    %v2618 = vld [vmem:[%s11 + $0x35c] sm:$0xf]
    %v2619 = vld [vmem:[%s11 + $0x360] sm:$0xf]
    %v2620 = vld [vmem:[%s11 + $0x364] sm:$0xf]
    %v2621 = vld [vmem:[%s11 + $0x368] sm:$0xf]
    %v2622 = vld [vmem:[%s11 + $0x36c] sm:$0xf]
    %v2623 = vld [vmem:[%s11 + $0x370] sm:$0xf]
    %v2624 = vld [vmem:[%s11 + $0x374] sm:$0xf]
    %v2625 = vld [vmem:[%s11 + $0x378] sm:$0xf]
    %v2626 = vld [vmem:[%s11 + $0x37c] sm:$0xf]
    %v2627 = vld [vmem:[%s11 + $0x380] sm:$0xf]
    %v2628 = vld [vmem:[%s11 + $0x384] sm:$0xf]
    %v2629 = vld [vmem:[%s11 + $0x388] sm:$0xf]
    %v2630 = vld [vmem:[%s11 + $0x38c] sm:$0xf]
    %v2631 = vld [vmem:[%s11 + $0x390] sm:$0xf]
    %v2632 = vld [vmem:[%s11 + $0x394] sm:$0xf]
    %v2633 = vld [vmem:[%s11 + $0x398] sm:$0xf]
    %v2634 = vld [vmem:[%s11 + $0x39c] sm:$0xf]
    %v2635 = vld [vmem:[%s11 + $0x3a0] sm:$0xf]
    %v2636 = vld [vmem:[%s11 + $0x3a4] sm:$0xf]
    %v2637 = vld [vmem:[%s11 + $0x3a8] sm:$0xf]
    %v2638 = vld [vmem:[%s11 + $0x3ac] sm:$0xf]
    %v2639 = vld [vmem:[%s11 + $0x3b0] sm:$0xf]
    %v2640 = vld [vmem:[%s11 + $0x3b4] sm:$0xf]
    %v2641 = vld [vmem:[%s11 + $0x3b8] sm:$0xf]
    %v2642 = vld [vmem:[%s11 + $0x3bc] sm:$0xf]
    %v2643 = vld [vmem:[%s11 + $0x3c0] sm:$0xf]
    %v2644 = vld [vmem:[%s11 + $0x3c4] sm:$0xf]
    %v2645 = vld [vmem:[%s11 + $0x3c8] sm:$0xf]
    %v2646 = vld [vmem:[%s11 + $0x3cc] sm:$0xf]
    %v2647 = vld [vmem:[%s11 + $0x3d0] sm:$0xf]
    %v2648 = vld [vmem:[%s11 + $0x3d4] sm:$0xf]
    %v2649 = vld [vmem:[%s11 + $0x3d8] sm:$0xf]
    %v2650 = vld [vmem:[%s11 + $0x3dc] sm:$0xf]
    %v2651 = vld [vmem:[%s11 + $0x3e0] sm:$0xf]
    %v2652 = vld [vmem:[%s11 + $0x3e4] sm:$0xf]
    %v2653 = vld [vmem:[%s11 + $0x3e8] sm:$0xf]
    %v2654 = vld [vmem:[%s11 + $0x3ec] sm:$0xf]
    %v2655 = vld [vmem:[%s11 + $0x3f0] sm:$0xf]
    %v2656 = vld [vmem:[%s11 + $0x3f4] sm:$0xf]
    %v2657 = vld [vmem:[%s11 + $0x3f8] sm:$0xf]
    %v2658 = vld [vmem:[%s11 + $0x3fc] sm:$0xf]
    %v2659 = vld [vmem:[%s12] sm:$0x1]
    %v2661 = vlaneseq
    %v2662 = vshrl.u32 %v2661, 7
    %v2663 = vsub.s32 0, %v2662
    %v2664 = vrot.slane %v2659, %v2663
    %v2922 = vunpack.c.l.b16 %v2403
    %v2923 = vunpack.c.l.b16 %v2404
    %v2924 = vunpack.c.l.b16 %v2405
    %v2925 = vunpack.c.l.b16 %v2406
    %v2926 = vunpack.c.l.b16 %v2407
    %v2927 = vunpack.c.l.b16 %v2408
    %v2928 = vunpack.c.l.b16 %v2409
    %v2929 = vunpack.c.l.b16 %v2410
    %v2930 = vunpack.c.l.b16 %v2411
    %v2931 = vunpack.c.l.b16 %v2412
    %v2932 = vunpack.c.l.b16 %v2413
    %v2933 = vunpack.c.l.b16 %v2414
    %v2934 = vunpack.c.l.b16 %v2415
    %v2935 = vunpack.c.l.b16 %v2416
    %v2936 = vunpack.c.l.b16 %v2417
    %v2937 = vunpack.c.l.b16 %v2418
    %v2938 = vunpack.c.l.b16 %v2419
    %v2939 = vunpack.c.l.b16 %v2420
    %v2940 = vunpack.c.l.b16 %v2421
    %v2941 = vunpack.c.l.b16 %v2422
    %v2942 = vunpack.c.l.b16 %v2423
    %v2943 = vunpack.c.l.b16 %v2424
    %v2944 = vunpack.c.l.b16 %v2425
    %v2945 = vunpack.c.l.b16 %v2426
    %v2946 = vunpack.c.l.b16 %v2427
    %v2947 = vunpack.c.l.b16 %v2428
    %v2948 = vunpack.c.l.b16 %v2429
    %v2949 = vunpack.c.l.b16 %v2430
    %v2950 = vunpack.c.l.b16 %v2431
    %v2951 = vunpack.c.l.b16 %v2432
    %v2952 = vunpack.c.l.b16 %v2433
    %v2953 = vunpack.c.l.b16 %v2434
    %v2954 = vunpack.c.l.b16 %v2435
    %v2955 = vunpack.c.l.b16 %v2436
    %v2956 = vunpack.c.l.b16 %v2437
    %v2957 = vunpack.c.l.b16 %v2438
    %v2958 = vunpack.c.l.b16 %v2439
    %v2959 = vunpack.c.l.b16 %v2440
    %v2960 = vunpack.c.l.b16 %v2441
    %v2961 = vunpack.c.l.b16 %v2442
    %v2962 = vunpack.c.l.b16 %v2443
    %v2963 = vunpack.c.l.b16 %v2444
    %v2964 = vunpack.c.l.b16 %v2445
    %v2965 = vunpack.c.l.b16 %v2446
    %v2966 = vunpack.c.l.b16 %v2447
    %v2967 = vunpack.c.l.b16 %v2448
    %v2968 = vunpack.c.l.b16 %v2449
    %v2969 = vunpack.c.l.b16 %v2450
    %v2970 = vunpack.c.l.b16 %v2451
    %v2971 = vunpack.c.l.b16 %v2452
    %v2972 = vunpack.c.l.b16 %v2453
    %v2973 = vunpack.c.l.b16 %v2454
    %v2974 = vunpack.c.l.b16 %v2455
    %v2975 = vunpack.c.l.b16 %v2456
    %v2976 = vunpack.c.l.b16 %v2457
    %v2977 = vunpack.c.l.b16 %v2458
    %v2978 = vunpack.c.l.b16 %v2459
    %v2979 = vunpack.c.l.b16 %v2460
    %v2980 = vunpack.c.l.b16 %v2461
    %v2981 = vunpack.c.l.b16 %v2462
    %v2982 = vunpack.c.l.b16 %v2463
    %v2983 = vunpack.c.l.b16 %v2464
    %v2984 = vunpack.c.l.b16 %v2465
    %v2985 = vunpack.c.l.b16 %v2466
    %v2986 = vunpack.c.l.b16 %v2467
    %v2987 = vunpack.c.l.b16 %v2468
    %v2988 = vunpack.c.l.b16 %v2469
    %v2989 = vunpack.c.l.b16 %v2470
    %v2990 = vunpack.c.l.b16 %v2471
    %v2991 = vunpack.c.l.b16 %v2472
    %v2992 = vunpack.c.l.b16 %v2473
    %v2993 = vunpack.c.l.b16 %v2474
    %v2994 = vunpack.c.l.b16 %v2475
    %v2995 = vunpack.c.l.b16 %v2476
    %v2996 = vunpack.c.l.b16 %v2477
    %v2997 = vunpack.c.l.b16 %v2478
    %v2998 = vunpack.c.l.b16 %v2479
    %v2999 = vunpack.c.l.b16 %v2480
    %v3000 = vunpack.c.l.b16 %v2481
    %v3001 = vunpack.c.l.b16 %v2482
    %v3002 = vunpack.c.l.b16 %v2483
    %v3003 = vunpack.c.l.b16 %v2484
    %v3004 = vunpack.c.l.b16 %v2485
    %v3005 = vunpack.c.l.b16 %v2486
    %v3006 = vunpack.c.l.b16 %v2487
    %v3007 = vunpack.c.l.b16 %v2488
    %v3008 = vunpack.c.l.b16 %v2489
    %v3009 = vunpack.c.l.b16 %v2490
    %v3010 = vunpack.c.l.b16 %v2491
    %v3011 = vunpack.c.l.b16 %v2492
    %v3012 = vunpack.c.l.b16 %v2493
    %v3013 = vunpack.c.l.b16 %v2494
    %v3014 = vunpack.c.l.b16 %v2495
    %v3015 = vunpack.c.l.b16 %v2496
    %v3016 = vunpack.c.l.b16 %v2497
    %v3017 = vunpack.c.l.b16 %v2498
    %v3018 = vunpack.c.l.b16 %v2499
    %v3019 = vunpack.c.l.b16 %v2500
    %v3020 = vunpack.c.l.b16 %v2501
    %v3021 = vunpack.c.l.b16 %v2502
    %v3022 = vunpack.c.l.b16 %v2503
    %v3023 = vunpack.c.l.b16 %v2504
    %v3024 = vunpack.c.l.b16 %v2505
    %v3025 = vunpack.c.l.b16 %v2506
    %v3026 = vunpack.c.l.b16 %v2507
    %v3027 = vunpack.c.l.b16 %v2508
    %v3028 = vunpack.c.l.b16 %v2509
    %v3029 = vunpack.c.l.b16 %v2510
    %v3030 = vunpack.c.l.b16 %v2511
    %v3031 = vunpack.c.l.b16 %v2512
    %v3032 = vunpack.c.l.b16 %v2513
    %v3033 = vunpack.c.l.b16 %v2514
    %v3034 = vunpack.c.l.b16 %v2515
    %v3035 = vunpack.c.l.b16 %v2516
    %v3036 = vunpack.c.l.b16 %v2517
    %v3037 = vunpack.c.l.b16 %v2518
    %v3038 = vunpack.c.l.b16 %v2519
    %v3039 = vunpack.c.l.b16 %v2520
    %v3040 = vunpack.c.l.b16 %v2521
    %v3041 = vunpack.c.l.b16 %v2522
    %v3042 = vunpack.c.l.b16 %v2523
    %v3043 = vunpack.c.l.b16 %v2524
    %v3044 = vunpack.c.l.b16 %v2525
    %v3045 = vunpack.c.l.b16 %v2526
    %v3046 = vunpack.c.l.b16 %v2527
    %v3047 = vunpack.c.l.b16 %v2528
    %v3048 = vunpack.c.l.b16 %v2529
    %v3049 = vunpack.c.l.b16 %v2530
    %v3050 = vunpack.c.l.b16 %v2531
    %v3051 = vunpack.c.l.b16 %v2532
    %v3052 = vunpack.c.l.b16 %v2533
    %v3053 = vunpack.c.l.b16 %v2534
    %v3054 = vunpack.c.l.b16 %v2535
    %v3055 = vunpack.c.l.b16 %v2536
    %v3056 = vunpack.c.l.b16 %v2537
    %v3057 = vunpack.c.l.b16 %v2538
    %v3058 = vunpack.c.l.b16 %v2539
    %v3059 = vunpack.c.l.b16 %v2540
    %v3060 = vunpack.c.l.b16 %v2541
    %v3061 = vunpack.c.l.b16 %v2542
    %v3062 = vunpack.c.l.b16 %v2543
    %v3063 = vunpack.c.l.b16 %v2544
    %v3064 = vunpack.c.l.b16 %v2545
    %v3065 = vunpack.c.l.b16 %v2546
    %v3066 = vunpack.c.l.b16 %v2547
    %v3067 = vunpack.c.l.b16 %v2548
    %v3068 = vunpack.c.l.b16 %v2549
    %v3069 = vunpack.c.l.b16 %v2550
    %v3070 = vunpack.c.l.b16 %v2551
    %v3071 = vunpack.c.l.b16 %v2552
    %v3072 = vunpack.c.l.b16 %v2553
    %v3073 = vunpack.c.l.b16 %v2554
    %v3074 = vunpack.c.l.b16 %v2555
    %v3075 = vunpack.c.l.b16 %v2556
    %v3076 = vunpack.c.l.b16 %v2557
    %v3077 = vunpack.c.l.b16 %v2558
    %v3078 = vunpack.c.l.b16 %v2559
    %v3079 = vunpack.c.l.b16 %v2560
    %v3080 = vunpack.c.l.b16 %v2561
    %v3081 = vunpack.c.l.b16 %v2562
    %v3082 = vunpack.c.l.b16 %v2563
    %v3083 = vunpack.c.l.b16 %v2564
    %v3084 = vunpack.c.l.b16 %v2565
    %v3085 = vunpack.c.l.b16 %v2566
    %v3086 = vunpack.c.l.b16 %v2567
    %v3087 = vunpack.c.l.b16 %v2568
    %v3088 = vunpack.c.l.b16 %v2569
    %v3089 = vunpack.c.l.b16 %v2570
    %v3090 = vunpack.c.l.b16 %v2571
    %v3091 = vunpack.c.l.b16 %v2572
    %v3092 = vunpack.c.l.b16 %v2573
    %v3093 = vunpack.c.l.b16 %v2574
    %v3094 = vunpack.c.l.b16 %v2575
    %v3095 = vunpack.c.l.b16 %v2576
    %v3096 = vunpack.c.l.b16 %v2577
    %v3097 = vunpack.c.l.b16 %v2578
    %v3098 = vunpack.c.l.b16 %v2579
    %v3099 = vunpack.c.l.b16 %v2580
    %v3100 = vunpack.c.l.b16 %v2581
    %v3101 = vunpack.c.l.b16 %v2582
    %v3102 = vunpack.c.l.b16 %v2583
    %v3103 = vunpack.c.l.b16 %v2584
    %v3104 = vunpack.c.l.b16 %v2585
    %v3105 = vunpack.c.l.b16 %v2586
    %v3106 = vunpack.c.l.b16 %v2587
    %v3107 = vunpack.c.l.b16 %v2588
    %v3108 = vunpack.c.l.b16 %v2589
    %v3109 = vunpack.c.l.b16 %v2590
    %v3110 = vunpack.c.l.b16 %v2591
    %v3111 = vunpack.c.l.b16 %v2592
    %v3112 = vunpack.c.l.b16 %v2593
    %v3113 = vunpack.c.l.b16 %v2594
    %v3114 = vunpack.c.l.b16 %v2595
    %v3115 = vunpack.c.l.b16 %v2596
    %v3116 = vunpack.c.l.b16 %v2597
    %v3117 = vunpack.c.l.b16 %v2598
    %v3118 = vunpack.c.l.b16 %v2599
    %v3119 = vunpack.c.l.b16 %v2600
    %v3120 = vunpack.c.l.b16 %v2601
    %v3121 = vunpack.c.l.b16 %v2602
    %v3122 = vunpack.c.l.b16 %v2603
    %v3123 = vunpack.c.l.b16 %v2604
    %v3124 = vunpack.c.l.b16 %v2605
    %v3125 = vunpack.c.l.b16 %v2606
    %v3126 = vunpack.c.l.b16 %v2607
    %v3127 = vunpack.c.l.b16 %v2608
    %v3128 = vunpack.c.l.b16 %v2609
    %v3129 = vunpack.c.l.b16 %v2610
    %v3130 = vunpack.c.l.b16 %v2611
    %v3131 = vunpack.c.l.b16 %v2612
    %v3132 = vunpack.c.l.b16 %v2613
    %v3133 = vunpack.c.l.b16 %v2614
    %v3134 = vunpack.c.l.b16 %v2615
    %v3135 = vunpack.c.l.b16 %v2616
    %v3136 = vunpack.c.l.b16 %v2617
    %v3137 = vunpack.c.l.b16 %v2618
    %v3138 = vunpack.c.l.b16 %v2619
    %v3139 = vunpack.c.l.b16 %v2620
    %v3140 = vunpack.c.l.b16 %v2621
    %v3141 = vunpack.c.l.b16 %v2622
    %v3142 = vunpack.c.l.b16 %v2623
    %v3143 = vunpack.c.l.b16 %v2624
    %v3144 = vunpack.c.l.b16 %v2625
    %v3145 = vunpack.c.l.b16 %v2626
    %v3146 = vunpack.c.l.b16 %v2627
    %v3147 = vunpack.c.l.b16 %v2628
    %v3148 = vunpack.c.l.b16 %v2629
    %v3149 = vunpack.c.l.b16 %v2630
    %v3150 = vunpack.c.l.b16 %v2631
    %v3151 = vunpack.c.l.b16 %v2632
    %v3152 = vunpack.c.l.b16 %v2633
    %v3153 = vunpack.c.l.b16 %v2634
    %v3154 = vunpack.c.l.b16 %v2635
    %v3155 = vunpack.c.l.b16 %v2636
    %v3156 = vunpack.c.l.b16 %v2637
    %v3157 = vunpack.c.l.b16 %v2638
    %v3158 = vunpack.c.l.b16 %v2639
    %v3159 = vunpack.c.l.b16 %v2640
    %v3160 = vunpack.c.l.b16 %v2641
    %v3161 = vunpack.c.l.b16 %v2642
    %v3162 = vunpack.c.l.b16 %v2643
    %v3163 = vunpack.c.l.b16 %v2644
    %v3164 = vunpack.c.l.b16 %v2645
    %v3165 = vunpack.c.l.b16 %v2646
    %v3166 = vunpack.c.l.b16 %v2647
    %v3167 = vunpack.c.l.b16 %v2648
    %v3168 = vunpack.c.l.b16 %v2649
    %v3169 = vunpack.c.l.b16 %v2650
    %v3170 = vunpack.c.l.b16 %v2651
    %v3171 = vunpack.c.l.b16 %v2652
    %v3172 = vunpack.c.l.b16 %v2653
    %v3173 = vunpack.c.l.b16 %v2654
    %v3174 = vunpack.c.l.b16 %v2655
    %v3175 = vunpack.c.l.b16 %v2656
    %v3176 = vunpack.c.l.b16 %v2657
    %v3177 = vunpack.c.l.b16 %v2658
    %v3178 = vpack.c.b16 %v2923, %v2922
    %v3179 = vpack.c.b16 %v2925, %v2924
    %v3180 = vpack.c.b16 %v2927, %v2926
    %v3181 = vpack.c.b16 %v2929, %v2928
    %v3182 = vpack.c.b16 %v2931, %v2930
    %v3183 = vpack.c.b16 %v2933, %v2932
    %v3184 = vpack.c.b16 %v2935, %v2934
    %v3185 = vpack.c.b16 %v2937, %v2936
    %v3186 = vpack.c.b16 %v2939, %v2938
    %v3187 = vpack.c.b16 %v2941, %v2940
    %v3188 = vpack.c.b16 %v2943, %v2942
    %v3189 = vpack.c.b16 %v2945, %v2944
    %v3190 = vpack.c.b16 %v2947, %v2946
    %v3191 = vpack.c.b16 %v2949, %v2948
    %v3192 = vpack.c.b16 %v2951, %v2950
    %v3193 = vpack.c.b16 %v2953, %v2952
    %v3194 = vpack.c.b16 %v2955, %v2954
    %v3195 = vpack.c.b16 %v2957, %v2956
    %v3196 = vpack.c.b16 %v2959, %v2958
    %v3197 = vpack.c.b16 %v2961, %v2960
    %v3198 = vpack.c.b16 %v2963, %v2962
    %v3199 = vpack.c.b16 %v2965, %v2964
    %v3200 = vpack.c.b16 %v2967, %v2966
    %v3201 = vpack.c.b16 %v2969, %v2968
    %v3202 = vpack.c.b16 %v2971, %v2970
    %v3203 = vpack.c.b16 %v2973, %v2972
    %v3204 = vpack.c.b16 %v2975, %v2974
    %v3205 = vpack.c.b16 %v2977, %v2976
    %v3206 = vpack.c.b16 %v2979, %v2978
    %v3207 = vpack.c.b16 %v2981, %v2980
    %v3208 = vpack.c.b16 %v2983, %v2982
    %v3209 = vpack.c.b16 %v2985, %v2984
    %v3210 = vpack.c.b16 %v2987, %v2986
    %v3211 = vpack.c.b16 %v2989, %v2988
    %v3212 = vpack.c.b16 %v2991, %v2990
    %v3213 = vpack.c.b16 %v2993, %v2992
    %v3214 = vpack.c.b16 %v2995, %v2994
    %v3215 = vpack.c.b16 %v2997, %v2996
    %v3216 = vpack.c.b16 %v2999, %v2998
    %v3217 = vpack.c.b16 %v3001, %v3000
    %v3218 = vpack.c.b16 %v3003, %v3002
    %v3219 = vpack.c.b16 %v3005, %v3004
    %v3220 = vpack.c.b16 %v3007, %v3006
    %v3221 = vpack.c.b16 %v3009, %v3008
    %v3222 = vpack.c.b16 %v3011, %v3010
    %v3223 = vpack.c.b16 %v3013, %v3012
    %v3224 = vpack.c.b16 %v3015, %v3014
    %v3225 = vpack.c.b16 %v3017, %v3016
    %v3226 = vpack.c.b16 %v3019, %v3018
    %v3227 = vpack.c.b16 %v3021, %v3020
    %v3228 = vpack.c.b16 %v3023, %v3022
    %v3229 = vpack.c.b16 %v3025, %v3024
    %v3230 = vpack.c.b16 %v3027, %v3026
    %v3231 = vpack.c.b16 %v3029, %v3028
    %v3232 = vpack.c.b16 %v3031, %v3030
    %v3233 = vpack.c.b16 %v3033, %v3032
    %v3234 = vpack.c.b16 %v3035, %v3034
    %v3235 = vpack.c.b16 %v3037, %v3036
    %v3236 = vpack.c.b16 %v3039, %v3038
    %v3237 = vpack.c.b16 %v3041, %v3040
    %v3238 = vpack.c.b16 %v3043, %v3042
    %v3239 = vpack.c.b16 %v3045, %v3044
    %v3240 = vpack.c.b16 %v3047, %v3046
    %v3241 = vpack.c.b16 %v3049, %v3048
    %v3242 = vpack.c.b16 %v3051, %v3050
    %v3243 = vpack.c.b16 %v3053, %v3052
    %v3244 = vpack.c.b16 %v3055, %v3054
    %v3245 = vpack.c.b16 %v3057, %v3056
    %v3246 = vpack.c.b16 %v3059, %v3058
    %v3247 = vpack.c.b16 %v3061, %v3060
    %v3248 = vpack.c.b16 %v3063, %v3062
    %v3249 = vpack.c.b16 %v3065, %v3064
    %v3250 = vpack.c.b16 %v3067, %v3066
    %v3251 = vpack.c.b16 %v3069, %v3068
    %v3252 = vpack.c.b16 %v3071, %v3070
    %v3253 = vpack.c.b16 %v3073, %v3072
    %v3254 = vpack.c.b16 %v3075, %v3074
    %v3255 = vpack.c.b16 %v3077, %v3076
    %v3256 = vpack.c.b16 %v3079, %v3078
    %v3257 = vpack.c.b16 %v3081, %v3080
    %v3258 = vpack.c.b16 %v3083, %v3082
    %v3259 = vpack.c.b16 %v3085, %v3084
    %v3260 = vpack.c.b16 %v3087, %v3086
    %v3261 = vpack.c.b16 %v3089, %v3088
    %v3262 = vpack.c.b16 %v3091, %v3090
    %v3263 = vpack.c.b16 %v3093, %v3092
    %v3264 = vpack.c.b16 %v3095, %v3094
    %v3265 = vpack.c.b16 %v3097, %v3096
    %v3266 = vpack.c.b16 %v3099, %v3098
    %v3267 = vpack.c.b16 %v3101, %v3100
    %v3268 = vpack.c.b16 %v3103, %v3102
    %v3269 = vpack.c.b16 %v3105, %v3104
    %v3270 = vpack.c.b16 %v3107, %v3106
    %v3271 = vpack.c.b16 %v3109, %v3108
    %v3272 = vpack.c.b16 %v3111, %v3110
    %v3273 = vpack.c.b16 %v3113, %v3112
    %v3274 = vpack.c.b16 %v3115, %v3114
    %v3275 = vpack.c.b16 %v3117, %v3116
    %v3276 = vpack.c.b16 %v3119, %v3118
    %v3277 = vpack.c.b16 %v3121, %v3120
    %v3278 = vpack.c.b16 %v3123, %v3122
    %v3279 = vpack.c.b16 %v3125, %v3124
    %v3280 = vpack.c.b16 %v3127, %v3126
    %v3281 = vpack.c.b16 %v3129, %v3128
    %v3282 = vpack.c.b16 %v3131, %v3130
    %v3283 = vpack.c.b16 %v3133, %v3132
    %v3284 = vpack.c.b16 %v3135, %v3134
    %v3285 = vpack.c.b16 %v3137, %v3136
    %v3286 = vpack.c.b16 %v3139, %v3138
    %v3287 = vpack.c.b16 %v3141, %v3140
    %v3288 = vpack.c.b16 %v3143, %v3142
    %v3289 = vpack.c.b16 %v3145, %v3144
    %v3290 = vpack.c.b16 %v3147, %v3146
    %v3291 = vpack.c.b16 %v3149, %v3148
    %v3292 = vpack.c.b16 %v3151, %v3150
    %v3293 = vpack.c.b16 %v3153, %v3152
    %v3294 = vpack.c.b16 %v3155, %v3154
    %v3295 = vpack.c.b16 %v3157, %v3156
    %v3296 = vpack.c.b16 %v3159, %v3158
    %v3297 = vpack.c.b16 %v3161, %v3160
    %v3298 = vpack.c.b16 %v3163, %v3162
    %v3299 = vpack.c.b16 %v3165, %v3164
    %v3300 = vpack.c.b16 %v3167, %v3166
    %v3301 = vpack.c.b16 %v3169, %v3168
    %v3302 = vpack.c.b16 %v3171, %v3170
    %v3303 = vpack.c.b16 %v3173, %v3172
    %v3304 = vpack.c.b16 %v3175, %v3174
    %v3305 = vpack.c.b16 %v3177, %v3176
    %3434 = vmatprep.subr.bf16.mxu0 0
    %3435 = vmatpush1.bf16.msra.mxu0 %v3178
    %3436 = vmatprep.subr.bf16.mxu0 0
    %3437 = vmatpush1.bf16.msra.mxu0 %v3179
    %3438 = vmatprep.subr.bf16.mxu0 0
    %3439 = vmatpush1.bf16.msra.mxu0 %v3180
    %3440 = vmatprep.subr.bf16.mxu0 0
    %3441 = vmatpush1.bf16.msra.mxu0 %v3181
    %3442 = vmatprep.subr.bf16.mxu0 0
    %3443 = vmatpush1.bf16.msra.mxu0 %v3182
    %3444 = vmatprep.subr.bf16.mxu0 0
    %3445 = vmatpush1.bf16.msra.mxu0 %v3183
    %3446 = vmatprep.subr.bf16.mxu0 0
    %3447 = vmatpush1.bf16.msra.mxu0 %v3184
    %3448 = vmatprep.subr.bf16.mxu0 0
    %3449 = vmatpush1.bf16.msra.mxu0 %v3185
    %3450 = vmatprep.subr.bf16.mxu0 0
    %3451 = vmatpush1.bf16.msra.mxu0 %v3186
    %3452 = vmatprep.subr.bf16.mxu0 0
    %3453 = vmatpush1.bf16.msra.mxu0 %v3187
    %3454 = vmatprep.subr.bf16.mxu0 0
    %3455 = vmatpush1.bf16.msra.mxu0 %v3188
    %3456 = vmatprep.subr.bf16.mxu0 0
    %3457 = vmatpush1.bf16.msra.mxu0 %v3189
    %3458 = vmatprep.subr.bf16.mxu0 0
    %3459 = vmatpush1.bf16.msra.mxu0 %v3190
    %3460 = vmatprep.subr.bf16.mxu0 0
    %3461 = vmatpush1.bf16.msra.mxu0 %v3191
    %3462 = vmatprep.subr.bf16.mxu0 0
    %3463 = vmatpush1.bf16.msra.mxu0 %v3192
    %3464 = vmatprep.subr.bf16.mxu0 0
    %3465 = vmatpush1.bf16.msra.mxu0 %v3193
    %3466 = vmatprep.mubr.bf16.mxu0 %v2388
    %3467 = vmatmul.mubr.bf16.gmra.mrb[0].mxu0 %v2387
    %v3468 = vpop.f32.mrb[0].mxu0
    %v3469 = vadd.f32 %v2664, %v3468
    %v3470 = vpop.f32.mrb[0].mxu0
    %v3471 = vpop.f32.mrb[0].mxu0
    %v3472 = vadd.f32 %v2664, %v3471
    %v3473 = vpop.f32.mrb[0].mxu0
    %3474 = vdwg.mxu0
    %3475 = vmatprep.subr.bf16.mxu0 0
    %3476 = vmatpush1.bf16.msra.mxu0 %v3194
    %3477 = vmatprep.subr.bf16.mxu0 0
    %3478 = vmatpush1.bf16.msra.mxu0 %v3195
    %3479 = vmatprep.subr.bf16.mxu0 0
    %3480 = vmatpush1.bf16.msra.mxu0 %v3196
    %3481 = vmatprep.subr.bf16.mxu0 0
    %3482 = vmatpush1.bf16.msra.mxu0 %v3197
    %3483 = vmatprep.subr.bf16.mxu0 0
    %3484 = vmatpush1.bf16.msra.mxu0 %v3198
    %3485 = vmatprep.subr.bf16.mxu0 0
    %3486 = vmatpush1.bf16.msra.mxu0 %v3199
    %3487 = vmatprep.subr.bf16.mxu0 0
    %3488 = vmatpush1.bf16.msra.mxu0 %v3200
    %3489 = vmatprep.subr.bf16.mxu0 0
    %3490 = vmatpush1.bf16.msra.mxu0 %v3201
    %3491 = vmatprep.subr.bf16.mxu0 0
    %3492 = vmatpush1.bf16.msra.mxu0 %v3202
    %3493 = vmatprep.subr.bf16.mxu0 0
    %3494 = vmatpush1.bf16.msra.mxu0 %v3203
    %3495 = vmatprep.subr.bf16.mxu0 0
    %3496 = vmatpush1.bf16.msra.mxu0 %v3204
    %3497 = vmatprep.subr.bf16.mxu0 0
    %3498 = vmatpush1.bf16.msra.mxu0 %v3205
    %3499 = vmatprep.subr.bf16.mxu0 0
    %3500 = vmatpush1.bf16.msra.mxu0 %v3206
    %3501 = vmatprep.subr.bf16.mxu0 0
    %3502 = vmatpush1.bf16.msra.mxu0 %v3207
    %3503 = vmatprep.subr.bf16.mxu0 0
    %3504 = vmatpush1.bf16.msra.mxu0 %v3208
    %3505 = vmatprep.subr.bf16.mxu0 0
    %3506 = vmatpush1.bf16.msra.mxu0 %v3209
    %3507 = vmatprep.mubr.bf16.mxu0 %v2390
    %3508 = vmatmul.mubr.bf16.gmra.mrb[0].mxu0 %v2389
    %v3509 = vpop.f32.mrb[0].mxu0
    %v3510 = vadd.f32 %v3469, %v3509
    %v3511 = vpop.f32.mrb[0].mxu0
    %v3512 = vpop.f32.mrb[0].mxu0
    %v3513 = vadd.f32 %v3472, %v3512
    %v3514 = vpop.f32.mrb[0].mxu0
    %3515 = vdwg.mxu0
    %3516 = vmatprep.subr.bf16.mxu0 0
    %3517 = vmatpush1.bf16.msra.mxu0 %v3210
    %3518 = vmatprep.subr.bf16.mxu0 0
    %3519 = vmatpush1.bf16.msra.mxu0 %v3211
    %3520 = vmatprep.subr.bf16.mxu0 0
    %3521 = vmatpush1.bf16.msra.mxu0 %v3212
    %3522 = vmatprep.subr.bf16.mxu0 0
    %3523 = vmatpush1.bf16.msra.mxu0 %v3213
    %3524 = vmatprep.subr.bf16.mxu0 0
    %3525 = vmatpush1.bf16.msra.mxu0 %v3214
    %3526 = vmatprep.subr.bf16.mxu0 0
    %3527 = vmatpush1.bf16.msra.mxu0 %v3215
    %3528 = vmatprep.subr.bf16.mxu0 0
    %3529 = vmatpush1.bf16.msra.mxu0 %v3216
    %3530 = vmatprep.subr.bf16.mxu0 0
    %3531 = vmatpush1.bf16.msra.mxu0 %v3217
    %3532 = vmatprep.subr.bf16.mxu0 0
    %3533 = vmatpush1.bf16.msra.mxu0 %v3218
    %3534 = vmatprep.subr.bf16.mxu0 0
    %3535 = vmatpush1.bf16.msra.mxu0 %v3219
    %3536 = vmatprep.subr.bf16.mxu0 0
    %3537 = vmatpush1.bf16.msra.mxu0 %v3220
    %3538 = vmatprep.subr.bf16.mxu0 0
    %3539 = vmatpush1.bf16.msra.mxu0 %v3221
    %3540 = vmatprep.subr.bf16.mxu0 0
    %3541 = vmatpush1.bf16.msra.mxu0 %v3222
    %3542 = vmatprep.subr.bf16.mxu0 0
    %3543 = vmatpush1.bf16.msra.mxu0 %v3223
    %3544 = vmatprep.subr.bf16.mxu0 0
    %3545 = vmatpush1.bf16.msra.mxu0 %v3224
    %3546 = vmatprep.subr.bf16.mxu0 0
    %3547 = vmatpush1.bf16.msra.mxu0 %v3225
    %3548 = vmatprep.mubr.bf16.mxu0 %v2392
    %3549 = vmatmul.mubr.bf16.gmra.mrb[0].mxu0 %v2391
    %v3550 = vpop.f32.mrb[0].mxu0
    %v3551 = vadd.f32 %v3510, %v3550
    %v3552 = vpop.f32.mrb[0].mxu0
    %v3553 = vpop.f32.mrb[0].mxu0
    %v3554 = vadd.f32 %v3513, %v3553
    %v3555 = vpop.f32.mrb[0].mxu0
    %3556 = vdwg.mxu0
    %3557 = vmatprep.subr.bf16.mxu0 0
    %3558 = vmatpush1.bf16.msra.mxu0 %v3226
    %3559 = vmatprep.subr.bf16.mxu0 0
    %3560 = vmatpush1.bf16.msra.mxu0 %v3227
    %3561 = vmatprep.subr.bf16.mxu0 0
    %3562 = vmatpush1.bf16.msra.mxu0 %v3228
    %3563 = vmatprep.subr.bf16.mxu0 0
    %3564 = vmatpush1.bf16.msra.mxu0 %v3229
    %3565 = vmatprep.subr.bf16.mxu0 0
    %3566 = vmatpush1.bf16.msra.mxu0 %v3230
    %3567 = vmatprep.subr.bf16.mxu0 0
    %3568 = vmatpush1.bf16.msra.mxu0 %v3231
    %3569 = vmatprep.subr.bf16.mxu0 0
    %3570 = vmatpush1.bf16.msra.mxu0 %v3232
    %3571 = vmatprep.subr.bf16.mxu0 0
    %3572 = vmatpush1.bf16.msra.mxu0 %v3233
    %3573 = vmatprep.subr.bf16.mxu0 0
    %3574 = vmatpush1.bf16.msra.mxu0 %v3234
    %3575 = vmatprep.subr.bf16.mxu0 0
    %3576 = vmatpush1.bf16.msra.mxu0 %v3235
    %3577 = vmatprep.subr.bf16.mxu0 0
    %3578 = vmatpush1.bf16.msra.mxu0 %v3236
    %3579 = vmatprep.subr.bf16.mxu0 0
    %3580 = vmatpush1.bf16.msra.mxu0 %v3237
    %3581 = vmatprep.subr.bf16.mxu0 0
    %3582 = vmatpush1.bf16.msra.mxu0 %v3238
    %3583 = vmatprep.subr.bf16.mxu0 0
    %3584 = vmatpush1.bf16.msra.mxu0 %v3239
    %3585 = vmatprep.subr.bf16.mxu0 0
    %3586 = vmatpush1.bf16.msra.mxu0 %v3240
    %3587 = vmatprep.subr.bf16.mxu0 0
    %3588 = vmatpush1.bf16.msra.mxu0 %v3241
    %3589 = vmatprep.mubr.bf16.mxu0 %v2394
    %3590 = vmatmul.mubr.bf16.gmra.mrb[0].mxu0 %v2393
    %v3591 = vpop.f32.mrb[0].mxu0
    %v3592 = vadd.f32 %v3551, %v3591
    %v3593 = vpop.f32.mrb[0].mxu0
    %v3594 = vpop.f32.mrb[0].mxu0
    %v3595 = vadd.f32 %v3554, %v3594
    %v3596 = vpop.f32.mrb[0].mxu0
    %3597 = vdwg.mxu0
    %3598 = vmatprep.subr.bf16.mxu0 0
    %3599 = vmatpush1.bf16.msra.mxu0 %v3242
    %3600 = vmatprep.subr.bf16.mxu0 0
    %3601 = vmatpush1.bf16.msra.mxu0 %v3243
    %3602 = vmatprep.subr.bf16.mxu0 0
    %3603 = vmatpush1.bf16.msra.mxu0 %v3244
    %3604 = vmatprep.subr.bf16.mxu0 0
    %3605 = vmatpush1.bf16.msra.mxu0 %v3245
    %3606 = vmatprep.subr.bf16.mxu0 0
    %3607 = vmatpush1.bf16.msra.mxu0 %v3246
    %3608 = vmatprep.subr.bf16.mxu0 0
    %3609 = vmatpush1.bf16.msra.mxu0 %v3247
    %3610 = vmatprep.subr.bf16.mxu0 0
    %3611 = vmatpush1.bf16.msra.mxu0 %v3248
    %3612 = vmatprep.subr.bf16.mxu0 0
    %3613 = vmatpush1.bf16.msra.mxu0 %v3249
    %3614 = vmatprep.subr.bf16.mxu0 0
    %3615 = vmatpush1.bf16.msra.mxu0 %v3250
    %3616 = vmatprep.subr.bf16.mxu0 0
    %3617 = vmatpush1.bf16.msra.mxu0 %v3251
    %3618 = vmatprep.subr.bf16.mxu0 0
    %3619 = vmatpush1.bf16.msra.mxu0 %v3252
    %3620 = vmatprep.subr.bf16.mxu0 0
    %3621 = vmatpush1.bf16.msra.mxu0 %v3253
    %3622 = vmatprep.subr.bf16.mxu0 0
    %3623 = vmatpush1.bf16.msra.mxu0 %v3254
    %3624 = vmatprep.subr.bf16.mxu0 0
    %3625 = vmatpush1.bf16.msra.mxu0 %v3255
    %3626 = vmatprep.subr.bf16.mxu0 0
    %3627 = vmatpush1.bf16.msra.mxu0 %v3256
    %3628 = vmatprep.subr.bf16.mxu0 0
    %3629 = vmatpush1.bf16.msra.mxu0 %v3257
    %3630 = vmatprep.mubr.bf16.mxu0 %v2396
    %3631 = vmatmul.mubr.bf16.gmra.mrb[0].mxu0 %v2395
    %v3632 = vpop.f32.mrb[0].mxu0
    %v3633 = vadd.f32 %v3592, %v3632
    %v3634 = vpop.f32.mrb[0].mxu0
    %v3635 = vpop.f32.mrb[0].mxu0
    %v3636 = vadd.f32 %v3595, %v3635
    %v3637 = vpop.f32.mrb[0].mxu0
    %3638 = vdwg.mxu0
    %3639 = vmatprep.subr.bf16.mxu0 0
    %3640 = vmatpush1.bf16.msra.mxu0 %v3258
    %3641 = vmatprep.subr.bf16.mxu0 0
    %3642 = vmatpush1.bf16.msra.mxu0 %v3259
    %3643 = vmatprep.subr.bf16.mxu0 0
    %3644 = vmatpush1.bf16.msra.mxu0 %v3260
    %3645 = vmatprep.subr.bf16.mxu0 0
    %3646 = vmatpush1.bf16.msra.mxu0 %v3261
    %3647 = vmatprep.subr.bf16.mxu0 0
    %3648 = vmatpush1.bf16.msra.mxu0 %v3262
    %3649 = vmatprep.subr.bf16.mxu0 0
    %3650 = vmatpush1.bf16.msra.mxu0 %v3263
    %3651 = vmatprep.subr.bf16.mxu0 0
    %3652 = vmatpush1.bf16.msra.mxu0 %v3264
    %3653 = vmatprep.subr.bf16.mxu0 0
    %3654 = vmatpush1.bf16.msra.mxu0 %v3265
    %3655 = vmatprep.subr.bf16.mxu0 0
    %3656 = vmatpush1.bf16.msra.mxu0 %v3266
    %3657 = vmatprep.subr.bf16.mxu0 0
    %3658 = vmatpush1.bf16.msra.mxu0 %v3267
    %3659 = vmatprep.subr.bf16.mxu0 0
    %3660 = vmatpush1.bf16.msra.mxu0 %v3268
    %3661 = vmatprep.subr.bf16.mxu0 0
    %3662 = vmatpush1.bf16.msra.mxu0 %v3269
    %3663 = vmatprep.subr.bf16.mxu0 0
    %3664 = vmatpush1.bf16.msra.mxu0 %v3270
    %3665 = vmatprep.subr.bf16.mxu0 0
    %3666 = vmatpush1.bf16.msra.mxu0 %v3271
    %3667 = vmatprep.subr.bf16.mxu0 0
    %3668 = vmatpush1.bf16.msra.mxu0 %v3272
    %3669 = vmatprep.subr.bf16.mxu0 0
    %3670 = vmatpush1.bf16.msra.mxu0 %v3273
    %3671 = vmatprep.mubr.bf16.mxu0 %v2398
    %3672 = vmatmul.mubr.bf16.gmra.mrb[0].mxu0 %v2397
    %v3673 = vpop.f32.mrb[0].mxu0
    %v3674 = vadd.f32 %v3633, %v3673
    %v3675 = vpop.f32.mrb[0].mxu0
    %v3676 = vpop.f32.mrb[0].mxu0
    %v3677 = vadd.f32 %v3636, %v3676
    %v3678 = vpop.f32.mrb[0].mxu0
    %3679 = vdwg.mxu0
    %3680 = vmatprep.subr.bf16.mxu0 0
    %3681 = vmatpush1.bf16.msra.mxu0 %v3274
    %3682 = vmatprep.subr.bf16.mxu0 0
    %3683 = vmatpush1.bf16.msra.mxu0 %v3275
    %3684 = vmatprep.subr.bf16.mxu0 0
    %3685 = vmatpush1.bf16.msra.mxu0 %v3276
    %3686 = vmatprep.subr.bf16.mxu0 0
    %3687 = vmatpush1.bf16.msra.mxu0 %v3277
    %3688 = vmatprep.subr.bf16.mxu0 0
    %3689 = vmatpush1.bf16.msra.mxu0 %v3278
    %3690 = vmatprep.subr.bf16.mxu0 0
    %3691 = vmatpush1.bf16.msra.mxu0 %v3279
    %3692 = vmatprep.subr.bf16.mxu0 0
    %3693 = vmatpush1.bf16.msra.mxu0 %v3280
    %3694 = vmatprep.subr.bf16.mxu0 0
    %3695 = vmatpush1.bf16.msra.mxu0 %v3281
    %3696 = vmatprep.subr.bf16.mxu0 0
    %3697 = vmatpush1.bf16.msra.mxu0 %v3282
    %3698 = vmatprep.subr.bf16.mxu0 0
    %3699 = vmatpush1.bf16.msra.mxu0 %v3283
    %3700 = vmatprep.subr.bf16.mxu0 0
    %3701 = vmatpush1.bf16.msra.mxu0 %v3284
    %3702 = vmatprep.subr.bf16.mxu0 0
    %3703 = vmatpush1.bf16.msra.mxu0 %v3285
    %3704 = vmatprep.subr.bf16.mxu0 0
    %3705 = vmatpush1.bf16.msra.mxu0 %v3286
    %3706 = vmatprep.subr.bf16.mxu0 0
    %3707 = vmatpush1.bf16.msra.mxu0 %v3287
    %3708 = vmatprep.subr.bf16.mxu0 0
    %3709 = vmatpush1.bf16.msra.mxu0 %v3288
    %3710 = vmatprep.subr.bf16.mxu0 0
    %3711 = vmatpush1.bf16.msra.mxu0 %v3289
    %3712 = vmatprep.mubr.bf16.mxu0 %v2400
    %3713 = vmatmul.mubr.bf16.gmra.mrb[0].mxu0 %v2399
    %v3714 = vpop.f32.mrb[0].mxu0
    %v3715 = vadd.f32 %v3674, %v3714
    %v3716 = vpop.f32.mrb[0].mxu0
    %v3717 = vpop.f32.mrb[0].mxu0
    %v3718 = vadd.f32 %v3677, %v3717
    %v3719 = vpop.f32.mrb[0].mxu0
    %3720 = vdwg.mxu0
    %3721 = vmatprep.subr.bf16.mxu0 0
    %3722 = vmatpush1.bf16.msra.mxu0 %v3290
    %3723 = vmatprep.subr.bf16.mxu0 0
    %3724 = vmatpush1.bf16.msra.mxu0 %v3291
    %3725 = vmatprep.subr.bf16.mxu0 0
    %3726 = vmatpush1.bf16.msra.mxu0 %v3292
    %3727 = vmatprep.subr.bf16.mxu0 0
    %3728 = vmatpush1.bf16.msra.mxu0 %v3293
    %3729 = vmatprep.subr.bf16.mxu0 0
    %3730 = vmatpush1.bf16.msra.mxu0 %v3294
    %3731 = vmatprep.subr.bf16.mxu0 0
    %3732 = vmatpush1.bf16.msra.mxu0 %v3295
    %3733 = vmatprep.subr.bf16.mxu0 0
    %3734 = vmatpush1.bf16.msra.mxu0 %v3296
    %3735 = vmatprep.subr.bf16.mxu0 0
    %3736 = vmatpush1.bf16.msra.mxu0 %v3297
    %3737 = vmatprep.subr.bf16.mxu0 0
    %3738 = vmatpush1.bf16.msra.mxu0 %v3298
    %3739 = vmatprep.subr.bf16.mxu0 0
    %3740 = vmatpush1.bf16.msra.mxu0 %v3299
    %3741 = vmatprep.subr.bf16.mxu0 0
    %3742 = vmatpush1.bf16.msra.mxu0 %v3300
    %3743 = vmatprep.subr.bf16.mxu0 0
    %3744 = vmatpush1.bf16.msra.mxu0 %v3301
    %3745 = vmatprep.subr.bf16.mxu0 0
    %3746 = vmatpush1.bf16.msra.mxu0 %v3302
    %3747 = vmatprep.subr.bf16.mxu0 0
    %3748 = vmatpush1.bf16.msra.mxu0 %v3303
    %3749 = vmatprep.subr.bf16.mxu0 0
    %3750 = vmatpush1.bf16.msra.mxu0 %v3304
    %3751 = vmatprep.subr.bf16.mxu0 0
    %3752 = vmatpush1.bf16.msra.mxu0 %v3305
    %3753 = vmatprep.mubr.bf16.mxu0 %v2402
    %3754 = vmatmul.mubr.bf16.gmra.mrb[0].mxu0 %v2401
    %v3755 = vpop.f32.mrb[0].mxu0
    %v3756 = vadd.f32 %v3715, %v3755
    %v3757 = vpop.f32.mrb[0].mxu0
    %v3758 = vpop.f32.mrb[0].mxu0
    %v3759 = vadd.f32 %v3718, %v3758
    %v3760 = vpop.f32.mrb[0].mxu0
    %3761 = vdwg.mxu0
    %v3762 = vadd.f32 %v1729, %v3756
    %v3763 = vadd.f32 %v1730, %v3759
    %v3764 = vld [vmem:[%s13] sm:$0x1]
    %v3765 = vld [vmem:[%s14] sm:$0x1]
    %v3766 = vsel %vm156, %v3762, 0.0
    %3767 = vadd.xlane.f32.xlu0 %v3766
    %v3768 = vpop.xlane.xlu0 %3767
    %v3769 = vsel %vm156, %v3763, 0.0
    %3770 = vadd.xlane.f32.xlu0 %v3769
    %v3771 = vpop.xlane.xlu0 %3770
    %v3772 = vmul.f32 %v3768, %v1694
    %v3773 = vmul.f32 %v3771, %v1694
    %v3774 = vsub.f32 %v3762, %v3772
    %v3775 = vsub.f32 %v3763, %v3773
    %v3776 = vmul.f32 %v3774, %v3774
    %v3777 = vmul.f32 %v3775, %v3775
    %v3778 = vsel %vm156, %v3776, 0.0
    %3779 = vadd.xlane.f32.xlu0 %v3778
    %v3780 = vpop.xlane.xlu0 %3779
    %v3781 = vsel %vm156, %v3777, 0.0
    %3782 = vadd.xlane.f32.xlu0 %v3781
    %v3783 = vpop.xlane.xlu0 %3782
    %v3784 = vmul.f32 %v3780, %v1694
    %v3785 = vmul.f32 %v3783, %v1694
    %v3786 = vadd.f32 %v3784, 1e-05
    %v3787 = vadd.f32 %v3785, 1e-05
    %v3788 = vrsqrt.pop %v3786
    %v3789 = vrsqrt.pop %v3787
    %v3790 = vmul.f32 %v3774, %v3788
    %v3791 = vmul.f32 %v3775, %v3789
    %v3793 = vlaneseq
    %v3794 = vshrl.u32 %v3793, 7
    %v3795 = vsub.s32 0, %v3794
    %v3796 = vrot.slane %v3764, %v3795
    %v3798 = vmul.f32 %v3790, %v3796
    %v3799 = vmul.f32 %v3791, %v3796
    %v3801 = vlaneseq
    %v3802 = vshrl.u32 %v3801, 7
    %v3803 = vsub.s32 0, %v3802
    %v3804 = vrot.slane %v3765, %v3803
    %v3806 = vadd.f32 %v3798, %v3804
    %v3807 = vadd.f32 %v3799, %v3804
    %s3808 = scalar_lea.vmem %s3, 32
    %v3809 = vld [vmem:[%s3808] sm:$0xff]
    %v3810 = vld [vmem:[%s3808 + $0x8] sm:$0xff]
    %v3811 = vld [vmem:[%s3808 + $0x10] sm:$0xff]
    %v3812 = vld [vmem:[%s3808 + $0x18] sm:$0xff]
    %s3813 = scalar_lea.vmem %s4, 1
    %v3814 = vld [vmem:[%s3813] sm:$0x1]
    %v3816 = vlaneseq
    %v3817 = vshrl.u32 %v3816, 7
    %v3818 = vsub.s32 0, %v3817
    %v3819 = vrot.slane %v3814, %v3818
    %v3822 = vsel %vm156, %v3806, 0
    %v3825 = vsel %vm156, %v3807, 0
    %3827 = vmatprep.subr.mxu0 0.0
    %3828 = vmatpush1.msra.mxu0 %v3809
    %3829 = vmatprep.subr.mxu0 0.0
    %3830 = vmatpush1.msra.mxu0 %v3810
    %3831 = vmatprep.subr.mxu0 0.0
    %3832 = vmatpush1.msra.mxu0 %v3811
    %3833 = vmatprep.subr.mxu0 0.0
    %3834 = vmatpush1.msra.mxu0 %v3812
    %3835 = vmatprep.subr.mxu0 0.0
    %3836 = vmatpush1.msra.mxu0 0.0
    %3837 = vmatprep.subr.mxu0 0.0
    %3838 = vmatpush1.msra.mxu0 0.0
    %3839 = vmatprep.subr.mxu0 0.0
    %3840 = vmatpush1.msra.mxu0 0.0
    %3841 = vmatprep.subr.mxu0 0.0
    %3842 = vmatpush1.msra.mxu0 0.0
    %3843 = vmatprep.subr.mxu0 0.0
    %3844 = vmatpush1.msra.mxu0 0.0
    %3845 = vmatprep.subr.mxu0 0.0
    %3846 = vmatpush1.msra.mxu0 0.0
    %3847 = vmatprep.subr.mxu0 0.0
    %3848 = vmatpush1.msra.mxu0 0.0
    %3849 = vmatprep.subr.mxu0 0.0
    %3850 = vmatpush1.msra.mxu0 0.0
    %3851 = vmatprep.subr.mxu0 0.0
    %3852 = vmatpush1.msra.mxu0 0.0
    %3853 = vmatprep.subr.mxu0 0.0
    %3854 = vmatpush1.msra.mxu0 0.0
    %3855 = vmatprep.subr.mxu0 0.0
    %3856 = vmatpush1.msra.mxu0 0.0
    %3857 = vmatprep.subr.mxu0 0.0
    %3858 = vmatpush1.msra.mxu0 0.0
    %3859 = vmatprep.subr.mxu0 0.0
    %3860 = vmatpush1.msra.mxu0 0.0
    %3861 = vmatprep.subr.mxu0 0.0
    %3862 = vmatpush1.msra.mxu0 0.0
    %3863 = vmatprep.subr.mxu0 0.0
    %3864 = vmatpush1.msra.mxu0 0.0
    %3865 = vmatprep.subr.mxu0 0.0
    %3866 = vmatpush1.msra.mxu0 0.0
    %3867 = vmatprep.subr.mxu0 0.0
    %3868 = vmatpush1.msra.mxu0 0.0
    %3869 = vmatprep.subr.mxu0 0.0
    %3870 = vmatpush1.msra.mxu0 0.0
    %3871 = vmatprep.subr.mxu0 0.0
    %3872 = vmatpush1.msra.mxu0 0.0
    %3873 = vmatprep.subr.mxu0 0.0
    %3874 = vmatpush1.msra.mxu0 0.0
    %3875 = vmatprep.subr.mxu0 0.0
    %3876 = vmatpush1.msra.mxu0 0.0
    %3877 = vmatprep.subr.mxu0 0.0
    %3878 = vmatpush1.msra.mxu0 0.0
    %3879 = vmatprep.subr.mxu0 0.0
    %3880 = vmatpush1.msra.mxu0 0.0
    %3881 = vmatprep.subr.mxu0 0.0
    %3882 = vmatpush1.msra.mxu0 0.0
    %3883 = vmatprep.subr.mxu0 0.0
    %3884 = vmatpush1.msra.mxu0 0.0
    %3885 = vmatprep.subr.mxu0 0.0
    %3886 = vmatpush1.msra.mxu0 0.0
    %3887 = vmatprep.subr.mxu0 0.0
    %3888 = vmatpush1.msra.mxu0 0.0
    %3889 = vmatprep.subr.mxu0 0.0
    %3890 = vmatpush1.msra.mxu0 0.0
    %3891 = vmatprep.mubr.f32.mxu0 0.0
    %3892 = vmatmul.mubr.f32.gmra.mrb[0].mxu0 %v3822
    %v3893 = vpop.f32.mrb[0].mxu0
    %v3894 = vadd.f32 %v3819, %v3893
    %v3895 = vpop.f32.mrb[0].mxu0
    %3896 = vmatprep.mubr.f32.mxu0 0.0
    %3897 = vmatmul.mubr.f32.gmra.mrb[0].mxu0 %v3825
    %v3898 = vpop.f32.mrb[0].mxu0
    %v3899 = vadd.f32 %v3819, %v3898
    %v3900 = vpop.f32.mrb[0].mxu0
    %3901 = vdwg.mxu0
    %v3902 = vmul.f32 %v3894, 0.35355338
    %v3903 = vmul.f32 %v3899, 0.35355338
    %3905 = vrot.lane.b32.xlu0 %v3894, 96
    %v3906 = vpop.permute.xlu0 %3905
    %v3908 = vsel %vm63, %v3902, 0
    %v3910 = vsel %vm63, %v3906, 0
    %3912 = vmatprep.subr.mxu0 0.0
    %3913 = vmatpush1.xpose.msra.mxu0 %v3910
    %3914 = vmatprep.subr.mxu0 0.0
    %3915 = vmatpush1.xpose.msra.mxu0 0.0
    %3916 = vmatprep.subr.mxu0 0.0
    %3917 = vmatpush1.xpose.msra.mxu0 0.0
    %3918 = vmatprep.subr.mxu0 0.0
    %3919 = vmatpush1.xpose.msra.mxu0 0.0
    %3920 = vmatprep.subr.mxu0 0.0
    %3921 = vmatpush1.xpose.msra.mxu0 0.0
    %3922 = vmatprep.subr.mxu0 0.0
    %3923 = vmatpush1.xpose.msra.mxu0 0.0
    %3924 = vmatprep.subr.mxu0 0.0
    %3925 = vmatpush1.xpose.msra.mxu0 0.0
    %3926 = vmatprep.subr.mxu0 0.0
    %3927 = vmatpush1.xpose.msra.mxu0 0.0
    %3928 = vmatprep.subr.mxu0 0.0
    %3929 = vmatpush1.xpose.msra.mxu0 0.0
    %3930 = vmatprep.subr.mxu0 0.0
    %3931 = vmatpush1.xpose.msra.mxu0 0.0
    %3932 = vmatprep.subr.mxu0 0.0
    %3933 = vmatpush1.xpose.msra.mxu0 0.0
    %3934 = vmatprep.subr.mxu0 0.0
    %3935 = vmatpush1.xpose.msra.mxu0 0.0
    %3936 = vmatprep.subr.mxu0 0.0
    %3937 = vmatpush1.xpose.msra.mxu0 0.0
    %3938 = vmatprep.subr.mxu0 0.0
    %3939 = vmatpush1.xpose.msra.mxu0 0.0
    %3940 = vmatprep.subr.mxu0 0.0
    %3941 = vmatpush1.xpose.msra.mxu0 0.0
    %3942 = vmatprep.subr.mxu0 0.0
    %3943 = vmatpush1.xpose.msra.mxu0 0.0
    %3944 = vmatprep.subr.mxu0 0.0
    %3945 = vmatpush1.xpose.msra.mxu0 0.0
    %3946 = vmatprep.subr.mxu0 0.0
    %3947 = vmatpush1.xpose.msra.mxu0 0.0
    %3948 = vmatprep.subr.mxu0 0.0
    %3949 = vmatpush1.xpose.msra.mxu0 0.0
    %3950 = vmatprep.subr.mxu0 0.0
    %3951 = vmatpush1.xpose.msra.mxu0 0.0
    %3952 = vmatprep.subr.mxu0 0.0
    %3953 = vmatpush1.xpose.msra.mxu0 0.0
    %3954 = vmatprep.subr.mxu0 0.0
    %3955 = vmatpush1.xpose.msra.mxu0 0.0
    %3956 = vmatprep.subr.mxu0 0.0
    %3957 = vmatpush1.xpose.msra.mxu0 0.0
    %3958 = vmatprep.subr.mxu0 0.0
    %3959 = vmatpush1.xpose.msra.mxu0 0.0
    %3960 = vmatprep.subr.mxu0 0.0
    %3961 = vmatpush1.xpose.msra.mxu0 0.0
    %3962 = vmatprep.subr.mxu0 0.0
    %3963 = vmatpush1.xpose.msra.mxu0 0.0
    %3964 = vmatprep.subr.mxu0 0.0
    %3965 = vmatpush1.xpose.msra.mxu0 0.0
    %3966 = vmatprep.subr.mxu0 0.0
    %3967 = vmatpush1.xpose.msra.mxu0 0.0
    %3968 = vmatprep.subr.mxu0 0.0
    %3969 = vmatpush1.xpose.msra.mxu0 0.0
    %3970 = vmatprep.subr.mxu0 0.0
    %3971 = vmatpush1.xpose.msra.mxu0 0.0
    %3972 = vmatprep.subr.mxu0 0.0
    %3973 = vmatpush1.xpose.msra.mxu0 0.0
    %3974 = vmatprep.subr.mxu0 0.0
    %3975 = vmatpush1.xpose.msra.mxu0 0.0
    %3976 = vmatprep.mubr.f32.mxu0 0.0
    %3977 = vmatmul.mubr.f32.gmra.mrb[0].mxu0 %v3908
    %v3978 = vpop.f32.mrb[0].mxu0
    %v3979 = vadd.f32 0.0, %v3978
    %v3980 = vpop.f32.mrb[0].mxu0
    %3981 = vdwg.mxu0
    %3983 = vrot.lane.b32.xlu0 %v3899, 96
    %v3984 = vpop.permute.xlu0 %3983
    %v3986 = vsel %vm63, %v3903, 0
    %v3988 = vsel %vm63, %v3984, 0
    %3990 = vmatprep.subr.mxu0 0.0
    %3991 = vmatpush1.xpose.msra.mxu0 %v3988
    %3992 = vmatprep.subr.mxu0 0.0
    %3993 = vmatpush1.xpose.msra.mxu0 0.0
    %3994 = vmatprep.subr.mxu0 0.0
    %3995 = vmatpush1.xpose.msra.mxu0 0.0
    %3996 = vmatprep.subr.mxu0 0.0
    %3997 = vmatpush1.xpose.msra.mxu0 0.0
    %3998 = vmatprep.subr.mxu0 0.0
    %3999 = vmatpush1.xpose.msra.mxu0 0.0
    %4000 = vmatprep.subr.mxu0 0.0
    %4001 = vmatpush1.xpose.msra.mxu0 0.0
    %4002 = vmatprep.subr.mxu0 0.0
    %4003 = vmatpush1.xpose.msra.mxu0 0.0
    %4004 = vmatprep.subr.mxu0 0.0
    %4005 = vmatpush1.xpose.msra.mxu0 0.0
    %4006 = vmatprep.subr.mxu0 0.0
    %4007 = vmatpush1.xpose.msra.mxu0 0.0
    %4008 = vmatprep.subr.mxu0 0.0
    %4009 = vmatpush1.xpose.msra.mxu0 0.0
    %4010 = vmatprep.subr.mxu0 0.0
    %4011 = vmatpush1.xpose.msra.mxu0 0.0
    %4012 = vmatprep.subr.mxu0 0.0
    %4013 = vmatpush1.xpose.msra.mxu0 0.0
    %4014 = vmatprep.subr.mxu0 0.0
    %4015 = vmatpush1.xpose.msra.mxu0 0.0
    %4016 = vmatprep.subr.mxu0 0.0
    %4017 = vmatpush1.xpose.msra.mxu0 0.0
    %4018 = vmatprep.subr.mxu0 0.0
    %4019 = vmatpush1.xpose.msra.mxu0 0.0
    %4020 = vmatprep.subr.mxu0 0.0
    %4021 = vmatpush1.xpose.msra.mxu0 0.0
    %4022 = vmatprep.subr.mxu0 0.0
    %4023 = vmatpush1.xpose.msra.mxu0 0.0
    %4024 = vmatprep.subr.mxu0 0.0
    %4025 = vmatpush1.xpose.msra.mxu0 0.0
    %4026 = vmatprep.subr.mxu0 0.0
    %4027 = vmatpush1.xpose.msra.mxu0 0.0
    %4028 = vmatprep.subr.mxu0 0.0
    %4029 = vmatpush1.xpose.msra.mxu0 0.0
    %4030 = vmatprep.subr.mxu0 0.0
    %4031 = vmatpush1.xpose.msra.mxu0 0.0
    %4032 = vmatprep.subr.mxu0 0.0
    %4033 = vmatpush1.xpose.msra.mxu0 0.0
    %4034 = vmatprep.subr.mxu0 0.0
    %4035 = vmatpush1.xpose.msra.mxu0 0.0
    %4036 = vmatprep.subr.mxu0 0.0
    %4037 = vmatpush1.xpose.msra.mxu0 0.0
    %4038 = vmatprep.subr.mxu0 0.0
    %4039 = vmatpush1.xpose.msra.mxu0 0.0
    %4040 = vmatprep.subr.mxu0 0.0
    %4041 = vmatpush1.xpose.msra.mxu0 0.0
    %4042 = vmatprep.subr.mxu0 0.0
    %4043 = vmatpush1.xpose.msra.mxu0 0.0
    %4044 = vmatprep.subr.mxu0 0.0
    %4045 = vmatpush1.xpose.msra.mxu0 0.0
    %4046 = vmatprep.subr.mxu0 0.0
    %4047 = vmatpush1.xpose.msra.mxu0 0.0
    %4048 = vmatprep.subr.mxu0 0.0
    %4049 = vmatpush1.xpose.msra.mxu0 0.0
    %4050 = vmatprep.subr.mxu0 0.0
    %4051 = vmatpush1.xpose.msra.mxu0 0.0
    %4052 = vmatprep.subr.mxu0 0.0
    %4053 = vmatpush1.xpose.msra.mxu0 0.0
    %4054 = vmatprep.mubr.f32.mxu0 0.0
    %4055 = vmatmul.mubr.f32.gmra.mrb[0].mxu0 %v3986
    %v4056 = vpop.f32.mrb[0].mxu0
    %v4057 = vadd.f32 0.0, %v4056
    %v4058 = vpop.f32.mrb[0].mxu0
    %4059 = vdwg.mxu0
    %v4060 = vsel %vm63, %v3979, -inf
    %4061 = vmax.xlane.f32.xlu0 %v4060
    %v4062 = vpop.xlane.xlu0 %4061
    %v4063 = vsel %vm63, %v4057, -inf
    %4064 = vmax.xlane.f32.xlu0 %v4063
    %v4065 = vpop.xlane.xlu0 %4064
    %v4066 = vsub.f32 %v3979, %v4062
    %v4067 = vsub.f32 %v4057, %v4065
    %v4068 = vmul.f32 %v4066, 1.442695
    %v4069 = vpow.pop %v4068
    %v4070 = vmul.f32 %v4067, 1.442695
    %v4071 = vpow.pop %v4070
    %v4072 = vsel %vm63, %v4069, 0.0
    %4073 = vadd.xlane.f32.xlu0 %v4072
    %v4074 = vpop.xlane.xlu0 %4073
    %v4075 = vsel %vm63, %v4071, 0.0
    %4076 = vadd.xlane.f32.xlu0 %v4075
    %v4077 = vpop.xlane.xlu0 %4076
    %v4078 = vrcp.pop %v4074
    %v4079 = vrcp.pop %v4077
    %v4080 = vmul.f32 %v4069, %v4078
    %v4081 = vmul.f32 %v4071, %v4079
    %4082 = vrot.lane.b32.xlu0 %v3894, 64
    %v4083 = vpop.permute.xlu0 %4082
    %v4086 = vsel %vm63, %v4080, 0
    %4088 = vmatprep.subr.mxu0 0.0
    %4089 = vmatpush1.msra.mxu0 %v4083
    %4090 = vmatprep.subr.mxu0 0.0
    %4091 = vmatpush1.msra.mxu0 0.0
    %4092 = vmatprep.subr.mxu0 0.0
    %4093 = vmatpush1.msra.mxu0 0.0
    %4094 = vmatprep.subr.mxu0 0.0
    %4095 = vmatpush1.msra.mxu0 0.0
    %4096 = vmatprep.subr.mxu0 0.0
    %4097 = vmatpush1.msra.mxu0 0.0
    %4098 = vmatprep.subr.mxu0 0.0
    %4099 = vmatpush1.msra.mxu0 0.0
    %4100 = vmatprep.subr.mxu0 0.0
    %4101 = vmatpush1.msra.mxu0 0.0
    %4102 = vmatprep.subr.mxu0 0.0
    %4103 = vmatpush1.msra.mxu0 0.0
    %4104 = vmatprep.subr.mxu0 0.0
    %4105 = vmatpush1.msra.mxu0 0.0
    %4106 = vmatprep.subr.mxu0 0.0
    %4107 = vmatpush1.msra.mxu0 0.0
    %4108 = vmatprep.subr.mxu0 0.0
    %4109 = vmatpush1.msra.mxu0 0.0
    %4110 = vmatprep.subr.mxu0 0.0
    %4111 = vmatpush1.msra.mxu0 0.0
    %4112 = vmatprep.subr.mxu0 0.0
    %4113 = vmatpush1.msra.mxu0 0.0
    %4114 = vmatprep.subr.mxu0 0.0
    %4115 = vmatpush1.msra.mxu0 0.0
    %4116 = vmatprep.subr.mxu0 0.0
    %4117 = vmatpush1.msra.mxu0 0.0
    %4118 = vmatprep.subr.mxu0 0.0
    %4119 = vmatpush1.msra.mxu0 0.0
    %4120 = vmatprep.subr.mxu0 0.0
    %4121 = vmatpush1.msra.mxu0 0.0
    %4122 = vmatprep.subr.mxu0 0.0
    %4123 = vmatpush1.msra.mxu0 0.0
    %4124 = vmatprep.subr.mxu0 0.0
    %4125 = vmatpush1.msra.mxu0 0.0
    %4126 = vmatprep.subr.mxu0 0.0
    %4127 = vmatpush1.msra.mxu0 0.0
    %4128 = vmatprep.subr.mxu0 0.0
    %4129 = vmatpush1.msra.mxu0 0.0
    %4130 = vmatprep.subr.mxu0 0.0
    %4131 = vmatpush1.msra.mxu0 0.0
    %4132 = vmatprep.subr.mxu0 0.0
    %4133 = vmatpush1.msra.mxu0 0.0
    %4134 = vmatprep.subr.mxu0 0.0
    %4135 = vmatpush1.msra.mxu0 0.0
    %4136 = vmatprep.subr.mxu0 0.0
    %4137 = vmatpush1.msra.mxu0 0.0
    %4138 = vmatprep.subr.mxu0 0.0
    %4139 = vmatpush1.msra.mxu0 0.0
    %4140 = vmatprep.subr.mxu0 0.0
    %4141 = vmatpush1.msra.mxu0 0.0
    %4142 = vmatprep.subr.mxu0 0.0
    %4143 = vmatpush1.msra.mxu0 0.0
    %4144 = vmatprep.subr.mxu0 0.0
    %4145 = vmatpush1.msra.mxu0 0.0
    %4146 = vmatprep.subr.mxu0 0.0
    %4147 = vmatpush1.msra.mxu0 0.0
    %4148 = vmatprep.subr.mxu0 0.0
    %4149 = vmatpush1.msra.mxu0 0.0
    %4150 = vmatprep.subr.mxu0 0.0
    %4151 = vmatpush1.msra.mxu0 0.0
    %4152 = vmatprep.mubr.f32.mxu0 0.0
    %4153 = vmatmul.mubr.f32.gmra.mrb[0].mxu0 %v4086
    %v4154 = vpop.f32.mrb[0].mxu0
    %v4155 = vadd.f32 0.0, %v4154
    %v4156 = vpop.f32.mrb[0].mxu0
    %4157 = vdwg.mxu0
    %4158 = vrot.lane.b32.xlu0 %v3899, 64
    %v4159 = vpop.permute.xlu0 %4158
    %v4162 = vsel %vm63, %v4081, 0
    %4164 = vmatprep.subr.mxu0 0.0
    %4165 = vmatpush1.msra.mxu0 %v4159
    %4166 = vmatprep.subr.mxu0 0.0
    %4167 = vmatpush1.msra.mxu0 0.0
    %4168 = vmatprep.subr.mxu0 0.0
    %4169 = vmatpush1.msra.mxu0 0.0
    %4170 = vmatprep.subr.mxu0 0.0
    %4171 = vmatpush1.msra.mxu0 0.0
    %4172 = vmatprep.subr.mxu0 0.0
    %4173 = vmatpush1.msra.mxu0 0.0
    %4174 = vmatprep.subr.mxu0 0.0
    %4175 = vmatpush1.msra.mxu0 0.0
    %4176 = vmatprep.subr.mxu0 0.0
    %4177 = vmatpush1.msra.mxu0 0.0
    %4178 = vmatprep.subr.mxu0 0.0
    %4179 = vmatpush1.msra.mxu0 0.0
    %4180 = vmatprep.subr.mxu0 0.0
    %4181 = vmatpush1.msra.mxu0 0.0
    %4182 = vmatprep.subr.mxu0 0.0
    %4183 = vmatpush1.msra.mxu0 0.0
    %4184 = vmatprep.subr.mxu0 0.0
    %4185 = vmatpush1.msra.mxu0 0.0
    %4186 = vmatprep.subr.mxu0 0.0
    %4187 = vmatpush1.msra.mxu0 0.0
    %4188 = vmatprep.subr.mxu0 0.0
    %4189 = vmatpush1.msra.mxu0 0.0
    %4190 = vmatprep.subr.mxu0 0.0
    %4191 = vmatpush1.msra.mxu0 0.0
    %4192 = vmatprep.subr.mxu0 0.0
    %4193 = vmatpush1.msra.mxu0 0.0
    %4194 = vmatprep.subr.mxu0 0.0
    %4195 = vmatpush1.msra.mxu0 0.0
    %4196 = vmatprep.subr.mxu0 0.0
    %4197 = vmatpush1.msra.mxu0 0.0
    %4198 = vmatprep.subr.mxu0 0.0
    %4199 = vmatpush1.msra.mxu0 0.0
    %4200 = vmatprep.subr.mxu0 0.0
    %4201 = vmatpush1.msra.mxu0 0.0
    %4202 = vmatprep.subr.mxu0 0.0
    %4203 = vmatpush1.msra.mxu0 0.0
    %4204 = vmatprep.subr.mxu0 0.0
    %4205 = vmatpush1.msra.mxu0 0.0
    %4206 = vmatprep.subr.mxu0 0.0
    %4207 = vmatpush1.msra.mxu0 0.0
    %4208 = vmatprep.subr.mxu0 0.0
    %4209 = vmatpush1.msra.mxu0 0.0
    %4210 = vmatprep.subr.mxu0 0.0
    %4211 = vmatpush1.msra.mxu0 0.0
    %4212 = vmatprep.subr.mxu0 0.0
    %4213 = vmatpush1.msra.mxu0 0.0
    %4214 = vmatprep.subr.mxu0 0.0
    %4215 = vmatpush1.msra.mxu0 0.0
    %4216 = vmatprep.subr.mxu0 0.0
    %4217 = vmatpush1.msra.mxu0 0.0
    %4218 = vmatprep.subr.mxu0 0.0
    %4219 = vmatpush1.msra.mxu0 0.0
    %4220 = vmatprep.subr.mxu0 0.0
    %4221 = vmatpush1.msra.mxu0 0.0
    %4222 = vmatprep.subr.mxu0 0.0
    %4223 = vmatpush1.msra.mxu0 0.0
    %4224 = vmatprep.subr.mxu0 0.0
    %4225 = vmatpush1.msra.mxu0 0.0
    %4226 = vmatprep.subr.mxu0 0.0
    %4227 = vmatpush1.msra.mxu0 0.0
    %4228 = vmatprep.mubr.f32.mxu0 0.0
    %4229 = vmatmul.mubr.f32.gmra.mrb[0].mxu0 %v4162
    %v4230 = vpop.f32.mrb[0].mxu0
    %v4231 = vadd.f32 0.0, %v4230
    %v4232 = vpop.f32.mrb[0].mxu0
    %4233 = vdwg.mxu0
    %4234 = vrot.lane.b32.xlu0 %v3902, 120
    %v4235 = vpop.permute.xlu0 %4234
    %4236 = vrot.lane.b32.xlu0 %v3894, 88
    %v4237 = vpop.permute.xlu0 %4236
    %v4238 = vsel %vm63, %v4235, 0
    %v4240 = vsel %vm63, %v4237, 0
    %4242 = vmatprep.subr.mxu0 0.0
    %4243 = vmatpush1.xpose.msra.mxu0 %v4240
    %4244 = vmatprep.subr.mxu0 0.0
    %4245 = vmatpush1.xpose.msra.mxu0 0.0
    %4246 = vmatprep.subr.mxu0 0.0
    %4247 = vmatpush1.xpose.msra.mxu0 0.0
    %4248 = vmatprep.subr.mxu0 0.0
    %4249 = vmatpush1.xpose.msra.mxu0 0.0
    %4250 = vmatprep.subr.mxu0 0.0
    %4251 = vmatpush1.xpose.msra.mxu0 0.0
    %4252 = vmatprep.subr.mxu0 0.0
    %4253 = vmatpush1.xpose.msra.mxu0 0.0
    %4254 = vmatprep.subr.mxu0 0.0
    %4255 = vmatpush1.xpose.msra.mxu0 0.0
    %4256 = vmatprep.subr.mxu0 0.0
    %4257 = vmatpush1.xpose.msra.mxu0 0.0
    %4258 = vmatprep.subr.mxu0 0.0
    %4259 = vmatpush1.xpose.msra.mxu0 0.0
    %4260 = vmatprep.subr.mxu0 0.0
    %4261 = vmatpush1.xpose.msra.mxu0 0.0
    %4262 = vmatprep.subr.mxu0 0.0
    %4263 = vmatpush1.xpose.msra.mxu0 0.0
    %4264 = vmatprep.subr.mxu0 0.0
    %4265 = vmatpush1.xpose.msra.mxu0 0.0
    %4266 = vmatprep.subr.mxu0 0.0
    %4267 = vmatpush1.xpose.msra.mxu0 0.0
    %4268 = vmatprep.subr.mxu0 0.0
    %4269 = vmatpush1.xpose.msra.mxu0 0.0
    %4270 = vmatprep.subr.mxu0 0.0
    %4271 = vmatpush1.xpose.msra.mxu0 0.0
    %4272 = vmatprep.subr.mxu0 0.0
    %4273 = vmatpush1.xpose.msra.mxu0 0.0
    %4274 = vmatprep.subr.mxu0 0.0
    %4275 = vmatpush1.xpose.msra.mxu0 0.0
    %4276 = vmatprep.subr.mxu0 0.0
    %4277 = vmatpush1.xpose.msra.mxu0 0.0
    %4278 = vmatprep.subr.mxu0 0.0
    %4279 = vmatpush1.xpose.msra.mxu0 0.0
    %4280 = vmatprep.subr.mxu0 0.0
    %4281 = vmatpush1.xpose.msra.mxu0 0.0
    %4282 = vmatprep.subr.mxu0 0.0
    %4283 = vmatpush1.xpose.msra.mxu0 0.0
    %4284 = vmatprep.subr.mxu0 0.0
    %4285 = vmatpush1.xpose.msra.mxu0 0.0
    %4286 = vmatprep.subr.mxu0 0.0
    %4287 = vmatpush1.xpose.msra.mxu0 0.0
    %4288 = vmatprep.subr.mxu0 0.0
    %4289 = vmatpush1.xpose.msra.mxu0 0.0
    %4290 = vmatprep.subr.mxu0 0.0
    %4291 = vmatpush1.xpose.msra.mxu0 0.0
    %4292 = vmatprep.subr.mxu0 0.0
    %4293 = vmatpush1.xpose.msra.mxu0 0.0
    %4294 = vmatprep.subr.mxu0 0.0
    %4295 = vmatpush1.xpose.msra.mxu0 0.0
    %4296 = vmatprep.subr.mxu0 0.0
    %4297 = vmatpush1.xpose.msra.mxu0 0.0
    %4298 = vmatprep.subr.mxu0 0.0
    %4299 = vmatpush1.xpose.msra.mxu0 0.0
    %4300 = vmatprep.subr.mxu0 0.0
    %4301 = vmatpush1.xpose.msra.mxu0 0.0
    %4302 = vmatprep.subr.mxu0 0.0
    %4303 = vmatpush1.xpose.msra.mxu0 0.0
    %4304 = vmatprep.subr.mxu0 0.0
    %4305 = vmatpush1.xpose.msra.mxu0 0.0
    %4306 = vmatprep.mubr.f32.mxu0 0.0
    %4307 = vmatmul.mubr.f32.gmra.mrb[0].mxu0 %v4238
    %v4308 = vpop.f32.mrb[0].mxu0
    %v4309 = vadd.f32 0.0, %v4308
    %v4310 = vpop.f32.mrb[0].mxu0
    %4311 = vdwg.mxu0
    %4312 = vrot.lane.b32.xlu0 %v3903, 120
    %v4313 = vpop.permute.xlu0 %4312
    %4314 = vrot.lane.b32.xlu0 %v3899, 88
    %v4315 = vpop.permute.xlu0 %4314
    %v4316 = vsel %vm63, %v4313, 0
    %v4318 = vsel %vm63, %v4315, 0
    %4320 = vmatprep.subr.mxu0 0.0
    %4321 = vmatpush1.xpose.msra.mxu0 %v4318
    %4322 = vmatprep.subr.mxu0 0.0
    %4323 = vmatpush1.xpose.msra.mxu0 0.0
    %4324 = vmatprep.subr.mxu0 0.0
    %4325 = vmatpush1.xpose.msra.mxu0 0.0
    %4326 = vmatprep.subr.mxu0 0.0
    %4327 = vmatpush1.xpose.msra.mxu0 0.0
    %4328 = vmatprep.subr.mxu0 0.0
    %4329 = vmatpush1.xpose.msra.mxu0 0.0
    %4330 = vmatprep.subr.mxu0 0.0
    %4331 = vmatpush1.xpose.msra.mxu0 0.0
    %4332 = vmatprep.subr.mxu0 0.0
    %4333 = vmatpush1.xpose.msra.mxu0 0.0
    %4334 = vmatprep.subr.mxu0 0.0
    %4335 = vmatpush1.xpose.msra.mxu0 0.0
    %4336 = vmatprep.subr.mxu0 0.0
    %4337 = vmatpush1.xpose.msra.mxu0 0.0
    %4338 = vmatprep.subr.mxu0 0.0
    %4339 = vmatpush1.xpose.msra.mxu0 0.0
    %4340 = vmatprep.subr.mxu0 0.0
    %4341 = vmatpush1.xpose.msra.mxu0 0.0
    %4342 = vmatprep.subr.mxu0 0.0
    %4343 = vmatpush1.xpose.msra.mxu0 0.0
    %4344 = vmatprep.subr.mxu0 0.0
    %4345 = vmatpush1.xpose.msra.mxu0 0.0
    %4346 = vmatprep.subr.mxu0 0.0
    %4347 = vmatpush1.xpose.msra.mxu0 0.0
    %4348 = vmatprep.subr.mxu0 0.0
    %4349 = vmatpush1.xpose.msra.mxu0 0.0
    %4350 = vmatprep.subr.mxu0 0.0
    %4351 = vmatpush1.xpose.msra.mxu0 0.0
    %4352 = vmatprep.subr.mxu0 0.0
    %4353 = vmatpush1.xpose.msra.mxu0 0.0
    %4354 = vmatprep.subr.mxu0 0.0
    %4355 = vmatpush1.xpose.msra.mxu0 0.0
    %4356 = vmatprep.subr.mxu0 0.0
    %4357 = vmatpush1.xpose.msra.mxu0 0.0
    %4358 = vmatprep.subr.mxu0 0.0
    %4359 = vmatpush1.xpose.msra.mxu0 0.0
    %4360 = vmatprep.subr.mxu0 0.0
    %4361 = vmatpush1.xpose.msra.mxu0 0.0
    %4362 = vmatprep.subr.mxu0 0.0
    %4363 = vmatpush1.xpose.msra.mxu0 0.0
    %4364 = vmatprep.subr.mxu0 0.0
    %4365 = vmatpush1.xpose.msra.mxu0 0.0
    %4366 = vmatprep.subr.mxu0 0.0
    %4367 = vmatpush1.xpose.msra.mxu0 0.0
    %4368 = vmatprep.subr.mxu0 0.0
    %4369 = vmatpush1.xpose.msra.mxu0 0.0
    %4370 = vmatprep.subr.mxu0 0.0
    %4371 = vmatpush1.xpose.msra.mxu0 0.0
    %4372 = vmatprep.subr.mxu0 0.0
    %4373 = vmatpush1.xpose.msra.mxu0 0.0
    %4374 = vmatprep.subr.mxu0 0.0
    %4375 = vmatpush1.xpose.msra.mxu0 0.0
    %4376 = vmatprep.subr.mxu0 0.0
    %4377 = vmatpush1.xpose.msra.mxu0 0.0
    %4378 = vmatprep.subr.mxu0 0.0
    %4379 = vmatpush1.xpose.msra.mxu0 0.0
    %4380 = vmatprep.subr.mxu0 0.0
    %4381 = vmatpush1.xpose.msra.mxu0 0.0
    %4382 = vmatprep.subr.mxu0 0.0
    %4383 = vmatpush1.xpose.msra.mxu0 0.0
    %4384 = vmatprep.mubr.f32.mxu0 0.0
    %4385 = vmatmul.mubr.f32.gmra.mrb[0].mxu0 %v4316
    %v4386 = vpop.f32.mrb[0].mxu0
    %v4387 = vadd.f32 0.0, %v4386
    %v4388 = vpop.f32.mrb[0].mxu0
    %4389 = vdwg.mxu0
    %v4390 = vsel %vm63, %v4309, -inf
    %4391 = vmax.xlane.f32.xlu0 %v4390
    %v4392 = vpop.xlane.xlu0 %4391
    %v4393 = vsel %vm63, %v4387, -inf
    %4394 = vmax.xlane.f32.xlu0 %v4393
    %v4395 = vpop.xlane.xlu0 %4394
    %v4396 = vsub.f32 %v4309, %v4392
    %v4397 = vsub.f32 %v4387, %v4395
    %v4398 = vmul.f32 %v4396, 1.442695
    %v4399 = vpow.pop %v4398
    %v4400 = vmul.f32 %v4397, 1.442695
    %v4401 = vpow.pop %v4400
    %v4402 = vsel %vm63, %v4399, 0.0
    %4403 = vadd.xlane.f32.xlu0 %v4402
    %v4404 = vpop.xlane.xlu0 %4403
    %v4405 = vsel %vm63, %v4401, 0.0
    %4406 = vadd.xlane.f32.xlu0 %v4405
    %v4407 = vpop.xlane.xlu0 %4406
    %v4408 = vrcp.pop %v4404
    %v4409 = vrcp.pop %v4407
    %v4410 = vmul.f32 %v4399, %v4408
    %v4411 = vmul.f32 %v4401, %v4409
    %4412 = vrot.lane.b32.xlu0 %v3894, 56
    %v4413 = vpop.permute.xlu0 %4412
    %v4416 = vsel %vm63, %v4410, 0
    %4418 = vmatprep.subr.mxu0 0.0
    %4419 = vmatpush1.msra.mxu0 %v4413
    %4420 = vmatprep.subr.mxu0 0.0
    %4421 = vmatpush1.msra.mxu0 0.0
    %4422 = vmatprep.subr.mxu0 0.0
    %4423 = vmatpush1.msra.mxu0 0.0
    %4424 = vmatprep.subr.mxu0 0.0
    %4425 = vmatpush1.msra.mxu0 0.0
    %4426 = vmatprep.subr.mxu0 0.0
    %4427 = vmatpush1.msra.mxu0 0.0
    %4428 = vmatprep.subr.mxu0 0.0
    %4429 = vmatpush1.msra.mxu0 0.0
    %4430 = vmatprep.subr.mxu0 0.0
    %4431 = vmatpush1.msra.mxu0 0.0
    %4432 = vmatprep.subr.mxu0 0.0
    %4433 = vmatpush1.msra.mxu0 0.0
    %4434 = vmatprep.subr.mxu0 0.0
    %4435 = vmatpush1.msra.mxu0 0.0
    %4436 = vmatprep.subr.mxu0 0.0
    %4437 = vmatpush1.msra.mxu0 0.0
    %4438 = vmatprep.subr.mxu0 0.0
    %4439 = vmatpush1.msra.mxu0 0.0
    %4440 = vmatprep.subr.mxu0 0.0
    %4441 = vmatpush1.msra.mxu0 0.0
    %4442 = vmatprep.subr.mxu0 0.0
    %4443 = vmatpush1.msra.mxu0 0.0
    %4444 = vmatprep.subr.mxu0 0.0
    %4445 = vmatpush1.msra.mxu0 0.0
    %4446 = vmatprep.subr.mxu0 0.0
    %4447 = vmatpush1.msra.mxu0 0.0
    %4448 = vmatprep.subr.mxu0 0.0
    %4449 = vmatpush1.msra.mxu0 0.0
    %4450 = vmatprep.subr.mxu0 0.0
    %4451 = vmatpush1.msra.mxu0 0.0
    %4452 = vmatprep.subr.mxu0 0.0
    %4453 = vmatpush1.msra.mxu0 0.0
    %4454 = vmatprep.subr.mxu0 0.0
    %4455 = vmatpush1.msra.mxu0 0.0
    %4456 = vmatprep.subr.mxu0 0.0
    %4457 = vmatpush1.msra.mxu0 0.0
    %4458 = vmatprep.subr.mxu0 0.0
    %4459 = vmatpush1.msra.mxu0 0.0
    %4460 = vmatprep.subr.mxu0 0.0
    %4461 = vmatpush1.msra.mxu0 0.0
    %4462 = vmatprep.subr.mxu0 0.0
    %4463 = vmatpush1.msra.mxu0 0.0
    %4464 = vmatprep.subr.mxu0 0.0
    %4465 = vmatpush1.msra.mxu0 0.0
    %4466 = vmatprep.subr.mxu0 0.0
    %4467 = vmatpush1.msra.mxu0 0.0
    %4468 = vmatprep.subr.mxu0 0.0
    %4469 = vmatpush1.msra.mxu0 0.0
    %4470 = vmatprep.subr.mxu0 0.0
    %4471 = vmatpush1.msra.mxu0 0.0
    %4472 = vmatprep.subr.mxu0 0.0
    %4473 = vmatpush1.msra.mxu0 0.0
    %4474 = vmatprep.subr.mxu0 0.0
    %4475 = vmatpush1.msra.mxu0 0.0
    %4476 = vmatprep.subr.mxu0 0.0
    %4477 = vmatpush1.msra.mxu0 0.0
    %4478 = vmatprep.subr.mxu0 0.0
    %4479 = vmatpush1.msra.mxu0 0.0
    %4480 = vmatprep.subr.mxu0 0.0
    %4481 = vmatpush1.msra.mxu0 0.0
    %4482 = vmatprep.mubr.f32.mxu0 0.0
    %4483 = vmatmul.mubr.f32.gmra.mrb[0].mxu0 %v4416
    %v4484 = vpop.f32.mrb[0].mxu0
    %v4485 = vadd.f32 0.0, %v4484
    %v4486 = vpop.f32.mrb[0].mxu0
    %4487 = vdwg.mxu0
    %4488 = vrot.lane.b32.xlu0 %v3899, 56
    %v4489 = vpop.permute.xlu0 %4488
    %v4492 = vsel %vm63, %v4411, 0
    %4494 = vmatprep.subr.mxu0 0.0
    %4495 = vmatpush1.msra.mxu0 %v4489
    %4496 = vmatprep.subr.mxu0 0.0
    %4497 = vmatpush1.msra.mxu0 0.0
    %4498 = vmatprep.subr.mxu0 0.0
    %4499 = vmatpush1.msra.mxu0 0.0
    %4500 = vmatprep.subr.mxu0 0.0
    %4501 = vmatpush1.msra.mxu0 0.0
    %4502 = vmatprep.subr.mxu0 0.0
    %4503 = vmatpush1.msra.mxu0 0.0
    %4504 = vmatprep.subr.mxu0 0.0
    %4505 = vmatpush1.msra.mxu0 0.0
    %4506 = vmatprep.subr.mxu0 0.0
    %4507 = vmatpush1.msra.mxu0 0.0
    %4508 = vmatprep.subr.mxu0 0.0
    %4509 = vmatpush1.msra.mxu0 0.0
    %4510 = vmatprep.subr.mxu0 0.0
    %4511 = vmatpush1.msra.mxu0 0.0
    %4512 = vmatprep.subr.mxu0 0.0
    %4513 = vmatpush1.msra.mxu0 0.0
    %4514 = vmatprep.subr.mxu0 0.0
    %4515 = vmatpush1.msra.mxu0 0.0
    %4516 = vmatprep.subr.mxu0 0.0
    %4517 = vmatpush1.msra.mxu0 0.0
    %4518 = vmatprep.subr.mxu0 0.0
    %4519 = vmatpush1.msra.mxu0 0.0
    %4520 = vmatprep.subr.mxu0 0.0
    %4521 = vmatpush1.msra.mxu0 0.0
    %4522 = vmatprep.subr.mxu0 0.0
    %4523 = vmatpush1.msra.mxu0 0.0
    %4524 = vmatprep.subr.mxu0 0.0
    %4525 = vmatpush1.msra.mxu0 0.0
    %4526 = vmatprep.subr.mxu0 0.0
    %4527 = vmatpush1.msra.mxu0 0.0
    %4528 = vmatprep.subr.mxu0 0.0
    %4529 = vmatpush1.msra.mxu0 0.0
    %4530 = vmatprep.subr.mxu0 0.0
    %4531 = vmatpush1.msra.mxu0 0.0
    %4532 = vmatprep.subr.mxu0 0.0
    %4533 = vmatpush1.msra.mxu0 0.0
    %4534 = vmatprep.subr.mxu0 0.0
    %4535 = vmatpush1.msra.mxu0 0.0
    %4536 = vmatprep.subr.mxu0 0.0
    %4537 = vmatpush1.msra.mxu0 0.0
    %4538 = vmatprep.subr.mxu0 0.0
    %4539 = vmatpush1.msra.mxu0 0.0
    %4540 = vmatprep.subr.mxu0 0.0
    %4541 = vmatpush1.msra.mxu0 0.0
    %4542 = vmatprep.subr.mxu0 0.0
    %4543 = vmatpush1.msra.mxu0 0.0
    %4544 = vmatprep.subr.mxu0 0.0
    %4545 = vmatpush1.msra.mxu0 0.0
    %4546 = vmatprep.subr.mxu0 0.0
    %4547 = vmatpush1.msra.mxu0 0.0
    %4548 = vmatprep.subr.mxu0 0.0
    %4549 = vmatpush1.msra.mxu0 0.0
    %4550 = vmatprep.subr.mxu0 0.0
    %4551 = vmatpush1.msra.mxu0 0.0
    %4552 = vmatprep.subr.mxu0 0.0
    %4553 = vmatpush1.msra.mxu0 0.0
    %4554 = vmatprep.subr.mxu0 0.0
    %4555 = vmatpush1.msra.mxu0 0.0
    %4556 = vmatprep.subr.mxu0 0.0
    %4557 = vmatpush1.msra.mxu0 0.0
    %4558 = vmatprep.mubr.f32.mxu0 0.0
    %4559 = vmatmul.mubr.f32.gmra.mrb[0].mxu0 %v4492
    %v4560 = vpop.f32.mrb[0].mxu0
    %v4561 = vadd.f32 0.0, %v4560
    %v4562 = vpop.f32.mrb[0].mxu0
    %4563 = vdwg.mxu0
    %4564 = vrot.lane.b32.xlu0 %v3902, 112
    %v4565 = vpop.permute.xlu0 %4564
    %4566 = vrot.lane.b32.xlu0 %v3894, 80
    %v4567 = vpop.permute.xlu0 %4566
    %v4568 = vsel %vm63, %v4565, 0
    %v4570 = vsel %vm63, %v4567, 0
    %4572 = vmatprep.subr.mxu0 0.0
    %4573 = vmatpush1.xpose.msra.mxu0 %v4570
    %4574 = vmatprep.subr.mxu0 0.0
    %4575 = vmatpush1.xpose.msra.mxu0 0.0
    %4576 = vmatprep.subr.mxu0 0.0
    %4577 = vmatpush1.xpose.msra.mxu0 0.0
    %4578 = vmatprep.subr.mxu0 0.0
    %4579 = vmatpush1.xpose.msra.mxu0 0.0
    %4580 = vmatprep.subr.mxu0 0.0
    %4581 = vmatpush1.xpose.msra.mxu0 0.0
    %4582 = vmatprep.subr.mxu0 0.0
    %4583 = vmatpush1.xpose.msra.mxu0 0.0
    %4584 = vmatprep.subr.mxu0 0.0
    %4585 = vmatpush1.xpose.msra.mxu0 0.0
    %4586 = vmatprep.subr.mxu0 0.0
    %4587 = vmatpush1.xpose.msra.mxu0 0.0
    %4588 = vmatprep.subr.mxu0 0.0
    %4589 = vmatpush1.xpose.msra.mxu0 0.0
    %4590 = vmatprep.subr.mxu0 0.0
    %4591 = vmatpush1.xpose.msra.mxu0 0.0
    %4592 = vmatprep.subr.mxu0 0.0
    %4593 = vmatpush1.xpose.msra.mxu0 0.0
    %4594 = vmatprep.subr.mxu0 0.0
    %4595 = vmatpush1.xpose.msra.mxu0 0.0
    %4596 = vmatprep.subr.mxu0 0.0
    %4597 = vmatpush1.xpose.msra.mxu0 0.0
    %4598 = vmatprep.subr.mxu0 0.0
    %4599 = vmatpush1.xpose.msra.mxu0 0.0
    %4600 = vmatprep.subr.mxu0 0.0
    %4601 = vmatpush1.xpose.msra.mxu0 0.0
    %4602 = vmatprep.subr.mxu0 0.0
    %4603 = vmatpush1.xpose.msra.mxu0 0.0
    %4604 = vmatprep.subr.mxu0 0.0
    %4605 = vmatpush1.xpose.msra.mxu0 0.0
    %4606 = vmatprep.subr.mxu0 0.0
    %4607 = vmatpush1.xpose.msra.mxu0 0.0
    %4608 = vmatprep.subr.mxu0 0.0
    %4609 = vmatpush1.xpose.msra.mxu0 0.0
    %4610 = vmatprep.subr.mxu0 0.0
    %4611 = vmatpush1.xpose.msra.mxu0 0.0
    %4612 = vmatprep.subr.mxu0 0.0
    %4613 = vmatpush1.xpose.msra.mxu0 0.0
    %4614 = vmatprep.subr.mxu0 0.0
    %4615 = vmatpush1.xpose.msra.mxu0 0.0
    %4616 = vmatprep.subr.mxu0 0.0
    %4617 = vmatpush1.xpose.msra.mxu0 0.0
    %4618 = vmatprep.subr.mxu0 0.0
    %4619 = vmatpush1.xpose.msra.mxu0 0.0
    %4620 = vmatprep.subr.mxu0 0.0
    %4621 = vmatpush1.xpose.msra.mxu0 0.0
    %4622 = vmatprep.subr.mxu0 0.0
    %4623 = vmatpush1.xpose.msra.mxu0 0.0
    %4624 = vmatprep.subr.mxu0 0.0
    %4625 = vmatpush1.xpose.msra.mxu0 0.0
    %4626 = vmatprep.subr.mxu0 0.0
    %4627 = vmatpush1.xpose.msra.mxu0 0.0
    %4628 = vmatprep.subr.mxu0 0.0
    %4629 = vmatpush1.xpose.msra.mxu0 0.0
    %4630 = vmatprep.subr.mxu0 0.0
    %4631 = vmatpush1.xpose.msra.mxu0 0.0
    %4632 = vmatprep.subr.mxu0 0.0
    %4633 = vmatpush1.xpose.msra.mxu0 0.0
    %4634 = vmatprep.subr.mxu0 0.0
    %4635 = vmatpush1.xpose.msra.mxu0 0.0
    %4636 = vmatprep.mubr.f32.mxu0 0.0
    %4637 = vmatmul.mubr.f32.gmra.mrb[0].mxu0 %v4568
    %v4638 = vpop.f32.mrb[0].mxu0
    %v4639 = vadd.f32 0.0, %v4638
    %v4640 = vpop.f32.mrb[0].mxu0
    %4641 = vdwg.mxu0
    %4642 = vrot.lane.b32.xlu0 %v3903, 112
    %v4643 = vpop.permute.xlu0 %4642
    %4644 = vrot.lane.b32.xlu0 %v3899, 80
    %v4645 = vpop.permute.xlu0 %4644
    %v4646 = vsel %vm63, %v4643, 0
    %v4648 = vsel %vm63, %v4645, 0
    %4650 = vmatprep.subr.mxu0 0.0
    %4651 = vmatpush1.xpose.msra.mxu0 %v4648
    %4652 = vmatprep.subr.mxu0 0.0
    %4653 = vmatpush1.xpose.msra.mxu0 0.0
    %4654 = vmatprep.subr.mxu0 0.0
    %4655 = vmatpush1.xpose.msra.mxu0 0.0
    %4656 = vmatprep.subr.mxu0 0.0
    %4657 = vmatpush1.xpose.msra.mxu0 0.0
    %4658 = vmatprep.subr.mxu0 0.0
    %4659 = vmatpush1.xpose.msra.mxu0 0.0
    %4660 = vmatprep.subr.mxu0 0.0
    %4661 = vmatpush1.xpose.msra.mxu0 0.0
    %4662 = vmatprep.subr.mxu0 0.0
    %4663 = vmatpush1.xpose.msra.mxu0 0.0
    %4664 = vmatprep.subr.mxu0 0.0
    %4665 = vmatpush1.xpose.msra.mxu0 0.0
    %4666 = vmatprep.subr.mxu0 0.0
    %4667 = vmatpush1.xpose.msra.mxu0 0.0
    %4668 = vmatprep.subr.mxu0 0.0
    %4669 = vmatpush1.xpose.msra.mxu0 0.0
    %4670 = vmatprep.subr.mxu0 0.0
    %4671 = vmatpush1.xpose.msra.mxu0 0.0
    %4672 = vmatprep.subr.mxu0 0.0
    %4673 = vmatpush1.xpose.msra.mxu0 0.0
    %4674 = vmatprep.subr.mxu0 0.0
    %4675 = vmatpush1.xpose.msra.mxu0 0.0
    %4676 = vmatprep.subr.mxu0 0.0
    %4677 = vmatpush1.xpose.msra.mxu0 0.0
    %4678 = vmatprep.subr.mxu0 0.0
    %4679 = vmatpush1.xpose.msra.mxu0 0.0
    %4680 = vmatprep.subr.mxu0 0.0
    %4681 = vmatpush1.xpose.msra.mxu0 0.0
    %4682 = vmatprep.subr.mxu0 0.0
    %4683 = vmatpush1.xpose.msra.mxu0 0.0
    %4684 = vmatprep.subr.mxu0 0.0
    %4685 = vmatpush1.xpose.msra.mxu0 0.0
    %4686 = vmatprep.subr.mxu0 0.0
    %4687 = vmatpush1.xpose.msra.mxu0 0.0
    %4688 = vmatprep.subr.mxu0 0.0
    %4689 = vmatpush1.xpose.msra.mxu0 0.0
    %4690 = vmatprep.subr.mxu0 0.0
    %4691 = vmatpush1.xpose.msra.mxu0 0.0
    %4692 = vmatprep.subr.mxu0 0.0
    %4693 = vmatpush1.xpose.msra.mxu0 0.0
    %4694 = vmatprep.subr.mxu0 0.0
    %4695 = vmatpush1.xpose.msra.mxu0 0.0
    %4696 = vmatprep.subr.mxu0 0.0
    %4697 = vmatpush1.xpose.msra.mxu0 0.0
    %4698 = vmatprep.subr.mxu0 0.0
    %4699 = vmatpush1.xpose.msra.mxu0 0.0
    %4700 = vmatprep.subr.mxu0 0.0
    %4701 = vmatpush1.xpose.msra.mxu0 0.0
    %4702 = vmatprep.subr.mxu0 0.0
    %4703 = vmatpush1.xpose.msra.mxu0 0.0
    %4704 = vmatprep.subr.mxu0 0.0
    %4705 = vmatpush1.xpose.msra.mxu0 0.0
    %4706 = vmatprep.subr.mxu0 0.0
    %4707 = vmatpush1.xpose.msra.mxu0 0.0
    %4708 = vmatprep.subr.mxu0 0.0
    %4709 = vmatpush1.xpose.msra.mxu0 0.0
    %4710 = vmatprep.subr.mxu0 0.0
    %4711 = vmatpush1.xpose.msra.mxu0 0.0
    %4712 = vmatprep.subr.mxu0 0.0
    %4713 = vmatpush1.xpose.msra.mxu0 0.0
    %4714 = vmatprep.mubr.f32.mxu0 0.0
    %4715 = vmatmul.mubr.f32.gmra.mrb[0].mxu0 %v4646
    %v4716 = vpop.f32.mrb[0].mxu0
    %v4717 = vadd.f32 0.0, %v4716
    %v4718 = vpop.f32.mrb[0].mxu0
    %4719 = vdwg.mxu0
    %v4720 = vsel %vm63, %v4639, -inf
    %4721 = vmax.xlane.f32.xlu0 %v4720
    %v4722 = vpop.xlane.xlu0 %4721
    %v4723 = vsel %vm63, %v4717, -inf
    %4724 = vmax.xlane.f32.xlu0 %v4723
    %v4725 = vpop.xlane.xlu0 %4724
    %v4726 = vsub.f32 %v4639, %v4722
    %v4727 = vsub.f32 %v4717, %v4725
    %v4728 = vmul.f32 %v4726, 1.442695
    %v4729 = vpow.pop %v4728
    %v4730 = vmul.f32 %v4727, 1.442695
    %v4731 = vpow.pop %v4730
    %v4732 = vsel %vm63, %v4729, 0.0
    %4733 = vadd.xlane.f32.xlu0 %v4732
    %v4734 = vpop.xlane.xlu0 %4733
    %v4735 = vsel %vm63, %v4731, 0.0
    %4736 = vadd.xlane.f32.xlu0 %v4735
    %v4737 = vpop.xlane.xlu0 %4736
    %v4738 = vrcp.pop %v4734
    %v4739 = vrcp.pop %v4737
    %v4740 = vmul.f32 %v4729, %v4738
    %v4741 = vmul.f32 %v4731, %v4739
    %4742 = vrot.lane.b32.xlu0 %v3894, 48
    %v4743 = vpop.permute.xlu0 %4742
    %v4746 = vsel %vm63, %v4740, 0
    %4748 = vmatprep.subr.mxu0 0.0
    %4749 = vmatpush1.msra.mxu0 %v4743
    %4750 = vmatprep.subr.mxu0 0.0
    %4751 = vmatpush1.msra.mxu0 0.0
    %4752 = vmatprep.subr.mxu0 0.0
    %4753 = vmatpush1.msra.mxu0 0.0
    %4754 = vmatprep.subr.mxu0 0.0
    %4755 = vmatpush1.msra.mxu0 0.0
    %4756 = vmatprep.subr.mxu0 0.0
    %4757 = vmatpush1.msra.mxu0 0.0
    %4758 = vmatprep.subr.mxu0 0.0
    %4759 = vmatpush1.msra.mxu0 0.0
    %4760 = vmatprep.subr.mxu0 0.0
    %4761 = vmatpush1.msra.mxu0 0.0
    %4762 = vmatprep.subr.mxu0 0.0
    %4763 = vmatpush1.msra.mxu0 0.0
    %4764 = vmatprep.subr.mxu0 0.0
    %4765 = vmatpush1.msra.mxu0 0.0
    %4766 = vmatprep.subr.mxu0 0.0
    %4767 = vmatpush1.msra.mxu0 0.0
    %4768 = vmatprep.subr.mxu0 0.0
    %4769 = vmatpush1.msra.mxu0 0.0
    %4770 = vmatprep.subr.mxu0 0.0
    %4771 = vmatpush1.msra.mxu0 0.0
    %4772 = vmatprep.subr.mxu0 0.0
    %4773 = vmatpush1.msra.mxu0 0.0
    %4774 = vmatprep.subr.mxu0 0.0
    %4775 = vmatpush1.msra.mxu0 0.0
    %4776 = vmatprep.subr.mxu0 0.0
    %4777 = vmatpush1.msra.mxu0 0.0
    %4778 = vmatprep.subr.mxu0 0.0
    %4779 = vmatpush1.msra.mxu0 0.0
    %4780 = vmatprep.subr.mxu0 0.0
    %4781 = vmatpush1.msra.mxu0 0.0
    %4782 = vmatprep.subr.mxu0 0.0
    %4783 = vmatpush1.msra.mxu0 0.0
    %4784 = vmatprep.subr.mxu0 0.0
    %4785 = vmatpush1.msra.mxu0 0.0
    %4786 = vmatprep.subr.mxu0 0.0
    %4787 = vmatpush1.msra.mxu0 0.0
    %4788 = vmatprep.subr.mxu0 0.0
    %4789 = vmatpush1.msra.mxu0 0.0
    %4790 = vmatprep.subr.mxu0 0.0
    %4791 = vmatpush1.msra.mxu0 0.0
    %4792 = vmatprep.subr.mxu0 0.0
    %4793 = vmatpush1.msra.mxu0 0.0
    %4794 = vmatprep.subr.mxu0 0.0
    %4795 = vmatpush1.msra.mxu0 0.0
    %4796 = vmatprep.subr.mxu0 0.0
    %4797 = vmatpush1.msra.mxu0 0.0
    %4798 = vmatprep.subr.mxu0 0.0
    %4799 = vmatpush1.msra.mxu0 0.0
    %4800 = vmatprep.subr.mxu0 0.0
    %4801 = vmatpush1.msra.mxu0 0.0
    %4802 = vmatprep.subr.mxu0 0.0
    %4803 = vmatpush1.msra.mxu0 0.0
    %4804 = vmatprep.subr.mxu0 0.0
    %4805 = vmatpush1.msra.mxu0 0.0
    %4806 = vmatprep.subr.mxu0 0.0
    %4807 = vmatpush1.msra.mxu0 0.0
    %4808 = vmatprep.subr.mxu0 0.0
    %4809 = vmatpush1.msra.mxu0 0.0
    %4810 = vmatprep.subr.mxu0 0.0
    %4811 = vmatpush1.msra.mxu0 0.0
    %4812 = vmatprep.mubr.f32.mxu0 0.0
    %4813 = vmatmul.mubr.f32.gmra.mrb[0].mxu0 %v4746
    %v4814 = vpop.f32.mrb[0].mxu0
    %v4815 = vadd.f32 0.0, %v4814
    %v4816 = vpop.f32.mrb[0].mxu0
    %4817 = vdwg.mxu0
    %4818 = vrot.lane.b32.xlu0 %v3899, 48
    %v4819 = vpop.permute.xlu0 %4818
    %v4822 = vsel %vm63, %v4741, 0
    %4824 = vmatprep.subr.mxu0 0.0
    %4825 = vmatpush1.msra.mxu0 %v4819
    %4826 = vmatprep.subr.mxu0 0.0
    %4827 = vmatpush1.msra.mxu0 0.0
    %4828 = vmatprep.subr.mxu0 0.0
    %4829 = vmatpush1.msra.mxu0 0.0
    %4830 = vmatprep.subr.mxu0 0.0
    %4831 = vmatpush1.msra.mxu0 0.0
    %4832 = vmatprep.subr.mxu0 0.0
    %4833 = vmatpush1.msra.mxu0 0.0
    %4834 = vmatprep.subr.mxu0 0.0
    %4835 = vmatpush1.msra.mxu0 0.0
    %4836 = vmatprep.subr.mxu0 0.0
    %4837 = vmatpush1.msra.mxu0 0.0
    %4838 = vmatprep.subr.mxu0 0.0
    %4839 = vmatpush1.msra.mxu0 0.0
    %4840 = vmatprep.subr.mxu0 0.0
    %4841 = vmatpush1.msra.mxu0 0.0
    %4842 = vmatprep.subr.mxu0 0.0
    %4843 = vmatpush1.msra.mxu0 0.0
    %4844 = vmatprep.subr.mxu0 0.0
    %4845 = vmatpush1.msra.mxu0 0.0
    %4846 = vmatprep.subr.mxu0 0.0
    %4847 = vmatpush1.msra.mxu0 0.0
    %4848 = vmatprep.subr.mxu0 0.0
    %4849 = vmatpush1.msra.mxu0 0.0
    %4850 = vmatprep.subr.mxu0 0.0
    %4851 = vmatpush1.msra.mxu0 0.0
    %4852 = vmatprep.subr.mxu0 0.0
    %4853 = vmatpush1.msra.mxu0 0.0
    %4854 = vmatprep.subr.mxu0 0.0
    %4855 = vmatpush1.msra.mxu0 0.0
    %4856 = vmatprep.subr.mxu0 0.0
    %4857 = vmatpush1.msra.mxu0 0.0
    %4858 = vmatprep.subr.mxu0 0.0
    %4859 = vmatpush1.msra.mxu0 0.0
    %4860 = vmatprep.subr.mxu0 0.0
    %4861 = vmatpush1.msra.mxu0 0.0
    %4862 = vmatprep.subr.mxu0 0.0
    %4863 = vmatpush1.msra.mxu0 0.0
    %4864 = vmatprep.subr.mxu0 0.0
    %4865 = vmatpush1.msra.mxu0 0.0
    %4866 = vmatprep.subr.mxu0 0.0
    %4867 = vmatpush1.msra.mxu0 0.0
    %4868 = vmatprep.subr.mxu0 0.0
    %4869 = vmatpush1.msra.mxu0 0.0
    %4870 = vmatprep.subr.mxu0 0.0
    %4871 = vmatpush1.msra.mxu0 0.0
    %4872 = vmatprep.subr.mxu0 0.0
    %4873 = vmatpush1.msra.mxu0 0.0
    %4874 = vmatprep.subr.mxu0 0.0
    %4875 = vmatpush1.msra.mxu0 0.0
    %4876 = vmatprep.subr.mxu0 0.0
    %4877 = vmatpush1.msra.mxu0 0.0
    %4878 = vmatprep.subr.mxu0 0.0
    %4879 = vmatpush1.msra.mxu0 0.0
    %4880 = vmatprep.subr.mxu0 0.0
    %4881 = vmatpush1.msra.mxu0 0.0
    %4882 = vmatprep.subr.mxu0 0.0
    %4883 = vmatpush1.msra.mxu0 0.0
    %4884 = vmatprep.subr.mxu0 0.0
    %4885 = vmatpush1.msra.mxu0 0.0
    %4886 = vmatprep.subr.mxu0 0.0
    %4887 = vmatpush1.msra.mxu0 0.0
    %4888 = vmatprep.mubr.f32.mxu0 0.0
    %4889 = vmatmul.mubr.f32.gmra.mrb[0].mxu0 %v4822
    %v4890 = vpop.f32.mrb[0].mxu0
    %v4891 = vadd.f32 0.0, %v4890
    %v4892 = vpop.f32.mrb[0].mxu0
    %4893 = vdwg.mxu0
    %4894 = vrot.lane.b32.xlu0 %v3902, 104
    %v4895 = vpop.permute.xlu0 %4894
    %4896 = vrot.lane.b32.xlu0 %v3894, 72
    %v4897 = vpop.permute.xlu0 %4896
    %v4898 = vsel %vm63, %v4895, 0
    %v4900 = vsel %vm63, %v4897, 0
    %4902 = vmatprep.subr.mxu0 0.0
    %4903 = vmatpush1.xpose.msra.mxu0 %v4900
    %4904 = vmatprep.subr.mxu0 0.0
    %4905 = vmatpush1.xpose.msra.mxu0 0.0
    %4906 = vmatprep.subr.mxu0 0.0
    %4907 = vmatpush1.xpose.msra.mxu0 0.0
    %4908 = vmatprep.subr.mxu0 0.0
    %4909 = vmatpush1.xpose.msra.mxu0 0.0
    %4910 = vmatprep.subr.mxu0 0.0
    %4911 = vmatpush1.xpose.msra.mxu0 0.0
    %4912 = vmatprep.subr.mxu0 0.0
    %4913 = vmatpush1.xpose.msra.mxu0 0.0
    %4914 = vmatprep.subr.mxu0 0.0
    %4915 = vmatpush1.xpose.msra.mxu0 0.0
    %4916 = vmatprep.subr.mxu0 0.0
    %4917 = vmatpush1.xpose.msra.mxu0 0.0
    %4918 = vmatprep.subr.mxu0 0.0
    %4919 = vmatpush1.xpose.msra.mxu0 0.0
    %4920 = vmatprep.subr.mxu0 0.0
    %4921 = vmatpush1.xpose.msra.mxu0 0.0
    %4922 = vmatprep.subr.mxu0 0.0
    %4923 = vmatpush1.xpose.msra.mxu0 0.0
    %4924 = vmatprep.subr.mxu0 0.0
    %4925 = vmatpush1.xpose.msra.mxu0 0.0
    %4926 = vmatprep.subr.mxu0 0.0
    %4927 = vmatpush1.xpose.msra.mxu0 0.0
    %4928 = vmatprep.subr.mxu0 0.0
    %4929 = vmatpush1.xpose.msra.mxu0 0.0
    %4930 = vmatprep.subr.mxu0 0.0
    %4931 = vmatpush1.xpose.msra.mxu0 0.0
    %4932 = vmatprep.subr.mxu0 0.0
    %4933 = vmatpush1.xpose.msra.mxu0 0.0
    %4934 = vmatprep.subr.mxu0 0.0
    %4935 = vmatpush1.xpose.msra.mxu0 0.0
    %4936 = vmatprep.subr.mxu0 0.0
    %4937 = vmatpush1.xpose.msra.mxu0 0.0
    %4938 = vmatprep.subr.mxu0 0.0
    %4939 = vmatpush1.xpose.msra.mxu0 0.0
    %4940 = vmatprep.subr.mxu0 0.0
    %4941 = vmatpush1.xpose.msra.mxu0 0.0
    %4942 = vmatprep.subr.mxu0 0.0
    %4943 = vmatpush1.xpose.msra.mxu0 0.0
    %4944 = vmatprep.subr.mxu0 0.0
    %4945 = vmatpush1.xpose.msra.mxu0 0.0
    %4946 = vmatprep.subr.mxu0 0.0
    %4947 = vmatpush1.xpose.msra.mxu0 0.0
    %4948 = vmatprep.subr.mxu0 0.0
    %4949 = vmatpush1.xpose.msra.mxu0 0.0
    %4950 = vmatprep.subr.mxu0 0.0
    %4951 = vmatpush1.xpose.msra.mxu0 0.0
    %4952 = vmatprep.subr.mxu0 0.0
    %4953 = vmatpush1.xpose.msra.mxu0 0.0
    %4954 = vmatprep.subr.mxu0 0.0
    %4955 = vmatpush1.xpose.msra.mxu0 0.0
    %4956 = vmatprep.subr.mxu0 0.0
    %4957 = vmatpush1.xpose.msra.mxu0 0.0
    %4958 = vmatprep.subr.mxu0 0.0
    %4959 = vmatpush1.xpose.msra.mxu0 0.0
    %4960 = vmatprep.subr.mxu0 0.0
    %4961 = vmatpush1.xpose.msra.mxu0 0.0
    %4962 = vmatprep.subr.mxu0 0.0
    %4963 = vmatpush1.xpose.msra.mxu0 0.0
    %4964 = vmatprep.subr.mxu0 0.0
    %4965 = vmatpush1.xpose.msra.mxu0 0.0
    %4966 = vmatprep.mubr.f32.mxu0 0.0
    %4967 = vmatmul.mubr.f32.gmra.mrb[0].mxu0 %v4898
    %v4968 = vpop.f32.mrb[0].mxu0
    %v4969 = vadd.f32 0.0, %v4968
    %v4970 = vpop.f32.mrb[0].mxu0
    %4971 = vdwg.mxu0
    %4972 = vrot.lane.b32.xlu0 %v3903, 104
    %v4973 = vpop.permute.xlu0 %4972
    %4974 = vrot.lane.b32.xlu0 %v3899, 72
    %v4975 = vpop.permute.xlu0 %4974
    %v4976 = vsel %vm63, %v4973, 0
    %v4978 = vsel %vm63, %v4975, 0
    %4980 = vmatprep.subr.mxu0 0.0
    %4981 = vmatpush1.xpose.msra.mxu0 %v4978
    %4982 = vmatprep.subr.mxu0 0.0
    %4983 = vmatpush1.xpose.msra.mxu0 0.0
    %4984 = vmatprep.subr.mxu0 0.0
    %4985 = vmatpush1.xpose.msra.mxu0 0.0
    %4986 = vmatprep.subr.mxu0 0.0
    %4987 = vmatpush1.xpose.msra.mxu0 0.0
    %4988 = vmatprep.subr.mxu0 0.0
    %4989 = vmatpush1.xpose.msra.mxu0 0.0
    %4990 = vmatprep.subr.mxu0 0.0
    %4991 = vmatpush1.xpose.msra.mxu0 0.0
    %4992 = vmatprep.subr.mxu0 0.0
    %4993 = vmatpush1.xpose.msra.mxu0 0.0
    %4994 = vmatprep.subr.mxu0 0.0
    %4995 = vmatpush1.xpose.msra.mxu0 0.0
    %4996 = vmatprep.subr.mxu0 0.0
    %4997 = vmatpush1.xpose.msra.mxu0 0.0
    %4998 = vmatprep.subr.mxu0 0.0
    %4999 = vmatpush1.xpose.msra.mxu0 0.0
    %5000 = vmatprep.subr.mxu0 0.0
    %5001 = vmatpush1.xpose.msra.mxu0 0.0
    %5002 = vmatprep.subr.mxu0 0.0
    %5003 = vmatpush1.xpose.msra.mxu0 0.0
    %5004 = vmatprep.subr.mxu0 0.0
    %5005 = vmatpush1.xpose.msra.mxu0 0.0
    %5006 = vmatprep.subr.mxu0 0.0
    %5007 = vmatpush1.xpose.msra.mxu0 0.0
    %5008 = vmatprep.subr.mxu0 0.0
    %5009 = vmatpush1.xpose.msra.mxu0 0.0
    %5010 = vmatprep.subr.mxu0 0.0
    %5011 = vmatpush1.xpose.msra.mxu0 0.0
    %5012 = vmatprep.subr.mxu0 0.0
    %5013 = vmatpush1.xpose.msra.mxu0 0.0
    %5014 = vmatprep.subr.mxu0 0.0
    %5015 = vmatpush1.xpose.msra.mxu0 0.0
    %5016 = vmatprep.subr.mxu0 0.0
    %5017 = vmatpush1.xpose.msra.mxu0 0.0
    %5018 = vmatprep.subr.mxu0 0.0
    %5019 = vmatpush1.xpose.msra.mxu0 0.0
    %5020 = vmatprep.subr.mxu0 0.0
    %5021 = vmatpush1.xpose.msra.mxu0 0.0
    %5022 = vmatprep.subr.mxu0 0.0
    %5023 = vmatpush1.xpose.msra.mxu0 0.0
    %5024 = vmatprep.subr.mxu0 0.0
    %5025 = vmatpush1.xpose.msra.mxu0 0.0
    %5026 = vmatprep.subr.mxu0 0.0
    %5027 = vmatpush1.xpose.msra.mxu0 0.0
    %5028 = vmatprep.subr.mxu0 0.0
    %5029 = vmatpush1.xpose.msra.mxu0 0.0
    %5030 = vmatprep.subr.mxu0 0.0
    %5031 = vmatpush1.xpose.msra.mxu0 0.0
    %5032 = vmatprep.subr.mxu0 0.0
    %5033 = vmatpush1.xpose.msra.mxu0 0.0
    %5034 = vmatprep.subr.mxu0 0.0
    %5035 = vmatpush1.xpose.msra.mxu0 0.0
    %5036 = vmatprep.subr.mxu0 0.0
    %5037 = vmatpush1.xpose.msra.mxu0 0.0
    %5038 = vmatprep.subr.mxu0 0.0
    %5039 = vmatpush1.xpose.msra.mxu0 0.0
    %5040 = vmatprep.subr.mxu0 0.0
    %5041 = vmatpush1.xpose.msra.mxu0 0.0
    %5042 = vmatprep.subr.mxu0 0.0
    %5043 = vmatpush1.xpose.msra.mxu0 0.0
    %5044 = vmatprep.mubr.f32.mxu0 0.0
    %5045 = vmatmul.mubr.f32.gmra.mrb[0].mxu0 %v4976
    %v5046 = vpop.f32.mrb[0].mxu0
    %v5047 = vadd.f32 0.0, %v5046
    %v5048 = vpop.f32.mrb[0].mxu0
    %5049 = vdwg.mxu0
    %v5050 = vsel %vm63, %v4969, -inf
    %5051 = vmax.xlane.f32.xlu0 %v5050
    %v5052 = vpop.xlane.xlu0 %5051
    %v5053 = vsel %vm63, %v5047, -inf
    %5054 = vmax.xlane.f32.xlu0 %v5053
    %v5055 = vpop.xlane.xlu0 %5054
    %v5056 = vsub.f32 %v4969, %v5052
    %v5057 = vsub.f32 %v5047, %v5055
    %v5058 = vmul.f32 %v5056, 1.442695
    %v5059 = vpow.pop %v5058
    %v5060 = vmul.f32 %v5057, 1.442695
    %v5061 = vpow.pop %v5060
    %v5062 = vsel %vm63, %v5059, 0.0
    %5063 = vadd.xlane.f32.xlu0 %v5062
    %v5064 = vpop.xlane.xlu0 %5063
    %v5065 = vsel %vm63, %v5061, 0.0
    %5066 = vadd.xlane.f32.xlu0 %v5065
    %v5067 = vpop.xlane.xlu0 %5066
    %v5068 = vrcp.pop %v5064
    %v5069 = vrcp.pop %v5067
    %v5070 = vmul.f32 %v5059, %v5068
    %v5071 = vmul.f32 %v5061, %v5069
    %5072 = vrot.lane.b32.xlu0 %v3894, 40
    %v5073 = vpop.permute.xlu0 %5072
    %v5076 = vsel %vm63, %v5070, 0
    %5078 = vmatprep.subr.mxu0 0.0
    %5079 = vmatpush1.msra.mxu0 %v5073
    %5080 = vmatprep.subr.mxu0 0.0
    %5081 = vmatpush1.msra.mxu0 0.0
    %5082 = vmatprep.subr.mxu0 0.0
    %5083 = vmatpush1.msra.mxu0 0.0
    %5084 = vmatprep.subr.mxu0 0.0
    %5085 = vmatpush1.msra.mxu0 0.0
    %5086 = vmatprep.subr.mxu0 0.0
    %5087 = vmatpush1.msra.mxu0 0.0
    %5088 = vmatprep.subr.mxu0 0.0
    %5089 = vmatpush1.msra.mxu0 0.0
    %5090 = vmatprep.subr.mxu0 0.0
    %5091 = vmatpush1.msra.mxu0 0.0
    %5092 = vmatprep.subr.mxu0 0.0
    %5093 = vmatpush1.msra.mxu0 0.0
    %5094 = vmatprep.subr.mxu0 0.0
    %5095 = vmatpush1.msra.mxu0 0.0
    %5096 = vmatprep.subr.mxu0 0.0
    %5097 = vmatpush1.msra.mxu0 0.0
    %5098 = vmatprep.subr.mxu0 0.0
    %5099 = vmatpush1.msra.mxu0 0.0
    %5100 = vmatprep.subr.mxu0 0.0
    %5101 = vmatpush1.msra.mxu0 0.0
    %5102 = vmatprep.subr.mxu0 0.0
    %5103 = vmatpush1.msra.mxu0 0.0
    %5104 = vmatprep.subr.mxu0 0.0
    %5105 = vmatpush1.msra.mxu0 0.0
    %5106 = vmatprep.subr.mxu0 0.0
    %5107 = vmatpush1.msra.mxu0 0.0
    %5108 = vmatprep.subr.mxu0 0.0
    %5109 = vmatpush1.msra.mxu0 0.0
    %5110 = vmatprep.subr.mxu0 0.0
    %5111 = vmatpush1.msra.mxu0 0.0
    %5112 = vmatprep.subr.mxu0 0.0
    %5113 = vmatpush1.msra.mxu0 0.0
    %5114 = vmatprep.subr.mxu0 0.0
    %5115 = vmatpush1.msra.mxu0 0.0
    %5116 = vmatprep.subr.mxu0 0.0
    %5117 = vmatpush1.msra.mxu0 0.0
    %5118 = vmatprep.subr.mxu0 0.0
    %5119 = vmatpush1.msra.mxu0 0.0
    %5120 = vmatprep.subr.mxu0 0.0
    %5121 = vmatpush1.msra.mxu0 0.0
    %5122 = vmatprep.subr.mxu0 0.0
    %5123 = vmatpush1.msra.mxu0 0.0
    %5124 = vmatprep.subr.mxu0 0.0
    %5125 = vmatpush1.msra.mxu0 0.0
    %5126 = vmatprep.subr.mxu0 0.0
    %5127 = vmatpush1.msra.mxu0 0.0
    %5128 = vmatprep.subr.mxu0 0.0
    %5129 = vmatpush1.msra.mxu0 0.0
    %5130 = vmatprep.subr.mxu0 0.0
    %5131 = vmatpush1.msra.mxu0 0.0
    %5132 = vmatprep.subr.mxu0 0.0
    %5133 = vmatpush1.msra.mxu0 0.0
    %5134 = vmatprep.subr.mxu0 0.0
    %5135 = vmatpush1.msra.mxu0 0.0
    %5136 = vmatprep.subr.mxu0 0.0
    %5137 = vmatpush1.msra.mxu0 0.0
    %5138 = vmatprep.subr.mxu0 0.0
    %5139 = vmatpush1.msra.mxu0 0.0
    %5140 = vmatprep.subr.mxu0 0.0
    %5141 = vmatpush1.msra.mxu0 0.0
    %5142 = vmatprep.mubr.f32.mxu0 0.0
    %5143 = vmatmul.mubr.f32.gmra.mrb[0].mxu0 %v5076
    %v5144 = vpop.f32.mrb[0].mxu0
    %v5145 = vadd.f32 0.0, %v5144
    %v5146 = vpop.f32.mrb[0].mxu0
    %5147 = vdwg.mxu0
    %5148 = vrot.lane.b32.xlu0 %v3899, 40
    %v5149 = vpop.permute.xlu0 %5148
    %v5152 = vsel %vm63, %v5071, 0
    %5154 = vmatprep.subr.mxu0 0.0
    %5155 = vmatpush1.msra.mxu0 %v5149
    %5156 = vmatprep.subr.mxu0 0.0
    %5157 = vmatpush1.msra.mxu0 0.0
    %5158 = vmatprep.subr.mxu0 0.0
    %5159 = vmatpush1.msra.mxu0 0.0
    %5160 = vmatprep.subr.mxu0 0.0
    %5161 = vmatpush1.msra.mxu0 0.0
    %5162 = vmatprep.subr.mxu0 0.0
    %5163 = vmatpush1.msra.mxu0 0.0
    %5164 = vmatprep.subr.mxu0 0.0
    %5165 = vmatpush1.msra.mxu0 0.0
    %5166 = vmatprep.subr.mxu0 0.0
    %5167 = vmatpush1.msra.mxu0 0.0
    %5168 = vmatprep.subr.mxu0 0.0
    %5169 = vmatpush1.msra.mxu0 0.0
    %5170 = vmatprep.subr.mxu0 0.0
    %5171 = vmatpush1.msra.mxu0 0.0
    %5172 = vmatprep.subr.mxu0 0.0
    %5173 = vmatpush1.msra.mxu0 0.0
    %5174 = vmatprep.subr.mxu0 0.0
    %5175 = vmatpush1.msra.mxu0 0.0
    %5176 = vmatprep.subr.mxu0 0.0
    %5177 = vmatpush1.msra.mxu0 0.0
    %5178 = vmatprep.subr.mxu0 0.0
    %5179 = vmatpush1.msra.mxu0 0.0
    %5180 = vmatprep.subr.mxu0 0.0
    %5181 = vmatpush1.msra.mxu0 0.0
    %5182 = vmatprep.subr.mxu0 0.0
    %5183 = vmatpush1.msra.mxu0 0.0
    %5184 = vmatprep.subr.mxu0 0.0
    %5185 = vmatpush1.msra.mxu0 0.0
    %5186 = vmatprep.subr.mxu0 0.0
    %5187 = vmatpush1.msra.mxu0 0.0
    %5188 = vmatprep.subr.mxu0 0.0
    %5189 = vmatpush1.msra.mxu0 0.0
    %5190 = vmatprep.subr.mxu0 0.0
    %5191 = vmatpush1.msra.mxu0 0.0
    %5192 = vmatprep.subr.mxu0 0.0
    %5193 = vmatpush1.msra.mxu0 0.0
    %5194 = vmatprep.subr.mxu0 0.0
    %5195 = vmatpush1.msra.mxu0 0.0
    %5196 = vmatprep.subr.mxu0 0.0
    %5197 = vmatpush1.msra.mxu0 0.0
    %5198 = vmatprep.subr.mxu0 0.0
    %5199 = vmatpush1.msra.mxu0 0.0
    %5200 = vmatprep.subr.mxu0 0.0
    %5201 = vmatpush1.msra.mxu0 0.0
    %5202 = vmatprep.subr.mxu0 0.0
    %5203 = vmatpush1.msra.mxu0 0.0
    %5204 = vmatprep.subr.mxu0 0.0
    %5205 = vmatpush1.msra.mxu0 0.0
    %5206 = vmatprep.subr.mxu0 0.0
    %5207 = vmatpush1.msra.mxu0 0.0
    %5208 = vmatprep.subr.mxu0 0.0
    %5209 = vmatpush1.msra.mxu0 0.0
    %5210 = vmatprep.subr.mxu0 0.0
    %5211 = vmatpush1.msra.mxu0 0.0
    %5212 = vmatprep.subr.mxu0 0.0
    %5213 = vmatpush1.msra.mxu0 0.0
    %5214 = vmatprep.subr.mxu0 0.0
    %5215 = vmatpush1.msra.mxu0 0.0
    %5216 = vmatprep.subr.mxu0 0.0
    %5217 = vmatpush1.msra.mxu0 0.0
    %5218 = vmatprep.mubr.f32.mxu0 0.0
    %5219 = vmatmul.mubr.f32.gmra.mrb[0].mxu0 %v5152
    %v5220 = vpop.f32.mrb[0].mxu0
    %v5221 = vadd.f32 0.0, %v5220
    %v5222 = vpop.f32.mrb[0].mxu0
    %5223 = vdwg.mxu0
    %5226 = vrot.lane.b32.xlu0 %v4485, 8
    %v5227 = vpop.permute.xlu0 %5226
    %5228 = vrot.lane.b32.xlu0 %v4561, 8
    %v5229 = vpop.permute.xlu0 %5228
    %5234 = vrot.lane.b32.xlu0 %v4815, 16
    %v5235 = vpop.permute.xlu0 %5234
    %5236 = vrot.lane.b32.xlu0 %v4891, 16
    %v5237 = vpop.permute.xlu0 %5236
    %5242 = vrot.lane.b32.xlu0 %v5145, 24
    %v5243 = vpop.permute.xlu0 %5242
    %5244 = vrot.lane.b32.xlu0 %v5221, 24
    %v5245 = vpop.permute.xlu0 %5244
    %v5248 = vsel %vm63, %v4155, %v5227
    %v5249 = vsel %vm63, %v4231, %v5229
    %v5250 = vsel %vm1586, %v5248, %v5235
    %v5251 = vsel %vm1586, %v5249, %v5237
    %v5252 = vsel %vm1589, %v5250, %v5243
    %v5253 = vsel %vm1589, %v5251, %v5245
    %s5254 = scalar_lea.vmem %s5, 32
    %v5255 = vld [vmem:[%s5254] sm:$0xff]
    %v5256 = vld [vmem:[%s5254 + $0x8] sm:$0xff]
    %v5257 = vld [vmem:[%s5254 + $0x10] sm:$0xff]
    %v5258 = vld [vmem:[%s5254 + $0x18] sm:$0xff]
    %s5259 = scalar_lea.vmem %s6, 1
    %v5260 = vld [vmem:[%s5259] sm:$0x1]
    %v5262 = vlaneseq
    %v5263 = vshrl.u32 %v5262, 7
    %v5264 = vsub.s32 0, %v5263
    %v5265 = vrot.slane %v5260, %v5264
    %v5268 = vsel %vm156, %v5252, 0
    %v5271 = vsel %vm156, %v5253, 0
    %5273 = vmatprep.subr.mxu0 0.0
    %5274 = vmatpush1.msra.mxu0 %v5255
    %5275 = vmatprep.subr.mxu0 0.0
    %5276 = vmatpush1.msra.mxu0 %v5256
    %5277 = vmatprep.subr.mxu0 0.0
    %5278 = vmatpush1.msra.mxu0 %v5257
    %5279 = vmatprep.subr.mxu0 0.0
    %5280 = vmatpush1.msra.mxu0 %v5258
    %5281 = vmatprep.subr.mxu0 0.0
    %5282 = vmatpush1.msra.mxu0 0.0
    %5283 = vmatprep.subr.mxu0 0.0
    %5284 = vmatpush1.msra.mxu0 0.0
    %5285 = vmatprep.subr.mxu0 0.0
    %5286 = vmatpush1.msra.mxu0 0.0
    %5287 = vmatprep.subr.mxu0 0.0
    %5288 = vmatpush1.msra.mxu0 0.0
    %5289 = vmatprep.subr.mxu0 0.0
    %5290 = vmatpush1.msra.mxu0 0.0
    %5291 = vmatprep.subr.mxu0 0.0
    %5292 = vmatpush1.msra.mxu0 0.0
    %5293 = vmatprep.subr.mxu0 0.0
    %5294 = vmatpush1.msra.mxu0 0.0
    %5295 = vmatprep.subr.mxu0 0.0
    %5296 = vmatpush1.msra.mxu0 0.0
    %5297 = vmatprep.subr.mxu0 0.0
    %5298 = vmatpush1.msra.mxu0 0.0
    %5299 = vmatprep.subr.mxu0 0.0
    %5300 = vmatpush1.msra.mxu0 0.0
    %5301 = vmatprep.subr.mxu0 0.0
    %5302 = vmatpush1.msra.mxu0 0.0
    %5303 = vmatprep.subr.mxu0 0.0
    %5304 = vmatpush1.msra.mxu0 0.0
    %5305 = vmatprep.subr.mxu0 0.0
    %5306 = vmatpush1.msra.mxu0 0.0
    %5307 = vmatprep.subr.mxu0 0.0
    %5308 = vmatpush1.msra.mxu0 0.0
    %5309 = vmatprep.subr.mxu0 0.0
    %5310 = vmatpush1.msra.mxu0 0.0
    %5311 = vmatprep.subr.mxu0 0.0
    %5312 = vmatpush1.msra.mxu0 0.0
    %5313 = vmatprep.subr.mxu0 0.0
    %5314 = vmatpush1.msra.mxu0 0.0
    %5315 = vmatprep.subr.mxu0 0.0
    %5316 = vmatpush1.msra.mxu0 0.0
    %5317 = vmatprep.subr.mxu0 0.0
    %5318 = vmatpush1.msra.mxu0 0.0
    %5319 = vmatprep.subr.mxu0 0.0
    %5320 = vmatpush1.msra.mxu0 0.0
    %5321 = vmatprep.subr.mxu0 0.0
    %5322 = vmatpush1.msra.mxu0 0.0
    %5323 = vmatprep.subr.mxu0 0.0
    %5324 = vmatpush1.msra.mxu0 0.0
    %5325 = vmatprep.subr.mxu0 0.0
    %5326 = vmatpush1.msra.mxu0 0.0
    %5327 = vmatprep.subr.mxu0 0.0
    %5328 = vmatpush1.msra.mxu0 0.0
    %5329 = vmatprep.subr.mxu0 0.0
    %5330 = vmatpush1.msra.mxu0 0.0
    %5331 = vmatprep.subr.mxu0 0.0
    %5332 = vmatpush1.msra.mxu0 0.0
    %5333 = vmatprep.subr.mxu0 0.0
    %5334 = vmatpush1.msra.mxu0 0.0
    %5335 = vmatprep.subr.mxu0 0.0
    %5336 = vmatpush1.msra.mxu0 0.0
    %5337 = vmatprep.mubr.f32.mxu0 0.0
    %5338 = vmatmul.mubr.f32.gmra.mrb[0].mxu0 %v5268
    %v5339 = vpop.f32.mrb[0].mxu0
    %v5340 = vadd.f32 %v5265, %v5339
    %v5341 = vpop.f32.mrb[0].mxu0
    %5342 = vmatprep.mubr.f32.mxu0 0.0
    %5343 = vmatmul.mubr.f32.gmra.mrb[0].mxu0 %v5271
    %v5344 = vpop.f32.mrb[0].mxu0
    %v5345 = vadd.f32 %v5265, %v5344
    %v5346 = vpop.f32.mrb[0].mxu0
    %5347 = vdwg.mxu0
    %v5348 = vadd.f32 %v3806, %v5340
    %v5349 = vadd.f32 %v3807, %v5345
    %s5350 = scalar_lea.vmem %s7, 1
    %v5351 = vld [vmem:[%s5350] sm:$0x1]
    %s5352 = scalar_lea.vmem %s8, 1
    %v5353 = vld [vmem:[%s5352] sm:$0x1]
    %v5354 = vsel %vm156, %v5348, 0.0
    %5355 = vadd.xlane.f32.xlu0 %v5354
    %v5356 = vpop.xlane.xlu0 %5355
    %v5357 = vsel %vm156, %v5349, 0.0
    %5358 = vadd.xlane.f32.xlu0 %v5357
    %v5359 = vpop.xlane.xlu0 %5358
    %v5360 = vmul.f32 %v5356, %v1694
    %v5361 = vmul.f32 %v5359, %v1694
    %v5362 = vsub.f32 %v5348, %v5360
    %v5363 = vsub.f32 %v5349, %v5361
    %v5364 = vmul.f32 %v5362, %v5362
    %v5365 = vmul.f32 %v5363, %v5363
    %v5366 = vsel %vm156, %v5364, 0.0
    %5367 = vadd.xlane.f32.xlu0 %v5366
    %v5368 = vpop.xlane.xlu0 %5367
    %v5369 = vsel %vm156, %v5365, 0.0
    %5370 = vadd.xlane.f32.xlu0 %v5369
    %v5371 = vpop.xlane.xlu0 %5370
    %v5372 = vmul.f32 %v5368, %v1694
    %v5373 = vmul.f32 %v5371, %v1694
    %v5374 = vadd.f32 %v5372, 1e-05
    %v5375 = vadd.f32 %v5373, 1e-05
    %v5376 = vrsqrt.pop %v5374
    %v5377 = vrsqrt.pop %v5375
    %v5378 = vmul.f32 %v5362, %v5376
    %v5379 = vmul.f32 %v5363, %v5377
    %v5381 = vlaneseq
    %v5382 = vshrl.u32 %v5381, 7
    %v5383 = vsub.s32 0, %v5382
    %v5384 = vrot.slane %v5351, %v5383
    %v5386 = vmul.f32 %v5378, %v5384
    %v5387 = vmul.f32 %v5379, %v5384
    %v5389 = vlaneseq
    %v5390 = vshrl.u32 %v5389, 7
    %v5391 = vsub.s32 0, %v5390
    %v5392 = vrot.slane %v5353, %v5391
    %v5394 = vadd.f32 %v5386, %v5392
    %v5395 = vadd.f32 %v5387, %v5392
    %v5396 = vpack.c.bf16 %v5395, %v5394
    %s5397 = scalar_lea.vmem %s9, 256
    %v5398 = vld [vmem:[%s5397] sm:$0xff]
    %v5399 = vld [vmem:[%s5397 + $0x8] sm:$0xff]
    %v5400 = vld [vmem:[%s5397 + $0x10] sm:$0xff]
    %v5401 = vld [vmem:[%s5397 + $0x18] sm:$0xff]
    %v5402 = vld [vmem:[%s5397 + $0x20] sm:$0xff]
    %v5403 = vld [vmem:[%s5397 + $0x28] sm:$0xff]
    %v5404 = vld [vmem:[%s5397 + $0x30] sm:$0xff]
    %v5405 = vld [vmem:[%s5397 + $0x38] sm:$0xff]
    %v5406 = vld [vmem:[%s5397 + $0x40] sm:$0xff]
    %v5407 = vld [vmem:[%s5397 + $0x48] sm:$0xff]
    %v5408 = vld [vmem:[%s5397 + $0x50] sm:$0xff]
    %v5409 = vld [vmem:[%s5397 + $0x58] sm:$0xff]
    %v5410 = vld [vmem:[%s5397 + $0x60] sm:$0xff]
    %v5411 = vld [vmem:[%s5397 + $0x68] sm:$0xff]
    %v5412 = vld [vmem:[%s5397 + $0x70] sm:$0xff]
    %v5413 = vld [vmem:[%s5397 + $0x78] sm:$0xff]
    %v5414 = vld [vmem:[%s5397 + $0x80] sm:$0xff]
    %v5415 = vld [vmem:[%s5397 + $0x88] sm:$0xff]
    %v5416 = vld [vmem:[%s5397 + $0x90] sm:$0xff]
    %v5417 = vld [vmem:[%s5397 + $0x98] sm:$0xff]
    %v5418 = vld [vmem:[%s5397 + $0xa0] sm:$0xff]
    %v5419 = vld [vmem:[%s5397 + $0xa8] sm:$0xff]
    %v5420 = vld [vmem:[%s5397 + $0xb0] sm:$0xff]
    %v5421 = vld [vmem:[%s5397 + $0xb8] sm:$0xff]
    %v5422 = vld [vmem:[%s5397 + $0xc0] sm:$0xff]
    %v5423 = vld [vmem:[%s5397 + $0xc8] sm:$0xff]
    %v5424 = vld [vmem:[%s5397 + $0xd0] sm:$0xff]
    %v5425 = vld [vmem:[%s5397 + $0xd8] sm:$0xff]
    %v5426 = vld [vmem:[%s5397 + $0xe0] sm:$0xff]
    %v5427 = vld [vmem:[%s5397 + $0xe8] sm:$0xff]
    %v5428 = vld [vmem:[%s5397 + $0xf0] sm:$0xff]
    %v5429 = vld [vmem:[%s5397 + $0xf8] sm:$0xff]
    %s5430 = scalar_lea.vmem %s10, 16
    %v5431 = vld [vmem:[%s5430] sm:$0xff]
    %v5432 = vld [vmem:[%s5430 + $0x8] sm:$0xff]
    %v5435 = vlaneseq
    %v5436 = vshrl.u32 %v5435, 7
    %v5437 = vsub.s32 0, %v5436
    %v5438 = vrot.slane %v5431, %v5437
    %v5439 = vlaneseq
    %v5440 = vshrl.u32 %v5439, 7
    %v5441 = vsub.s32 1, %v5440
    %v5442 = vrot.slane %v5431, %v5441
    %v5443 = vlaneseq
    %v5444 = vshrl.u32 %v5443, 7
    %v5445 = vsub.s32 2, %v5444
    %v5446 = vrot.slane %v5431, %v5445
    %v5447 = vlaneseq
    %v5448 = vshrl.u32 %v5447, 7
    %v5449 = vsub.s32 3, %v5448
    %v5450 = vrot.slane %v5431, %v5449
    %v5451 = vlaneseq
    %v5452 = vshrl.u32 %v5451, 7
    %v5453 = vsub.s32 4, %v5452
    %v5454 = vrot.slane %v5431, %v5453
    %v5455 = vlaneseq
    %v5456 = vshrl.u32 %v5455, 7
    %v5457 = vsub.s32 5, %v5456
    %v5458 = vrot.slane %v5431, %v5457
    %v5459 = vlaneseq
    %v5460 = vshrl.u32 %v5459, 7
    %v5461 = vsub.s32 6, %v5460
    %v5462 = vrot.slane %v5431, %v5461
    %v5463 = vlaneseq
    %v5464 = vshrl.u32 %v5463, 7
    %v5465 = vsub.s32 7, %v5464
    %v5466 = vrot.slane %v5431, %v5465
    %v5467 = vlaneseq
    %v5468 = vshrl.u32 %v5467, 7
    %v5469 = vsub.s32 0, %v5468
    %v5470 = vrot.slane %v5432, %v5469
    %v5471 = vlaneseq
    %v5472 = vshrl.u32 %v5471, 7
    %v5473 = vsub.s32 1, %v5472
    %v5474 = vrot.slane %v5432, %v5473
    %v5475 = vlaneseq
    %v5476 = vshrl.u32 %v5475, 7
    %v5477 = vsub.s32 2, %v5476
    %v5478 = vrot.slane %v5432, %v5477
    %v5479 = vlaneseq
    %v5480 = vshrl.u32 %v5479, 7
    %v5481 = vsub.s32 3, %v5480
    %v5482 = vrot.slane %v5432, %v5481
    %v5483 = vlaneseq
    %v5484 = vshrl.u32 %v5483, 7
    %v5485 = vsub.s32 4, %v5484
    %v5486 = vrot.slane %v5432, %v5485
    %v5487 = vlaneseq
    %v5488 = vshrl.u32 %v5487, 7
    %v5489 = vsub.s32 5, %v5488
    %v5490 = vrot.slane %v5432, %v5489
    %v5491 = vlaneseq
    %v5492 = vshrl.u32 %v5491, 7
    %v5493 = vsub.s32 6, %v5492
    %v5494 = vrot.slane %v5432, %v5493
    %v5495 = vlaneseq
    %v5496 = vshrl.u32 %v5495, 7
    %v5497 = vsub.s32 7, %v5496
    %v5498 = vrot.slane %v5432, %v5497
    %v5547 = vunpack.c.l.b16 %v5398
    %v5548 = vunpack.c.h.b16 %v5398
    %v5549 = vunpack.c.l.b16 %v5399
    %v5550 = vunpack.c.h.b16 %v5399
    %v5551 = vunpack.c.l.b16 %v5400
    %v5552 = vunpack.c.h.b16 %v5400
    %v5553 = vunpack.c.l.b16 %v5401
    %v5554 = vunpack.c.h.b16 %v5401
    %v5555 = vunpack.c.l.b16 %v5402
    %v5556 = vunpack.c.h.b16 %v5402
    %v5557 = vunpack.c.l.b16 %v5403
    %v5558 = vunpack.c.h.b16 %v5403
    %v5559 = vunpack.c.l.b16 %v5404
    %v5560 = vunpack.c.h.b16 %v5404
    %v5561 = vunpack.c.l.b16 %v5405
    %v5562 = vunpack.c.h.b16 %v5405
    %v5563 = vunpack.c.l.b16 %v5406
    %v5564 = vunpack.c.h.b16 %v5406
    %v5565 = vunpack.c.l.b16 %v5407
    %v5566 = vunpack.c.h.b16 %v5407
    %v5567 = vunpack.c.l.b16 %v5408
    %v5568 = vunpack.c.h.b16 %v5408
    %v5569 = vunpack.c.l.b16 %v5409
    %v5570 = vunpack.c.h.b16 %v5409
    %v5571 = vunpack.c.l.b16 %v5410
    %v5572 = vunpack.c.h.b16 %v5410
    %v5573 = vunpack.c.l.b16 %v5411
    %v5574 = vunpack.c.h.b16 %v5411
    %v5575 = vunpack.c.l.b16 %v5412
    %v5576 = vunpack.c.h.b16 %v5412
    %v5577 = vunpack.c.l.b16 %v5413
    %v5578 = vunpack.c.h.b16 %v5413
    %v5579 = vunpack.c.l.b16 %v5414
    %v5580 = vunpack.c.h.b16 %v5414
    %v5581 = vunpack.c.l.b16 %v5415
    %v5582 = vunpack.c.h.b16 %v5415
    %v5583 = vunpack.c.l.b16 %v5416
    %v5584 = vunpack.c.h.b16 %v5416
    %v5585 = vunpack.c.l.b16 %v5417
    %v5586 = vunpack.c.h.b16 %v5417
    %v5587 = vunpack.c.l.b16 %v5418
    %v5588 = vunpack.c.h.b16 %v5418
    %v5589 = vunpack.c.l.b16 %v5419
    %v5590 = vunpack.c.h.b16 %v5419
    %v5591 = vunpack.c.l.b16 %v5420
    %v5592 = vunpack.c.h.b16 %v5420
    %v5593 = vunpack.c.l.b16 %v5421
    %v5594 = vunpack.c.h.b16 %v5421
    %v5595 = vunpack.c.l.b16 %v5422
    %v5596 = vunpack.c.h.b16 %v5422
    %v5597 = vunpack.c.l.b16 %v5423
    %v5598 = vunpack.c.h.b16 %v5423
    %v5599 = vunpack.c.l.b16 %v5424
    %v5600 = vunpack.c.h.b16 %v5424
    %v5601 = vunpack.c.l.b16 %v5425
    %v5602 = vunpack.c.h.b16 %v5425
    %v5603 = vunpack.c.l.b16 %v5426
    %v5604 = vunpack.c.h.b16 %v5426
    %v5605 = vunpack.c.l.b16 %v5427
    %v5606 = vunpack.c.h.b16 %v5427
    %v5607 = vunpack.c.l.b16 %v5428
    %v5608 = vunpack.c.h.b16 %v5428
    %v5609 = vunpack.c.l.b16 %v5429
    %v5610 = vunpack.c.h.b16 %v5429
    %v5611 = vpack.c.b16 %v5563, %v5547
    %v5612 = vpack.c.b16 %v5564, %v5548
    %v5613 = vpack.c.b16 %v5565, %v5549
    %v5614 = vpack.c.b16 %v5566, %v5550
    %v5615 = vpack.c.b16 %v5567, %v5551
    %v5616 = vpack.c.b16 %v5568, %v5552
    %v5617 = vpack.c.b16 %v5569, %v5553
    %v5618 = vpack.c.b16 %v5570, %v5554
    %v5619 = vpack.c.b16 %v5571, %v5555
    %v5620 = vpack.c.b16 %v5572, %v5556
    %v5621 = vpack.c.b16 %v5573, %v5557
    %v5622 = vpack.c.b16 %v5574, %v5558
    %v5623 = vpack.c.b16 %v5575, %v5559
    %v5624 = vpack.c.b16 %v5576, %v5560
    %v5625 = vpack.c.b16 %v5577, %v5561
    %v5626 = vpack.c.b16 %v5578, %v5562
    %v5627 = vpack.c.b16 %v5595, %v5579
    %v5628 = vpack.c.b16 %v5596, %v5580
    %v5629 = vpack.c.b16 %v5597, %v5581
    %v5630 = vpack.c.b16 %v5598, %v5582
    %v5631 = vpack.c.b16 %v5599, %v5583
    %v5632 = vpack.c.b16 %v5600, %v5584
    %v5633 = vpack.c.b16 %v5601, %v5585
    %v5634 = vpack.c.b16 %v5602, %v5586
    %v5635 = vpack.c.b16 %v5603, %v5587
    %v5636 = vpack.c.b16 %v5604, %v5588
    %v5637 = vpack.c.b16 %v5605, %v5589
    %v5638 = vpack.c.b16 %v5606, %v5590
    %v5639 = vpack.c.b16 %v5607, %v5591
    %v5640 = vpack.c.b16 %v5608, %v5592
    %v5641 = vpack.c.b16 %v5609, %v5593
    %v5642 = vpack.c.b16 %v5610, %v5594
    %v5676 = vsel %vm156, %v5396, 0
    %5678 = vmatprep.subr.bf16.mxu0 %v5612
    %5679 = vmatpush1.bf16.msra.mxu0 %v5611
    %5680 = vmatprep.subr.bf16.mxu0 %v5628
    %5681 = vmatpush1.bf16.msra.mxu0 %v5627
    %5682 = vmatprep.subr.bf16.mxu0 0
    %5683 = vmatpush1.bf16.msra.mxu0 0
    %5684 = vmatprep.subr.bf16.mxu0 0
    %5685 = vmatpush1.bf16.msra.mxu0 0
    %5686 = vmatprep.subr.bf16.mxu0 0
    %5687 = vmatpush1.bf16.msra.mxu0 0
    %5688 = vmatprep.subr.bf16.mxu0 0
    %5689 = vmatpush1.bf16.msra.mxu0 0
    %5690 = vmatprep.subr.bf16.mxu0 0
    %5691 = vmatpush1.bf16.msra.mxu0 0
    %5692 = vmatprep.subr.bf16.mxu0 0
    %5693 = vmatpush1.bf16.msra.mxu0 0
    %5694 = vmatprep.subr.bf16.mxu0 0
    %5695 = vmatpush1.bf16.msra.mxu0 0
    %5696 = vmatprep.subr.bf16.mxu0 0
    %5697 = vmatpush1.bf16.msra.mxu0 0
    %5698 = vmatprep.subr.bf16.mxu0 0
    %5699 = vmatpush1.bf16.msra.mxu0 0
    %5700 = vmatprep.subr.bf16.mxu0 0
    %5701 = vmatpush1.bf16.msra.mxu0 0
    %5702 = vmatprep.subr.bf16.mxu0 0
    %5703 = vmatpush1.bf16.msra.mxu0 0
    %5704 = vmatprep.subr.bf16.mxu0 0
    %5705 = vmatpush1.bf16.msra.mxu0 0
    %5706 = vmatprep.subr.bf16.mxu0 0
    %5707 = vmatpush1.bf16.msra.mxu0 0
    %5708 = vmatprep.subr.bf16.mxu0 0
    %5709 = vmatpush1.bf16.msra.mxu0 0
    %5710 = vmatprep.mubr.bf16.mxu0 0
    %5711 = vmatmul.mubr.bf16.gmra.mrb[0].mxu0 %v5676
    %v5712 = vpop.f32.mrb[0].mxu0
    %v5713 = vadd.f32 %v5438, %v5712
    %v5714 = vpop.f32.mrb[0].mxu0
    %v5715 = vadd.f32 %v5442, %v5714
    %v5716 = vpop.f32.mrb[0].mxu0
    %v5717 = vadd.f32 %v5438, %v5716
    %v5718 = vpop.f32.mrb[0].mxu0
    %v5719 = vadd.f32 %v5442, %v5718
    %5720 = vdwg.mxu0
    %5721 = vmatprep.subr.bf16.mxu0 %v5614
    %5722 = vmatpush1.bf16.msra.mxu0 %v5613
    %5723 = vmatprep.subr.bf16.mxu0 %v5630
    %5724 = vmatpush1.bf16.msra.mxu0 %v5629
    %5725 = vmatprep.subr.bf16.mxu0 0
    %5726 = vmatpush1.bf16.msra.mxu0 0
    %5727 = vmatprep.subr.bf16.mxu0 0
    %5728 = vmatpush1.bf16.msra.mxu0 0
    %5729 = vmatprep.subr.bf16.mxu0 0
    %5730 = vmatpush1.bf16.msra.mxu0 0
    %5731 = vmatprep.subr.bf16.mxu0 0
    %5732 = vmatpush1.bf16.msra.mxu0 0
    %5733 = vmatprep.subr.bf16.mxu0 0
    %5734 = vmatpush1.bf16.msra.mxu0 0
    %5735 = vmatprep.subr.bf16.mxu0 0
    %5736 = vmatpush1.bf16.msra.mxu0 0
    %5737 = vmatprep.subr.bf16.mxu0 0
    %5738 = vmatpush1.bf16.msra.mxu0 0
    %5739 = vmatprep.subr.bf16.mxu0 0
    %5740 = vmatpush1.bf16.msra.mxu0 0
    %5741 = vmatprep.subr.bf16.mxu0 0
    %5742 = vmatpush1.bf16.msra.mxu0 0
    %5743 = vmatprep.subr.bf16.mxu0 0
    %5744 = vmatpush1.bf16.msra.mxu0 0
    %5745 = vmatprep.subr.bf16.mxu0 0
    %5746 = vmatpush1.bf16.msra.mxu0 0
    %5747 = vmatprep.subr.bf16.mxu0 0
    %5748 = vmatpush1.bf16.msra.mxu0 0
    %5749 = vmatprep.subr.bf16.mxu0 0
    %5750 = vmatpush1.bf16.msra.mxu0 0
    %5751 = vmatprep.subr.bf16.mxu0 0
    %5752 = vmatpush1.bf16.msra.mxu0 0
    %5753 = vmatprep.mubr.bf16.mxu0 0
    %5754 = vmatmul.mubr.bf16.gmra.mrb[0].mxu0 %v5676
    %v5755 = vpop.f32.mrb[0].mxu0
    %v5756 = vadd.f32 %v5446, %v5755
    %v5757 = vpop.f32.mrb[0].mxu0
    %v5758 = vadd.f32 %v5450, %v5757
    %v5759 = vpop.f32.mrb[0].mxu0
    %v5760 = vadd.f32 %v5446, %v5759
    %v5761 = vpop.f32.mrb[0].mxu0
    %v5762 = vadd.f32 %v5450, %v5761
    %5763 = vdwg.mxu0
    %5764 = vmatprep.subr.bf16.mxu0 %v5616
    %5765 = vmatpush1.bf16.msra.mxu0 %v5615
    %5766 = vmatprep.subr.bf16.mxu0 %v5632
    %5767 = vmatpush1.bf16.msra.mxu0 %v5631
    %5768 = vmatprep.subr.bf16.mxu0 0
    %5769 = vmatpush1.bf16.msra.mxu0 0
    %5770 = vmatprep.subr.bf16.mxu0 0
    %5771 = vmatpush1.bf16.msra.mxu0 0
    %5772 = vmatprep.subr.bf16.mxu0 0
    %5773 = vmatpush1.bf16.msra.mxu0 0
    %5774 = vmatprep.subr.bf16.mxu0 0
    %5775 = vmatpush1.bf16.msra.mxu0 0
    %5776 = vmatprep.subr.bf16.mxu0 0
    %5777 = vmatpush1.bf16.msra.mxu0 0
    %5778 = vmatprep.subr.bf16.mxu0 0
    %5779 = vmatpush1.bf16.msra.mxu0 0
    %5780 = vmatprep.subr.bf16.mxu0 0
    %5781 = vmatpush1.bf16.msra.mxu0 0
    %5782 = vmatprep.subr.bf16.mxu0 0
    %5783 = vmatpush1.bf16.msra.mxu0 0
    %5784 = vmatprep.subr.bf16.mxu0 0
    %5785 = vmatpush1.bf16.msra.mxu0 0
    %5786 = vmatprep.subr.bf16.mxu0 0
    %5787 = vmatpush1.bf16.msra.mxu0 0
    %5788 = vmatprep.subr.bf16.mxu0 0
    %5789 = vmatpush1.bf16.msra.mxu0 0
    %5790 = vmatprep.subr.bf16.mxu0 0
    %5791 = vmatpush1.bf16.msra.mxu0 0
    %5792 = vmatprep.subr.bf16.mxu0 0
    %5793 = vmatpush1.bf16.msra.mxu0 0
    %5794 = vmatprep.subr.bf16.mxu0 0
    %5795 = vmatpush1.bf16.msra.mxu0 0
    %5796 = vmatprep.mubr.bf16.mxu0 0
    %5797 = vmatmul.mubr.bf16.gmra.mrb[0].mxu0 %v5676
    %v5798 = vpop.f32.mrb[0].mxu0
    %v5799 = vadd.f32 %v5454, %v5798
    %v5800 = vpop.f32.mrb[0].mxu0
    %v5801 = vadd.f32 %v5458, %v5800
    %v5802 = vpop.f32.mrb[0].mxu0
    %v5803 = vadd.f32 %v5454, %v5802
    %v5804 = vpop.f32.mrb[0].mxu0
    %v5805 = vadd.f32 %v5458, %v5804
    %5806 = vdwg.mxu0
    %5807 = vmatprep.subr.bf16.mxu0 %v5618
    %5808 = vmatpush1.bf16.msra.mxu0 %v5617
    %5809 = vmatprep.subr.bf16.mxu0 %v5634
    %5810 = vmatpush1.bf16.msra.mxu0 %v5633
    %5811 = vmatprep.subr.bf16.mxu0 0
    %5812 = vmatpush1.bf16.msra.mxu0 0
    %5813 = vmatprep.subr.bf16.mxu0 0
    %5814 = vmatpush1.bf16.msra.mxu0 0
    %5815 = vmatprep.subr.bf16.mxu0 0
    %5816 = vmatpush1.bf16.msra.mxu0 0
    %5817 = vmatprep.subr.bf16.mxu0 0
    %5818 = vmatpush1.bf16.msra.mxu0 0
    %5819 = vmatprep.subr.bf16.mxu0 0
    %5820 = vmatpush1.bf16.msra.mxu0 0
    %5821 = vmatprep.subr.bf16.mxu0 0
    %5822 = vmatpush1.bf16.msra.mxu0 0
    %5823 = vmatprep.subr.bf16.mxu0 0
    %5824 = vmatpush1.bf16.msra.mxu0 0
    %5825 = vmatprep.subr.bf16.mxu0 0
    %5826 = vmatpush1.bf16.msra.mxu0 0
    %5827 = vmatprep.subr.bf16.mxu0 0
    %5828 = vmatpush1.bf16.msra.mxu0 0
    %5829 = vmatprep.subr.bf16.mxu0 0
    %5830 = vmatpush1.bf16.msra.mxu0 0
    %5831 = vmatprep.subr.bf16.mxu0 0
    %5832 = vmatpush1.bf16.msra.mxu0 0
    %5833 = vmatprep.subr.bf16.mxu0 0
    %5834 = vmatpush1.bf16.msra.mxu0 0
    %5835 = vmatprep.subr.bf16.mxu0 0
    %5836 = vmatpush1.bf16.msra.mxu0 0
    %5837 = vmatprep.subr.bf16.mxu0 0
    %5838 = vmatpush1.bf16.msra.mxu0 0
    %5839 = vmatprep.mubr.bf16.mxu0 0
    %5840 = vmatmul.mubr.bf16.gmra.mrb[0].mxu0 %v5676
    %v5841 = vpop.f32.mrb[0].mxu0
    %v5842 = vadd.f32 %v5462, %v5841
    %v5843 = vpop.f32.mrb[0].mxu0
    %v5844 = vadd.f32 %v5466, %v5843
    %v5845 = vpop.f32.mrb[0].mxu0
    %v5846 = vadd.f32 %v5462, %v5845
    %v5847 = vpop.f32.mrb[0].mxu0
    %v5848 = vadd.f32 %v5466, %v5847
    %5849 = vdwg.mxu0
    %5850 = vmatprep.subr.bf16.mxu0 %v5620
    %5851 = vmatpush1.bf16.msra.mxu0 %v5619
    %5852 = vmatprep.subr.bf16.mxu0 %v5636
    %5853 = vmatpush1.bf16.msra.mxu0 %v5635
    %5854 = vmatprep.subr.bf16.mxu0 0
    %5855 = vmatpush1.bf16.msra.mxu0 0
    %5856 = vmatprep.subr.bf16.mxu0 0
    %5857 = vmatpush1.bf16.msra.mxu0 0
    %5858 = vmatprep.subr.bf16.mxu0 0
    %5859 = vmatpush1.bf16.msra.mxu0 0
    %5860 = vmatprep.subr.bf16.mxu0 0
    %5861 = vmatpush1.bf16.msra.mxu0 0
    %5862 = vmatprep.subr.bf16.mxu0 0
    %5863 = vmatpush1.bf16.msra.mxu0 0
    %5864 = vmatprep.subr.bf16.mxu0 0
    %5865 = vmatpush1.bf16.msra.mxu0 0
    %5866 = vmatprep.subr.bf16.mxu0 0
    %5867 = vmatpush1.bf16.msra.mxu0 0
    %5868 = vmatprep.subr.bf16.mxu0 0
    %5869 = vmatpush1.bf16.msra.mxu0 0
    %5870 = vmatprep.subr.bf16.mxu0 0
    %5871 = vmatpush1.bf16.msra.mxu0 0
    %5872 = vmatprep.subr.bf16.mxu0 0
    %5873 = vmatpush1.bf16.msra.mxu0 0
    %5874 = vmatprep.subr.bf16.mxu0 0
    %5875 = vmatpush1.bf16.msra.mxu0 0
    %5876 = vmatprep.subr.bf16.mxu0 0
    %5877 = vmatpush1.bf16.msra.mxu0 0
    %5878 = vmatprep.subr.bf16.mxu0 0
    %5879 = vmatpush1.bf16.msra.mxu0 0
    %5880 = vmatprep.subr.bf16.mxu0 0
    %5881 = vmatpush1.bf16.msra.mxu0 0
    %5882 = vmatprep.mubr.bf16.mxu0 0
    %5883 = vmatmul.mubr.bf16.gmra.mrb[0].mxu0 %v5676
    %v5884 = vpop.f32.mrb[0].mxu0
    %v5885 = vadd.f32 %v5470, %v5884
    %v5886 = vpop.f32.mrb[0].mxu0
    %v5887 = vadd.f32 %v5474, %v5886
    %v5888 = vpop.f32.mrb[0].mxu0
    %v5889 = vadd.f32 %v5470, %v5888
    %v5890 = vpop.f32.mrb[0].mxu0
    %v5891 = vadd.f32 %v5474, %v5890
    %5892 = vdwg.mxu0
    %5893 = vmatprep.subr.bf16.mxu0 %v5622
    %5894 = vmatpush1.bf16.msra.mxu0 %v5621
    %5895 = vmatprep.subr.bf16.mxu0 %v5638
    %5896 = vmatpush1.bf16.msra.mxu0 %v5637
    %5897 = vmatprep.subr.bf16.mxu0 0
    %5898 = vmatpush1.bf16.msra.mxu0 0
    %5899 = vmatprep.subr.bf16.mxu0 0
    %5900 = vmatpush1.bf16.msra.mxu0 0
    %5901 = vmatprep.subr.bf16.mxu0 0
    %5902 = vmatpush1.bf16.msra.mxu0 0
    %5903 = vmatprep.subr.bf16.mxu0 0
    %5904 = vmatpush1.bf16.msra.mxu0 0
    %5905 = vmatprep.subr.bf16.mxu0 0
    %5906 = vmatpush1.bf16.msra.mxu0 0
    %5907 = vmatprep.subr.bf16.mxu0 0
    %5908 = vmatpush1.bf16.msra.mxu0 0
    %5909 = vmatprep.subr.bf16.mxu0 0
    %5910 = vmatpush1.bf16.msra.mxu0 0
    %5911 = vmatprep.subr.bf16.mxu0 0
    %5912 = vmatpush1.bf16.msra.mxu0 0
    %5913 = vmatprep.subr.bf16.mxu0 0
    %5914 = vmatpush1.bf16.msra.mxu0 0
    %5915 = vmatprep.subr.bf16.mxu0 0
    %5916 = vmatpush1.bf16.msra.mxu0 0
    %5917 = vmatprep.subr.bf16.mxu0 0
    %5918 = vmatpush1.bf16.msra.mxu0 0
    %5919 = vmatprep.subr.bf16.mxu0 0
    %5920 = vmatpush1.bf16.msra.mxu0 0
    %5921 = vmatprep.subr.bf16.mxu0 0
    %5922 = vmatpush1.bf16.msra.mxu0 0
    %5923 = vmatprep.subr.bf16.mxu0 0
    %5924 = vmatpush1.bf16.msra.mxu0 0
    %5925 = vmatprep.mubr.bf16.mxu0 0
    %5926 = vmatmul.mubr.bf16.gmra.mrb[0].mxu0 %v5676
    %v5927 = vpop.f32.mrb[0].mxu0
    %v5928 = vadd.f32 %v5478, %v5927
    %v5929 = vpop.f32.mrb[0].mxu0
    %v5930 = vadd.f32 %v5482, %v5929
    %v5931 = vpop.f32.mrb[0].mxu0
    %v5932 = vadd.f32 %v5478, %v5931
    %v5933 = vpop.f32.mrb[0].mxu0
    %v5934 = vadd.f32 %v5482, %v5933
    %5935 = vdwg.mxu0
    %5936 = vmatprep.subr.bf16.mxu0 %v5624
    %5937 = vmatpush1.bf16.msra.mxu0 %v5623
    %5938 = vmatprep.subr.bf16.mxu0 %v5640
    %5939 = vmatpush1.bf16.msra.mxu0 %v5639
    %5940 = vmatprep.subr.bf16.mxu0 0
    %5941 = vmatpush1.bf16.msra.mxu0 0
    %5942 = vmatprep.subr.bf16.mxu0 0
    %5943 = vmatpush1.bf16.msra.mxu0 0
    %5944 = vmatprep.subr.bf16.mxu0 0
    %5945 = vmatpush1.bf16.msra.mxu0 0
    %5946 = vmatprep.subr.bf16.mxu0 0
    %5947 = vmatpush1.bf16.msra.mxu0 0
    %5948 = vmatprep.subr.bf16.mxu0 0
    %5949 = vmatpush1.bf16.msra.mxu0 0
    %5950 = vmatprep.subr.bf16.mxu0 0
    %5951 = vmatpush1.bf16.msra.mxu0 0
    %5952 = vmatprep.subr.bf16.mxu0 0
    %5953 = vmatpush1.bf16.msra.mxu0 0
    %5954 = vmatprep.subr.bf16.mxu0 0
    %5955 = vmatpush1.bf16.msra.mxu0 0
    %5956 = vmatprep.subr.bf16.mxu0 0
    %5957 = vmatpush1.bf16.msra.mxu0 0
    %5958 = vmatprep.subr.bf16.mxu0 0
    %5959 = vmatpush1.bf16.msra.mxu0 0
    %5960 = vmatprep.subr.bf16.mxu0 0
    %5961 = vmatpush1.bf16.msra.mxu0 0
    %5962 = vmatprep.subr.bf16.mxu0 0
    %5963 = vmatpush1.bf16.msra.mxu0 0
    %5964 = vmatprep.subr.bf16.mxu0 0
    %5965 = vmatpush1.bf16.msra.mxu0 0
    %5966 = vmatprep.subr.bf16.mxu0 0
    %5967 = vmatpush1.bf16.msra.mxu0 0
    %5968 = vmatprep.mubr.bf16.mxu0 0
    %5969 = vmatmul.mubr.bf16.gmra.mrb[0].mxu0 %v5676
    %v5970 = vpop.f32.mrb[0].mxu0
    %v5971 = vadd.f32 %v5486, %v5970
    %v5972 = vpop.f32.mrb[0].mxu0
    %v5973 = vadd.f32 %v5490, %v5972
    %v5974 = vpop.f32.mrb[0].mxu0
    %v5975 = vadd.f32 %v5486, %v5974
    %v5976 = vpop.f32.mrb[0].mxu0
    %v5977 = vadd.f32 %v5490, %v5976
    %5978 = vdwg.mxu0
    %5979 = vmatprep.subr.bf16.mxu0 %v5626
    %5980 = vmatpush1.bf16.msra.mxu0 %v5625
    %5981 = vmatprep.subr.bf16.mxu0 %v5642
    %5982 = vmatpush1.bf16.msra.mxu0 %v5641
    %5983 = vmatprep.subr.bf16.mxu0 0
    %5984 = vmatpush1.bf16.msra.mxu0 0
    %5985 = vmatprep.subr.bf16.mxu0 0
    %5986 = vmatpush1.bf16.msra.mxu0 0
    %5987 = vmatprep.subr.bf16.mxu0 0
    %5988 = vmatpush1.bf16.msra.mxu0 0
    %5989 = vmatprep.subr.bf16.mxu0 0
    %5990 = vmatpush1.bf16.msra.mxu0 0
    %5991 = vmatprep.subr.bf16.mxu0 0
    %5992 = vmatpush1.bf16.msra.mxu0 0
    %5993 = vmatprep.subr.bf16.mxu0 0
    %5994 = vmatpush1.bf16.msra.mxu0 0
    %5995 = vmatprep.subr.bf16.mxu0 0
    %5996 = vmatpush1.bf16.msra.mxu0 0
    %5997 = vmatprep.subr.bf16.mxu0 0
    %5998 = vmatpush1.bf16.msra.mxu0 0
    %5999 = vmatprep.subr.bf16.mxu0 0
    %6000 = vmatpush1.bf16.msra.mxu0 0
    %6001 = vmatprep.subr.bf16.mxu0 0
    %6002 = vmatpush1.bf16.msra.mxu0 0
    %6003 = vmatprep.subr.bf16.mxu0 0
    %6004 = vmatpush1.bf16.msra.mxu0 0
    %6005 = vmatprep.subr.bf16.mxu0 0
    %6006 = vmatpush1.bf16.msra.mxu0 0
    %6007 = vmatprep.subr.bf16.mxu0 0
    %6008 = vmatpush1.bf16.msra.mxu0 0
    %6009 = vmatprep.subr.bf16.mxu0 0
    %6010 = vmatpush1.bf16.msra.mxu0 0
    %6011 = vmatprep.mubr.bf16.mxu0 0
    %6012 = vmatmul.mubr.bf16.gmra.mrb[0].mxu0 %v5676
    %v6013 = vpop.f32.mrb[0].mxu0
    %v6014 = vadd.f32 %v5494, %v6013
    %v6015 = vpop.f32.mrb[0].mxu0
    %v6016 = vadd.f32 %v5498, %v6015
    %v6017 = vpop.f32.mrb[0].mxu0
    %v6018 = vadd.f32 %v5494, %v6017
    %v6019 = vpop.f32.mrb[0].mxu0
    %v6020 = vadd.f32 %v5498, %v6019
    %6021 = vdwg.mxu0
    %v6022 = vmax.f32 %v5713, 0.0
    %v6023 = vmax.f32 %v5715, 0.0
    %v6024 = vmax.f32 %v5756, 0.0
    %v6025 = vmax.f32 %v5758, 0.0
    %v6026 = vmax.f32 %v5799, 0.0
    %v6027 = vmax.f32 %v5801, 0.0
    %v6028 = vmax.f32 %v5842, 0.0
    %v6029 = vmax.f32 %v5844, 0.0
    %v6030 = vmax.f32 %v5885, 0.0
    %v6031 = vmax.f32 %v5887, 0.0
    %v6032 = vmax.f32 %v5928, 0.0
    %v6033 = vmax.f32 %v5930, 0.0
    %v6034 = vmax.f32 %v5971, 0.0
    %v6035 = vmax.f32 %v5973, 0.0
    %v6036 = vmax.f32 %v6014, 0.0
    %v6037 = vmax.f32 %v6016, 0.0
    %v6038 = vmax.f32 %v5717, 0.0
    %v6039 = vmax.f32 %v5719, 0.0
    %v6040 = vmax.f32 %v5760, 0.0
    %v6041 = vmax.f32 %v5762, 0.0
    %v6042 = vmax.f32 %v5803, 0.0
    %v6043 = vmax.f32 %v5805, 0.0
    %v6044 = vmax.f32 %v5846, 0.0
    %v6045 = vmax.f32 %v5848, 0.0
    %v6046 = vmax.f32 %v5889, 0.0
    %v6047 = vmax.f32 %v5891, 0.0
    %v6048 = vmax.f32 %v5932, 0.0
    %v6049 = vmax.f32 %v5934, 0.0
    %v6050 = vmax.f32 %v5975, 0.0
    %v6051 = vmax.f32 %v5977, 0.0
    %v6052 = vmax.f32 %v6018, 0.0
    %v6053 = vmax.f32 %v6020, 0.0
    %v6054 = vpack.c.bf16 %v6038, %v6022
    %v6055 = vpack.c.bf16 %v6039, %v6023
    %v6056 = vpack.c.bf16 %v6040, %v6024
    %v6057 = vpack.c.bf16 %v6041, %v6025
    %v6058 = vpack.c.bf16 %v6042, %v6026
    %v6059 = vpack.c.bf16 %v6043, %v6027
    %v6060 = vpack.c.bf16 %v6044, %v6028
    %v6061 = vpack.c.bf16 %v6045, %v6029
    %v6062 = vpack.c.bf16 %v6046, %v6030
    %v6063 = vpack.c.bf16 %v6047, %v6031
    %v6064 = vpack.c.bf16 %v6048, %v6032
    %v6065 = vpack.c.bf16 %v6049, %v6033
    %v6066 = vpack.c.bf16 %v6050, %v6034
    %v6067 = vpack.c.bf16 %v6051, %v6035
    %v6068 = vpack.c.bf16 %v6052, %v6036
    %v6069 = vpack.c.bf16 %v6053, %v6037
    %s6070 = scalar_lea.vmem %s11, 1024
    %v6071 = vld [vmem:[%s6070] sm:$0xf]
    %v6072 = vld [vmem:[%s6070 + $0x4] sm:$0xf]
    %v6073 = vld [vmem:[%s6070 + $0x8] sm:$0xf]
    %v6074 = vld [vmem:[%s6070 + $0xc] sm:$0xf]
    %v6075 = vld [vmem:[%s6070 + $0x10] sm:$0xf]
    %v6076 = vld [vmem:[%s6070 + $0x14] sm:$0xf]
    %v6077 = vld [vmem:[%s6070 + $0x18] sm:$0xf]
    %v6078 = vld [vmem:[%s6070 + $0x1c] sm:$0xf]
    %v6079 = vld [vmem:[%s6070 + $0x20] sm:$0xf]
    %v6080 = vld [vmem:[%s6070 + $0x24] sm:$0xf]
    %v6081 = vld [vmem:[%s6070 + $0x28] sm:$0xf]
    %v6082 = vld [vmem:[%s6070 + $0x2c] sm:$0xf]
    %v6083 = vld [vmem:[%s6070 + $0x30] sm:$0xf]
    %v6084 = vld [vmem:[%s6070 + $0x34] sm:$0xf]
    %v6085 = vld [vmem:[%s6070 + $0x38] sm:$0xf]
    %v6086 = vld [vmem:[%s6070 + $0x3c] sm:$0xf]
    %v6087 = vld [vmem:[%s6070 + $0x40] sm:$0xf]
    %v6088 = vld [vmem:[%s6070 + $0x44] sm:$0xf]
    %v6089 = vld [vmem:[%s6070 + $0x48] sm:$0xf]
    %v6090 = vld [vmem:[%s6070 + $0x4c] sm:$0xf]
    %v6091 = vld [vmem:[%s6070 + $0x50] sm:$0xf]
    %v6092 = vld [vmem:[%s6070 + $0x54] sm:$0xf]
    %v6093 = vld [vmem:[%s6070 + $0x58] sm:$0xf]
    %v6094 = vld [vmem:[%s6070 + $0x5c] sm:$0xf]
    %v6095 = vld [vmem:[%s6070 + $0x60] sm:$0xf]
    %v6096 = vld [vmem:[%s6070 + $0x64] sm:$0xf]
    %v6097 = vld [vmem:[%s6070 + $0x68] sm:$0xf]
    %v6098 = vld [vmem:[%s6070 + $0x6c] sm:$0xf]
    %v6099 = vld [vmem:[%s6070 + $0x70] sm:$0xf]
    %v6100 = vld [vmem:[%s6070 + $0x74] sm:$0xf]
    %v6101 = vld [vmem:[%s6070 + $0x78] sm:$0xf]
    %v6102 = vld [vmem:[%s6070 + $0x7c] sm:$0xf]
    %v6103 = vld [vmem:[%s6070 + $0x80] sm:$0xf]
    %v6104 = vld [vmem:[%s6070 + $0x84] sm:$0xf]
    %v6105 = vld [vmem:[%s6070 + $0x88] sm:$0xf]
    %v6106 = vld [vmem:[%s6070 + $0x8c] sm:$0xf]
    %v6107 = vld [vmem:[%s6070 + $0x90] sm:$0xf]
    %v6108 = vld [vmem:[%s6070 + $0x94] sm:$0xf]
    %v6109 = vld [vmem:[%s6070 + $0x98] sm:$0xf]
    %v6110 = vld [vmem:[%s6070 + $0x9c] sm:$0xf]
    %v6111 = vld [vmem:[%s6070 + $0xa0] sm:$0xf]
    %v6112 = vld [vmem:[%s6070 + $0xa4] sm:$0xf]
    %v6113 = vld [vmem:[%s6070 + $0xa8] sm:$0xf]
    %v6114 = vld [vmem:[%s6070 + $0xac] sm:$0xf]
    %v6115 = vld [vmem:[%s6070 + $0xb0] sm:$0xf]
    %v6116 = vld [vmem:[%s6070 + $0xb4] sm:$0xf]
    %v6117 = vld [vmem:[%s6070 + $0xb8] sm:$0xf]
    %v6118 = vld [vmem:[%s6070 + $0xbc] sm:$0xf]
    %v6119 = vld [vmem:[%s6070 + $0xc0] sm:$0xf]
    %v6120 = vld [vmem:[%s6070 + $0xc4] sm:$0xf]
    %v6121 = vld [vmem:[%s6070 + $0xc8] sm:$0xf]
    %v6122 = vld [vmem:[%s6070 + $0xcc] sm:$0xf]
    %v6123 = vld [vmem:[%s6070 + $0xd0] sm:$0xf]
    %v6124 = vld [vmem:[%s6070 + $0xd4] sm:$0xf]
    %v6125 = vld [vmem:[%s6070 + $0xd8] sm:$0xf]
    %v6126 = vld [vmem:[%s6070 + $0xdc] sm:$0xf]
    %v6127 = vld [vmem:[%s6070 + $0xe0] sm:$0xf]
    %v6128 = vld [vmem:[%s6070 + $0xe4] sm:$0xf]
    %v6129 = vld [vmem:[%s6070 + $0xe8] sm:$0xf]
    %v6130 = vld [vmem:[%s6070 + $0xec] sm:$0xf]
    %v6131 = vld [vmem:[%s6070 + $0xf0] sm:$0xf]
    %v6132 = vld [vmem:[%s6070 + $0xf4] sm:$0xf]
    %v6133 = vld [vmem:[%s6070 + $0xf8] sm:$0xf]
    %v6134 = vld [vmem:[%s6070 + $0xfc] sm:$0xf]
    %v6135 = vld [vmem:[%s6070 + $0x100] sm:$0xf]
    %v6136 = vld [vmem:[%s6070 + $0x104] sm:$0xf]
    %v6137 = vld [vmem:[%s6070 + $0x108] sm:$0xf]
    %v6138 = vld [vmem:[%s6070 + $0x10c] sm:$0xf]
    %v6139 = vld [vmem:[%s6070 + $0x110] sm:$0xf]
    %v6140 = vld [vmem:[%s6070 + $0x114] sm:$0xf]
    %v6141 = vld [vmem:[%s6070 + $0x118] sm:$0xf]
    %v6142 = vld [vmem:[%s6070 + $0x11c] sm:$0xf]
    %v6143 = vld [vmem:[%s6070 + $0x120] sm:$0xf]
    %v6144 = vld [vmem:[%s6070 + $0x124] sm:$0xf]
    %v6145 = vld [vmem:[%s6070 + $0x128] sm:$0xf]
    %v6146 = vld [vmem:[%s6070 + $0x12c] sm:$0xf]
    %v6147 = vld [vmem:[%s6070 + $0x130] sm:$0xf]
    %v6148 = vld [vmem:[%s6070 + $0x134] sm:$0xf]
    %v6149 = vld [vmem:[%s6070 + $0x138] sm:$0xf]
    %v6150 = vld [vmem:[%s6070 + $0x13c] sm:$0xf]
    %v6151 = vld [vmem:[%s6070 + $0x140] sm:$0xf]
    %v6152 = vld [vmem:[%s6070 + $0x144] sm:$0xf]
    %v6153 = vld [vmem:[%s6070 + $0x148] sm:$0xf]
    %v6154 = vld [vmem:[%s6070 + $0x14c] sm:$0xf]
    %v6155 = vld [vmem:[%s6070 + $0x150] sm:$0xf]
    %v6156 = vld [vmem:[%s6070 + $0x154] sm:$0xf]
    %v6157 = vld [vmem:[%s6070 + $0x158] sm:$0xf]
    %v6158 = vld [vmem:[%s6070 + $0x15c] sm:$0xf]
    %v6159 = vld [vmem:[%s6070 + $0x160] sm:$0xf]
    %v6160 = vld [vmem:[%s6070 + $0x164] sm:$0xf]
    %v6161 = vld [vmem:[%s6070 + $0x168] sm:$0xf]
    %v6162 = vld [vmem:[%s6070 + $0x16c] sm:$0xf]
    %v6163 = vld [vmem:[%s6070 + $0x170] sm:$0xf]
    %v6164 = vld [vmem:[%s6070 + $0x174] sm:$0xf]
    %v6165 = vld [vmem:[%s6070 + $0x178] sm:$0xf]
    %v6166 = vld [vmem:[%s6070 + $0x17c] sm:$0xf]
    %v6167 = vld [vmem:[%s6070 + $0x180] sm:$0xf]
    %v6168 = vld [vmem:[%s6070 + $0x184] sm:$0xf]
    %v6169 = vld [vmem:[%s6070 + $0x188] sm:$0xf]
    %v6170 = vld [vmem:[%s6070 + $0x18c] sm:$0xf]
    %v6171 = vld [vmem:[%s6070 + $0x190] sm:$0xf]
    %v6172 = vld [vmem:[%s6070 + $0x194] sm:$0xf]
    %v6173 = vld [vmem:[%s6070 + $0x198] sm:$0xf]
    %v6174 = vld [vmem:[%s6070 + $0x19c] sm:$0xf]
    %v6175 = vld [vmem:[%s6070 + $0x1a0] sm:$0xf]
    %v6176 = vld [vmem:[%s6070 + $0x1a4] sm:$0xf]
    %v6177 = vld [vmem:[%s6070 + $0x1a8] sm:$0xf]
    %v6178 = vld [vmem:[%s6070 + $0x1ac] sm:$0xf]
    %v6179 = vld [vmem:[%s6070 + $0x1b0] sm:$0xf]
    %v6180 = vld [vmem:[%s6070 + $0x1b4] sm:$0xf]
    %v6181 = vld [vmem:[%s6070 + $0x1b8] sm:$0xf]
    %v6182 = vld [vmem:[%s6070 + $0x1bc] sm:$0xf]
    %v6183 = vld [vmem:[%s6070 + $0x1c0] sm:$0xf]
    %v6184 = vld [vmem:[%s6070 + $0x1c4] sm:$0xf]
    %v6185 = vld [vmem:[%s6070 + $0x1c8] sm:$0xf]
    %v6186 = vld [vmem:[%s6070 + $0x1cc] sm:$0xf]
    %v6187 = vld [vmem:[%s6070 + $0x1d0] sm:$0xf]
    %v6188 = vld [vmem:[%s6070 + $0x1d4] sm:$0xf]
    %v6189 = vld [vmem:[%s6070 + $0x1d8] sm:$0xf]
    %v6190 = vld [vmem:[%s6070 + $0x1dc] sm:$0xf]
    %v6191 = vld [vmem:[%s6070 + $0x1e0] sm:$0xf]
    %v6192 = vld [vmem:[%s6070 + $0x1e4] sm:$0xf]
    %v6193 = vld [vmem:[%s6070 + $0x1e8] sm:$0xf]
    %v6194 = vld [vmem:[%s6070 + $0x1ec] sm:$0xf]
    %v6195 = vld [vmem:[%s6070 + $0x1f0] sm:$0xf]
    %v6196 = vld [vmem:[%s6070 + $0x1f4] sm:$0xf]
    %v6197 = vld [vmem:[%s6070 + $0x1f8] sm:$0xf]
    %v6198 = vld [vmem:[%s6070 + $0x1fc] sm:$0xf]
    %v6199 = vld [vmem:[%s6070 + $0x200] sm:$0xf]
    %v6200 = vld [vmem:[%s6070 + $0x204] sm:$0xf]
    %v6201 = vld [vmem:[%s6070 + $0x208] sm:$0xf]
    %v6202 = vld [vmem:[%s6070 + $0x20c] sm:$0xf]
    %v6203 = vld [vmem:[%s6070 + $0x210] sm:$0xf]
    %v6204 = vld [vmem:[%s6070 + $0x214] sm:$0xf]
    %v6205 = vld [vmem:[%s6070 + $0x218] sm:$0xf]
    %v6206 = vld [vmem:[%s6070 + $0x21c] sm:$0xf]
    %v6207 = vld [vmem:[%s6070 + $0x220] sm:$0xf]
    %v6208 = vld [vmem:[%s6070 + $0x224] sm:$0xf]
    %v6209 = vld [vmem:[%s6070 + $0x228] sm:$0xf]
    %v6210 = vld [vmem:[%s6070 + $0x22c] sm:$0xf]
    %v6211 = vld [vmem:[%s6070 + $0x230] sm:$0xf]
    %v6212 = vld [vmem:[%s6070 + $0x234] sm:$0xf]
    %v6213 = vld [vmem:[%s6070 + $0x238] sm:$0xf]
    %v6214 = vld [vmem:[%s6070 + $0x23c] sm:$0xf]
    %v6215 = vld [vmem:[%s6070 + $0x240] sm:$0xf]
    %v6216 = vld [vmem:[%s6070 + $0x244] sm:$0xf]
    %v6217 = vld [vmem:[%s6070 + $0x248] sm:$0xf]
    %v6218 = vld [vmem:[%s6070 + $0x24c] sm:$0xf]
    %v6219 = vld [vmem:[%s6070 + $0x250] sm:$0xf]
    %v6220 = vld [vmem:[%s6070 + $0x254] sm:$0xf]
    %v6221 = vld [vmem:[%s6070 + $0x258] sm:$0xf]
    %v6222 = vld [vmem:[%s6070 + $0x25c] sm:$0xf]
    %v6223 = vld [vmem:[%s6070 + $0x260] sm:$0xf]
    %v6224 = vld [vmem:[%s6070 + $0x264] sm:$0xf]
    %v6225 = vld [vmem:[%s6070 + $0x268] sm:$0xf]
    %v6226 = vld [vmem:[%s6070 + $0x26c] sm:$0xf]
    %v6227 = vld [vmem:[%s6070 + $0x270] sm:$0xf]
    %v6228 = vld [vmem:[%s6070 + $0x274] sm:$0xf]
    %v6229 = vld [vmem:[%s6070 + $0x278] sm:$0xf]
    %v6230 = vld [vmem:[%s6070 + $0x27c] sm:$0xf]
    %v6231 = vld [vmem:[%s6070 + $0x280] sm:$0xf]
    %v6232 = vld [vmem:[%s6070 + $0x284] sm:$0xf]
    %v6233 = vld [vmem:[%s6070 + $0x288] sm:$0xf]
    %v6234 = vld [vmem:[%s6070 + $0x28c] sm:$0xf]
    %v6235 = vld [vmem:[%s6070 + $0x290] sm:$0xf]
    %v6236 = vld [vmem:[%s6070 + $0x294] sm:$0xf]
    %v6237 = vld [vmem:[%s6070 + $0x298] sm:$0xf]
    %v6238 = vld [vmem:[%s6070 + $0x29c] sm:$0xf]
    %v6239 = vld [vmem:[%s6070 + $0x2a0] sm:$0xf]
    %v6240 = vld [vmem:[%s6070 + $0x2a4] sm:$0xf]
    %v6241 = vld [vmem:[%s6070 + $0x2a8] sm:$0xf]
    %v6242 = vld [vmem:[%s6070 + $0x2ac] sm:$0xf]
    %v6243 = vld [vmem:[%s6070 + $0x2b0] sm:$0xf]
    %v6244 = vld [vmem:[%s6070 + $0x2b4] sm:$0xf]
    %v6245 = vld [vmem:[%s6070 + $0x2b8] sm:$0xf]
    %v6246 = vld [vmem:[%s6070 + $0x2bc] sm:$0xf]
    %v6247 = vld [vmem:[%s6070 + $0x2c0] sm:$0xf]
    %v6248 = vld [vmem:[%s6070 + $0x2c4] sm:$0xf]
    %v6249 = vld [vmem:[%s6070 + $0x2c8] sm:$0xf]
    %v6250 = vld [vmem:[%s6070 + $0x2cc] sm:$0xf]
    %v6251 = vld [vmem:[%s6070 + $0x2d0] sm:$0xf]
    %v6252 = vld [vmem:[%s6070 + $0x2d4] sm:$0xf]
    %v6253 = vld [vmem:[%s6070 + $0x2d8] sm:$0xf]
    %v6254 = vld [vmem:[%s6070 + $0x2dc] sm:$0xf]
    %v6255 = vld [vmem:[%s6070 + $0x2e0] sm:$0xf]
    %v6256 = vld [vmem:[%s6070 + $0x2e4] sm:$0xf]
    %v6257 = vld [vmem:[%s6070 + $0x2e8] sm:$0xf]
    %v6258 = vld [vmem:[%s6070 + $0x2ec] sm:$0xf]
    %v6259 = vld [vmem:[%s6070 + $0x2f0] sm:$0xf]
    %v6260 = vld [vmem:[%s6070 + $0x2f4] sm:$0xf]
    %v6261 = vld [vmem:[%s6070 + $0x2f8] sm:$0xf]
    %v6262 = vld [vmem:[%s6070 + $0x2fc] sm:$0xf]
    %v6263 = vld [vmem:[%s6070 + $0x300] sm:$0xf]
    %v6264 = vld [vmem:[%s6070 + $0x304] sm:$0xf]
    %v6265 = vld [vmem:[%s6070 + $0x308] sm:$0xf]
    %v6266 = vld [vmem:[%s6070 + $0x30c] sm:$0xf]
    %v6267 = vld [vmem:[%s6070 + $0x310] sm:$0xf]
    %v6268 = vld [vmem:[%s6070 + $0x314] sm:$0xf]
    %v6269 = vld [vmem:[%s6070 + $0x318] sm:$0xf]
    %v6270 = vld [vmem:[%s6070 + $0x31c] sm:$0xf]
    %v6271 = vld [vmem:[%s6070 + $0x320] sm:$0xf]
    %v6272 = vld [vmem:[%s6070 + $0x324] sm:$0xf]
    %v6273 = vld [vmem:[%s6070 + $0x328] sm:$0xf]
    %v6274 = vld [vmem:[%s6070 + $0x32c] sm:$0xf]
    %v6275 = vld [vmem:[%s6070 + $0x330] sm:$0xf]
    %v6276 = vld [vmem:[%s6070 + $0x334] sm:$0xf]
    %v6277 = vld [vmem:[%s6070 + $0x338] sm:$0xf]
    %v6278 = vld [vmem:[%s6070 + $0x33c] sm:$0xf]
    %v6279 = vld [vmem:[%s6070 + $0x340] sm:$0xf]
    %v6280 = vld [vmem:[%s6070 + $0x344] sm:$0xf]
    %v6281 = vld [vmem:[%s6070 + $0x348] sm:$0xf]
    %v6282 = vld [vmem:[%s6070 + $0x34c] sm:$0xf]
    %v6283 = vld [vmem:[%s6070 + $0x350] sm:$0xf]
    %v6284 = vld [vmem:[%s6070 + $0x354] sm:$0xf]
    %v6285 = vld [vmem:[%s6070 + $0x358] sm:$0xf]
    %v6286 = vld [vmem:[%s6070 + $0x35c] sm:$0xf]
    %v6287 = vld [vmem:[%s6070 + $0x360] sm:$0xf]
    %v6288 = vld [vmem:[%s6070 + $0x364] sm:$0xf]
    %v6289 = vld [vmem:[%s6070 + $0x368] sm:$0xf]
    %v6290 = vld [vmem:[%s6070 + $0x36c] sm:$0xf]
    %v6291 = vld [vmem:[%s6070 + $0x370] sm:$0xf]
    %v6292 = vld [vmem:[%s6070 + $0x374] sm:$0xf]
    %v6293 = vld [vmem:[%s6070 + $0x378] sm:$0xf]
    %v6294 = vld [vmem:[%s6070 + $0x37c] sm:$0xf]
    %v6295 = vld [vmem:[%s6070 + $0x380] sm:$0xf]
    %v6296 = vld [vmem:[%s6070 + $0x384] sm:$0xf]
    %v6297 = vld [vmem:[%s6070 + $0x388] sm:$0xf]
    %v6298 = vld [vmem:[%s6070 + $0x38c] sm:$0xf]
    %v6299 = vld [vmem:[%s6070 + $0x390] sm:$0xf]
    %v6300 = vld [vmem:[%s6070 + $0x394] sm:$0xf]
    %v6301 = vld [vmem:[%s6070 + $0x398] sm:$0xf]
    %v6302 = vld [vmem:[%s6070 + $0x39c] sm:$0xf]
    %v6303 = vld [vmem:[%s6070 + $0x3a0] sm:$0xf]
    %v6304 = vld [vmem:[%s6070 + $0x3a4] sm:$0xf]
    %v6305 = vld [vmem:[%s6070 + $0x3a8] sm:$0xf]
    %v6306 = vld [vmem:[%s6070 + $0x3ac] sm:$0xf]
    %v6307 = vld [vmem:[%s6070 + $0x3b0] sm:$0xf]
    %v6308 = vld [vmem:[%s6070 + $0x3b4] sm:$0xf]
    %v6309 = vld [vmem:[%s6070 + $0x3b8] sm:$0xf]
    %v6310 = vld [vmem:[%s6070 + $0x3bc] sm:$0xf]
    %v6311 = vld [vmem:[%s6070 + $0x3c0] sm:$0xf]
    %v6312 = vld [vmem:[%s6070 + $0x3c4] sm:$0xf]
    %v6313 = vld [vmem:[%s6070 + $0x3c8] sm:$0xf]
    %v6314 = vld [vmem:[%s6070 + $0x3cc] sm:$0xf]
    %v6315 = vld [vmem:[%s6070 + $0x3d0] sm:$0xf]
    %v6316 = vld [vmem:[%s6070 + $0x3d4] sm:$0xf]
    %v6317 = vld [vmem:[%s6070 + $0x3d8] sm:$0xf]
    %v6318 = vld [vmem:[%s6070 + $0x3dc] sm:$0xf]
    %v6319 = vld [vmem:[%s6070 + $0x3e0] sm:$0xf]
    %v6320 = vld [vmem:[%s6070 + $0x3e4] sm:$0xf]
    %v6321 = vld [vmem:[%s6070 + $0x3e8] sm:$0xf]
    %v6322 = vld [vmem:[%s6070 + $0x3ec] sm:$0xf]
    %v6323 = vld [vmem:[%s6070 + $0x3f0] sm:$0xf]
    %v6324 = vld [vmem:[%s6070 + $0x3f4] sm:$0xf]
    %v6325 = vld [vmem:[%s6070 + $0x3f8] sm:$0xf]
    %v6326 = vld [vmem:[%s6070 + $0x3fc] sm:$0xf]
    %s6327 = scalar_lea.vmem %s12, 1
    %v6328 = vld [vmem:[%s6327] sm:$0x1]
    %v6330 = vlaneseq
    %v6331 = vshrl.u32 %v6330, 7
    %v6332 = vsub.s32 0, %v6331
    %v6333 = vrot.slane %v6328, %v6332
    %v6591 = vunpack.c.l.b16 %v6071
    %v6592 = vunpack.c.l.b16 %v6072
    %v6593 = vunpack.c.l.b16 %v6073
    %v6594 = vunpack.c.l.b16 %v6074
    %v6595 = vunpack.c.l.b16 %v6075
    %v6596 = vunpack.c.l.b16 %v6076
    %v6597 = vunpack.c.l.b16 %v6077
    %v6598 = vunpack.c.l.b16 %v6078
    %v6599 = vunpack.c.l.b16 %v6079
    %v6600 = vunpack.c.l.b16 %v6080
    %v6601 = vunpack.c.l.b16 %v6081
    %v6602 = vunpack.c.l.b16 %v6082
    %v6603 = vunpack.c.l.b16 %v6083
    %v6604 = vunpack.c.l.b16 %v6084
    %v6605 = vunpack.c.l.b16 %v6085
    %v6606 = vunpack.c.l.b16 %v6086
    %v6607 = vunpack.c.l.b16 %v6087
    %v6608 = vunpack.c.l.b16 %v6088
    %v6609 = vunpack.c.l.b16 %v6089
    %v6610 = vunpack.c.l.b16 %v6090
    %v6611 = vunpack.c.l.b16 %v6091
    %v6612 = vunpack.c.l.b16 %v6092
    %v6613 = vunpack.c.l.b16 %v6093
    %v6614 = vunpack.c.l.b16 %v6094
    %v6615 = vunpack.c.l.b16 %v6095
    %v6616 = vunpack.c.l.b16 %v6096
    %v6617 = vunpack.c.l.b16 %v6097
    %v6618 = vunpack.c.l.b16 %v6098
    %v6619 = vunpack.c.l.b16 %v6099
    %v6620 = vunpack.c.l.b16 %v6100
    %v6621 = vunpack.c.l.b16 %v6101
    %v6622 = vunpack.c.l.b16 %v6102
    %v6623 = vunpack.c.l.b16 %v6103
    %v6624 = vunpack.c.l.b16 %v6104
    %v6625 = vunpack.c.l.b16 %v6105
    %v6626 = vunpack.c.l.b16 %v6106
    %v6627 = vunpack.c.l.b16 %v6107
    %v6628 = vunpack.c.l.b16 %v6108
    %v6629 = vunpack.c.l.b16 %v6109
    %v6630 = vunpack.c.l.b16 %v6110
    %v6631 = vunpack.c.l.b16 %v6111
    %v6632 = vunpack.c.l.b16 %v6112
    %v6633 = vunpack.c.l.b16 %v6113
    %v6634 = vunpack.c.l.b16 %v6114
    %v6635 = vunpack.c.l.b16 %v6115
    %v6636 = vunpack.c.l.b16 %v6116
    %v6637 = vunpack.c.l.b16 %v6117
    %v6638 = vunpack.c.l.b16 %v6118
    %v6639 = vunpack.c.l.b16 %v6119
    %v6640 = vunpack.c.l.b16 %v6120
    %v6641 = vunpack.c.l.b16 %v6121
    %v6642 = vunpack.c.l.b16 %v6122
    %v6643 = vunpack.c.l.b16 %v6123
    %v6644 = vunpack.c.l.b16 %v6124
    %v6645 = vunpack.c.l.b16 %v6125
    %v6646 = vunpack.c.l.b16 %v6126
    %v6647 = vunpack.c.l.b16 %v6127
    %v6648 = vunpack.c.l.b16 %v6128
    %v6649 = vunpack.c.l.b16 %v6129
    %v6650 = vunpack.c.l.b16 %v6130
    %v6651 = vunpack.c.l.b16 %v6131
    %v6652 = vunpack.c.l.b16 %v6132
    %v6653 = vunpack.c.l.b16 %v6133
    %v6654 = vunpack.c.l.b16 %v6134
    %v6655 = vunpack.c.l.b16 %v6135
    %v6656 = vunpack.c.l.b16 %v6136
    %v6657 = vunpack.c.l.b16 %v6137
    %v6658 = vunpack.c.l.b16 %v6138
    %v6659 = vunpack.c.l.b16 %v6139
    %v6660 = vunpack.c.l.b16 %v6140
    %v6661 = vunpack.c.l.b16 %v6141
    %v6662 = vunpack.c.l.b16 %v6142
    %v6663 = vunpack.c.l.b16 %v6143
    %v6664 = vunpack.c.l.b16 %v6144
    %v6665 = vunpack.c.l.b16 %v6145
    %v6666 = vunpack.c.l.b16 %v6146
    %v6667 = vunpack.c.l.b16 %v6147
    %v6668 = vunpack.c.l.b16 %v6148
    %v6669 = vunpack.c.l.b16 %v6149
    %v6670 = vunpack.c.l.b16 %v6150
    %v6671 = vunpack.c.l.b16 %v6151
    %v6672 = vunpack.c.l.b16 %v6152
    %v6673 = vunpack.c.l.b16 %v6153
    %v6674 = vunpack.c.l.b16 %v6154
    %v6675 = vunpack.c.l.b16 %v6155
    %v6676 = vunpack.c.l.b16 %v6156
    %v6677 = vunpack.c.l.b16 %v6157
    %v6678 = vunpack.c.l.b16 %v6158
    %v6679 = vunpack.c.l.b16 %v6159
    %v6680 = vunpack.c.l.b16 %v6160
    %v6681 = vunpack.c.l.b16 %v6161
    %v6682 = vunpack.c.l.b16 %v6162
    %v6683 = vunpack.c.l.b16 %v6163
    %v6684 = vunpack.c.l.b16 %v6164
    %v6685 = vunpack.c.l.b16 %v6165
    %v6686 = vunpack.c.l.b16 %v6166
    %v6687 = vunpack.c.l.b16 %v6167
    %v6688 = vunpack.c.l.b16 %v6168
    %v6689 = vunpack.c.l.b16 %v6169
    %v6690 = vunpack.c.l.b16 %v6170
    %v6691 = vunpack.c.l.b16 %v6171
    %v6692 = vunpack.c.l.b16 %v6172
    %v6693 = vunpack.c.l.b16 %v6173
    %v6694 = vunpack.c.l.b16 %v6174
    %v6695 = vunpack.c.l.b16 %v6175
    %v6696 = vunpack.c.l.b16 %v6176
    %v6697 = vunpack.c.l.b16 %v6177
    %v6698 = vunpack.c.l.b16 %v6178
    %v6699 = vunpack.c.l.b16 %v6179
    %v6700 = vunpack.c.l.b16 %v6180
    %v6701 = vunpack.c.l.b16 %v6181
    %v6702 = vunpack.c.l.b16 %v6182
    %v6703 = vunpack.c.l.b16 %v6183
    %v6704 = vunpack.c.l.b16 %v6184
    %v6705 = vunpack.c.l.b16 %v6185
    %v6706 = vunpack.c.l.b16 %v6186
    %v6707 = vunpack.c.l.b16 %v6187
    %v6708 = vunpack.c.l.b16 %v6188
    %v6709 = vunpack.c.l.b16 %v6189
    %v6710 = vunpack.c.l.b16 %v6190
    %v6711 = vunpack.c.l.b16 %v6191
    %v6712 = vunpack.c.l.b16 %v6192
    %v6713 = vunpack.c.l.b16 %v6193
    %v6714 = vunpack.c.l.b16 %v6194
    %v6715 = vunpack.c.l.b16 %v6195
    %v6716 = vunpack.c.l.b16 %v6196
    %v6717 = vunpack.c.l.b16 %v6197
    %v6718 = vunpack.c.l.b16 %v6198
    %v6719 = vunpack.c.l.b16 %v6199
    %v6720 = vunpack.c.l.b16 %v6200
    %v6721 = vunpack.c.l.b16 %v6201
    %v6722 = vunpack.c.l.b16 %v6202
    %v6723 = vunpack.c.l.b16 %v6203
    %v6724 = vunpack.c.l.b16 %v6204
    %v6725 = vunpack.c.l.b16 %v6205
    %v6726 = vunpack.c.l.b16 %v6206
    %v6727 = vunpack.c.l.b16 %v6207
    %v6728 = vunpack.c.l.b16 %v6208
    %v6729 = vunpack.c.l.b16 %v6209
    %v6730 = vunpack.c.l.b16 %v6210
    %v6731 = vunpack.c.l.b16 %v6211
    %v6732 = vunpack.c.l.b16 %v6212
    %v6733 = vunpack.c.l.b16 %v6213
    %v6734 = vunpack.c.l.b16 %v6214
    %v6735 = vunpack.c.l.b16 %v6215
    %v6736 = vunpack.c.l.b16 %v6216
    %v6737 = vunpack.c.l.b16 %v6217
    %v6738 = vunpack.c.l.b16 %v6218
    %v6739 = vunpack.c.l.b16 %v6219
    %v6740 = vunpack.c.l.b16 %v6220
    %v6741 = vunpack.c.l.b16 %v6221
    %v6742 = vunpack.c.l.b16 %v6222
    %v6743 = vunpack.c.l.b16 %v6223
    %v6744 = vunpack.c.l.b16 %v6224
    %v6745 = vunpack.c.l.b16 %v6225
    %v6746 = vunpack.c.l.b16 %v6226
    %v6747 = vunpack.c.l.b16 %v6227
    %v6748 = vunpack.c.l.b16 %v6228
    %v6749 = vunpack.c.l.b16 %v6229
    %v6750 = vunpack.c.l.b16 %v6230
    %v6751 = vunpack.c.l.b16 %v6231
    %v6752 = vunpack.c.l.b16 %v6232
    %v6753 = vunpack.c.l.b16 %v6233
    %v6754 = vunpack.c.l.b16 %v6234
    %v6755 = vunpack.c.l.b16 %v6235
    %v6756 = vunpack.c.l.b16 %v6236
    %v6757 = vunpack.c.l.b16 %v6237
    %v6758 = vunpack.c.l.b16 %v6238
    %v6759 = vunpack.c.l.b16 %v6239
    %v6760 = vunpack.c.l.b16 %v6240
    %v6761 = vunpack.c.l.b16 %v6241
    %v6762 = vunpack.c.l.b16 %v6242
    %v6763 = vunpack.c.l.b16 %v6243
    %v6764 = vunpack.c.l.b16 %v6244
    %v6765 = vunpack.c.l.b16 %v6245
    %v6766 = vunpack.c.l.b16 %v6246
    %v6767 = vunpack.c.l.b16 %v6247
    %v6768 = vunpack.c.l.b16 %v6248
    %v6769 = vunpack.c.l.b16 %v6249
    %v6770 = vunpack.c.l.b16 %v6250
    %v6771 = vunpack.c.l.b16 %v6251
    %v6772 = vunpack.c.l.b16 %v6252
    %v6773 = vunpack.c.l.b16 %v6253
    %v6774 = vunpack.c.l.b16 %v6254
    %v6775 = vunpack.c.l.b16 %v6255
    %v6776 = vunpack.c.l.b16 %v6256
    %v6777 = vunpack.c.l.b16 %v6257
    %v6778 = vunpack.c.l.b16 %v6258
    %v6779 = vunpack.c.l.b16 %v6259
    %v6780 = vunpack.c.l.b16 %v6260
    %v6781 = vunpack.c.l.b16 %v6261
    %v6782 = vunpack.c.l.b16 %v6262
    %v6783 = vunpack.c.l.b16 %v6263
    %v6784 = vunpack.c.l.b16 %v6264
    %v6785 = vunpack.c.l.b16 %v6265
    %v6786 = vunpack.c.l.b16 %v6266
    %v6787 = vunpack.c.l.b16 %v6267
    %v6788 = vunpack.c.l.b16 %v6268
    %v6789 = vunpack.c.l.b16 %v6269
    %v6790 = vunpack.c.l.b16 %v6270
    %v6791 = vunpack.c.l.b16 %v6271
    %v6792 = vunpack.c.l.b16 %v6272
    %v6793 = vunpack.c.l.b16 %v6273
    %v6794 = vunpack.c.l.b16 %v6274
    %v6795 = vunpack.c.l.b16 %v6275
    %v6796 = vunpack.c.l.b16 %v6276
    %v6797 = vunpack.c.l.b16 %v6277
    %v6798 = vunpack.c.l.b16 %v6278
    %v6799 = vunpack.c.l.b16 %v6279
    %v6800 = vunpack.c.l.b16 %v6280
    %v6801 = vunpack.c.l.b16 %v6281
    %v6802 = vunpack.c.l.b16 %v6282
    %v6803 = vunpack.c.l.b16 %v6283
    %v6804 = vunpack.c.l.b16 %v6284
    %v6805 = vunpack.c.l.b16 %v6285
    %v6806 = vunpack.c.l.b16 %v6286
    %v6807 = vunpack.c.l.b16 %v6287
    %v6808 = vunpack.c.l.b16 %v6288
    %v6809 = vunpack.c.l.b16 %v6289
    %v6810 = vunpack.c.l.b16 %v6290
    %v6811 = vunpack.c.l.b16 %v6291
    %v6812 = vunpack.c.l.b16 %v6292
    %v6813 = vunpack.c.l.b16 %v6293
    %v6814 = vunpack.c.l.b16 %v6294
    %v6815 = vunpack.c.l.b16 %v6295
    %v6816 = vunpack.c.l.b16 %v6296
    %v6817 = vunpack.c.l.b16 %v6297
    %v6818 = vunpack.c.l.b16 %v6298
    %v6819 = vunpack.c.l.b16 %v6299
    %v6820 = vunpack.c.l.b16 %v6300
    %v6821 = vunpack.c.l.b16 %v6301
    %v6822 = vunpack.c.l.b16 %v6302
    %v6823 = vunpack.c.l.b16 %v6303
    %v6824 = vunpack.c.l.b16 %v6304
    %v6825 = vunpack.c.l.b16 %v6305
    %v6826 = vunpack.c.l.b16 %v6306
    %v6827 = vunpack.c.l.b16 %v6307
    %v6828 = vunpack.c.l.b16 %v6308
    %v6829 = vunpack.c.l.b16 %v6309
    %v6830 = vunpack.c.l.b16 %v6310
    %v6831 = vunpack.c.l.b16 %v6311
    %v6832 = vunpack.c.l.b16 %v6312
    %v6833 = vunpack.c.l.b16 %v6313
    %v6834 = vunpack.c.l.b16 %v6314
    %v6835 = vunpack.c.l.b16 %v6315
    %v6836 = vunpack.c.l.b16 %v6316
    %v6837 = vunpack.c.l.b16 %v6317
    %v6838 = vunpack.c.l.b16 %v6318
    %v6839 = vunpack.c.l.b16 %v6319
    %v6840 = vunpack.c.l.b16 %v6320
    %v6841 = vunpack.c.l.b16 %v6321
    %v6842 = vunpack.c.l.b16 %v6322
    %v6843 = vunpack.c.l.b16 %v6323
    %v6844 = vunpack.c.l.b16 %v6324
    %v6845 = vunpack.c.l.b16 %v6325
    %v6846 = vunpack.c.l.b16 %v6326
    %v6847 = vpack.c.b16 %v6592, %v6591
    %v6848 = vpack.c.b16 %v6594, %v6593
    %v6849 = vpack.c.b16 %v6596, %v6595
    %v6850 = vpack.c.b16 %v6598, %v6597
    %v6851 = vpack.c.b16 %v6600, %v6599
    %v6852 = vpack.c.b16 %v6602, %v6601
    %v6853 = vpack.c.b16 %v6604, %v6603
    %v6854 = vpack.c.b16 %v6606, %v6605
    %v6855 = vpack.c.b16 %v6608, %v6607
    %v6856 = vpack.c.b16 %v6610, %v6609
    %v6857 = vpack.c.b16 %v6612, %v6611
    %v6858 = vpack.c.b16 %v6614, %v6613
    %v6859 = vpack.c.b16 %v6616, %v6615
    %v6860 = vpack.c.b16 %v6618, %v6617
    %v6861 = vpack.c.b16 %v6620, %v6619
    %v6862 = vpack.c.b16 %v6622, %v6621
    %v6863 = vpack.c.b16 %v6624, %v6623
    %v6864 = vpack.c.b16 %v6626, %v6625
    %v6865 = vpack.c.b16 %v6628, %v6627
    %v6866 = vpack.c.b16 %v6630, %v6629
    %v6867 = vpack.c.b16 %v6632, %v6631
    %v6868 = vpack.c.b16 %v6634, %v6633
    %v6869 = vpack.c.b16 %v6636, %v6635
    %v6870 = vpack.c.b16 %v6638, %v6637
    %v6871 = vpack.c.b16 %v6640, %v6639
    %v6872 = vpack.c.b16 %v6642, %v6641
    %v6873 = vpack.c.b16 %v6644, %v6643
    %v6874 = vpack.c.b16 %v6646, %v6645
    %v6875 = vpack.c.b16 %v6648, %v6647
    %v6876 = vpack.c.b16 %v6650, %v6649
    %v6877 = vpack.c.b16 %v6652, %v6651
    %v6878 = vpack.c.b16 %v6654, %v6653
    %v6879 = vpack.c.b16 %v6656, %v6655
    %v6880 = vpack.c.b16 %v6658, %v6657
    %v6881 = vpack.c.b16 %v6660, %v6659
    %v6882 = vpack.c.b16 %v6662, %v6661
    %v6883 = vpack.c.b16 %v6664, %v6663
    %v6884 = vpack.c.b16 %v6666, %v6665
    %v6885 = vpack.c.b16 %v6668, %v6667
    %v6886 = vpack.c.b16 %v6670, %v6669
    %v6887 = vpack.c.b16 %v6672, %v6671
    %v6888 = vpack.c.b16 %v6674, %v6673
    %v6889 = vpack.c.b16 %v6676, %v6675
    %v6890 = vpack.c.b16 %v6678, %v6677
    %v6891 = vpack.c.b16 %v6680, %v6679
    %v6892 = vpack.c.b16 %v6682, %v6681
    %v6893 = vpack.c.b16 %v6684, %v6683
    %v6894 = vpack.c.b16 %v6686, %v6685
    %v6895 = vpack.c.b16 %v6688, %v6687
    %v6896 = vpack.c.b16 %v6690, %v6689
    %v6897 = vpack.c.b16 %v6692, %v6691
    %v6898 = vpack.c.b16 %v6694, %v6693
    %v6899 = vpack.c.b16 %v6696, %v6695
    %v6900 = vpack.c.b16 %v6698, %v6697
    %v6901 = vpack.c.b16 %v6700, %v6699
    %v6902 = vpack.c.b16 %v6702, %v6701
    %v6903 = vpack.c.b16 %v6704, %v6703
    %v6904 = vpack.c.b16 %v6706, %v6705
    %v6905 = vpack.c.b16 %v6708, %v6707
    %v6906 = vpack.c.b16 %v6710, %v6709
    %v6907 = vpack.c.b16 %v6712, %v6711
    %v6908 = vpack.c.b16 %v6714, %v6713
    %v6909 = vpack.c.b16 %v6716, %v6715
    %v6910 = vpack.c.b16 %v6718, %v6717
    %v6911 = vpack.c.b16 %v6720, %v6719
    %v6912 = vpack.c.b16 %v6722, %v6721
    %v6913 = vpack.c.b16 %v6724, %v6723
    %v6914 = vpack.c.b16 %v6726, %v6725
    %v6915 = vpack.c.b16 %v6728, %v6727
    %v6916 = vpack.c.b16 %v6730, %v6729
    %v6917 = vpack.c.b16 %v6732, %v6731
    %v6918 = vpack.c.b16 %v6734, %v6733
    %v6919 = vpack.c.b16 %v6736, %v6735
    %v6920 = vpack.c.b16 %v6738, %v6737
    %v6921 = vpack.c.b16 %v6740, %v6739
    %v6922 = vpack.c.b16 %v6742, %v6741
    %v6923 = vpack.c.b16 %v6744, %v6743
    %v6924 = vpack.c.b16 %v6746, %v6745
    %v6925 = vpack.c.b16 %v6748, %v6747
    %v6926 = vpack.c.b16 %v6750, %v6749
    %v6927 = vpack.c.b16 %v6752, %v6751
    %v6928 = vpack.c.b16 %v6754, %v6753
    %v6929 = vpack.c.b16 %v6756, %v6755
    %v6930 = vpack.c.b16 %v6758, %v6757
    %v6931 = vpack.c.b16 %v6760, %v6759
    %v6932 = vpack.c.b16 %v6762, %v6761
    %v6933 = vpack.c.b16 %v6764, %v6763
    %v6934 = vpack.c.b16 %v6766, %v6765
    %v6935 = vpack.c.b16 %v6768, %v6767
    %v6936 = vpack.c.b16 %v6770, %v6769
    %v6937 = vpack.c.b16 %v6772, %v6771
    %v6938 = vpack.c.b16 %v6774, %v6773
    %v6939 = vpack.c.b16 %v6776, %v6775
    %v6940 = vpack.c.b16 %v6778, %v6777
    %v6941 = vpack.c.b16 %v6780, %v6779
    %v6942 = vpack.c.b16 %v6782, %v6781
    %v6943 = vpack.c.b16 %v6784, %v6783
    %v6944 = vpack.c.b16 %v6786, %v6785
    %v6945 = vpack.c.b16 %v6788, %v6787
    %v6946 = vpack.c.b16 %v6790, %v6789
    %v6947 = vpack.c.b16 %v6792, %v6791
    %v6948 = vpack.c.b16 %v6794, %v6793
    %v6949 = vpack.c.b16 %v6796, %v6795
    %v6950 = vpack.c.b16 %v6798, %v6797
    %v6951 = vpack.c.b16 %v6800, %v6799
    %v6952 = vpack.c.b16 %v6802, %v6801
    %v6953 = vpack.c.b16 %v6804, %v6803
    %v6954 = vpack.c.b16 %v6806, %v6805
    %v6955 = vpack.c.b16 %v6808, %v6807
    %v6956 = vpack.c.b16 %v6810, %v6809
    %v6957 = vpack.c.b16 %v6812, %v6811
    %v6958 = vpack.c.b16 %v6814, %v6813
    %v6959 = vpack.c.b16 %v6816, %v6815
    %v6960 = vpack.c.b16 %v6818, %v6817
    %v6961 = vpack.c.b16 %v6820, %v6819
    %v6962 = vpack.c.b16 %v6822, %v6821
    %v6963 = vpack.c.b16 %v6824, %v6823
    %v6964 = vpack.c.b16 %v6826, %v6825
    %v6965 = vpack.c.b16 %v6828, %v6827
    %v6966 = vpack.c.b16 %v6830, %v6829
    %v6967 = vpack.c.b16 %v6832, %v6831
    %v6968 = vpack.c.b16 %v6834, %v6833
    %v6969 = vpack.c.b16 %v6836, %v6835
    %v6970 = vpack.c.b16 %v6838, %v6837
    %v6971 = vpack.c.b16 %v6840, %v6839
    %v6972 = vpack.c.b16 %v6842, %v6841
    %v6973 = vpack.c.b16 %v6844, %v6843
    %v6974 = vpack.c.b16 %v6846, %v6845
    %7103 = vmatprep.subr.bf16.mxu0 0
    %7104 = vmatpush1.bf16.msra.mxu0 %v6847
    %7105 = vmatprep.subr.bf16.mxu0 0
    %7106 = vmatpush1.bf16.msra.mxu0 %v6848
    %7107 = vmatprep.subr.bf16.mxu0 0
    %7108 = vmatpush1.bf16.msra.mxu0 %v6849
    %7109 = vmatprep.subr.bf16.mxu0 0
    %7110 = vmatpush1.bf16.msra.mxu0 %v6850
    %7111 = vmatprep.subr.bf16.mxu0 0
    %7112 = vmatpush1.bf16.msra.mxu0 %v6851
    %7113 = vmatprep.subr.bf16.mxu0 0
    %7114 = vmatpush1.bf16.msra.mxu0 %v6852
    %7115 = vmatprep.subr.bf16.mxu0 0
    %7116 = vmatpush1.bf16.msra.mxu0 %v6853
    %7117 = vmatprep.subr.bf16.mxu0 0
    %7118 = vmatpush1.bf16.msra.mxu0 %v6854
    %7119 = vmatprep.subr.bf16.mxu0 0
    %7120 = vmatpush1.bf16.msra.mxu0 %v6855
    %7121 = vmatprep.subr.bf16.mxu0 0
    %7122 = vmatpush1.bf16.msra.mxu0 %v6856
    %7123 = vmatprep.subr.bf16.mxu0 0
    %7124 = vmatpush1.bf16.msra.mxu0 %v6857
    %7125 = vmatprep.subr.bf16.mxu0 0
    %7126 = vmatpush1.bf16.msra.mxu0 %v6858
    %7127 = vmatprep.subr.bf16.mxu0 0
    %7128 = vmatpush1.bf16.msra.mxu0 %v6859
    %7129 = vmatprep.subr.bf16.mxu0 0
    %7130 = vmatpush1.bf16.msra.mxu0 %v6860
    %7131 = vmatprep.subr.bf16.mxu0 0
    %7132 = vmatpush1.bf16.msra.mxu0 %v6861
    %7133 = vmatprep.subr.bf16.mxu0 0
    %7134 = vmatpush1.bf16.msra.mxu0 %v6862
    %7135 = vmatprep.mubr.bf16.mxu0 %v6055
    %7136 = vmatmul.mubr.bf16.gmra.mrb[0].mxu0 %v6054
    %v7137 = vpop.f32.mrb[0].mxu0
    %v7138 = vadd.f32 %v6333, %v7137
    %v7139 = vpop.f32.mrb[0].mxu0
    %v7140 = vpop.f32.mrb[0].mxu0
    %v7141 = vadd.f32 %v6333, %v7140
    %v7142 = vpop.f32.mrb[0].mxu0
    %7143 = vdwg.mxu0
    %7144 = vmatprep.subr.bf16.mxu0 0
    %7145 = vmatpush1.bf16.msra.mxu0 %v6863
    %7146 = vmatprep.subr.bf16.mxu0 0
    %7147 = vmatpush1.bf16.msra.mxu0 %v6864
    %7148 = vmatprep.subr.bf16.mxu0 0
    %7149 = vmatpush1.bf16.msra.mxu0 %v6865
    %7150 = vmatprep.subr.bf16.mxu0 0
    %7151 = vmatpush1.bf16.msra.mxu0 %v6866
    %7152 = vmatprep.subr.bf16.mxu0 0
    %7153 = vmatpush1.bf16.msra.mxu0 %v6867
    %7154 = vmatprep.subr.bf16.mxu0 0
    %7155 = vmatpush1.bf16.msra.mxu0 %v6868
    %7156 = vmatprep.subr.bf16.mxu0 0
    %7157 = vmatpush1.bf16.msra.mxu0 %v6869
    %7158 = vmatprep.subr.bf16.mxu0 0
    %7159 = vmatpush1.bf16.msra.mxu0 %v6870
    %7160 = vmatprep.subr.bf16.mxu0 0
    %7161 = vmatpush1.bf16.msra.mxu0 %v6871
    %7162 = vmatprep.subr.bf16.mxu0 0
    %7163 = vmatpush1.bf16.msra.mxu0 %v6872
    %7164 = vmatprep.subr.bf16.mxu0 0
    %7165 = vmatpush1.bf16.msra.mxu0 %v6873
    %7166 = vmatprep.subr.bf16.mxu0 0
    %7167 = vmatpush1.bf16.msra.mxu0 %v6874
    %7168 = vmatprep.subr.bf16.mxu0 0
    %7169 = vmatpush1.bf16.msra.mxu0 %v6875
    %7170 = vmatprep.subr.bf16.mxu0 0
    %7171 = vmatpush1.bf16.msra.mxu0 %v6876
    %7172 = vmatprep.subr.bf16.mxu0 0
    %7173 = vmatpush1.bf16.msra.mxu0 %v6877
    %7174 = vmatprep.subr.bf16.mxu0 0
    %7175 = vmatpush1.bf16.msra.mxu0 %v6878
    %7176 = vmatprep.mubr.bf16.mxu0 %v6057
    %7177 = vmatmul.mubr.bf16.gmra.mrb[0].mxu0 %v6056
    %v7178 = vpop.f32.mrb[0].mxu0
    %v7179 = vadd.f32 %v7138, %v7178
    %v7180 = vpop.f32.mrb[0].mxu0
    %v7181 = vpop.f32.mrb[0].mxu0
    %v7182 = vadd.f32 %v7141, %v7181
    %v7183 = vpop.f32.mrb[0].mxu0
    %7184 = vdwg.mxu0
    %7185 = vmatprep.subr.bf16.mxu0 0
    %7186 = vmatpush1.bf16.msra.mxu0 %v6879
    %7187 = vmatprep.subr.bf16.mxu0 0
    %7188 = vmatpush1.bf16.msra.mxu0 %v6880
    %7189 = vmatprep.subr.bf16.mxu0 0
    %7190 = vmatpush1.bf16.msra.mxu0 %v6881
    %7191 = vmatprep.subr.bf16.mxu0 0
    %7192 = vmatpush1.bf16.msra.mxu0 %v6882
    %7193 = vmatprep.subr.bf16.mxu0 0
    %7194 = vmatpush1.bf16.msra.mxu0 %v6883
    %7195 = vmatprep.subr.bf16.mxu0 0
    %7196 = vmatpush1.bf16.msra.mxu0 %v6884
    %7197 = vmatprep.subr.bf16.mxu0 0
    %7198 = vmatpush1.bf16.msra.mxu0 %v6885
    %7199 = vmatprep.subr.bf16.mxu0 0
    %7200 = vmatpush1.bf16.msra.mxu0 %v6886
    %7201 = vmatprep.subr.bf16.mxu0 0
    %7202 = vmatpush1.bf16.msra.mxu0 %v6887
    %7203 = vmatprep.subr.bf16.mxu0 0
    %7204 = vmatpush1.bf16.msra.mxu0 %v6888
    %7205 = vmatprep.subr.bf16.mxu0 0
    %7206 = vmatpush1.bf16.msra.mxu0 %v6889
    %7207 = vmatprep.subr.bf16.mxu0 0
    %7208 = vmatpush1.bf16.msra.mxu0 %v6890
    %7209 = vmatprep.subr.bf16.mxu0 0
    %7210 = vmatpush1.bf16.msra.mxu0 %v6891
    %7211 = vmatprep.subr.bf16.mxu0 0
    %7212 = vmatpush1.bf16.msra.mxu0 %v6892
    %7213 = vmatprep.subr.bf16.mxu0 0
    %7214 = vmatpush1.bf16.msra.mxu0 %v6893
    %7215 = vmatprep.subr.bf16.mxu0 0
    %7216 = vmatpush1.bf16.msra.mxu0 %v6894
    %7217 = vmatprep.mubr.bf16.mxu0 %v6059
    %7218 = vmatmul.mubr.bf16.gmra.mrb[0].mxu0 %v6058
    %v7219 = vpop.f32.mrb[0].mxu0
    %v7220 = vadd.f32 %v7179, %v7219
    %v7221 = vpop.f32.mrb[0].mxu0
    %v7222 = vpop.f32.mrb[0].mxu0
    %v7223 = vadd.f32 %v7182, %v7222
    %v7224 = vpop.f32.mrb[0].mxu0
    %7225 = vdwg.mxu0
    %7226 = vmatprep.subr.bf16.mxu0 0
    %7227 = vmatpush1.bf16.msra.mxu0 %v6895
    %7228 = vmatprep.subr.bf16.mxu0 0
    %7229 = vmatpush1.bf16.msra.mxu0 %v6896
    %7230 = vmatprep.subr.bf16.mxu0 0
    %7231 = vmatpush1.bf16.msra.mxu0 %v6897
    %7232 = vmatprep.subr.bf16.mxu0 0
    %7233 = vmatpush1.bf16.msra.mxu0 %v6898
    %7234 = vmatprep.subr.bf16.mxu0 0
    %7235 = vmatpush1.bf16.msra.mxu0 %v6899
    %7236 = vmatprep.subr.bf16.mxu0 0
    %7237 = vmatpush1.bf16.msra.mxu0 %v6900
    %7238 = vmatprep.subr.bf16.mxu0 0
    %7239 = vmatpush1.bf16.msra.mxu0 %v6901
    %7240 = vmatprep.subr.bf16.mxu0 0
    %7241 = vmatpush1.bf16.msra.mxu0 %v6902
    %7242 = vmatprep.subr.bf16.mxu0 0
    %7243 = vmatpush1.bf16.msra.mxu0 %v6903
    %7244 = vmatprep.subr.bf16.mxu0 0
    %7245 = vmatpush1.bf16.msra.mxu0 %v6904
    %7246 = vmatprep.subr.bf16.mxu0 0
    %7247 = vmatpush1.bf16.msra.mxu0 %v6905
    %7248 = vmatprep.subr.bf16.mxu0 0
    %7249 = vmatpush1.bf16.msra.mxu0 %v6906
    %7250 = vmatprep.subr.bf16.mxu0 0
    %7251 = vmatpush1.bf16.msra.mxu0 %v6907
    %7252 = vmatprep.subr.bf16.mxu0 0
    %7253 = vmatpush1.bf16.msra.mxu0 %v6908
    %7254 = vmatprep.subr.bf16.mxu0 0
    %7255 = vmatpush1.bf16.msra.mxu0 %v6909
    %7256 = vmatprep.subr.bf16.mxu0 0
    %7257 = vmatpush1.bf16.msra.mxu0 %v6910
    %7258 = vmatprep.mubr.bf16.mxu0 %v6061
    %7259 = vmatmul.mubr.bf16.gmra.mrb[0].mxu0 %v6060
    %v7260 = vpop.f32.mrb[0].mxu0
    %v7261 = vadd.f32 %v7220, %v7260
    %v7262 = vpop.f32.mrb[0].mxu0
    %v7263 = vpop.f32.mrb[0].mxu0
    %v7264 = vadd.f32 %v7223, %v7263
    %v7265 = vpop.f32.mrb[0].mxu0
    %7266 = vdwg.mxu0
    %7267 = vmatprep.subr.bf16.mxu0 0
    %7268 = vmatpush1.bf16.msra.mxu0 %v6911
    %7269 = vmatprep.subr.bf16.mxu0 0
    %7270 = vmatpush1.bf16.msra.mxu0 %v6912
    %7271 = vmatprep.subr.bf16.mxu0 0
    %7272 = vmatpush1.bf16.msra.mxu0 %v6913
    %7273 = vmatprep.subr.bf16.mxu0 0
    %7274 = vmatpush1.bf16.msra.mxu0 %v6914
    %7275 = vmatprep.subr.bf16.mxu0 0
    %7276 = vmatpush1.bf16.msra.mxu0 %v6915
    %7277 = vmatprep.subr.bf16.mxu0 0
    %7278 = vmatpush1.bf16.msra.mxu0 %v6916
    %7279 = vmatprep.subr.bf16.mxu0 0
    %7280 = vmatpush1.bf16.msra.mxu0 %v6917
    %7281 = vmatprep.subr.bf16.mxu0 0
    %7282 = vmatpush1.bf16.msra.mxu0 %v6918
    %7283 = vmatprep.subr.bf16.mxu0 0
    %7284 = vmatpush1.bf16.msra.mxu0 %v6919
    %7285 = vmatprep.subr.bf16.mxu0 0
    %7286 = vmatpush1.bf16.msra.mxu0 %v6920
    %7287 = vmatprep.subr.bf16.mxu0 0
    %7288 = vmatpush1.bf16.msra.mxu0 %v6921
    %7289 = vmatprep.subr.bf16.mxu0 0
    %7290 = vmatpush1.bf16.msra.mxu0 %v6922
    %7291 = vmatprep.subr.bf16.mxu0 0
    %7292 = vmatpush1.bf16.msra.mxu0 %v6923
    %7293 = vmatprep.subr.bf16.mxu0 0
    %7294 = vmatpush1.bf16.msra.mxu0 %v6924
    %7295 = vmatprep.subr.bf16.mxu0 0
    %7296 = vmatpush1.bf16.msra.mxu0 %v6925
    %7297 = vmatprep.subr.bf16.mxu0 0
    %7298 = vmatpush1.bf16.msra.mxu0 %v6926
    %7299 = vmatprep.mubr.bf16.mxu0 %v6063
    %7300 = vmatmul.mubr.bf16.gmra.mrb[0].mxu0 %v6062
    %v7301 = vpop.f32.mrb[0].mxu0
    %v7302 = vadd.f32 %v7261, %v7301
    %v7303 = vpop.f32.mrb[0].mxu0
    %v7304 = vpop.f32.mrb[0].mxu0
    %v7305 = vadd.f32 %v7264, %v7304
    %v7306 = vpop.f32.mrb[0].mxu0
    %7307 = vdwg.mxu0
    %7308 = vmatprep.subr.bf16.mxu0 0
    %7309 = vmatpush1.bf16.msra.mxu0 %v6927
    %7310 = vmatprep.subr.bf16.mxu0 0
    %7311 = vmatpush1.bf16.msra.mxu0 %v6928
    %7312 = vmatprep.subr.bf16.mxu0 0
    %7313 = vmatpush1.bf16.msra.mxu0 %v6929
    %7314 = vmatprep.subr.bf16.mxu0 0
    %7315 = vmatpush1.bf16.msra.mxu0 %v6930
    %7316 = vmatprep.subr.bf16.mxu0 0
    %7317 = vmatpush1.bf16.msra.mxu0 %v6931
    %7318 = vmatprep.subr.bf16.mxu0 0
    %7319 = vmatpush1.bf16.msra.mxu0 %v6932
    %7320 = vmatprep.subr.bf16.mxu0 0
    %7321 = vmatpush1.bf16.msra.mxu0 %v6933
    %7322 = vmatprep.subr.bf16.mxu0 0
    %7323 = vmatpush1.bf16.msra.mxu0 %v6934
    %7324 = vmatprep.subr.bf16.mxu0 0
    %7325 = vmatpush1.bf16.msra.mxu0 %v6935
    %7326 = vmatprep.subr.bf16.mxu0 0
    %7327 = vmatpush1.bf16.msra.mxu0 %v6936
    %7328 = vmatprep.subr.bf16.mxu0 0
    %7329 = vmatpush1.bf16.msra.mxu0 %v6937
    %7330 = vmatprep.subr.bf16.mxu0 0
    %7331 = vmatpush1.bf16.msra.mxu0 %v6938
    %7332 = vmatprep.subr.bf16.mxu0 0
    %7333 = vmatpush1.bf16.msra.mxu0 %v6939
    %7334 = vmatprep.subr.bf16.mxu0 0
    %7335 = vmatpush1.bf16.msra.mxu0 %v6940
    %7336 = vmatprep.subr.bf16.mxu0 0
    %7337 = vmatpush1.bf16.msra.mxu0 %v6941
    %7338 = vmatprep.subr.bf16.mxu0 0
    %7339 = vmatpush1.bf16.msra.mxu0 %v6942
    %7340 = vmatprep.mubr.bf16.mxu0 %v6065
    %7341 = vmatmul.mubr.bf16.gmra.mrb[0].mxu0 %v6064
    %v7342 = vpop.f32.mrb[0].mxu0
    %v7343 = vadd.f32 %v7302, %v7342
    %v7344 = vpop.f32.mrb[0].mxu0
    %v7345 = vpop.f32.mrb[0].mxu0
    %v7346 = vadd.f32 %v7305, %v7345
    %v7347 = vpop.f32.mrb[0].mxu0
    %7348 = vdwg.mxu0
    %7349 = vmatprep.subr.bf16.mxu0 0
    %7350 = vmatpush1.bf16.msra.mxu0 %v6943
    %7351 = vmatprep.subr.bf16.mxu0 0
    %7352 = vmatpush1.bf16.msra.mxu0 %v6944
    %7353 = vmatprep.subr.bf16.mxu0 0
    %7354 = vmatpush1.bf16.msra.mxu0 %v6945
    %7355 = vmatprep.subr.bf16.mxu0 0
    %7356 = vmatpush1.bf16.msra.mxu0 %v6946
    %7357 = vmatprep.subr.bf16.mxu0 0
    %7358 = vmatpush1.bf16.msra.mxu0 %v6947
    %7359 = vmatprep.subr.bf16.mxu0 0
    %7360 = vmatpush1.bf16.msra.mxu0 %v6948
    %7361 = vmatprep.subr.bf16.mxu0 0
    %7362 = vmatpush1.bf16.msra.mxu0 %v6949
    %7363 = vmatprep.subr.bf16.mxu0 0
    %7364 = vmatpush1.bf16.msra.mxu0 %v6950
    %7365 = vmatprep.subr.bf16.mxu0 0
    %7366 = vmatpush1.bf16.msra.mxu0 %v6951
    %7367 = vmatprep.subr.bf16.mxu0 0
    %7368 = vmatpush1.bf16.msra.mxu0 %v6952
    %7369 = vmatprep.subr.bf16.mxu0 0
    %7370 = vmatpush1.bf16.msra.mxu0 %v6953
    %7371 = vmatprep.subr.bf16.mxu0 0
    %7372 = vmatpush1.bf16.msra.mxu0 %v6954
    %7373 = vmatprep.subr.bf16.mxu0 0
    %7374 = vmatpush1.bf16.msra.mxu0 %v6955
    %7375 = vmatprep.subr.bf16.mxu0 0
    %7376 = vmatpush1.bf16.msra.mxu0 %v6956
    %7377 = vmatprep.subr.bf16.mxu0 0
    %7378 = vmatpush1.bf16.msra.mxu0 %v6957
    %7379 = vmatprep.subr.bf16.mxu0 0
    %7380 = vmatpush1.bf16.msra.mxu0 %v6958
    %7381 = vmatprep.mubr.bf16.mxu0 %v6067
    %7382 = vmatmul.mubr.bf16.gmra.mrb[0].mxu0 %v6066
    %v7383 = vpop.f32.mrb[0].mxu0
    %v7384 = vadd.f32 %v7343, %v7383
    %v7385 = vpop.f32.mrb[0].mxu0
    %v7386 = vpop.f32.mrb[0].mxu0
    %v7387 = vadd.f32 %v7346, %v7386
    %v7388 = vpop.f32.mrb[0].mxu0
    %7389 = vdwg.mxu0
    %7390 = vmatprep.subr.bf16.mxu0 0
    %7391 = vmatpush1.bf16.msra.mxu0 %v6959
    %7392 = vmatprep.subr.bf16.mxu0 0
    %7393 = vmatpush1.bf16.msra.mxu0 %v6960
    %7394 = vmatprep.subr.bf16.mxu0 0
    %7395 = vmatpush1.bf16.msra.mxu0 %v6961
    %7396 = vmatprep.subr.bf16.mxu0 0
    %7397 = vmatpush1.bf16.msra.mxu0 %v6962
    %7398 = vmatprep.subr.bf16.mxu0 0
    %7399 = vmatpush1.bf16.msra.mxu0 %v6963
    %7400 = vmatprep.subr.bf16.mxu0 0
    %7401 = vmatpush1.bf16.msra.mxu0 %v6964
    %7402 = vmatprep.subr.bf16.mxu0 0
    %7403 = vmatpush1.bf16.msra.mxu0 %v6965
    %7404 = vmatprep.subr.bf16.mxu0 0
    %7405 = vmatpush1.bf16.msra.mxu0 %v6966
    %7406 = vmatprep.subr.bf16.mxu0 0
    %7407 = vmatpush1.bf16.msra.mxu0 %v6967
    %7408 = vmatprep.subr.bf16.mxu0 0
    %7409 = vmatpush1.bf16.msra.mxu0 %v6968
    %7410 = vmatprep.subr.bf16.mxu0 0
    %7411 = vmatpush1.bf16.msra.mxu0 %v6969
    %7412 = vmatprep.subr.bf16.mxu0 0
    %7413 = vmatpush1.bf16.msra.mxu0 %v6970
    %7414 = vmatprep.subr.bf16.mxu0 0
    %7415 = vmatpush1.bf16.msra.mxu0 %v6971
    %7416 = vmatprep.subr.bf16.mxu0 0
    %7417 = vmatpush1.bf16.msra.mxu0 %v6972
    %7418 = vmatprep.subr.bf16.mxu0 0
    %7419 = vmatpush1.bf16.msra.mxu0 %v6973
    %7420 = vmatprep.subr.bf16.mxu0 0
    %7421 = vmatpush1.bf16.msra.mxu0 %v6974
    %7422 = vmatprep.mubr.bf16.mxu0 %v6069
    %7423 = vmatmul.mubr.bf16.gmra.mrb[0].mxu0 %v6068
    %v7424 = vpop.f32.mrb[0].mxu0
    %v7425 = vadd.f32 %v7384, %v7424
    %v7426 = vpop.f32.mrb[0].mxu0
    %v7427 = vpop.f32.mrb[0].mxu0
    %v7428 = vadd.f32 %v7387, %v7427
    %v7429 = vpop.f32.mrb[0].mxu0
    %7430 = vdwg.mxu0
    %v7431 = vadd.f32 %v5394, %v7425
    %v7432 = vadd.f32 %v5395, %v7428
    %s7433 = scalar_lea.vmem %s13, 1
    %v7434 = vld [vmem:[%s7433] sm:$0x1]
    %s7435 = scalar_lea.vmem %s14, 1
    %v7436 = vld [vmem:[%s7435] sm:$0x1]
    %v7437 = vsel %vm156, %v7431, 0.0
    %7438 = vadd.xlane.f32.xlu0 %v7437
    %v7439 = vpop.xlane.xlu0 %7438
    %v7440 = vsel %vm156, %v7432, 0.0
    %7441 = vadd.xlane.f32.xlu0 %v7440
    %v7442 = vpop.xlane.xlu0 %7441
    %v7443 = vmul.f32 %v7439, %v1694
    %v7444 = vmul.f32 %v7442, %v1694
    %v7445 = vsub.f32 %v7431, %v7443
    %v7446 = vsub.f32 %v7432, %v7444
    %v7447 = vmul.f32 %v7445, %v7445
    %v7448 = vmul.f32 %v7446, %v7446
    %v7449 = vsel %vm156, %v7447, 0.0
    %7450 = vadd.xlane.f32.xlu0 %v7449
    %v7451 = vpop.xlane.xlu0 %7450
    %v7452 = vsel %vm156, %v7448, 0.0
    %7453 = vadd.xlane.f32.xlu0 %v7452
    %v7454 = vpop.xlane.xlu0 %7453
    %v7455 = vmul.f32 %v7451, %v1694
    %v7456 = vmul.f32 %v7454, %v1694
    %v7457 = vadd.f32 %v7455, 1e-05
    %v7458 = vadd.f32 %v7456, 1e-05
    %v7459 = vrsqrt.pop %v7457
    %v7460 = vrsqrt.pop %v7458
    %v7461 = vmul.f32 %v7445, %v7459
    %v7462 = vmul.f32 %v7446, %v7460
    %v7464 = vlaneseq
    %v7465 = vshrl.u32 %v7464, 7
    %v7466 = vsub.s32 0, %v7465
    %v7467 = vrot.slane %v7434, %v7466
    %v7469 = vmul.f32 %v7461, %v7467
    %v7470 = vmul.f32 %v7462, %v7467
    %v7472 = vlaneseq
    %v7473 = vshrl.u32 %v7472, 7
    %v7474 = vsub.s32 0, %v7473
    %v7475 = vrot.slane %v7436, %v7474
    %v7477 = vadd.f32 %v7469, %v7475
    %v7478 = vadd.f32 %v7470, %v7475
    %v7480 = vrot.slane %v7477, 7
    %v7483 = vrot.slane %v7478, 6
    %vm7485 = vcmask 1040384
    %v7486 = vsel %vm7485, %v7480, %v7483
    %v7487 = vmax.f32 %v7486, -10.0
    %v7488 = vmin.f32 %v7487, 10.0
    %v7489 = vld [vmem:[%s15] sm:$0xff]
    %v7490 = vld [vmem:[%s15 + $0x8] sm:$0xff]
    %v7491 = vld [vmem:[%s15 + $0x10] sm:$0xff]
    %v7492 = vld [vmem:[%s15 + $0x18] sm:$0xff]
    %v7493 = vld [vmem:[%s16] sm:$0x1]
    %v7495 = vlaneseq
    %v7496 = vshrl.u32 %v7495, 7
    %v7497 = vsub.s32 0, %v7496
    %v7498 = vrot.slane %v7493, %v7497
    %v7501 = vsel %vm156, %v7488, 0
    %7503 = vmatprep.subr.mxu0 0.0
    %7504 = vmatpush1.msra.mxu0 %v7489
    %7505 = vmatprep.subr.mxu0 0.0
    %7506 = vmatpush1.msra.mxu0 %v7490
    %7507 = vmatprep.subr.mxu0 0.0
    %7508 = vmatpush1.msra.mxu0 %v7491
    %7509 = vmatprep.subr.mxu0 0.0
    %7510 = vmatpush1.msra.mxu0 %v7492
    %7511 = vmatprep.subr.mxu0 0.0
    %7512 = vmatpush1.msra.mxu0 0.0
    %7513 = vmatprep.subr.mxu0 0.0
    %7514 = vmatpush1.msra.mxu0 0.0
    %7515 = vmatprep.subr.mxu0 0.0
    %7516 = vmatpush1.msra.mxu0 0.0
    %7517 = vmatprep.subr.mxu0 0.0
    %7518 = vmatpush1.msra.mxu0 0.0
    %7519 = vmatprep.subr.mxu0 0.0
    %7520 = vmatpush1.msra.mxu0 0.0
    %7521 = vmatprep.subr.mxu0 0.0
    %7522 = vmatpush1.msra.mxu0 0.0
    %7523 = vmatprep.subr.mxu0 0.0
    %7524 = vmatpush1.msra.mxu0 0.0
    %7525 = vmatprep.subr.mxu0 0.0
    %7526 = vmatpush1.msra.mxu0 0.0
    %7527 = vmatprep.subr.mxu0 0.0
    %7528 = vmatpush1.msra.mxu0 0.0
    %7529 = vmatprep.subr.mxu0 0.0
    %7530 = vmatpush1.msra.mxu0 0.0
    %7531 = vmatprep.subr.mxu0 0.0
    %7532 = vmatpush1.msra.mxu0 0.0
    %7533 = vmatprep.subr.mxu0 0.0
    %7534 = vmatpush1.msra.mxu0 0.0
    %7535 = vmatprep.subr.mxu0 0.0
    %7536 = vmatpush1.msra.mxu0 0.0
    %7537 = vmatprep.subr.mxu0 0.0
    %7538 = vmatpush1.msra.mxu0 0.0
    %7539 = vmatprep.subr.mxu0 0.0
    %7540 = vmatpush1.msra.mxu0 0.0
    %7541 = vmatprep.subr.mxu0 0.0
    %7542 = vmatpush1.msra.mxu0 0.0
    %7543 = vmatprep.subr.mxu0 0.0
    %7544 = vmatpush1.msra.mxu0 0.0
    %7545 = vmatprep.subr.mxu0 0.0
    %7546 = vmatpush1.msra.mxu0 0.0
    %7547 = vmatprep.subr.mxu0 0.0
    %7548 = vmatpush1.msra.mxu0 0.0
    %7549 = vmatprep.subr.mxu0 0.0
    %7550 = vmatpush1.msra.mxu0 0.0
    %7551 = vmatprep.subr.mxu0 0.0
    %7552 = vmatpush1.msra.mxu0 0.0
    %7553 = vmatprep.subr.mxu0 0.0
    %7554 = vmatpush1.msra.mxu0 0.0
    %7555 = vmatprep.subr.mxu0 0.0
    %7556 = vmatpush1.msra.mxu0 0.0
    %7557 = vmatprep.subr.mxu0 0.0
    %7558 = vmatpush1.msra.mxu0 0.0
    %7559 = vmatprep.subr.mxu0 0.0
    %7560 = vmatpush1.msra.mxu0 0.0
    %7561 = vmatprep.subr.mxu0 0.0
    %7562 = vmatpush1.msra.mxu0 0.0
    %7563 = vmatprep.subr.mxu0 0.0
    %7564 = vmatpush1.msra.mxu0 0.0
    %7565 = vmatprep.subr.mxu0 0.0
    %7566 = vmatpush1.msra.mxu0 0.0
    %7567 = vmatprep.mubr.f32.mxu0 0.0
    %7568 = vmatmul.mubr.f32.gmra.mrb[0].mxu0 %v7501
    %v7569 = vpop.f32.mrb[0].mxu0
    %v7570 = vadd.f32 %v7498, %v7569
    %v7571 = vpop.f32.mrb[0].mxu0
    %7572 = vdwg.mxu0
    %7573 = vst [vmem:[#allocation2] sm:$0x3] %v7570
    // Predicated region
    $region70: #{tpu_custom_call.1} parent=1 // pred_check
      _
    $region71: #{tpu_custom_call.1} parent=1 // pred_check_branch
      %7575 = sbr.rel (0) target = $region73
    $region72: #{tpu_custom_call.1} parent=1 // pred_region
      %s7577 = ssub.s32 32, 32
      %7578 = vsyncadd [#allocation3], %s7577
      %s7580 = sshll.u32 [#allocation2], 4
      %s7581 = int_to_ptr.vmem [resolvable:$true] %s7580
      %7583 = dma.vmem_to_hbm [thread:$0]  %s7581, 32, %s17, [#allocation3]
    $region73: #{tpu_custom_call.1} parent=1 // pred_fallthru
      _
    // Predicated region
    $region74: #{tpu_custom_call.1} parent=1 // pred_check
      _
    $region75: #{tpu_custom_call.1} parent=1 // pred_check_branch
      %7585 = sbr.rel (0) target = $region77
    $region76: #{tpu_custom_call.1} parent=1 // pred_region
      %7586 = dma.done [#allocation3], 32
    $region77: #{tpu_custom_call.1} parent=1 // pred_fallthru
      _
    %7587 = vsyncpa [#allocation3], 1

</llo_original>
